<compile_context>
chip_gen: v7x
topology: tpu7x:2x2x1
jax: 0.10.0
libtpu: 0.0.40
codegen_flags: <defaults>
</compile_context>

<pallas_src>
import functools

import jax
import jax.numpy as jnp
from jax import lax
from jax.experimental import pallas as pl
from jax.experimental.pallas import tpu as pltpu

BN_EPS = 1e-5      # torch.nn.BatchNorm1d default eps
GINE_EPS = 0.0     # GINEConv default eps (train_eps=False)
LANES = 128
SUBLANES = 8


def _round_up(v, m):
    return ((v + m - 1) // m) * m


def _bucket(n, minimum=SUBLANES):
    """Round n up to a power of two (>= minimum) to keep the compile cache small."""
    n = max(int(n), 1)
    return max(minimum, 1 << (n - 1).bit_length())


def _pad2(a, rows, cols):
    a = jnp.asarray(a, jnp.float32)
    if a.ndim == 1:
        a = a[None, :]
    return jnp.pad(a, ((0, rows - a.shape[0]), (0, cols - a.shape[1])))


# ---------------------------------------------------------------------------
# Fused Pallas kernel: (GINEConv + BN + ReLU) x n_layers  +  final MLP
# ---------------------------------------------------------------------------
def _meta_gnn_kernel(n_real, n_layers,
                     # inputs (all VMEM f32)
                     x_ref, ea_ref,                    # [Np,F], [Ep,F]
                     g_ref, s_ref,                     # [Ep,Np] gather, [Np,Ep] scatter
                     we_ref, be_ref,                   # [L,F,F], [L,1,F]
                     w1_ref, b1_ref, w2_ref, b2_ref,   # stacked per layer
                     bnw_ref, bnb_ref,                 # [L,1,F]
                     w3_ref, b3_ref, w4_ref, b4_ref,   # final MLP
                     # output
                     o_ref):                           # VMEM f32 [Np,F]
    f32 = jnp.float32
    np_rows, feat = x_ref.shape

    # node-row validity mask (hoisted: constant across layers)
    rows = lax.broadcasted_iota(jnp.int32, (np_rows, feat), 0)
    row_mask = (rows < n_real).astype(f32)
    inv_n = 1.0 / float(n_real)

    gather = g_ref[...]
    scatter = s_ref[...]
    ea = ea_ref[...]
    x = x_ref[...]

    for layer in range(n_layers):
        # edge embedding: edge_nn(edge_attr)
        emsg = jnp.dot(ea, we_ref[layer], preferred_element_type=f32) + be_ref[layer]

        # GINE aggregation as two MXU matmuls:
        #   msg = relu(x[src] + edge_emb)   (gather via one-hot G)
        #   agg[dst] += msg                 (scatter-add via one-hot S)
        # Padded edge rows have zero rows in G and zero columns in S, so they never
        # contribute; padded node rows of S are zero, keeping agg's pad rows zero.
        msg = jnp.maximum(
            jnp.dot(gather, x, preferred_element_type=f32) + emsg, 0.0)
        agg = jnp.dot(scatter, msg, preferred_element_type=f32)

        # GINEConv nn: Linear -> ReLU -> Linear
        h = (1.0 + GINE_EPS) * x + agg
        h1 = jnp.maximum(
            jnp.dot(h, w1_ref[layer], preferred_element_type=f32) + b1_ref[layer],
            0.0)
        out = (jnp.dot(h1, w2_ref[layer], preferred_element_type=f32)
               + b2_ref[layer])

        # BatchNorm1d (training mode): masked two-pass statistics (no cancellation)
        om = out * row_mask
        mean = jnp.sum(om, axis=0, keepdims=True) * inv_n
        diff = (out - mean) * row_mask
        var = jnp.maximum(jnp.sum(diff * diff, axis=0, keepdims=True) * inv_n, 0.0)
        y = ((out - mean) * lax.rsqrt(var + BN_EPS) * bnw_ref[layer]
             + bnb_ref[layer])

        # ReLU; keep padded node rows zeroed so they never pollute later layers
        x = jnp.maximum(y, 0.0) * row_mask

    # final MLP: Linear(h, 4h) -> ReLU -> Linear(4h, 1)
    hm = jnp.maximum(
        jnp.dot(x, w3_ref[...], preferred_element_type=f32) + b3_ref[...], 0.0)
    o_ref[...] = jnp.dot(hm, w4_ref[...], preferred_element_type=f32) + b4_ref[...]


# ---------------------------------------------------------------------------
# One-time parameter preparation (padding/stacking hoisted out of forward path)
# ---------------------------------------------------------------------------
def prepare_meta_gnn_params(params):
    layers = params["layers"]
    mlp = params["mlp"]
    dims = [1]
    for lp in layers:
        dims += [lp["We"].shape[0], lp["We"].shape[1],
                 lp["W1"].shape[0], lp["W1"].shape[1],
                 lp["W2"].shape[0], lp["W2"].shape[1]]
    dims += [mlp["W3"].shape[0], mlp["W3"].shape[1],
             mlp["W4"].shape[0], mlp["W4"].shape[1]]
    feat = _round_up(max(dims), LANES)

    def stack(key):
        return jnp.stack([
            _pad2(lp[key], feat if jnp.ndim(lp[key]) == 2 else 1, feat)
            for lp in layers])

    return dict(
        feat=feat, n_layers=len(layers),
        We=stack("We"), be=stack("be"),
        W1=stack("W1"), b1=stack("b1"),
        W2=stack("W2"), b2=stack("b2"),
        bn_w=stack("bn_w"), bn_b=stack("bn_b"),
        W3=_pad2(mlp["W3"], feat, feat), b3=_pad2(mlp["b3"], 1, feat),
        W4=_pad2(mlp["W4"], feat, feat), b4=_pad2(mlp["b4"], 1, feat),
    )


# ---------------------------------------------------------------------------
# Forward wrapper: pad dynamic graph tensors, single fused pallas_call
# ---------------------------------------------------------------------------
def meta_gnn_forward(x, edge_index, edge_attr, prep):
    n_nodes = x.shape[0]
    n_edges = edge_index.shape[1]
    assert n_nodes > 0, "MetaGNN forward requires at least one node"
    feat = prep["feat"]
    n_layers = prep["n_layers"]
    np_rows = _bucket(n_nodes)
    ep_rows = _bucket(n_edges)

    x_p = _pad2(x, np_rows, feat)
    ea_p = _pad2(edge_attr, ep_rows, feat)
    src = edge_index[0].astype(jnp.int32)
    dst = edge_index[1].astype(jnp.int32)

    # One-hot gather / scatter matrices (depend only on edge_index; shared by all
    # layers). G[e, src[e]] = 1, S[dst[e], e] = 1; padded rows/cols stay zero.
    e_ids = jnp.arange(n_edges, dtype=jnp.int32)
    gather = jnp.zeros((ep_rows, np_rows), jnp.float32).at[e_ids, src].set(1.0)
    scatter = jnp.zeros((np_rows, ep_rows), jnp.float32).at[dst, e_ids].set(1.0)

    vmem = pl.BlockSpec(memory_space=pltpu.MemorySpace.VMEM)

    args = (x_p, ea_p, gather, scatter,
            prep["We"], prep["be"], prep["W1"], prep["b1"],
            prep["W2"], prep["b2"], prep["bn_w"], prep["bn_b"],
            prep["W3"], prep["b3"], prep["W4"], prep["b4"])

    out_p = pl.pallas_call(
        functools.partial(_meta_gnn_kernel, n_nodes, n_layers),
        out_shape=jax.ShapeDtypeStruct((np_rows, feat), jnp.float32),
        in_specs=[vmem] * len(args),
        out_specs=vmem,
    )(*args)
    return out_p[:n_nodes, :1]


# ---------------------------------------------------------------------------
# Pure-JAX reference (unpadded) for correctness checking
# ---------------------------------------------------------------------------
def ref_forward(x, edge_index, edge_attr, params):
    src, dst = edge_index[0], edge_index[1]
    n_nodes = x.shape[0]
    for lp in params["layers"]:
        edge_emb = edge_attr @ lp["We"] + lp["be"]
        msg = jax.nn.relu(x[src] + edge_emb)
        aggr = jnp.zeros((n_nodes, msg.shape[1]), jnp.float32).at[dst].add(msg)
        h = (1.0 + GINE_EPS) * x + aggr
        h1 = jax.nn.relu(h @ lp["W1"] + lp["b1"])
        out = h1 @ lp["W2"] + lp["b2"]
        mean = out.mean(0, keepdims=True)
        var = ((out - mean) ** 2).mean(0, keepdims=True)
        x = jax.nn.relu((out - mean) / jnp.sqrt(var + BN_EPS) * lp["bn_w"]
                        + lp["bn_b"])
    mp = params["mlp"]
    h = jax.nn.relu(x @ mp["W3"] + mp["b3"])
    return h @ mp["W4"] + mp["b4"]


# ---------------------------------------------------------------------------
if __name__ == "__main__":
    # keep f32 matmuls at full precision on TPU so kernel and reference agree
    jax.config.update("jax_default_matmul_precision", "highest")

    key = jax.random.PRNGKey(0)
    n_node_attr, n_edge_attr, n_hidden, n_layers = 6, 4, 32, 2
    N, E = 10, 24

    ks = iter(jax.random.split(key, 32))

    x = jax.random.normal(next(ks), (N, n_node_attr), jnp.float32)
    src = jax.random.randint(next(ks), (E,), 0, N, jnp.int32)
    dst = jax.random.randint(next(ks), (E,), 0, N, jnp.int32)
    edge_index = jnp.stack([src, dst])
    edge_attr = jax.random.normal(next(ks), (E, n_edge_attr), jnp.float32)

    def lin(k, fan_in, fan_out):
        # torch.nn.Linear-style init; weights stored transposed (in, out)
        kw, kb = jax.random.split(k)
        s = 1.0 / (fan_in ** 0.5)
        w = jax.random.uniform(kw, (fan_in, fan_out), jnp.float32, -s, s)
        b = jax.random.uniform(kb, (fan_out,), jnp.float32, -s, s)
        return w, b

    layers = []
    for i in range(n_layers):
        d_in = n_node_attr if i == 0 else n_hidden
        We, be = lin(next(ks), n_edge_attr, d_in)
        W1, b1 = lin(next(ks), d_in, 2 * n_hidden)
        W2, b2 = lin(next(ks), 2 * n_hidden, n_hidden)
        layers.append(dict(We=We, be=be, W1=W1, b1=b1, W2=W2, b2=b2,
                           bn_w=jnp.ones((n_hidden,), jnp.float32),
                           bn_b=jnp.zeros((n_hidden,), jnp.float32)))
    W3, b3 = lin(next(ks), n_hidden, 4 * n_hidden)
    W4, b4 = lin(next(ks), 4 * n_hidden, 1)
    params = dict(layers=layers, mlp=dict(W3=W3, b3=b3, W4=W4, b4=b4))

    # TODO(synk): BatchNorm1d running_mean/running_var state updates (a training
    # side effect) are not reproduced; forward matches training-mode output.
    prep = prepare_meta_gnn_params(params)

    out = jax.block_until_ready(meta_gnn_forward(x, edge_index, edge_attr, prep))
    ref = jax.block_until_ready(ref_forward(x, edge_index, edge_attr, params))

    assert out.shape == (N, 1), out.shape
    assert jnp.allclose(out, ref, rtol=1e-3, atol=1e-3), (out, ref)
    print("KERNEL_OK")
</pallas_src>

<mosaic_0001>
module attributes {stable_mosaic.version = 11 : i64} {
  func.func @_meta_gnn_kernel(%arg0: memref<16x128xf32, #tpu.memory_space<vmem>>, %arg1: memref<32x128xf32, #tpu.memory_space<vmem>>, %arg2: memref<32x16xf32, #tpu.memory_space<vmem>>, %arg3: memref<16x32xf32, #tpu.memory_space<vmem>>, %arg4: memref<2x128x128xf32, #tpu.memory_space<vmem>>, %arg5: memref<2x1x128xf32, #tpu.memory_space<vmem>>, %arg6: memref<2x128x128xf32, #tpu.memory_space<vmem>>, %arg7: memref<2x1x128xf32, #tpu.memory_space<vmem>>, %arg8: memref<2x128x128xf32, #tpu.memory_space<vmem>>, %arg9: memref<2x1x128xf32, #tpu.memory_space<vmem>>, %arg10: memref<2x1x128xf32, #tpu.memory_space<vmem>>, %arg11: memref<2x1x128xf32, #tpu.memory_space<vmem>>, %arg12: memref<128x128xf32, #tpu.memory_space<vmem>>, %arg13: memref<1x128xf32, #tpu.memory_space<vmem>>, %arg14: memref<128x128xf32, #tpu.memory_space<vmem>>, %arg15: memref<1x128xf32, #tpu.memory_space<vmem>>, %arg16: memref<16x128xf32, #tpu.memory_space<vmem>>) attributes {dimension_semantics = [], scalar_prefetch = 0 : i64, scratch_operands = 0 : i64, tpu.core_type = #tpu.core_type<tc>} {
    %0 = tpu.iota {dimensions = array<i32: 0>} : vector<16x128xi32>
    %c10_i32 = arith.constant 10 : i32
    %1 = vector.broadcast %c10_i32 : i32 to vector<16x128xi32>
    %2 = arith.cmpi slt, %0, %1 : vector<16x128xi32>
    %3 = arith.extui %2 : vector<16x128xi1> to vector<16x128xi32>
    %4 = arith.sitofp %3 : vector<16x128xi32> to vector<16x128xf32>
    %c0 = arith.constant 0 : index
    %c0_0 = arith.constant 0 : index
    %5 = vector.load %arg2[%c0, %c0_0] : memref<32x16xf32, #tpu.memory_space<vmem>>, vector<32x16xf32>
    %c0_1 = arith.constant 0 : index
    %c0_2 = arith.constant 0 : index
    %6 = vector.load %arg3[%c0_1, %c0_2] : memref<16x32xf32, #tpu.memory_space<vmem>>, vector<16x32xf32>
    %c0_3 = arith.constant 0 : index
    %c0_4 = arith.constant 0 : index
    %7 = vector.load %arg1[%c0_3, %c0_4] : memref<32x128xf32, #tpu.memory_space<vmem>>, vector<32x128xf32>
    %c0_5 = arith.constant 0 : index
    %c0_6 = arith.constant 0 : index
    %8 = vector.load %arg0[%c0_5, %c0_6] : memref<16x128xf32, #tpu.memory_space<vmem>>, vector<16x128xf32>
    %c0_7 = arith.constant 0 : index
    %c0_8 = arith.constant 0 : index
    %c0_9 = arith.constant 0 : index
    %9 = vector.load %arg4[%c0_7, %c0_8, %c0_9] : memref<2x128x128xf32, #tpu.memory_space<vmem>>, vector<1x128x128xf32>
    %10 = vector.shape_cast %9 : vector<1x128x128xf32> to vector<128x128xf32>
    %cst = arith.constant dense<0.000000e+00> : vector<32x128xf32>
    %11 = tpu.matmul %7, %10, %cst {dimension_numbers = #tpu.dot_dimension_numbers<[1], [0], [0], [1], [0, 0, 1, 1], [], []>, precision = #tpu.contract_precision<fp32>} : vector<32x128xf32>, vector<128x128xf32>, vector<32x128xf32> -> vector<32x128xf32>
    %c0_10 = arith.constant 0 : index
    %c0_11 = arith.constant 0 : index
    %c0_12 = arith.constant 0 : index
    %12 = vector.load %arg5[%c0_10, %c0_11, %c0_12] : memref<2x1x128xf32, #tpu.memory_space<vmem>>, vector<1x1x128xf32>
    %13 = vector.shape_cast %12 : vector<1x1x128xf32> to vector<1x128xf32>
    %14 = vector.broadcast %13 : vector<1x128xf32> to vector<32x128xf32>
    %15 = arith.addf %11, %14 : vector<32x128xf32>
    %cst_13 = arith.constant dense<0.000000e+00> : vector<32x128xf32>
    %16 = tpu.matmul %5, %8, %cst_13 {dimension_numbers = #tpu.dot_dimension_numbers<[1], [0], [0], [1], [0, 0, 1, 1], [], []>, precision = #tpu.contract_precision<fp32>} : vector<32x16xf32>, vector<16x128xf32>, vector<32x128xf32> -> vector<32x128xf32>
    %17 = arith.addf %16, %15 : vector<32x128xf32>
    %cst_14 = arith.constant 0.000000e+00 : f32
    %18 = vector.broadcast %cst_14 : f32 to vector<32x128xf32>
    %19 = arith.maximumf %17, %18 : vector<32x128xf32>
    %cst_15 = arith.constant dense<0.000000e+00> : vector<16x128xf32>
    %20 = tpu.matmul %6, %19, %cst_15 {dimension_numbers = #tpu.dot_dimension_numbers<[1], [0], [0], [1], [0, 0, 1, 1], [], []>, precision = #tpu.contract_precision<fp32>} : vector<16x32xf32>, vector<32x128xf32>, vector<16x128xf32> -> vector<16x128xf32>
    %cst_16 = arith.constant 1.000000e+00 : f32
    %21 = vector.broadcast %cst_16 : f32 to vector<16x128xf32>
    %22 = arith.mulf %21, %8 : vector<16x128xf32>
    %23 = arith.addf %22, %20 : vector<16x128xf32>
    %c0_17 = arith.constant 0 : index
    %c0_18 = arith.constant 0 : index
    %c0_19 = arith.constant 0 : index
    %24 = vector.load %arg6[%c0_17, %c0_18, %c0_19] : memref<2x128x128xf32, #tpu.memory_space<vmem>>, vector<1x128x128xf32>
    %25 = vector.shape_cast %24 : vector<1x128x128xf32> to vector<128x128xf32>
    %cst_20 = arith.constant dense<0.000000e+00> : vector<16x128xf32>
    %26 = tpu.matmul %23, %25, %cst_20 {dimension_numbers = #tpu.dot_dimension_numbers<[1], [0], [0], [1], [0, 0, 1, 1], [], []>, precision = #tpu.contract_precision<fp32>} : vector<16x128xf32>, vector<128x128xf32>, vector<16x128xf32> -> vector<16x128xf32>
    %c0_21 = arith.constant 0 : index
    %c0_22 = arith.constant 0 : index
    %c0_23 = arith.constant 0 : index
    %27 = vector.load %arg7[%c0_21, %c0_22, %c0_23] : memref<2x1x128xf32, #tpu.memory_space<vmem>>, vector<1x1x128xf32>
    %28 = vector.shape_cast %27 : vector<1x1x128xf32> to vector<1x128xf32>
    %29 = vector.broadcast %28 : vector<1x128xf32> to vector<16x128xf32>
    %30 = arith.addf %26, %29 : vector<16x128xf32>
    %cst_24 = arith.constant 0.000000e+00 : f32
    %31 = vector.broadcast %cst_24 : f32 to vector<16x128xf32>
    %32 = arith.maximumf %30, %31 : vector<16x128xf32>
    %c0_25 = arith.constant 0 : index
    %c0_26 = arith.constant 0 : index
    %c0_27 = arith.constant 0 : index
    %33 = vector.load %arg8[%c0_25, %c0_26, %c0_27] : memref<2x128x128xf32, #tpu.memory_space<vmem>>, vector<1x128x128xf32>
    %34 = vector.shape_cast %33 : vector<1x128x128xf32> to vector<128x128xf32>
    %cst_28 = arith.constant dense<0.000000e+00> : vector<16x128xf32>
    %35 = tpu.matmul %32, %34, %cst_28 {dimension_numbers = #tpu.dot_dimension_numbers<[1], [0], [0], [1], [0, 0, 1, 1], [], []>, precision = #tpu.contract_precision<fp32>} : vector<16x128xf32>, vector<128x128xf32>, vector<16x128xf32> -> vector<16x128xf32>
    %c0_29 = arith.constant 0 : index
    %c0_30 = arith.constant 0 : index
    %c0_31 = arith.constant 0 : index
    %36 = vector.load %arg9[%c0_29, %c0_30, %c0_31] : memref<2x1x128xf32, #tpu.memory_space<vmem>>, vector<1x1x128xf32>
    %37 = vector.shape_cast %36 : vector<1x1x128xf32> to vector<1x128xf32>
    %38 = vector.broadcast %37 : vector<1x128xf32> to vector<16x128xf32>
    %39 = arith.addf %35, %38 : vector<16x128xf32>
    %40 = arith.mulf %39, %4 : vector<16x128xf32>
    %cst_32 = arith.constant dense<0.000000e+00> : vector<128xf32>
    %41 = vector.multi_reduction <add>, %40, %cst_32 [0] : vector<16x128xf32> to vector<128xf32>
    %42 = vector.shape_cast %41 : vector<128xf32> to vector<1x128xf32>
    %cst_33 = arith.constant 1.000000e-01 : f32
    %43 = vector.broadcast %cst_33 : f32 to vector<1x128xf32>
    %44 = arith.mulf %42, %43 : vector<1x128xf32>
    %45 = vector.broadcast %44 : vector<1x128xf32> to vector<16x128xf32>
    %46 = arith.subf %39, %45 : vector<16x128xf32>
    %47 = arith.mulf %46, %4 : vector<16x128xf32>
    %48 = arith.mulf %47, %47 : vector<16x128xf32>
    %cst_34 = arith.constant dense<0.000000e+00> : vector<128xf32>
    %49 = vector.multi_reduction <add>, %48, %cst_34 [0] : vector<16x128xf32> to vector<128xf32>
    %50 = vector.shape_cast %49 : vector<128xf32> to vector<1x128xf32>
    %cst_35 = arith.constant 1.000000e-01 : f32
    %51 = vector.broadcast %cst_35 : f32 to vector<1x128xf32>
    %52 = arith.mulf %50, %51 : vector<1x128xf32>
    %cst_36 = arith.constant 0.000000e+00 : f32
    %53 = vector.broadcast %cst_36 : f32 to vector<1x128xf32>
    %54 = arith.maximumf %52, %53 : vector<1x128xf32>
    %55 = vector.broadcast %44 : vector<1x128xf32> to vector<16x128xf32>
    %56 = arith.subf %39, %55 : vector<16x128xf32>
    %cst_37 = arith.constant 9.99999974E-6 : f32
    %57 = vector.broadcast %cst_37 : f32 to vector<1x128xf32>
    %58 = arith.addf %54, %57 : vector<1x128xf32>
    %59 = math.rsqrt %58 : vector<1x128xf32>
    %60 = vector.broadcast %59 : vector<1x128xf32> to vector<16x128xf32>
    %61 = arith.mulf %56, %60 : vector<16x128xf32>
    %c0_38 = arith.constant 0 : index
    %c0_39 = arith.constant 0 : index
    %c0_40 = arith.constant 0 : index
    %62 = vector.load %arg10[%c0_38, %c0_39, %c0_40] : memref<2x1x128xf32, #tpu.memory_space<vmem>>, vector<1x1x128xf32>
    %63 = vector.shape_cast %62 : vector<1x1x128xf32> to vector<1x128xf32>
    %64 = vector.broadcast %63 : vector<1x128xf32> to vector<16x128xf32>
    %65 = arith.mulf %61, %64 : vector<16x128xf32>
    %c0_41 = arith.constant 0 : index
    %c0_42 = arith.constant 0 : index
    %c0_43 = arith.constant 0 : index
    %66 = vector.load %arg11[%c0_41, %c0_42, %c0_43] : memref<2x1x128xf32, #tpu.memory_space<vmem>>, vector<1x1x128xf32>
    %67 = vector.shape_cast %66 : vector<1x1x128xf32> to vector<1x128xf32>
    %68 = vector.broadcast %67 : vector<1x128xf32> to vector<16x128xf32>
    %69 = arith.addf %65, %68 : vector<16x128xf32>
    %cst_44 = arith.constant 0.000000e+00 : f32
    %70 = vector.broadcast %cst_44 : f32 to vector<16x128xf32>
    %71 = arith.maximumf %69, %70 : vector<16x128xf32>
    %72 = arith.mulf %71, %4 : vector<16x128xf32>
    %c1 = arith.constant 1 : index
    %c0_45 = arith.constant 0 : index
    %c0_46 = arith.constant 0 : index
    %73 = vector.load %arg4[%c1, %c0_45, %c0_46] : memref<2x128x128xf32, #tpu.memory_space<vmem>>, vector<1x128x128xf32>
    %74 = vector.shape_cast %73 : vector<1x128x128xf32> to vector<128x128xf32>
    %cst_47 = arith.constant dense<0.000000e+00> : vector<32x128xf32>
    %75 = tpu.matmul %7, %74, %cst_47 {dimension_numbers = #tpu.dot_dimension_numbers<[1], [0], [0], [1], [0, 0, 1, 1], [], []>, precision = #tpu.contract_precision<fp32>} : vector<32x128xf32>, vector<128x128xf32>, vector<32x128xf32> -> vector<32x128xf32>
    %c1_48 = arith.constant 1 : index
    %c0_49 = arith.constant 0 : index
    %c0_50 = arith.constant 0 : index
    %76 = vector.load %arg5[%c1_48, %c0_49, %c0_50] : memref<2x1x128xf32, #tpu.memory_space<vmem>>, vector<1x1x128xf32>
    %77 = vector.shape_cast %76 : vector<1x1x128xf32> to vector<1x128xf32>
    %78 = vector.broadcast %77 : vector<1x128xf32> to vector<32x128xf32>
    %79 = arith.addf %75, %78 : vector<32x128xf32>
    %cst_51 = arith.constant dense<0.000000e+00> : vector<32x128xf32>
    %80 = tpu.matmul %5, %72, %cst_51 {dimension_numbers = #tpu.dot_dimension_numbers<[1], [0], [0], [1], [0, 0, 1, 1], [], []>, precision = #tpu.contract_precision<fp32>} : vector<32x16xf32>, vector<16x128xf32>, vector<32x128xf32> -> vector<32x128xf32>
    %81 = arith.addf %80, %79 : vector<32x128xf32>
    %cst_52 = arith.constant 0.000000e+00 : f32
    %82 = vector.broadcast %cst_52 : f32 to vector<32x128xf32>
    %83 = arith.maximumf %81, %82 : vector<32x128xf32>
    %cst_53 = arith.constant dense<0.000000e+00> : vector<16x128xf32>
    %84 = tpu.matmul %6, %83, %cst_53 {dimension_numbers = #tpu.dot_dimension_numbers<[1], [0], [0], [1], [0, 0, 1, 1], [], []>, precision = #tpu.contract_precision<fp32>} : vector<16x32xf32>, vector<32x128xf32>, vector<16x128xf32> -> vector<16x128xf32>
    %cst_54 = arith.constant 1.000000e+00 : f32
    %85 = vector.broadcast %cst_54 : f32 to vector<16x128xf32>
    %86 = arith.mulf %85, %72 : vector<16x128xf32>
    %87 = arith.addf %86, %84 : vector<16x128xf32>
    %c1_55 = arith.constant 1 : index
    %c0_56 = arith.constant 0 : index
    %c0_57 = arith.constant 0 : index
    %88 = vector.load %arg6[%c1_55, %c0_56, %c0_57] : memref<2x128x128xf32, #tpu.memory_space<vmem>>, vector<1x128x128xf32>
    %89 = vector.shape_cast %88 : vector<1x128x128xf32> to vector<128x128xf32>
    %cst_58 = arith.constant dense<0.000000e+00> : vector<16x128xf32>
    %90 = tpu.matmul %87, %89, %cst_58 {dimension_numbers = #tpu.dot_dimension_numbers<[1], [0], [0], [1], [0, 0, 1, 1], [], []>, precision = #tpu.contract_precision<fp32>} : vector<16x128xf32>, vector<128x128xf32>, vector<16x128xf32> -> vector<16x128xf32>
    %c1_59 = arith.constant 1 : index
    %c0_60 = arith.constant 0 : index
    %c0_61 = arith.constant 0 : index
    %91 = vector.load %arg7[%c1_59, %c0_60, %c0_61] : memref<2x1x128xf32, #tpu.memory_space<vmem>>, vector<1x1x128xf32>
    %92 = vector.shape_cast %91 : vector<1x1x128xf32> to vector<1x128xf32>
    %93 = vector.broadcast %92 : vector<1x128xf32> to vector<16x128xf32>
    %94 = arith.addf %90, %93 : vector<16x128xf32>
    %cst_62 = arith.constant 0.000000e+00 : f32
    %95 = vector.broadcast %cst_62 : f32 to vector<16x128xf32>
    %96 = arith.maximumf %94, %95 : vector<16x128xf32>
    %c1_63 = arith.constant 1 : index
    %c0_64 = arith.constant 0 : index
    %c0_65 = arith.constant 0 : index
    %97 = vector.load %arg8[%c1_63, %c0_64, %c0_65] : memref<2x128x128xf32, #tpu.memory_space<vmem>>, vector<1x128x128xf32>
    %98 = vector.shape_cast %97 : vector<1x128x128xf32> to vector<128x128xf32>
    %cst_66 = arith.constant dense<0.000000e+00> : vector<16x128xf32>
    %99 = tpu.matmul %96, %98, %cst_66 {dimension_numbers = #tpu.dot_dimension_numbers<[1], [0], [0], [1], [0, 0, 1, 1], [], []>, precision = #tpu.contract_precision<fp32>} : vector<16x128xf32>, vector<128x128xf32>, vector<16x128xf32> -> vector<16x128xf32>
    %c1_67 = arith.constant 1 : index
    %c0_68 = arith.constant 0 : index
    %c0_69 = arith.constant 0 : index
    %100 = vector.load %arg9[%c1_67, %c0_68, %c0_69] : memref<2x1x128xf32, #tpu.memory_space<vmem>>, vector<1x1x128xf32>
    %101 = vector.shape_cast %100 : vector<1x1x128xf32> to vector<1x128xf32>
    %102 = vector.broadcast %101 : vector<1x128xf32> to vector<16x128xf32>
    %103 = arith.addf %99, %102 : vector<16x128xf32>
    %104 = arith.mulf %103, %4 : vector<16x128xf32>
    %cst_70 = arith.constant dense<0.000000e+00> : vector<128xf32>
    %105 = vector.multi_reduction <add>, %104, %cst_70 [0] : vector<16x128xf32> to vector<128xf32>
    %106 = vector.shape_cast %105 : vector<128xf32> to vector<1x128xf32>
    %cst_71 = arith.constant 1.000000e-01 : f32
    %107 = vector.broadcast %cst_71 : f32 to vector<1x128xf32>
    %108 = arith.mulf %106, %107 : vector<1x128xf32>
    %109 = vector.broadcast %108 : vector<1x128xf32> to vector<16x128xf32>
    %110 = arith.subf %103, %109 : vector<16x128xf32>
    %111 = arith.mulf %110, %4 : vector<16x128xf32>
    %112 = arith.mulf %111, %111 : vector<16x128xf32>
    %cst_72 = arith.constant dense<0.000000e+00> : vector<128xf32>
    %113 = vector.multi_reduction <add>, %112, %cst_72 [0] : vector<16x128xf32> to vector<128xf32>
    %114 = vector.shape_cast %113 : vector<128xf32> to vector<1x128xf32>
    %cst_73 = arith.constant 1.000000e-01 : f32
    %115 = vector.broadcast %cst_73 : f32 to vector<1x128xf32>
    %116 = arith.mulf %114, %115 : vector<1x128xf32>
    %cst_74 = arith.constant 0.000000e+00 : f32
    %117 = vector.broadcast %cst_74 : f32 to vector<1x128xf32>
    %118 = arith.maximumf %116, %117 : vector<1x128xf32>
    %119 = vector.broadcast %108 : vector<1x128xf32> to vector<16x128xf32>
    %120 = arith.subf %103, %119 : vector<16x128xf32>
    %cst_75 = arith.constant 9.99999974E-6 : f32
    %121 = vector.broadcast %cst_75 : f32 to vector<1x128xf32>
    %122 = arith.addf %118, %121 : vector<1x128xf32>
    %123 = math.rsqrt %122 : vector<1x128xf32>
    %124 = vector.broadcast %123 : vector<1x128xf32> to vector<16x128xf32>
    %125 = arith.mulf %120, %124 : vector<16x128xf32>
    %c1_76 = arith.constant 1 : index
    %c0_77 = arith.constant 0 : index
    %c0_78 = arith.constant 0 : index
    %126 = vector.load %arg10[%c1_76, %c0_77, %c0_78] : memref<2x1x128xf32, #tpu.memory_space<vmem>>, vector<1x1x128xf32>
    %127 = vector.shape_cast %126 : vector<1x1x128xf32> to vector<1x128xf32>
    %128 = vector.broadcast %127 : vector<1x128xf32> to vector<16x128xf32>
    %129 = arith.mulf %125, %128 : vector<16x128xf32>
    %c1_79 = arith.constant 1 : index
    %c0_80 = arith.constant 0 : index
    %c0_81 = arith.constant 0 : index
    %130 = vector.load %arg11[%c1_79, %c0_80, %c0_81] : memref<2x1x128xf32, #tpu.memory_space<vmem>>, vector<1x1x128xf32>
    %131 = vector.shape_cast %130 : vector<1x1x128xf32> to vector<1x128xf32>
    %132 = vector.broadcast %131 : vector<1x128xf32> to vector<16x128xf32>
    %133 = arith.addf %129, %132 : vector<16x128xf32>
    %cst_82 = arith.constant 0.000000e+00 : f32
    %134 = vector.broadcast %cst_82 : f32 to vector<16x128xf32>
    %135 = arith.maximumf %133, %134 : vector<16x128xf32>
    %136 = arith.mulf %135, %4 : vector<16x128xf32>
    %c0_83 = arith.constant 0 : index
    %c0_84 = arith.constant 0 : index
    %137 = vector.load %arg12[%c0_83, %c0_84] : memref<128x128xf32, #tpu.memory_space<vmem>>, vector<128x128xf32>
    %cst_85 = arith.constant dense<0.000000e+00> : vector<16x128xf32>
    %138 = tpu.matmul %136, %137, %cst_85 {dimension_numbers = #tpu.dot_dimension_numbers<[1], [0], [0], [1], [0, 0, 1, 1], [], []>, precision = #tpu.contract_precision<fp32>} : vector<16x128xf32>, vector<128x128xf32>, vector<16x128xf32> -> vector<16x128xf32>
    %c0_86 = arith.constant 0 : index
    %c0_87 = arith.constant 0 : index
    %139 = vector.load %arg13[%c0_86, %c0_87] : memref<1x128xf32, #tpu.memory_space<vmem>>, vector<1x128xf32>
    %140 = vector.broadcast %139 : vector<1x128xf32> to vector<16x128xf32>
    %141 = arith.addf %138, %140 : vector<16x128xf32>
    %cst_88 = arith.constant 0.000000e+00 : f32
    %142 = vector.broadcast %cst_88 : f32 to vector<16x128xf32>
    %143 = arith.maximumf %141, %142 : vector<16x128xf32>
    %c0_89 = arith.constant 0 : index
    %c0_90 = arith.constant 0 : index
    %144 = vector.load %arg14[%c0_89, %c0_90] : memref<128x128xf32, #tpu.memory_space<vmem>>, vector<128x128xf32>
    %cst_91 = arith.constant dense<0.000000e+00> : vector<16x128xf32>
    %145 = tpu.matmul %143, %144, %cst_91 {dimension_numbers = #tpu.dot_dimension_numbers<[1], [0], [0], [1], [0, 0, 1, 1], [], []>, precision = #tpu.contract_precision<fp32>} : vector<16x128xf32>, vector<128x128xf32>, vector<16x128xf32> -> vector<16x128xf32>
    %c0_92 = arith.constant 0 : index
    %c0_93 = arith.constant 0 : index
    %146 = vector.load %arg15[%c0_92, %c0_93] : memref<1x128xf32, #tpu.memory_space<vmem>>, vector<1x128xf32>
    %147 = vector.broadcast %146 : vector<1x128xf32> to vector<16x128xf32>
    %148 = arith.addf %145, %147 : vector<16x128xf32>
    %c0_94 = arith.constant 0 : index
    %c0_95 = arith.constant 0 : index
    %149 = vector.load %arg16[%c0_94, %c0_95] : memref<16x128xf32, #tpu.memory_space<vmem>>, vector<16x128xf32>
    tpu.vector_store %arg16[%c0_94, %c0_95], %148 {strides = array<i32>} : memref<16x128xf32, #tpu.memory_space<vmem>>, vector<16x128xf32>,
    return
  }
}

</mosaic_0001>

<llo_original>
// kernel: tpu_custom_call.1
$region0: #{tpu_custom_call.1}
  #allocation0 [shape = 'u32[]', space=smem, size = 0x4, offset = 0x4, fixed_abs, tag = 'smem constant byte address 0x4 - core index']
  #allocation1 [shape = 'u32[144,128]{1,0:T(1,128)}', space=vmem, size = 0x12000, scoped, tag = 'internal scratch']
  %s0 = inlined_call_operand.vmem [shape: f32[16,128], index: 0, kind: input, shape index: {}]
  %s1 = inlined_call_operand.vmem [shape: f32[32,128], index: 1, kind: input, shape index: {}]
  %s2 = inlined_call_operand.vmem [shape: f32[32,16], index: 2, kind: input, shape index: {}]
  %s3 = inlined_call_operand.hbm [shape: f32[16,32], index: 3, kind: input, shape index: {}]
  %s4 = inlined_call_operand.hbm [shape: f32[2,128,128], index: 4, kind: input, shape index: {}]
  %s5 = inlined_call_operand.vmem [shape: f32[2,1,128], index: 5, kind: input, shape index: {}]
  %s6 = inlined_call_operand.hbm [shape: f32[2,128,128], index: 6, kind: input, shape index: {}]
  %s7 = inlined_call_operand.vmem [shape: f32[2,1,128], index: 7, kind: input, shape index: {}]
  %s8 = inlined_call_operand.hbm [shape: f32[2,128,128], index: 8, kind: input, shape index: {}]
  %s9 = inlined_call_operand.vmem [shape: f32[2,1,128], index: 9, kind: input, shape index: {}]
  %s10 = inlined_call_operand.vmem [shape: f32[2,1,128], index: 10, kind: input, shape index: {}]
  %s11 = inlined_call_operand.vmem [shape: f32[2,1,128], index: 11, kind: input, shape index: {}]
  %s12 = inlined_call_operand.hbm [shape: f32[128,128], index: 12, kind: input, shape index: {}]
  %s13 = inlined_call_operand.vmem [shape: f32[1,128], index: 13, kind: input, shape index: {}]
  %s14 = inlined_call_operand.hbm [shape: f32[128,128], index: 14, kind: input, shape index: {}]
  %s15 = inlined_call_operand.vmem [shape: f32[1,128], index: 15, kind: input, shape index: {}]
  %s16 = inlined_call_operand.hbm [shape: f32[16,128], index: 16, kind: output, shape index: {}]
  %s17 = sld [smem:[#allocation0]]
  $region98: #{tpu_custom_call.1} parent=0
    _
  %s19 = ssub.s32 1, %s17
  %s20 = scalar_select 0, %s19, %s17
  $region1: #{tpu_custom_call.1} parent=0
    #allocation2 [shape = 'u8[8192]{0}', space=vmem, size = 0x2000, scoped, tag = 'input window, operand 3, single buffered']
    #allocation3 [shape = 's32[1]{0}', space=sflag, size = 0x4, scoped, tag = 'scoped memory for tpu_custom_call.1']
    #allocation4 [shape = 's32[1]{0}', space=sflag, size = 0x4, scoped, tag = 'scoped memory for tpu_custom_call.1']
    #allocation5 [shape = 'u8[131072]{0}', space=vmem, size = 0x20000, scoped, tag = 'input window, operand 4, single buffered']
    #allocation6 [shape = 's32[1]{0}', space=sflag, size = 0x4, scoped, tag = 'scoped memory for tpu_custom_call.1']
    #allocation7 [shape = 'u8[131072]{0}', space=vmem, size = 0x20000, scoped, tag = 'input window, operand 6, single buffered']
    #allocation8 [shape = 'u8[131072]{0}', space=vmem, size = 0x20000, scoped, tag = 'input window, operand 8, single buffered']
    #allocation9 [shape = 's32[1]{0}', space=sflag, size = 0x4, scoped, tag = 'scoped memory for tpu_custom_call.1']
    #allocation10 [shape = 'u8[65536]{0}', space=vmem, size = 0x10000, scoped, tag = 'input window, operand 12, single buffered']
    #allocation11 [shape = 'u8[65536]{0}', space=vmem, size = 0x10000, scoped, tag = 'input window, operand 14, single buffered']
    #allocation12 [shape = 's32[1]{0}', space=sflag, size = 0x4, scoped, tag = 'scoped memory for tpu_custom_call.1']
    #allocation13 [shape = 'u8[8192]{0}', space=vmem, size = 0x2000, scoped, tag = 'output window, operand 0, single buffered']
    %21 = vsyncpa [#allocation3], 0
    %22 = vsyncpa [#allocation6], 0
    %23 = vsyncpa [#allocation9], 0
    %24 = vsyncpa [#allocation12], 0
    %25 = vsyncpa [#allocation4], 0
    // Predicated region
    $region2: #{tpu_custom_call.1} parent=1 // pred_check
      _
    $region3: #{tpu_custom_call.1} parent=1 // pred_check_branch
      %27 = sbr.rel (0) target = $region5
    $region4: #{tpu_custom_call.1} parent=1 // pred_region
      _
    $region5: #{tpu_custom_call.1} parent=1 // pred_fallthru
      _
    // Predicated region
    $region6: #{tpu_custom_call.1} parent=1 // pred_check
      _
    $region7: #{tpu_custom_call.1} parent=1 // pred_check_branch
      %29 = sbr.rel (0) target = $region9
    $region8: #{tpu_custom_call.1} parent=1 // pred_region
      _
    $region9: #{tpu_custom_call.1} parent=1 // pred_fallthru
      _
    // Predicated region
    $region10: #{tpu_custom_call.1} parent=1 // pred_check
      _
    $region11: #{tpu_custom_call.1} parent=1 // pred_check_branch
      %31 = sbr.rel (0) target = $region13
    $region12: #{tpu_custom_call.1} parent=1 // pred_region
      _
    $region13: #{tpu_custom_call.1} parent=1 // pred_fallthru
      _
    // Predicated region
    $region14: #{tpu_custom_call.1} parent=1 // pred_check
      _
    $region15: #{tpu_custom_call.1} parent=1 // pred_check_branch
      %33 = sbr.rel (0) target = $region17
    $region16: #{tpu_custom_call.1} parent=1 // pred_region
      %s35 = ssub.s32 256, 256
      %36 = vsyncadd [#allocation3], %s35
      %s37 = sshll.u32 [#allocation2], 4
      %s38 = int_to_ptr.vmem [resolvable:$true] %s37
      %43 = dma.hbm_to_vmem [thread:$0]  %s3, 256, %s38, [#allocation3], 128, 128, 8
    $region17: #{tpu_custom_call.1} parent=1 // pred_fallthru
      _
    // Predicated region
    $region18: #{tpu_custom_call.1} parent=1 // pred_check
      _
    $region19: #{tpu_custom_call.1} parent=1 // pred_check_branch
      %45 = sbr.rel (0) target = $region21
    $region20: #{tpu_custom_call.1} parent=1 // pred_region
      %s47 = ssub.s32 4096, 4096
      %48 = vsyncadd [#allocation6], %s47
      %s49 = sshll.u32 [#allocation5], 4
      %s50 = int_to_ptr.vmem [resolvable:$true] %s49
      %55 = dma.hbm_to_vmem [thread:$0]  %s4, 4096, %s50, [#allocation6], 128, 128, 8
    $region21: #{tpu_custom_call.1} parent=1 // pred_fallthru
      _
    // Predicated region
    $region22: #{tpu_custom_call.1} parent=1 // pred_check
      _
    $region23: #{tpu_custom_call.1} parent=1 // pred_check_branch
      %57 = sbr.rel (0) target = $region25
    $region24: #{tpu_custom_call.1} parent=1 // pred_region
      _
    $region25: #{tpu_custom_call.1} parent=1 // pred_fallthru
      _
    // Predicated region
    $region26: #{tpu_custom_call.1} parent=1 // pred_check
      _
    $region27: #{tpu_custom_call.1} parent=1 // pred_check_branch
      %59 = sbr.rel (0) target = $region29
    $region28: #{tpu_custom_call.1} parent=1 // pred_region
      %s61 = ssub.s32 4096, 4096
      %62 = vsyncadd [#allocation6], %s61
      %s63 = sshll.u32 [#allocation7], 4
      %s64 = int_to_ptr.vmem [resolvable:$true] %s63
      %69 = dma.hbm_to_vmem [thread:$0]  %s6, 4096, %s64, [#allocation6], 128, 128, 8
    $region29: #{tpu_custom_call.1} parent=1 // pred_fallthru
      _
    // Predicated region
    $region30: #{tpu_custom_call.1} parent=1 // pred_check
      _
    $region31: #{tpu_custom_call.1} parent=1 // pred_check_branch
      %71 = sbr.rel (0) target = $region33
    $region32: #{tpu_custom_call.1} parent=1 // pred_region
      _
    $region33: #{tpu_custom_call.1} parent=1 // pred_fallthru
      _
    // Predicated region
    $region34: #{tpu_custom_call.1} parent=1 // pred_check
      _
    $region35: #{tpu_custom_call.1} parent=1 // pred_check_branch
      %73 = sbr.rel (0) target = $region37
    $region36: #{tpu_custom_call.1} parent=1 // pred_region
      %s75 = ssub.s32 4096, 4096
      %76 = vsyncadd [#allocation9], %s75
      %s77 = sshll.u32 [#allocation8], 4
      %s78 = int_to_ptr.vmem [resolvable:$true] %s77
      %83 = dma.hbm_to_vmem [thread:$0]  %s8, 4096, %s78, [#allocation9], 128, 128, 8
    $region37: #{tpu_custom_call.1} parent=1 // pred_fallthru
      _
    // Predicated region
    $region38: #{tpu_custom_call.1} parent=1 // pred_check
      _
    $region39: #{tpu_custom_call.1} parent=1 // pred_check_branch
      %85 = sbr.rel (0) target = $region41
    $region40: #{tpu_custom_call.1} parent=1 // pred_region
      _
    $region41: #{tpu_custom_call.1} parent=1 // pred_fallthru
      _
    // Predicated region
    $region42: #{tpu_custom_call.1} parent=1 // pred_check
      _
    $region43: #{tpu_custom_call.1} parent=1 // pred_check_branch
      %87 = sbr.rel (0) target = $region45
    $region44: #{tpu_custom_call.1} parent=1 // pred_region
      _
    $region45: #{tpu_custom_call.1} parent=1 // pred_fallthru
      _
    // Predicated region
    $region46: #{tpu_custom_call.1} parent=1 // pred_check
      _
    $region47: #{tpu_custom_call.1} parent=1 // pred_check_branch
      %89 = sbr.rel (0) target = $region49
    $region48: #{tpu_custom_call.1} parent=1 // pred_region
      _
    $region49: #{tpu_custom_call.1} parent=1 // pred_fallthru
      _
    // Predicated region
    $region50: #{tpu_custom_call.1} parent=1 // pred_check
      _
    $region51: #{tpu_custom_call.1} parent=1 // pred_check_branch
      %91 = sbr.rel (0) target = $region53
    $region52: #{tpu_custom_call.1} parent=1 // pred_region
      %s93 = ssub.s32 2048, 2048
      %94 = vsyncadd [#allocation9], %s93
      %s95 = sshll.u32 [#allocation10], 4
      %s96 = int_to_ptr.vmem [resolvable:$true] %s95
      %101 = dma.hbm_to_vmem [thread:$0]  %s12, 2048, %s96, [#allocation9], 128, 128, 8
    $region53: #{tpu_custom_call.1} parent=1 // pred_fallthru
      _
    // Predicated region
    $region54: #{tpu_custom_call.1} parent=1 // pred_check
      _
    $region55: #{tpu_custom_call.1} parent=1 // pred_check_branch
      %103 = sbr.rel (0) target = $region57
    $region56: #{tpu_custom_call.1} parent=1 // pred_region
      _
    $region57: #{tpu_custom_call.1} parent=1 // pred_fallthru
      _
    // Predicated region
    $region58: #{tpu_custom_call.1} parent=1 // pred_check
      _
    $region59: #{tpu_custom_call.1} parent=1 // pred_check_branch
      %105 = sbr.rel (0) target = $region61
    $region60: #{tpu_custom_call.1} parent=1 // pred_region
      %s107 = ssub.s32 2048, 2048
      %108 = vsyncadd [#allocation12], %s107
      %s109 = sshll.u32 [#allocation11], 4
      %s110 = int_to_ptr.vmem [resolvable:$true] %s109
      %115 = dma.hbm_to_vmem [thread:$0]  %s14, 2048, %s110, [#allocation12], 128, 128, 8
    $region61: #{tpu_custom_call.1} parent=1 // pred_fallthru
      _
    // Predicated region
    $region62: #{tpu_custom_call.1} parent=1 // pred_check
      _
    $region63: #{tpu_custom_call.1} parent=1 // pred_check_branch
      %117 = sbr.rel (0) target = $region65
    $region64: #{tpu_custom_call.1} parent=1 // pred_region
      _
    $region65: #{tpu_custom_call.1} parent=1 // pred_fallthru
      _
    // Predicated region
    $region66: #{tpu_custom_call.1} parent=1 // pred_check
      _
    $region67: #{tpu_custom_call.1} parent=1 // pred_check_branch
      %119 = sbr.rel (0) target = $region69
    $region68: #{tpu_custom_call.1} parent=1 // pred_region
      %120 = dma.done [#allocation3], 256
    $region69: #{tpu_custom_call.1} parent=1 // pred_fallthru
      _
    // Predicated region
    $region70: #{tpu_custom_call.1} parent=1 // pred_check
      _
    $region71: #{tpu_custom_call.1} parent=1 // pred_check_branch
      %122 = sbr.rel (0) target = $region73
    $region72: #{tpu_custom_call.1} parent=1 // pred_region
      %123 = dma.done [#allocation6], 4096
    $region73: #{tpu_custom_call.1} parent=1 // pred_fallthru
      _
    // Predicated region
    $region74: #{tpu_custom_call.1} parent=1 // pred_check
      _
    $region75: #{tpu_custom_call.1} parent=1 // pred_check_branch
      %125 = sbr.rel (0) target = $region77
    $region76: #{tpu_custom_call.1} parent=1 // pred_region
      %126 = dma.done [#allocation6], 4096
    $region77: #{tpu_custom_call.1} parent=1 // pred_fallthru
      _
    // Predicated region
    $region78: #{tpu_custom_call.1} parent=1 // pred_check
      _
    $region79: #{tpu_custom_call.1} parent=1 // pred_check_branch
      %128 = sbr.rel (0) target = $region81
    $region80: #{tpu_custom_call.1} parent=1 // pred_region
      %129 = dma.done [#allocation9], 4096
    $region81: #{tpu_custom_call.1} parent=1 // pred_fallthru
      _
    // Predicated region
    $region82: #{tpu_custom_call.1} parent=1 // pred_check
      _
    $region83: #{tpu_custom_call.1} parent=1 // pred_check_branch
      %131 = sbr.rel (0) target = $region85
    $region84: #{tpu_custom_call.1} parent=1 // pred_region
      %132 = dma.done [#allocation9], 2048
    $region85: #{tpu_custom_call.1} parent=1 // pred_fallthru
      _
    // Predicated region
    $region86: #{tpu_custom_call.1} parent=1 // pred_check
      _
    $region87: #{tpu_custom_call.1} parent=1 // pred_check_branch
      %134 = sbr.rel (0) target = $region89
    $region88: #{tpu_custom_call.1} parent=1 // pred_region
      %135 = dma.done [#allocation12], 2048
    $region89: #{tpu_custom_call.1} parent=1 // pred_fallthru
      _
    %v136 = vlaneseq
    %v137 = vshrl.u32 %v136, 7
    %v138 = vadd.s32 %v137, 8
    %vm139 = vcmp.lt.s32.totalorder %v137, 10
    %vm140 = vcmp.lt.s32.totalorder %v138, 10
    %v141 = vsel %vm139, 1, 0
    %v142 = vsel %vm140, 1, 0
    %v143 = vcvt.s32.f32 %v141
    %v144 = vcvt.s32.f32 %v142
    %v145 = vld [vmem:[%s2] sm:$0xff]
    %v146 = vld [vmem:[%s2 + $0x8] sm:$0xff]
    %v147 = vld [vmem:[%s2 + $0x10] sm:$0xff]
    %v148 = vld [vmem:[%s2 + $0x18] sm:$0xff]
    %v149 = vld [vmem:[#allocation2] sm:$0xff]
    %v150 = vld [vmem:[#allocation2 + $0x8] sm:$0xff]
    %v151 = vld [vmem:[%s1] sm:$0xff]
    %v152 = vld [vmem:[%s1 + $0x8] sm:$0xff]
    %v153 = vld [vmem:[%s1 + $0x10] sm:$0xff]
    %v154 = vld [vmem:[%s1 + $0x18] sm:$0xff]
    %v155 = vld [vmem:[%s0] sm:$0xff]
    %v156 = vld [vmem:[%s0 + $0x8] sm:$0xff]
    %v157 = vld [vmem:[#allocation5] sm:$0xff]
    %v158 = vld [vmem:[#allocation5 + $0x8] sm:$0xff]
    %v159 = vld [vmem:[#allocation5 + $0x10] sm:$0xff]
    %v160 = vld [vmem:[#allocation5 + $0x18] sm:$0xff]
    %v161 = vld [vmem:[#allocation5 + $0x20] sm:$0xff]
    %v162 = vld [vmem:[#allocation5 + $0x28] sm:$0xff]
    %v163 = vld [vmem:[#allocation5 + $0x30] sm:$0xff]
    %v164 = vld [vmem:[#allocation5 + $0x38] sm:$0xff]
    %v165 = vld [vmem:[#allocation5 + $0x40] sm:$0xff]
    %v166 = vld [vmem:[#allocation5 + $0x48] sm:$0xff]
    %v167 = vld [vmem:[#allocation5 + $0x50] sm:$0xff]
    %v168 = vld [vmem:[#allocation5 + $0x58] sm:$0xff]
    %v169 = vld [vmem:[#allocation5 + $0x60] sm:$0xff]
    %v170 = vld [vmem:[#allocation5 + $0x68] sm:$0xff]
    %v171 = vld [vmem:[#allocation5 + $0x70] sm:$0xff]
    %v172 = vld [vmem:[#allocation5 + $0x78] sm:$0xff]
    %v173 = vld [vmem:[%s5] sm:$0x1]
    %v175 = vlaneseq
    %v176 = vshrl.u32 %v175, 7
    %v177 = vsub.s32 0, %v176
    %v178 = vrot.slane %v173, %v177
    %180 = vmatprep.subr.mxu0 0.0
    %v181 = vand.u32 %v157, 4294901760
    %182 = vmatpush1.msra.mxu0 %v181
    %183 = vmatprep.subr.mxu0 0.0
    %v184 = vand.u32 %v158, 4294901760
    %185 = vmatpush1.msra.mxu0 %v184
    %186 = vmatprep.subr.mxu0 0.0
    %v187 = vand.u32 %v159, 4294901760
    %188 = vmatpush1.msra.mxu0 %v187
    %189 = vmatprep.subr.mxu0 0.0
    %v190 = vand.u32 %v160, 4294901760
    %191 = vmatpush1.msra.mxu0 %v190
    %192 = vmatprep.subr.mxu0 0.0
    %v193 = vand.u32 %v161, 4294901760
    %194 = vmatpush1.msra.mxu0 %v193
    %195 = vmatprep.subr.mxu0 0.0
    %v196 = vand.u32 %v162, 4294901760
    %197 = vmatpush1.msra.mxu0 %v196
    %198 = vmatprep.subr.mxu0 0.0
    %v199 = vand.u32 %v163, 4294901760
    %200 = vmatpush1.msra.mxu0 %v199
    %201 = vmatprep.subr.mxu0 0.0
    %v202 = vand.u32 %v164, 4294901760
    %203 = vmatpush1.msra.mxu0 %v202
    %204 = vmatprep.subr.mxu0 0.0
    %v205 = vand.u32 %v165, 4294901760
    %206 = vmatpush1.msra.mxu0 %v205
    %207 = vmatprep.subr.mxu0 0.0
    %v208 = vand.u32 %v166, 4294901760
    %209 = vmatpush1.msra.mxu0 %v208
    %210 = vmatprep.subr.mxu0 0.0
    %v211 = vand.u32 %v167, 4294901760
    %212 = vmatpush1.msra.mxu0 %v211
    %213 = vmatprep.subr.mxu0 0.0
    %v214 = vand.u32 %v168, 4294901760
    %215 = vmatpush1.msra.mxu0 %v214
    %216 = vmatprep.subr.mxu0 0.0
    %v217 = vand.u32 %v169, 4294901760
    %218 = vmatpush1.msra.mxu0 %v217
    %219 = vmatprep.subr.mxu0 0.0
    %v220 = vand.u32 %v170, 4294901760
    %221 = vmatpush1.msra.mxu0 %v220
    %222 = vmatprep.subr.mxu0 0.0
    %v223 = vand.u32 %v171, 4294901760
    %224 = vmatpush1.msra.mxu0 %v223
    %225 = vmatprep.subr.mxu0 0.0
    %v226 = vand.u32 %v172, 4294901760
    %227 = vmatpush1.msra.mxu0 %v226
    %228 = vmatprep.subr.mxu0 0.0
    %229 = vmatpush1.msra.mxu0 0.0
    %230 = vmatprep.subr.mxu0 0.0
    %231 = vmatpush1.msra.mxu0 0.0
    %232 = vmatprep.subr.mxu0 0.0
    %233 = vmatpush1.msra.mxu0 0.0
    %234 = vmatprep.subr.mxu0 0.0
    %235 = vmatpush1.msra.mxu0 0.0
    %236 = vmatprep.subr.mxu0 0.0
    %237 = vmatpush1.msra.mxu0 0.0
    %238 = vmatprep.subr.mxu0 0.0
    %239 = vmatpush1.msra.mxu0 0.0
    %240 = vmatprep.subr.mxu0 0.0
    %241 = vmatpush1.msra.mxu0 0.0
    %242 = vmatprep.subr.mxu0 0.0
    %243 = vmatpush1.msra.mxu0 0.0
    %244 = vmatprep.subr.mxu0 0.0
    %245 = vmatpush1.msra.mxu0 0.0
    %246 = vmatprep.subr.mxu0 0.0
    %247 = vmatpush1.msra.mxu0 0.0
    %248 = vmatprep.subr.mxu0 0.0
    %249 = vmatpush1.msra.mxu0 0.0
    %250 = vmatprep.subr.mxu0 0.0
    %251 = vmatpush1.msra.mxu0 0.0
    %252 = vmatprep.subr.mxu0 0.0
    %253 = vmatpush1.msra.mxu0 0.0
    %254 = vmatprep.subr.mxu0 0.0
    %255 = vmatpush1.msra.mxu0 0.0
    %256 = vmatprep.subr.mxu0 0.0
    %257 = vmatpush1.msra.mxu0 0.0
    %258 = vmatprep.subr.mxu0 0.0
    %259 = vmatpush1.msra.mxu0 0.0
    %260 = vmatprep.mubr.f32.mxu0 0.0
    %v261 = vand.u32 %v151, 4294901760
    %v262 = vsub.f32 %v151, %v261
    %v263 = vand.u32 %v262, 4294901760
    %v264 = vsub.f32 %v262, %v263
    %v265 = vand.u32 %v264, 4294901760
    %266 = vmatmul.mubr.f32.gmra.mrb[0].mxu0 %v265
    %v267 = vpop.f32.mrb[0].mxu0
    %v268 = vadd.f32 %v178, %v267
    %v269 = vpop.f32.mrb[0].mxu0
    %270 = vmatprep.mubr.f32.mxu0 0.0
    %v271 = vand.u32 %v152, 4294901760
    %v272 = vsub.f32 %v152, %v271
    %v273 = vand.u32 %v272, 4294901760
    %v274 = vsub.f32 %v272, %v273
    %v275 = vand.u32 %v274, 4294901760
    %276 = vmatmul.mubr.f32.gmra.mrb[0].mxu0 %v275
    %v277 = vpop.f32.mrb[0].mxu0
    %v278 = vadd.f32 %v178, %v277
    %v279 = vpop.f32.mrb[0].mxu0
    %280 = vmatprep.mubr.f32.mxu0 0.0
    %v281 = vand.u32 %v153, 4294901760
    %v282 = vsub.f32 %v153, %v281
    %v283 = vand.u32 %v282, 4294901760
    %v284 = vsub.f32 %v282, %v283
    %v285 = vand.u32 %v284, 4294901760
    %286 = vmatmul.mubr.f32.gmra.mrb[0].mxu0 %v285
    %v287 = vpop.f32.mrb[0].mxu0
    %v288 = vadd.f32 %v178, %v287
    %v289 = vpop.f32.mrb[0].mxu0
    %290 = vmatprep.mubr.f32.mxu0 0.0
    %v291 = vand.u32 %v154, 4294901760
    %v292 = vsub.f32 %v154, %v291
    %v293 = vand.u32 %v292, 4294901760
    %v294 = vsub.f32 %v292, %v293
    %v295 = vand.u32 %v294, 4294901760
    %296 = vmatmul.mubr.f32.gmra.mrb[0].mxu0 %v295
    %v297 = vpop.f32.mrb[0].mxu0
    %v298 = vadd.f32 %v178, %v297
    %v299 = vpop.f32.mrb[0].mxu0
    %300 = vdwg.mxu0
    %301 = vmatprep.subr.mxu0 0.0
    %v302 = vand.u32 %v157, 4294901760
    %v303 = vsub.f32 %v157, %v302
    %v304 = vand.u32 %v303, 4294901760
    %v305 = vsub.f32 %v303, %v304
    %v306 = vand.u32 %v305, 4294901760
    %307 = vmatpush1.msra.mxu0 %v306
    %308 = vmatprep.subr.mxu0 0.0
    %v309 = vand.u32 %v158, 4294901760
    %v310 = vsub.f32 %v158, %v309
    %v311 = vand.u32 %v310, 4294901760
    %v312 = vsub.f32 %v310, %v311
    %v313 = vand.u32 %v312, 4294901760
    %314 = vmatpush1.msra.mxu0 %v313
    %315 = vmatprep.subr.mxu0 0.0
    %v316 = vand.u32 %v159, 4294901760
    %v317 = vsub.f32 %v159, %v316
    %v318 = vand.u32 %v317, 4294901760
    %v319 = vsub.f32 %v317, %v318
    %v320 = vand.u32 %v319, 4294901760
    %321 = vmatpush1.msra.mxu0 %v320
    %322 = vmatprep.subr.mxu0 0.0
    %v323 = vand.u32 %v160, 4294901760
    %v324 = vsub.f32 %v160, %v323
    %v325 = vand.u32 %v324, 4294901760
    %v326 = vsub.f32 %v324, %v325
    %v327 = vand.u32 %v326, 4294901760
    %328 = vmatpush1.msra.mxu0 %v327
    %329 = vmatprep.subr.mxu0 0.0
    %v330 = vand.u32 %v161, 4294901760
    %v331 = vsub.f32 %v161, %v330
    %v332 = vand.u32 %v331, 4294901760
    %v333 = vsub.f32 %v331, %v332
    %v334 = vand.u32 %v333, 4294901760
    %335 = vmatpush1.msra.mxu0 %v334
    %336 = vmatprep.subr.mxu0 0.0
    %v337 = vand.u32 %v162, 4294901760
    %v338 = vsub.f32 %v162, %v337
    %v339 = vand.u32 %v338, 4294901760
    %v340 = vsub.f32 %v338, %v339
    %v341 = vand.u32 %v340, 4294901760
    %342 = vmatpush1.msra.mxu0 %v341
    %343 = vmatprep.subr.mxu0 0.0
    %v344 = vand.u32 %v163, 4294901760
    %v345 = vsub.f32 %v163, %v344
    %v346 = vand.u32 %v345, 4294901760
    %v347 = vsub.f32 %v345, %v346
    %v348 = vand.u32 %v347, 4294901760
    %349 = vmatpush1.msra.mxu0 %v348
    %350 = vmatprep.subr.mxu0 0.0
    %v351 = vand.u32 %v164, 4294901760
    %v352 = vsub.f32 %v164, %v351
    %v353 = vand.u32 %v352, 4294901760
    %v354 = vsub.f32 %v352, %v353
    %v355 = vand.u32 %v354, 4294901760
    %356 = vmatpush1.msra.mxu0 %v355
    %357 = vmatprep.subr.mxu0 0.0
    %v358 = vand.u32 %v165, 4294901760
    %v359 = vsub.f32 %v165, %v358
    %v360 = vand.u32 %v359, 4294901760
    %v361 = vsub.f32 %v359, %v360
    %v362 = vand.u32 %v361, 4294901760
    %363 = vmatpush1.msra.mxu0 %v362
    %364 = vmatprep.subr.mxu0 0.0
    %v365 = vand.u32 %v166, 4294901760
    %v366 = vsub.f32 %v166, %v365
    %v367 = vand.u32 %v366, 4294901760
    %v368 = vsub.f32 %v366, %v367
    %v369 = vand.u32 %v368, 4294901760
    %370 = vmatpush1.msra.mxu0 %v369
    %371 = vmatprep.subr.mxu0 0.0
    %v372 = vand.u32 %v167, 4294901760
    %v373 = vsub.f32 %v167, %v372
    %v374 = vand.u32 %v373, 4294901760
    %v375 = vsub.f32 %v373, %v374
    %v376 = vand.u32 %v375, 4294901760
    %377 = vmatpush1.msra.mxu0 %v376
    %378 = vmatprep.subr.mxu0 0.0
    %v379 = vand.u32 %v168, 4294901760
    %v380 = vsub.f32 %v168, %v379
    %v381 = vand.u32 %v380, 4294901760
    %v382 = vsub.f32 %v380, %v381
    %v383 = vand.u32 %v382, 4294901760
    %384 = vmatpush1.msra.mxu0 %v383
    %385 = vmatprep.subr.mxu0 0.0
    %v386 = vand.u32 %v169, 4294901760
    %v387 = vsub.f32 %v169, %v386
    %v388 = vand.u32 %v387, 4294901760
    %v389 = vsub.f32 %v387, %v388
    %v390 = vand.u32 %v389, 4294901760
    %391 = vmatpush1.msra.mxu0 %v390
    %392 = vmatprep.subr.mxu0 0.0
    %v393 = vand.u32 %v170, 4294901760
    %v394 = vsub.f32 %v170, %v393
    %v395 = vand.u32 %v394, 4294901760
    %v396 = vsub.f32 %v394, %v395
    %v397 = vand.u32 %v396, 4294901760
    %398 = vmatpush1.msra.mxu0 %v397
    %399 = vmatprep.subr.mxu0 0.0
    %v400 = vand.u32 %v171, 4294901760
    %v401 = vsub.f32 %v171, %v400
    %v402 = vand.u32 %v401, 4294901760
    %v403 = vsub.f32 %v401, %v402
    %v404 = vand.u32 %v403, 4294901760
    %405 = vmatpush1.msra.mxu0 %v404
    %406 = vmatprep.subr.mxu0 0.0
    %v407 = vand.u32 %v172, 4294901760
    %v408 = vsub.f32 %v172, %v407
    %v409 = vand.u32 %v408, 4294901760
    %v410 = vsub.f32 %v408, %v409
    %v411 = vand.u32 %v410, 4294901760
    %412 = vmatpush1.msra.mxu0 %v411
    %413 = vmatprep.subr.mxu0 0.0
    %414 = vmatpush1.msra.mxu0 0.0
    %415 = vmatprep.subr.mxu0 0.0
    %416 = vmatpush1.msra.mxu0 0.0
    %417 = vmatprep.subr.mxu0 0.0
    %418 = vmatpush1.msra.mxu0 0.0
    %419 = vmatprep.subr.mxu0 0.0
    %420 = vmatpush1.msra.mxu0 0.0
    %421 = vmatprep.subr.mxu0 0.0
    %422 = vmatpush1.msra.mxu0 0.0
    %423 = vmatprep.subr.mxu0 0.0
    %424 = vmatpush1.msra.mxu0 0.0
    %425 = vmatprep.subr.mxu0 0.0
    %426 = vmatpush1.msra.mxu0 0.0
    %427 = vmatprep.subr.mxu0 0.0
    %428 = vmatpush1.msra.mxu0 0.0
    %429 = vmatprep.subr.mxu0 0.0
    %430 = vmatpush1.msra.mxu0 0.0
    %431 = vmatprep.subr.mxu0 0.0
    %432 = vmatpush1.msra.mxu0 0.0
    %433 = vmatprep.subr.mxu0 0.0
    %434 = vmatpush1.msra.mxu0 0.0
    %435 = vmatprep.subr.mxu0 0.0
    %436 = vmatpush1.msra.mxu0 0.0
    %437 = vmatprep.subr.mxu0 0.0
    %438 = vmatpush1.msra.mxu0 0.0
    %439 = vmatprep.subr.mxu0 0.0
    %440 = vmatpush1.msra.mxu0 0.0
    %441 = vmatprep.subr.mxu0 0.0
    %442 = vmatpush1.msra.mxu0 0.0
    %443 = vmatprep.subr.mxu0 0.0
    %444 = vmatpush1.msra.mxu0 0.0
    %445 = vmatprep.mubr.f32.mxu0 0.0
    %v446 = vand.u32 %v151, 4294901760
    %447 = vmatmul.mubr.f32.gmra.mrb[0].mxu0 %v446
    %v448 = vpop.f32.mrb[0].mxu0
    %v449 = vadd.f32 %v268, %v448
    %v450 = vpop.f32.mrb[0].mxu0
    %451 = vmatprep.mubr.f32.mxu0 0.0
    %v452 = vand.u32 %v152, 4294901760
    %453 = vmatmul.mubr.f32.gmra.mrb[0].mxu0 %v452
    %v454 = vpop.f32.mrb[0].mxu0
    %v455 = vadd.f32 %v278, %v454
    %v456 = vpop.f32.mrb[0].mxu0
    %457 = vmatprep.mubr.f32.mxu0 0.0
    %v458 = vand.u32 %v153, 4294901760
    %459 = vmatmul.mubr.f32.gmra.mrb[0].mxu0 %v458
    %v460 = vpop.f32.mrb[0].mxu0
    %v461 = vadd.f32 %v288, %v460
    %v462 = vpop.f32.mrb[0].mxu0
    %463 = vmatprep.mubr.f32.mxu0 0.0
    %v464 = vand.u32 %v154, 4294901760
    %465 = vmatmul.mubr.f32.gmra.mrb[0].mxu0 %v464
    %v466 = vpop.f32.mrb[0].mxu0
    %v467 = vadd.f32 %v298, %v466
    %v468 = vpop.f32.mrb[0].mxu0
    %469 = vdwg.mxu0
    %470 = vmatprep.subr.mxu0 0.0
    %v471 = vand.u32 %v157, 4294901760
    %v472 = vsub.f32 %v157, %v471
    %473 = vmatpush1.msra.mxu0 %v472
    %474 = vmatprep.subr.mxu0 0.0
    %v475 = vand.u32 %v158, 4294901760
    %v476 = vsub.f32 %v158, %v475
    %477 = vmatpush1.msra.mxu0 %v476
    %478 = vmatprep.subr.mxu0 0.0
    %v479 = vand.u32 %v159, 4294901760
    %v480 = vsub.f32 %v159, %v479
    %481 = vmatpush1.msra.mxu0 %v480
    %482 = vmatprep.subr.mxu0 0.0
    %v483 = vand.u32 %v160, 4294901760
    %v484 = vsub.f32 %v160, %v483
    %485 = vmatpush1.msra.mxu0 %v484
    %486 = vmatprep.subr.mxu0 0.0
    %v487 = vand.u32 %v161, 4294901760
    %v488 = vsub.f32 %v161, %v487
    %489 = vmatpush1.msra.mxu0 %v488
    %490 = vmatprep.subr.mxu0 0.0
    %v491 = vand.u32 %v162, 4294901760
    %v492 = vsub.f32 %v162, %v491
    %493 = vmatpush1.msra.mxu0 %v492
    %494 = vmatprep.subr.mxu0 0.0
    %v495 = vand.u32 %v163, 4294901760
    %v496 = vsub.f32 %v163, %v495
    %497 = vmatpush1.msra.mxu0 %v496
    %498 = vmatprep.subr.mxu0 0.0
    %v499 = vand.u32 %v164, 4294901760
    %v500 = vsub.f32 %v164, %v499
    %501 = vmatpush1.msra.mxu0 %v500
    %502 = vmatprep.subr.mxu0 0.0
    %v503 = vand.u32 %v165, 4294901760
    %v504 = vsub.f32 %v165, %v503
    %505 = vmatpush1.msra.mxu0 %v504
    %506 = vmatprep.subr.mxu0 0.0
    %v507 = vand.u32 %v166, 4294901760
    %v508 = vsub.f32 %v166, %v507
    %509 = vmatpush1.msra.mxu0 %v508
    %510 = vmatprep.subr.mxu0 0.0
    %v511 = vand.u32 %v167, 4294901760
    %v512 = vsub.f32 %v167, %v511
    %513 = vmatpush1.msra.mxu0 %v512
    %514 = vmatprep.subr.mxu0 0.0
    %v515 = vand.u32 %v168, 4294901760
    %v516 = vsub.f32 %v168, %v515
    %517 = vmatpush1.msra.mxu0 %v516
    %518 = vmatprep.subr.mxu0 0.0
    %v519 = vand.u32 %v169, 4294901760
    %v520 = vsub.f32 %v169, %v519
    %521 = vmatpush1.msra.mxu0 %v520
    %522 = vmatprep.subr.mxu0 0.0
    %v523 = vand.u32 %v170, 4294901760
    %v524 = vsub.f32 %v170, %v523
    %525 = vmatpush1.msra.mxu0 %v524
    %526 = vmatprep.subr.mxu0 0.0
    %v527 = vand.u32 %v171, 4294901760
    %v528 = vsub.f32 %v171, %v527
    %529 = vmatpush1.msra.mxu0 %v528
    %530 = vmatprep.subr.mxu0 0.0
    %v531 = vand.u32 %v172, 4294901760
    %v532 = vsub.f32 %v172, %v531
    %533 = vmatpush1.msra.mxu0 %v532
    %534 = vmatprep.subr.mxu0 0.0
    %535 = vmatpush1.msra.mxu0 0.0
    %536 = vmatprep.subr.mxu0 0.0
    %537 = vmatpush1.msra.mxu0 0.0
    %538 = vmatprep.subr.mxu0 0.0
    %539 = vmatpush1.msra.mxu0 0.0
    %540 = vmatprep.subr.mxu0 0.0
    %541 = vmatpush1.msra.mxu0 0.0
    %542 = vmatprep.subr.mxu0 0.0
    %543 = vmatpush1.msra.mxu0 0.0
    %544 = vmatprep.subr.mxu0 0.0
    %545 = vmatpush1.msra.mxu0 0.0
    %546 = vmatprep.subr.mxu0 0.0
    %547 = vmatpush1.msra.mxu0 0.0
    %548 = vmatprep.subr.mxu0 0.0
    %549 = vmatpush1.msra.mxu0 0.0
    %550 = vmatprep.subr.mxu0 0.0
    %551 = vmatpush1.msra.mxu0 0.0
    %552 = vmatprep.subr.mxu0 0.0
    %553 = vmatpush1.msra.mxu0 0.0
    %554 = vmatprep.subr.mxu0 0.0
    %555 = vmatpush1.msra.mxu0 0.0
    %556 = vmatprep.subr.mxu0 0.0
    %557 = vmatpush1.msra.mxu0 0.0
    %558 = vmatprep.subr.mxu0 0.0
    %559 = vmatpush1.msra.mxu0 0.0
    %560 = vmatprep.subr.mxu0 0.0
    %561 = vmatpush1.msra.mxu0 0.0
    %562 = vmatprep.subr.mxu0 0.0
    %563 = vmatpush1.msra.mxu0 0.0
    %564 = vmatprep.subr.mxu0 0.0
    %565 = vmatpush1.msra.mxu0 0.0
    %566 = vmatprep.mubr.f32.mxu0 0.0
    %v567 = vand.u32 %v151, 4294901760
    %v568 = vsub.f32 %v151, %v567
    %569 = vmatmul.mubr.f32.gmra.mrb[0].mxu0 %v568
    %v570 = vpop.f32.mrb[0].mxu0
    %v571 = vadd.f32 %v449, %v570
    %v572 = vpop.f32.mrb[0].mxu0
    %573 = vmatprep.mubr.f32.mxu0 0.0
    %v574 = vand.u32 %v152, 4294901760
    %v575 = vsub.f32 %v152, %v574
    %576 = vmatmul.mubr.f32.gmra.mrb[0].mxu0 %v575
    %v577 = vpop.f32.mrb[0].mxu0
    %v578 = vadd.f32 %v455, %v577
    %v579 = vpop.f32.mrb[0].mxu0
    %580 = vmatprep.mubr.f32.mxu0 0.0
    %v581 = vand.u32 %v153, 4294901760
    %v582 = vsub.f32 %v153, %v581
    %583 = vmatmul.mubr.f32.gmra.mrb[0].mxu0 %v582
    %v584 = vpop.f32.mrb[0].mxu0
    %v585 = vadd.f32 %v461, %v584
    %v586 = vpop.f32.mrb[0].mxu0
    %587 = vmatprep.mubr.f32.mxu0 0.0
    %v588 = vand.u32 %v154, 4294901760
    %v589 = vsub.f32 %v154, %v588
    %590 = vmatmul.mubr.f32.gmra.mrb[0].mxu0 %v589
    %v591 = vpop.f32.mrb[0].mxu0
    %v592 = vadd.f32 %v467, %v591
    %v593 = vpop.f32.mrb[0].mxu0
    %594 = vdwg.mxu0
    %595 = vmatprep.subr.mxu0 0.0
    %v596 = vand.u32 %v157, 4294901760
    %597 = vmatpush1.msra.mxu0 %v596
    %598 = vmatprep.subr.mxu0 0.0
    %v599 = vand.u32 %v158, 4294901760
    %600 = vmatpush1.msra.mxu0 %v599
    %601 = vmatprep.subr.mxu0 0.0
    %v602 = vand.u32 %v159, 4294901760
    %603 = vmatpush1.msra.mxu0 %v602
    %604 = vmatprep.subr.mxu0 0.0
    %v605 = vand.u32 %v160, 4294901760
    %606 = vmatpush1.msra.mxu0 %v605
    %607 = vmatprep.subr.mxu0 0.0
    %v608 = vand.u32 %v161, 4294901760
    %609 = vmatpush1.msra.mxu0 %v608
    %610 = vmatprep.subr.mxu0 0.0
    %v611 = vand.u32 %v162, 4294901760
    %612 = vmatpush1.msra.mxu0 %v611
    %613 = vmatprep.subr.mxu0 0.0
    %v614 = vand.u32 %v163, 4294901760
    %615 = vmatpush1.msra.mxu0 %v614
    %616 = vmatprep.subr.mxu0 0.0
    %v617 = vand.u32 %v164, 4294901760
    %618 = vmatpush1.msra.mxu0 %v617
    %619 = vmatprep.subr.mxu0 0.0
    %v620 = vand.u32 %v165, 4294901760
    %621 = vmatpush1.msra.mxu0 %v620
    %622 = vmatprep.subr.mxu0 0.0
    %v623 = vand.u32 %v166, 4294901760
    %624 = vmatpush1.msra.mxu0 %v623
    %625 = vmatprep.subr.mxu0 0.0
    %v626 = vand.u32 %v167, 4294901760
    %627 = vmatpush1.msra.mxu0 %v626
    %628 = vmatprep.subr.mxu0 0.0
    %v629 = vand.u32 %v168, 4294901760
    %630 = vmatpush1.msra.mxu0 %v629
    %631 = vmatprep.subr.mxu0 0.0
    %v632 = vand.u32 %v169, 4294901760
    %633 = vmatpush1.msra.mxu0 %v632
    %634 = vmatprep.subr.mxu0 0.0
    %v635 = vand.u32 %v170, 4294901760
    %636 = vmatpush1.msra.mxu0 %v635
    %637 = vmatprep.subr.mxu0 0.0
    %v638 = vand.u32 %v171, 4294901760
    %639 = vmatpush1.msra.mxu0 %v638
    %640 = vmatprep.subr.mxu0 0.0
    %v641 = vand.u32 %v172, 4294901760
    %642 = vmatpush1.msra.mxu0 %v641
    %643 = vmatprep.subr.mxu0 0.0
    %644 = vmatpush1.msra.mxu0 0.0
    %645 = vmatprep.subr.mxu0 0.0
    %646 = vmatpush1.msra.mxu0 0.0
    %647 = vmatprep.subr.mxu0 0.0
    %648 = vmatpush1.msra.mxu0 0.0
    %649 = vmatprep.subr.mxu0 0.0
    %650 = vmatpush1.msra.mxu0 0.0
    %651 = vmatprep.subr.mxu0 0.0
    %652 = vmatpush1.msra.mxu0 0.0
    %653 = vmatprep.subr.mxu0 0.0
    %654 = vmatpush1.msra.mxu0 0.0
    %655 = vmatprep.subr.mxu0 0.0
    %656 = vmatpush1.msra.mxu0 0.0
    %657 = vmatprep.subr.mxu0 0.0
    %658 = vmatpush1.msra.mxu0 0.0
    %659 = vmatprep.subr.mxu0 0.0
    %660 = vmatpush1.msra.mxu0 0.0
    %661 = vmatprep.subr.mxu0 0.0
    %662 = vmatpush1.msra.mxu0 0.0
    %663 = vmatprep.subr.mxu0 0.0
    %664 = vmatpush1.msra.mxu0 0.0
    %665 = vmatprep.subr.mxu0 0.0
    %666 = vmatpush1.msra.mxu0 0.0
    %667 = vmatprep.subr.mxu0 0.0
    %668 = vmatpush1.msra.mxu0 0.0
    %669 = vmatprep.subr.mxu0 0.0
    %670 = vmatpush1.msra.mxu0 0.0
    %671 = vmatprep.subr.mxu0 0.0
    %672 = vmatpush1.msra.mxu0 0.0
    %673 = vmatprep.subr.mxu0 0.0
    %674 = vmatpush1.msra.mxu0 0.0
    %675 = vmatprep.mubr.f32.mxu0 0.0
    %v676 = vand.u32 %v151, 4294901760
    %v677 = vsub.f32 %v151, %v676
    %v678 = vand.u32 %v677, 4294901760
    %679 = vmatmul.mubr.f32.gmra.mrb[0].mxu0 %v678
    %v680 = vpop.f32.mrb[0].mxu0
    %v681 = vadd.f32 %v571, %v680
    %v682 = vpop.f32.mrb[0].mxu0
    %683 = vmatprep.mubr.f32.mxu0 0.0
    %v684 = vand.u32 %v152, 4294901760
    %v685 = vsub.f32 %v152, %v684
    %v686 = vand.u32 %v685, 4294901760
    %687 = vmatmul.mubr.f32.gmra.mrb[0].mxu0 %v686
    %v688 = vpop.f32.mrb[0].mxu0
    %v689 = vadd.f32 %v578, %v688
    %v690 = vpop.f32.mrb[0].mxu0
    %691 = vmatprep.mubr.f32.mxu0 0.0
    %v692 = vand.u32 %v153, 4294901760
    %v693 = vsub.f32 %v153, %v692
    %v694 = vand.u32 %v693, 4294901760
    %695 = vmatmul.mubr.f32.gmra.mrb[0].mxu0 %v694
    %v696 = vpop.f32.mrb[0].mxu0
    %v697 = vadd.f32 %v585, %v696
    %v698 = vpop.f32.mrb[0].mxu0
    %699 = vmatprep.mubr.f32.mxu0 0.0
    %v700 = vand.u32 %v154, 4294901760
    %v701 = vsub.f32 %v154, %v700
    %v702 = vand.u32 %v701, 4294901760
    %703 = vmatmul.mubr.f32.gmra.mrb[0].mxu0 %v702
    %v704 = vpop.f32.mrb[0].mxu0
    %v705 = vadd.f32 %v592, %v704
    %v706 = vpop.f32.mrb[0].mxu0
    %707 = vdwg.mxu0
    %708 = vmatprep.subr.mxu0 0.0
    %v709 = vand.u32 %v157, 4294901760
    %v710 = vsub.f32 %v157, %v709
    %v711 = vand.u32 %v710, 4294901760
    %712 = vmatpush1.msra.mxu0 %v711
    %713 = vmatprep.subr.mxu0 0.0
    %v714 = vand.u32 %v158, 4294901760
    %v715 = vsub.f32 %v158, %v714
    %v716 = vand.u32 %v715, 4294901760
    %717 = vmatpush1.msra.mxu0 %v716
    %718 = vmatprep.subr.mxu0 0.0
    %v719 = vand.u32 %v159, 4294901760
    %v720 = vsub.f32 %v159, %v719
    %v721 = vand.u32 %v720, 4294901760
    %722 = vmatpush1.msra.mxu0 %v721
    %723 = vmatprep.subr.mxu0 0.0
    %v724 = vand.u32 %v160, 4294901760
    %v725 = vsub.f32 %v160, %v724
    %v726 = vand.u32 %v725, 4294901760
    %727 = vmatpush1.msra.mxu0 %v726
    %728 = vmatprep.subr.mxu0 0.0
    %v729 = vand.u32 %v161, 4294901760
    %v730 = vsub.f32 %v161, %v729
    %v731 = vand.u32 %v730, 4294901760
    %732 = vmatpush1.msra.mxu0 %v731
    %733 = vmatprep.subr.mxu0 0.0
    %v734 = vand.u32 %v162, 4294901760
    %v735 = vsub.f32 %v162, %v734
    %v736 = vand.u32 %v735, 4294901760
    %737 = vmatpush1.msra.mxu0 %v736
    %738 = vmatprep.subr.mxu0 0.0
    %v739 = vand.u32 %v163, 4294901760
    %v740 = vsub.f32 %v163, %v739
    %v741 = vand.u32 %v740, 4294901760
    %742 = vmatpush1.msra.mxu0 %v741
    %743 = vmatprep.subr.mxu0 0.0
    %v744 = vand.u32 %v164, 4294901760
    %v745 = vsub.f32 %v164, %v744
    %v746 = vand.u32 %v745, 4294901760
    %747 = vmatpush1.msra.mxu0 %v746
    %748 = vmatprep.subr.mxu0 0.0
    %v749 = vand.u32 %v165, 4294901760
    %v750 = vsub.f32 %v165, %v749
    %v751 = vand.u32 %v750, 4294901760
    %752 = vmatpush1.msra.mxu0 %v751
    %753 = vmatprep.subr.mxu0 0.0
    %v754 = vand.u32 %v166, 4294901760
    %v755 = vsub.f32 %v166, %v754
    %v756 = vand.u32 %v755, 4294901760
    %757 = vmatpush1.msra.mxu0 %v756
    %758 = vmatprep.subr.mxu0 0.0
    %v759 = vand.u32 %v167, 4294901760
    %v760 = vsub.f32 %v167, %v759
    %v761 = vand.u32 %v760, 4294901760
    %762 = vmatpush1.msra.mxu0 %v761
    %763 = vmatprep.subr.mxu0 0.0
    %v764 = vand.u32 %v168, 4294901760
    %v765 = vsub.f32 %v168, %v764
    %v766 = vand.u32 %v765, 4294901760
    %767 = vmatpush1.msra.mxu0 %v766
    %768 = vmatprep.subr.mxu0 0.0
    %v769 = vand.u32 %v169, 4294901760
    %v770 = vsub.f32 %v169, %v769
    %v771 = vand.u32 %v770, 4294901760
    %772 = vmatpush1.msra.mxu0 %v771
    %773 = vmatprep.subr.mxu0 0.0
    %v774 = vand.u32 %v170, 4294901760
    %v775 = vsub.f32 %v170, %v774
    %v776 = vand.u32 %v775, 4294901760
    %777 = vmatpush1.msra.mxu0 %v776
    %778 = vmatprep.subr.mxu0 0.0
    %v779 = vand.u32 %v171, 4294901760
    %v780 = vsub.f32 %v171, %v779
    %v781 = vand.u32 %v780, 4294901760
    %782 = vmatpush1.msra.mxu0 %v781
    %783 = vmatprep.subr.mxu0 0.0
    %v784 = vand.u32 %v172, 4294901760
    %v785 = vsub.f32 %v172, %v784
    %v786 = vand.u32 %v785, 4294901760
    %787 = vmatpush1.msra.mxu0 %v786
    %788 = vmatprep.subr.mxu0 0.0
    %789 = vmatpush1.msra.mxu0 0.0
    %790 = vmatprep.subr.mxu0 0.0
    %791 = vmatpush1.msra.mxu0 0.0
    %792 = vmatprep.subr.mxu0 0.0
    %793 = vmatpush1.msra.mxu0 0.0
    %794 = vmatprep.subr.mxu0 0.0
    %795 = vmatpush1.msra.mxu0 0.0
    %796 = vmatprep.subr.mxu0 0.0
    %797 = vmatpush1.msra.mxu0 0.0
    %798 = vmatprep.subr.mxu0 0.0
    %799 = vmatpush1.msra.mxu0 0.0
    %800 = vmatprep.subr.mxu0 0.0
    %801 = vmatpush1.msra.mxu0 0.0
    %802 = vmatprep.subr.mxu0 0.0
    %803 = vmatpush1.msra.mxu0 0.0
    %804 = vmatprep.subr.mxu0 0.0
    %805 = vmatpush1.msra.mxu0 0.0
    %806 = vmatprep.subr.mxu0 0.0
    %807 = vmatpush1.msra.mxu0 0.0
    %808 = vmatprep.subr.mxu0 0.0
    %809 = vmatpush1.msra.mxu0 0.0
    %810 = vmatprep.subr.mxu0 0.0
    %811 = vmatpush1.msra.mxu0 0.0
    %812 = vmatprep.subr.mxu0 0.0
    %813 = vmatpush1.msra.mxu0 0.0
    %814 = vmatprep.subr.mxu0 0.0
    %815 = vmatpush1.msra.mxu0 0.0
    %816 = vmatprep.subr.mxu0 0.0
    %817 = vmatpush1.msra.mxu0 0.0
    %818 = vmatprep.subr.mxu0 0.0
    %819 = vmatpush1.msra.mxu0 0.0
    %820 = vmatprep.mubr.f32.mxu0 0.0
    %v821 = vand.u32 %v151, 4294901760
    %822 = vmatmul.mubr.f32.gmra.mrb[0].mxu0 %v821
    %v823 = vpop.f32.mrb[0].mxu0
    %v824 = vadd.f32 %v681, %v823
    %v825 = vpop.f32.mrb[0].mxu0
    %826 = vmatprep.mubr.f32.mxu0 0.0
    %v827 = vand.u32 %v152, 4294901760
    %828 = vmatmul.mubr.f32.gmra.mrb[0].mxu0 %v827
    %v829 = vpop.f32.mrb[0].mxu0
    %v830 = vadd.f32 %v689, %v829
    %v831 = vpop.f32.mrb[0].mxu0
    %832 = vmatprep.mubr.f32.mxu0 0.0
    %v833 = vand.u32 %v153, 4294901760
    %834 = vmatmul.mubr.f32.gmra.mrb[0].mxu0 %v833
    %v835 = vpop.f32.mrb[0].mxu0
    %v836 = vadd.f32 %v697, %v835
    %v837 = vpop.f32.mrb[0].mxu0
    %838 = vmatprep.mubr.f32.mxu0 0.0
    %v839 = vand.u32 %v154, 4294901760
    %840 = vmatmul.mubr.f32.gmra.mrb[0].mxu0 %v839
    %v841 = vpop.f32.mrb[0].mxu0
    %v842 = vadd.f32 %v705, %v841
    %v843 = vpop.f32.mrb[0].mxu0
    %844 = vdwg.mxu0
    %845 = vmatprep.subr.mxu0 0.0
    %v846 = vand.u32 %v157, 4294901760
    %847 = vmatpush1.msra.mxu0 %v846
    %848 = vmatprep.subr.mxu0 0.0
    %v849 = vand.u32 %v158, 4294901760
    %850 = vmatpush1.msra.mxu0 %v849
    %851 = vmatprep.subr.mxu0 0.0
    %v852 = vand.u32 %v159, 4294901760
    %853 = vmatpush1.msra.mxu0 %v852
    %854 = vmatprep.subr.mxu0 0.0
    %v855 = vand.u32 %v160, 4294901760
    %856 = vmatpush1.msra.mxu0 %v855
    %857 = vmatprep.subr.mxu0 0.0
    %v858 = vand.u32 %v161, 4294901760
    %859 = vmatpush1.msra.mxu0 %v858
    %860 = vmatprep.subr.mxu0 0.0
    %v861 = vand.u32 %v162, 4294901760
    %862 = vmatpush1.msra.mxu0 %v861
    %863 = vmatprep.subr.mxu0 0.0
    %v864 = vand.u32 %v163, 4294901760
    %865 = vmatpush1.msra.mxu0 %v864
    %866 = vmatprep.subr.mxu0 0.0
    %v867 = vand.u32 %v164, 4294901760
    %868 = vmatpush1.msra.mxu0 %v867
    %869 = vmatprep.subr.mxu0 0.0
    %v870 = vand.u32 %v165, 4294901760
    %871 = vmatpush1.msra.mxu0 %v870
    %872 = vmatprep.subr.mxu0 0.0
    %v873 = vand.u32 %v166, 4294901760
    %874 = vmatpush1.msra.mxu0 %v873
    %875 = vmatprep.subr.mxu0 0.0
    %v876 = vand.u32 %v167, 4294901760
    %877 = vmatpush1.msra.mxu0 %v876
    %878 = vmatprep.subr.mxu0 0.0
    %v879 = vand.u32 %v168, 4294901760
    %880 = vmatpush1.msra.mxu0 %v879
    %881 = vmatprep.subr.mxu0 0.0
    %v882 = vand.u32 %v169, 4294901760
    %883 = vmatpush1.msra.mxu0 %v882
    %884 = vmatprep.subr.mxu0 0.0
    %v885 = vand.u32 %v170, 4294901760
    %886 = vmatpush1.msra.mxu0 %v885
    %887 = vmatprep.subr.mxu0 0.0
    %v888 = vand.u32 %v171, 4294901760
    %889 = vmatpush1.msra.mxu0 %v888
    %890 = vmatprep.subr.mxu0 0.0
    %v891 = vand.u32 %v172, 4294901760
    %892 = vmatpush1.msra.mxu0 %v891
    %893 = vmatprep.subr.mxu0 0.0
    %894 = vmatpush1.msra.mxu0 0.0
    %895 = vmatprep.subr.mxu0 0.0
    %896 = vmatpush1.msra.mxu0 0.0
    %897 = vmatprep.subr.mxu0 0.0
    %898 = vmatpush1.msra.mxu0 0.0
    %899 = vmatprep.subr.mxu0 0.0
    %900 = vmatpush1.msra.mxu0 0.0
    %901 = vmatprep.subr.mxu0 0.0
    %902 = vmatpush1.msra.mxu0 0.0
    %903 = vmatprep.subr.mxu0 0.0
    %904 = vmatpush1.msra.mxu0 0.0
    %905 = vmatprep.subr.mxu0 0.0
    %906 = vmatpush1.msra.mxu0 0.0
    %907 = vmatprep.subr.mxu0 0.0
    %908 = vmatpush1.msra.mxu0 0.0
    %909 = vmatprep.subr.mxu0 0.0
    %910 = vmatpush1.msra.mxu0 0.0
    %911 = vmatprep.subr.mxu0 0.0
    %912 = vmatpush1.msra.mxu0 0.0
    %913 = vmatprep.subr.mxu0 0.0
    %914 = vmatpush1.msra.mxu0 0.0
    %915 = vmatprep.subr.mxu0 0.0
    %916 = vmatpush1.msra.mxu0 0.0
    %917 = vmatprep.subr.mxu0 0.0
    %918 = vmatpush1.msra.mxu0 0.0
    %919 = vmatprep.subr.mxu0 0.0
    %920 = vmatpush1.msra.mxu0 0.0
    %921 = vmatprep.subr.mxu0 0.0
    %922 = vmatpush1.msra.mxu0 0.0
    %923 = vmatprep.subr.mxu0 0.0
    %924 = vmatpush1.msra.mxu0 0.0
    %925 = vmatprep.mubr.f32.mxu0 0.0
    %v926 = vand.u32 %v151, 4294901760
    %927 = vmatmul.mubr.f32.gmra.mrb[0].mxu0 %v926
    %v928 = vpop.f32.mrb[0].mxu0
    %v929 = vadd.f32 %v824, %v928
    %v930 = vpop.f32.mrb[0].mxu0
    %931 = vmatprep.mubr.f32.mxu0 0.0
    %v932 = vand.u32 %v152, 4294901760
    %933 = vmatmul.mubr.f32.gmra.mrb[0].mxu0 %v932
    %v934 = vpop.f32.mrb[0].mxu0
    %v935 = vadd.f32 %v830, %v934
    %v936 = vpop.f32.mrb[0].mxu0
    %937 = vmatprep.mubr.f32.mxu0 0.0
    %v938 = vand.u32 %v153, 4294901760
    %939 = vmatmul.mubr.f32.gmra.mrb[0].mxu0 %v938
    %v940 = vpop.f32.mrb[0].mxu0
    %v941 = vadd.f32 %v836, %v940
    %v942 = vpop.f32.mrb[0].mxu0
    %943 = vmatprep.mubr.f32.mxu0 0.0
    %v944 = vand.u32 %v154, 4294901760
    %945 = vmatmul.mubr.f32.gmra.mrb[0].mxu0 %v944
    %v946 = vpop.f32.mrb[0].mxu0
    %v947 = vadd.f32 %v842, %v946
    %v948 = vpop.f32.mrb[0].mxu0
    %949 = vdwg.mxu0
    %vm950 = vcmask 130048
    %v952 = vsel %vm950, %v145, 0
    %v955 = vsel %vm950, %v146, 0
    %v958 = vsel %vm950, %v147, 0
    %v961 = vsel %vm950, %v148, 0
    %963 = vmatprep.subr.mxu0 0.0
    %v964 = vand.u32 %v155, 4294901760
    %965 = vmatpush1.msra.mxu0 %v964
    %966 = vmatprep.subr.mxu0 0.0
    %v967 = vand.u32 %v156, 4294901760
    %968 = vmatpush1.msra.mxu0 %v967
    %969 = vmatprep.subr.mxu0 0.0
    %970 = vmatpush1.msra.mxu0 0.0
    %971 = vmatprep.subr.mxu0 0.0
    %972 = vmatpush1.msra.mxu0 0.0
    %973 = vmatprep.subr.mxu0 0.0
    %974 = vmatpush1.msra.mxu0 0.0
    %975 = vmatprep.subr.mxu0 0.0
    %976 = vmatpush1.msra.mxu0 0.0
    %977 = vmatprep.subr.mxu0 0.0
    %978 = vmatpush1.msra.mxu0 0.0
    %979 = vmatprep.subr.mxu0 0.0
    %980 = vmatpush1.msra.mxu0 0.0
    %981 = vmatprep.subr.mxu0 0.0
    %982 = vmatpush1.msra.mxu0 0.0
    %983 = vmatprep.subr.mxu0 0.0
    %984 = vmatpush1.msra.mxu0 0.0
    %985 = vmatprep.subr.mxu0 0.0
    %986 = vmatpush1.msra.mxu0 0.0
    %987 = vmatprep.subr.mxu0 0.0
    %988 = vmatpush1.msra.mxu0 0.0
    %989 = vmatprep.subr.mxu0 0.0
    %990 = vmatpush1.msra.mxu0 0.0
    %991 = vmatprep.subr.mxu0 0.0
    %992 = vmatpush1.msra.mxu0 0.0
    %993 = vmatprep.subr.mxu0 0.0
    %994 = vmatpush1.msra.mxu0 0.0
    %995 = vmatprep.subr.mxu0 0.0
    %996 = vmatpush1.msra.mxu0 0.0
    %997 = vmatprep.subr.mxu0 0.0
    %998 = vmatpush1.msra.mxu0 0.0
    %999 = vmatprep.subr.mxu0 0.0
    %1000 = vmatpush1.msra.mxu0 0.0
    %1001 = vmatprep.subr.mxu0 0.0
    %1002 = vmatpush1.msra.mxu0 0.0
    %1003 = vmatprep.subr.mxu0 0.0
    %1004 = vmatpush1.msra.mxu0 0.0
    %1005 = vmatprep.subr.mxu0 0.0
    %1006 = vmatpush1.msra.mxu0 0.0
    %1007 = vmatprep.subr.mxu0 0.0
    %1008 = vmatpush1.msra.mxu0 0.0
    %1009 = vmatprep.subr.mxu0 0.0
    %1010 = vmatpush1.msra.mxu0 0.0
    %1011 = vmatprep.subr.mxu0 0.0
    %1012 = vmatpush1.msra.mxu0 0.0
    %1013 = vmatprep.subr.mxu0 0.0
    %1014 = vmatpush1.msra.mxu0 0.0
    %1015 = vmatprep.subr.mxu0 0.0
    %1016 = vmatpush1.msra.mxu0 0.0
    %1017 = vmatprep.subr.mxu0 0.0
    %1018 = vmatpush1.msra.mxu0 0.0
    %1019 = vmatprep.subr.mxu0 0.0
    %1020 = vmatpush1.msra.mxu0 0.0
    %1021 = vmatprep.subr.mxu0 0.0
    %1022 = vmatpush1.msra.mxu0 0.0
    %1023 = vmatprep.subr.mxu0 0.0
    %1024 = vmatpush1.msra.mxu0 0.0
    %1025 = vmatprep.subr.mxu0 0.0
    %1026 = vmatpush1.msra.mxu0 0.0
    %1027 = vmatprep.subr.mxu0 0.0
    %1028 = vmatpush1.msra.mxu0 0.0
    %1029 = vmatprep.mubr.f32.mxu0 0.0
    %v1030 = vand.u32 %v952, 4294901760
    %v1031 = vsub.f32 %v952, %v1030
    %v1032 = vand.u32 %v1031, 4294901760
    %v1033 = vsub.f32 %v1031, %v1032
    %v1034 = vand.u32 %v1033, 4294901760
    %1035 = vmatmul.mubr.f32.gmra.mrb[0].mxu0 %v1034
    %v1036 = vpop.f32.mrb[0].mxu0
    %v1037 = vadd.f32 %v929, %v1036
    %v1038 = vpop.f32.mrb[0].mxu0
    %1039 = vmatprep.mubr.f32.mxu0 0.0
    %v1040 = vand.u32 %v955, 4294901760
    %v1041 = vsub.f32 %v955, %v1040
    %v1042 = vand.u32 %v1041, 4294901760
    %v1043 = vsub.f32 %v1041, %v1042
    %v1044 = vand.u32 %v1043, 4294901760
    %1045 = vmatmul.mubr.f32.gmra.mrb[0].mxu0 %v1044
    %v1046 = vpop.f32.mrb[0].mxu0
    %v1047 = vadd.f32 %v935, %v1046
    %v1048 = vpop.f32.mrb[0].mxu0
    %1049 = vmatprep.mubr.f32.mxu0 0.0
    %v1050 = vand.u32 %v958, 4294901760
    %v1051 = vsub.f32 %v958, %v1050
    %v1052 = vand.u32 %v1051, 4294901760
    %v1053 = vsub.f32 %v1051, %v1052
    %v1054 = vand.u32 %v1053, 4294901760
    %1055 = vmatmul.mubr.f32.gmra.mrb[0].mxu0 %v1054
    %v1056 = vpop.f32.mrb[0].mxu0
    %v1057 = vadd.f32 %v941, %v1056
    %v1058 = vpop.f32.mrb[0].mxu0
    %1059 = vmatprep.mubr.f32.mxu0 0.0
    %v1060 = vand.u32 %v961, 4294901760
    %v1061 = vsub.f32 %v961, %v1060
    %v1062 = vand.u32 %v1061, 4294901760
    %v1063 = vsub.f32 %v1061, %v1062
    %v1064 = vand.u32 %v1063, 4294901760
    %1065 = vmatmul.mubr.f32.gmra.mrb[0].mxu0 %v1064
    %v1066 = vpop.f32.mrb[0].mxu0
    %v1067 = vadd.f32 %v947, %v1066
    %v1068 = vpop.f32.mrb[0].mxu0
    %1069 = vdwg.mxu0
    %1070 = vmatprep.subr.mxu0 0.0
    %v1071 = vand.u32 %v155, 4294901760
    %v1072 = vsub.f32 %v155, %v1071
    %v1073 = vand.u32 %v1072, 4294901760
    %v1074 = vsub.f32 %v1072, %v1073
    %v1075 = vand.u32 %v1074, 4294901760
    %1076 = vmatpush1.msra.mxu0 %v1075
    %1077 = vmatprep.subr.mxu0 0.0
    %v1078 = vand.u32 %v156, 4294901760
    %v1079 = vsub.f32 %v156, %v1078
    %v1080 = vand.u32 %v1079, 4294901760
    %v1081 = vsub.f32 %v1079, %v1080
    %v1082 = vand.u32 %v1081, 4294901760
    %1083 = vmatpush1.msra.mxu0 %v1082
    %1084 = vmatprep.subr.mxu0 0.0
    %1085 = vmatpush1.msra.mxu0 0.0
    %1086 = vmatprep.subr.mxu0 0.0
    %1087 = vmatpush1.msra.mxu0 0.0
    %1088 = vmatprep.subr.mxu0 0.0
    %1089 = vmatpush1.msra.mxu0 0.0
    %1090 = vmatprep.subr.mxu0 0.0
    %1091 = vmatpush1.msra.mxu0 0.0
    %1092 = vmatprep.subr.mxu0 0.0
    %1093 = vmatpush1.msra.mxu0 0.0
    %1094 = vmatprep.subr.mxu0 0.0
    %1095 = vmatpush1.msra.mxu0 0.0
    %1096 = vmatprep.subr.mxu0 0.0
    %1097 = vmatpush1.msra.mxu0 0.0
    %1098 = vmatprep.subr.mxu0 0.0
    %1099 = vmatpush1.msra.mxu0 0.0
    %1100 = vmatprep.subr.mxu0 0.0
    %1101 = vmatpush1.msra.mxu0 0.0
    %1102 = vmatprep.subr.mxu0 0.0
    %1103 = vmatpush1.msra.mxu0 0.0
    %1104 = vmatprep.subr.mxu0 0.0
    %1105 = vmatpush1.msra.mxu0 0.0
    %1106 = vmatprep.subr.mxu0 0.0
    %1107 = vmatpush1.msra.mxu0 0.0
    %1108 = vmatprep.subr.mxu0 0.0
    %1109 = vmatpush1.msra.mxu0 0.0
    %1110 = vmatprep.subr.mxu0 0.0
    %1111 = vmatpush1.msra.mxu0 0.0
    %1112 = vmatprep.subr.mxu0 0.0
    %1113 = vmatpush1.msra.mxu0 0.0
    %1114 = vmatprep.subr.mxu0 0.0
    %1115 = vmatpush1.msra.mxu0 0.0
    %1116 = vmatprep.subr.mxu0 0.0
    %1117 = vmatpush1.msra.mxu0 0.0
    %1118 = vmatprep.subr.mxu0 0.0
    %1119 = vmatpush1.msra.mxu0 0.0
    %1120 = vmatprep.subr.mxu0 0.0
    %1121 = vmatpush1.msra.mxu0 0.0
    %1122 = vmatprep.subr.mxu0 0.0
    %1123 = vmatpush1.msra.mxu0 0.0
    %1124 = vmatprep.subr.mxu0 0.0
    %1125 = vmatpush1.msra.mxu0 0.0
    %1126 = vmatprep.subr.mxu0 0.0
    %1127 = vmatpush1.msra.mxu0 0.0
    %1128 = vmatprep.subr.mxu0 0.0
    %1129 = vmatpush1.msra.mxu0 0.0
    %1130 = vmatprep.subr.mxu0 0.0
    %1131 = vmatpush1.msra.mxu0 0.0
    %1132 = vmatprep.subr.mxu0 0.0
    %1133 = vmatpush1.msra.mxu0 0.0
    %1134 = vmatprep.subr.mxu0 0.0
    %1135 = vmatpush1.msra.mxu0 0.0
    %1136 = vmatprep.subr.mxu0 0.0
    %1137 = vmatpush1.msra.mxu0 0.0
    %1138 = vmatprep.subr.mxu0 0.0
    %1139 = vmatpush1.msra.mxu0 0.0
    %1140 = vmatprep.subr.mxu0 0.0
    %1141 = vmatpush1.msra.mxu0 0.0
    %1142 = vmatprep.subr.mxu0 0.0
    %1143 = vmatpush1.msra.mxu0 0.0
    %1144 = vmatprep.mubr.f32.mxu0 0.0
    %v1145 = vand.u32 %v952, 4294901760
    %1146 = vmatmul.mubr.f32.gmra.mrb[0].mxu0 %v1145
    %v1147 = vpop.f32.mrb[0].mxu0
    %v1148 = vadd.f32 %v1037, %v1147
    %v1149 = vpop.f32.mrb[0].mxu0
    %1150 = vmatprep.mubr.f32.mxu0 0.0
    %v1151 = vand.u32 %v955, 4294901760
    %1152 = vmatmul.mubr.f32.gmra.mrb[0].mxu0 %v1151
    %v1153 = vpop.f32.mrb[0].mxu0
    %v1154 = vadd.f32 %v1047, %v1153
    %v1155 = vpop.f32.mrb[0].mxu0
    %1156 = vmatprep.mubr.f32.mxu0 0.0
    %v1157 = vand.u32 %v958, 4294901760
    %1158 = vmatmul.mubr.f32.gmra.mrb[0].mxu0 %v1157
    %v1159 = vpop.f32.mrb[0].mxu0
    %v1160 = vadd.f32 %v1057, %v1159
    %v1161 = vpop.f32.mrb[0].mxu0
    %1162 = vmatprep.mubr.f32.mxu0 0.0
    %v1163 = vand.u32 %v961, 4294901760
    %1164 = vmatmul.mubr.f32.gmra.mrb[0].mxu0 %v1163
    %v1165 = vpop.f32.mrb[0].mxu0
    %v1166 = vadd.f32 %v1067, %v1165
    %v1167 = vpop.f32.mrb[0].mxu0
    %1168 = vdwg.mxu0
    %1169 = vmatprep.subr.mxu0 0.0
    %v1170 = vand.u32 %v155, 4294901760
    %v1171 = vsub.f32 %v155, %v1170
    %1172 = vmatpush1.msra.mxu0 %v1171
    %1173 = vmatprep.subr.mxu0 0.0
    %v1174 = vand.u32 %v156, 4294901760
    %v1175 = vsub.f32 %v156, %v1174
    %1176 = vmatpush1.msra.mxu0 %v1175
    %1177 = vmatprep.subr.mxu0 0.0
    %1178 = vmatpush1.msra.mxu0 0.0
    %1179 = vmatprep.subr.mxu0 0.0
    %1180 = vmatpush1.msra.mxu0 0.0
    %1181 = vmatprep.subr.mxu0 0.0
    %1182 = vmatpush1.msra.mxu0 0.0
    %1183 = vmatprep.subr.mxu0 0.0
    %1184 = vmatpush1.msra.mxu0 0.0
    %1185 = vmatprep.subr.mxu0 0.0
    %1186 = vmatpush1.msra.mxu0 0.0
    %1187 = vmatprep.subr.mxu0 0.0
    %1188 = vmatpush1.msra.mxu0 0.0
    %1189 = vmatprep.subr.mxu0 0.0
    %1190 = vmatpush1.msra.mxu0 0.0
    %1191 = vmatprep.subr.mxu0 0.0
    %1192 = vmatpush1.msra.mxu0 0.0
    %1193 = vmatprep.subr.mxu0 0.0
    %1194 = vmatpush1.msra.mxu0 0.0
    %1195 = vmatprep.subr.mxu0 0.0
    %1196 = vmatpush1.msra.mxu0 0.0
    %1197 = vmatprep.subr.mxu0 0.0
    %1198 = vmatpush1.msra.mxu0 0.0
    %1199 = vmatprep.subr.mxu0 0.0
    %1200 = vmatpush1.msra.mxu0 0.0
    %1201 = vmatprep.subr.mxu0 0.0
    %1202 = vmatpush1.msra.mxu0 0.0
    %1203 = vmatprep.subr.mxu0 0.0
    %1204 = vmatpush1.msra.mxu0 0.0
    %1205 = vmatprep.subr.mxu0 0.0
    %1206 = vmatpush1.msra.mxu0 0.0
    %1207 = vmatprep.subr.mxu0 0.0
    %1208 = vmatpush1.msra.mxu0 0.0
    %1209 = vmatprep.subr.mxu0 0.0
    %1210 = vmatpush1.msra.mxu0 0.0
    %1211 = vmatprep.subr.mxu0 0.0
    %1212 = vmatpush1.msra.mxu0 0.0
    %1213 = vmatprep.subr.mxu0 0.0
    %1214 = vmatpush1.msra.mxu0 0.0
    %1215 = vmatprep.subr.mxu0 0.0
    %1216 = vmatpush1.msra.mxu0 0.0
    %1217 = vmatprep.subr.mxu0 0.0
    %1218 = vmatpush1.msra.mxu0 0.0
    %1219 = vmatprep.subr.mxu0 0.0
    %1220 = vmatpush1.msra.mxu0 0.0
    %1221 = vmatprep.subr.mxu0 0.0
    %1222 = vmatpush1.msra.mxu0 0.0
    %1223 = vmatprep.subr.mxu0 0.0
    %1224 = vmatpush1.msra.mxu0 0.0
    %1225 = vmatprep.subr.mxu0 0.0
    %1226 = vmatpush1.msra.mxu0 0.0
    %1227 = vmatprep.subr.mxu0 0.0
    %1228 = vmatpush1.msra.mxu0 0.0
    %1229 = vmatprep.subr.mxu0 0.0
    %1230 = vmatpush1.msra.mxu0 0.0
    %1231 = vmatprep.subr.mxu0 0.0
    %1232 = vmatpush1.msra.mxu0 0.0
    %1233 = vmatprep.subr.mxu0 0.0
    %1234 = vmatpush1.msra.mxu0 0.0
    %1235 = vmatprep.subr.mxu0 0.0
    %1236 = vmatpush1.msra.mxu0 0.0
    %1237 = vmatprep.mubr.f32.mxu0 0.0
    %v1238 = vand.u32 %v952, 4294901760
    %v1239 = vsub.f32 %v952, %v1238
    %1240 = vmatmul.mubr.f32.gmra.mrb[0].mxu0 %v1239
    %v1241 = vpop.f32.mrb[0].mxu0
    %v1242 = vadd.f32 %v1148, %v1241
    %v1243 = vpop.f32.mrb[0].mxu0
    %1244 = vmatprep.mubr.f32.mxu0 0.0
    %v1245 = vand.u32 %v955, 4294901760
    %v1246 = vsub.f32 %v955, %v1245
    %1247 = vmatmul.mubr.f32.gmra.mrb[0].mxu0 %v1246
    %v1248 = vpop.f32.mrb[0].mxu0
    %v1249 = vadd.f32 %v1154, %v1248
    %v1250 = vpop.f32.mrb[0].mxu0
    %1251 = vmatprep.mubr.f32.mxu0 0.0
    %v1252 = vand.u32 %v958, 4294901760
    %v1253 = vsub.f32 %v958, %v1252
    %1254 = vmatmul.mubr.f32.gmra.mrb[0].mxu0 %v1253
    %v1255 = vpop.f32.mrb[0].mxu0
    %v1256 = vadd.f32 %v1160, %v1255
    %v1257 = vpop.f32.mrb[0].mxu0
    %1258 = vmatprep.mubr.f32.mxu0 0.0
    %v1259 = vand.u32 %v961, 4294901760
    %v1260 = vsub.f32 %v961, %v1259
    %1261 = vmatmul.mubr.f32.gmra.mrb[0].mxu0 %v1260
    %v1262 = vpop.f32.mrb[0].mxu0
    %v1263 = vadd.f32 %v1166, %v1262
    %v1264 = vpop.f32.mrb[0].mxu0
    %1265 = vdwg.mxu0
    %1266 = vmatprep.subr.mxu0 0.0
    %v1267 = vand.u32 %v155, 4294901760
    %1268 = vmatpush1.msra.mxu0 %v1267
    %1269 = vmatprep.subr.mxu0 0.0
    %v1270 = vand.u32 %v156, 4294901760
    %1271 = vmatpush1.msra.mxu0 %v1270
    %1272 = vmatprep.subr.mxu0 0.0
    %1273 = vmatpush1.msra.mxu0 0.0
    %1274 = vmatprep.subr.mxu0 0.0
    %1275 = vmatpush1.msra.mxu0 0.0
    %1276 = vmatprep.subr.mxu0 0.0
    %1277 = vmatpush1.msra.mxu0 0.0
    %1278 = vmatprep.subr.mxu0 0.0
    %1279 = vmatpush1.msra.mxu0 0.0
    %1280 = vmatprep.subr.mxu0 0.0
    %1281 = vmatpush1.msra.mxu0 0.0
    %1282 = vmatprep.subr.mxu0 0.0
    %1283 = vmatpush1.msra.mxu0 0.0
    %1284 = vmatprep.subr.mxu0 0.0
    %1285 = vmatpush1.msra.mxu0 0.0
    %1286 = vmatprep.subr.mxu0 0.0
    %1287 = vmatpush1.msra.mxu0 0.0
    %1288 = vmatprep.subr.mxu0 0.0
    %1289 = vmatpush1.msra.mxu0 0.0
    %1290 = vmatprep.subr.mxu0 0.0
    %1291 = vmatpush1.msra.mxu0 0.0
    %1292 = vmatprep.subr.mxu0 0.0
    %1293 = vmatpush1.msra.mxu0 0.0
    %1294 = vmatprep.subr.mxu0 0.0
    %1295 = vmatpush1.msra.mxu0 0.0
    %1296 = vmatprep.subr.mxu0 0.0
    %1297 = vmatpush1.msra.mxu0 0.0
    %1298 = vmatprep.subr.mxu0 0.0
    %1299 = vmatpush1.msra.mxu0 0.0
    %1300 = vmatprep.subr.mxu0 0.0
    %1301 = vmatpush1.msra.mxu0 0.0
    %1302 = vmatprep.subr.mxu0 0.0
    %1303 = vmatpush1.msra.mxu0 0.0
    %1304 = vmatprep.subr.mxu0 0.0
    %1305 = vmatpush1.msra.mxu0 0.0
    %1306 = vmatprep.subr.mxu0 0.0
    %1307 = vmatpush1.msra.mxu0 0.0
    %1308 = vmatprep.subr.mxu0 0.0
    %1309 = vmatpush1.msra.mxu0 0.0
    %1310 = vmatprep.subr.mxu0 0.0
    %1311 = vmatpush1.msra.mxu0 0.0
    %1312 = vmatprep.subr.mxu0 0.0
    %1313 = vmatpush1.msra.mxu0 0.0
    %1314 = vmatprep.subr.mxu0 0.0
    %1315 = vmatpush1.msra.mxu0 0.0
    %1316 = vmatprep.subr.mxu0 0.0
    %1317 = vmatpush1.msra.mxu0 0.0
    %1318 = vmatprep.subr.mxu0 0.0
    %1319 = vmatpush1.msra.mxu0 0.0
    %1320 = vmatprep.subr.mxu0 0.0
    %1321 = vmatpush1.msra.mxu0 0.0
    %1322 = vmatprep.subr.mxu0 0.0
    %1323 = vmatpush1.msra.mxu0 0.0
    %1324 = vmatprep.subr.mxu0 0.0
    %1325 = vmatpush1.msra.mxu0 0.0
    %1326 = vmatprep.subr.mxu0 0.0
    %1327 = vmatpush1.msra.mxu0 0.0
    %1328 = vmatprep.subr.mxu0 0.0
    %1329 = vmatpush1.msra.mxu0 0.0
    %1330 = vmatprep.subr.mxu0 0.0
    %1331 = vmatpush1.msra.mxu0 0.0
    %1332 = vmatprep.mubr.f32.mxu0 0.0
    %v1333 = vand.u32 %v952, 4294901760
    %v1334 = vsub.f32 %v952, %v1333
    %v1335 = vand.u32 %v1334, 4294901760
    %1336 = vmatmul.mubr.f32.gmra.mrb[0].mxu0 %v1335
    %v1337 = vpop.f32.mrb[0].mxu0
    %v1338 = vadd.f32 %v1242, %v1337
    %v1339 = vpop.f32.mrb[0].mxu0
    %1340 = vmatprep.mubr.f32.mxu0 0.0
    %v1341 = vand.u32 %v955, 4294901760
    %v1342 = vsub.f32 %v955, %v1341
    %v1343 = vand.u32 %v1342, 4294901760
    %1344 = vmatmul.mubr.f32.gmra.mrb[0].mxu0 %v1343
    %v1345 = vpop.f32.mrb[0].mxu0
    %v1346 = vadd.f32 %v1249, %v1345
    %v1347 = vpop.f32.mrb[0].mxu0
    %1348 = vmatprep.mubr.f32.mxu0 0.0
    %v1349 = vand.u32 %v958, 4294901760
    %v1350 = vsub.f32 %v958, %v1349
    %v1351 = vand.u32 %v1350, 4294901760
    %1352 = vmatmul.mubr.f32.gmra.mrb[0].mxu0 %v1351
    %v1353 = vpop.f32.mrb[0].mxu0
    %v1354 = vadd.f32 %v1256, %v1353
    %v1355 = vpop.f32.mrb[0].mxu0
    %1356 = vmatprep.mubr.f32.mxu0 0.0
    %v1357 = vand.u32 %v961, 4294901760
    %v1358 = vsub.f32 %v961, %v1357
    %v1359 = vand.u32 %v1358, 4294901760
    %1360 = vmatmul.mubr.f32.gmra.mrb[0].mxu0 %v1359
    %v1361 = vpop.f32.mrb[0].mxu0
    %v1362 = vadd.f32 %v1263, %v1361
    %v1363 = vpop.f32.mrb[0].mxu0
    %1364 = vdwg.mxu0
    %1365 = vmatprep.subr.mxu0 0.0
    %v1366 = vand.u32 %v155, 4294901760
    %v1367 = vsub.f32 %v155, %v1366
    %v1368 = vand.u32 %v1367, 4294901760
    %1369 = vmatpush1.msra.mxu0 %v1368
    %1370 = vmatprep.subr.mxu0 0.0
    %v1371 = vand.u32 %v156, 4294901760
    %v1372 = vsub.f32 %v156, %v1371
    %v1373 = vand.u32 %v1372, 4294901760
    %1374 = vmatpush1.msra.mxu0 %v1373
    %1375 = vmatprep.subr.mxu0 0.0
    %1376 = vmatpush1.msra.mxu0 0.0
    %1377 = vmatprep.subr.mxu0 0.0
    %1378 = vmatpush1.msra.mxu0 0.0
    %1379 = vmatprep.subr.mxu0 0.0
    %1380 = vmatpush1.msra.mxu0 0.0
    %1381 = vmatprep.subr.mxu0 0.0
    %1382 = vmatpush1.msra.mxu0 0.0
    %1383 = vmatprep.subr.mxu0 0.0
    %1384 = vmatpush1.msra.mxu0 0.0
    %1385 = vmatprep.subr.mxu0 0.0
    %1386 = vmatpush1.msra.mxu0 0.0
    %1387 = vmatprep.subr.mxu0 0.0
    %1388 = vmatpush1.msra.mxu0 0.0
    %1389 = vmatprep.subr.mxu0 0.0
    %1390 = vmatpush1.msra.mxu0 0.0
    %1391 = vmatprep.subr.mxu0 0.0
    %1392 = vmatpush1.msra.mxu0 0.0
    %1393 = vmatprep.subr.mxu0 0.0
    %1394 = vmatpush1.msra.mxu0 0.0
    %1395 = vmatprep.subr.mxu0 0.0
    %1396 = vmatpush1.msra.mxu0 0.0
    %1397 = vmatprep.subr.mxu0 0.0
    %1398 = vmatpush1.msra.mxu0 0.0
    %1399 = vmatprep.subr.mxu0 0.0
    %1400 = vmatpush1.msra.mxu0 0.0
    %1401 = vmatprep.subr.mxu0 0.0
    %1402 = vmatpush1.msra.mxu0 0.0
    %1403 = vmatprep.subr.mxu0 0.0
    %1404 = vmatpush1.msra.mxu0 0.0
    %1405 = vmatprep.subr.mxu0 0.0
    %1406 = vmatpush1.msra.mxu0 0.0
    %1407 = vmatprep.subr.mxu0 0.0
    %1408 = vmatpush1.msra.mxu0 0.0
    %1409 = vmatprep.subr.mxu0 0.0
    %1410 = vmatpush1.msra.mxu0 0.0
    %1411 = vmatprep.subr.mxu0 0.0
    %1412 = vmatpush1.msra.mxu0 0.0
    %1413 = vmatprep.subr.mxu0 0.0
    %1414 = vmatpush1.msra.mxu0 0.0
    %1415 = vmatprep.subr.mxu0 0.0
    %1416 = vmatpush1.msra.mxu0 0.0
    %1417 = vmatprep.subr.mxu0 0.0
    %1418 = vmatpush1.msra.mxu0 0.0
    %1419 = vmatprep.subr.mxu0 0.0
    %1420 = vmatpush1.msra.mxu0 0.0
    %1421 = vmatprep.subr.mxu0 0.0
    %1422 = vmatpush1.msra.mxu0 0.0
    %1423 = vmatprep.subr.mxu0 0.0
    %1424 = vmatpush1.msra.mxu0 0.0
    %1425 = vmatprep.subr.mxu0 0.0
    %1426 = vmatpush1.msra.mxu0 0.0
    %1427 = vmatprep.subr.mxu0 0.0
    %1428 = vmatpush1.msra.mxu0 0.0
    %1429 = vmatprep.subr.mxu0 0.0
    %1430 = vmatpush1.msra.mxu0 0.0
    %1431 = vmatprep.subr.mxu0 0.0
    %1432 = vmatpush1.msra.mxu0 0.0
    %1433 = vmatprep.subr.mxu0 0.0
    %1434 = vmatpush1.msra.mxu0 0.0
    %1435 = vmatprep.mubr.f32.mxu0 0.0
    %v1436 = vand.u32 %v952, 4294901760
    %1437 = vmatmul.mubr.f32.gmra.mrb[0].mxu0 %v1436
    %v1438 = vpop.f32.mrb[0].mxu0
    %v1439 = vadd.f32 %v1338, %v1438
    %v1440 = vpop.f32.mrb[0].mxu0
    %1441 = vmatprep.mubr.f32.mxu0 0.0
    %v1442 = vand.u32 %v955, 4294901760
    %1443 = vmatmul.mubr.f32.gmra.mrb[0].mxu0 %v1442
    %v1444 = vpop.f32.mrb[0].mxu0
    %v1445 = vadd.f32 %v1346, %v1444
    %v1446 = vpop.f32.mrb[0].mxu0
    %1447 = vmatprep.mubr.f32.mxu0 0.0
    %v1448 = vand.u32 %v958, 4294901760
    %1449 = vmatmul.mubr.f32.gmra.mrb[0].mxu0 %v1448
    %v1450 = vpop.f32.mrb[0].mxu0
    %v1451 = vadd.f32 %v1354, %v1450
    %v1452 = vpop.f32.mrb[0].mxu0
    %1453 = vmatprep.mubr.f32.mxu0 0.0
    %v1454 = vand.u32 %v961, 4294901760
    %1455 = vmatmul.mubr.f32.gmra.mrb[0].mxu0 %v1454
    %v1456 = vpop.f32.mrb[0].mxu0
    %v1457 = vadd.f32 %v1362, %v1456
    %v1458 = vpop.f32.mrb[0].mxu0
    %1459 = vdwg.mxu0
    %1460 = vmatprep.subr.mxu0 0.0
    %v1461 = vand.u32 %v155, 4294901760
    %1462 = vmatpush1.msra.mxu0 %v1461
    %1463 = vmatprep.subr.mxu0 0.0
    %v1464 = vand.u32 %v156, 4294901760
    %1465 = vmatpush1.msra.mxu0 %v1464
    %1466 = vmatprep.subr.mxu0 0.0
    %1467 = vmatpush1.msra.mxu0 0.0
    %1468 = vmatprep.subr.mxu0 0.0
    %1469 = vmatpush1.msra.mxu0 0.0
    %1470 = vmatprep.subr.mxu0 0.0
    %1471 = vmatpush1.msra.mxu0 0.0
    %1472 = vmatprep.subr.mxu0 0.0
    %1473 = vmatpush1.msra.mxu0 0.0
    %1474 = vmatprep.subr.mxu0 0.0
    %1475 = vmatpush1.msra.mxu0 0.0
    %1476 = vmatprep.subr.mxu0 0.0
    %1477 = vmatpush1.msra.mxu0 0.0
    %1478 = vmatprep.subr.mxu0 0.0
    %1479 = vmatpush1.msra.mxu0 0.0
    %1480 = vmatprep.subr.mxu0 0.0
    %1481 = vmatpush1.msra.mxu0 0.0
    %1482 = vmatprep.subr.mxu0 0.0
    %1483 = vmatpush1.msra.mxu0 0.0
    %1484 = vmatprep.subr.mxu0 0.0
    %1485 = vmatpush1.msra.mxu0 0.0
    %1486 = vmatprep.subr.mxu0 0.0
    %1487 = vmatpush1.msra.mxu0 0.0
    %1488 = vmatprep.subr.mxu0 0.0
    %1489 = vmatpush1.msra.mxu0 0.0
    %1490 = vmatprep.subr.mxu0 0.0
    %1491 = vmatpush1.msra.mxu0 0.0
    %1492 = vmatprep.subr.mxu0 0.0
    %1493 = vmatpush1.msra.mxu0 0.0
    %1494 = vmatprep.subr.mxu0 0.0
    %1495 = vmatpush1.msra.mxu0 0.0
    %1496 = vmatprep.subr.mxu0 0.0
    %1497 = vmatpush1.msra.mxu0 0.0
    %1498 = vmatprep.subr.mxu0 0.0
    %1499 = vmatpush1.msra.mxu0 0.0
    %1500 = vmatprep.subr.mxu0 0.0
    %1501 = vmatpush1.msra.mxu0 0.0
    %1502 = vmatprep.subr.mxu0 0.0
    %1503 = vmatpush1.msra.mxu0 0.0
    %1504 = vmatprep.subr.mxu0 0.0
    %1505 = vmatpush1.msra.mxu0 0.0
    %1506 = vmatprep.subr.mxu0 0.0
    %1507 = vmatpush1.msra.mxu0 0.0
    %1508 = vmatprep.subr.mxu0 0.0
    %1509 = vmatpush1.msra.mxu0 0.0
    %1510 = vmatprep.subr.mxu0 0.0
    %1511 = vmatpush1.msra.mxu0 0.0
    %1512 = vmatprep.subr.mxu0 0.0
    %1513 = vmatpush1.msra.mxu0 0.0
    %1514 = vmatprep.subr.mxu0 0.0
    %1515 = vmatpush1.msra.mxu0 0.0
    %1516 = vmatprep.subr.mxu0 0.0
    %1517 = vmatpush1.msra.mxu0 0.0
    %1518 = vmatprep.subr.mxu0 0.0
    %1519 = vmatpush1.msra.mxu0 0.0
    %1520 = vmatprep.subr.mxu0 0.0
    %1521 = vmatpush1.msra.mxu0 0.0
    %1522 = vmatprep.subr.mxu0 0.0
    %1523 = vmatpush1.msra.mxu0 0.0
    %1524 = vmatprep.subr.mxu0 0.0
    %1525 = vmatpush1.msra.mxu0 0.0
    %1526 = vmatprep.mubr.f32.mxu0 0.0
    %v1527 = vand.u32 %v952, 4294901760
    %1528 = vmatmul.mubr.f32.gmra.mrb[0].mxu0 %v1527
    %v1529 = vpop.f32.mrb[0].mxu0
    %v1530 = vadd.f32 %v1439, %v1529
    %v1531 = vpop.f32.mrb[0].mxu0
    %1532 = vmatprep.mubr.f32.mxu0 0.0
    %v1533 = vand.u32 %v955, 4294901760
    %1534 = vmatmul.mubr.f32.gmra.mrb[0].mxu0 %v1533
    %v1535 = vpop.f32.mrb[0].mxu0
    %v1536 = vadd.f32 %v1445, %v1535
    %v1537 = vpop.f32.mrb[0].mxu0
    %1538 = vmatprep.mubr.f32.mxu0 0.0
    %v1539 = vand.u32 %v958, 4294901760
    %1540 = vmatmul.mubr.f32.gmra.mrb[0].mxu0 %v1539
    %v1541 = vpop.f32.mrb[0].mxu0
    %v1542 = vadd.f32 %v1451, %v1541
    %v1543 = vpop.f32.mrb[0].mxu0
    %1544 = vmatprep.mubr.f32.mxu0 0.0
    %v1545 = vand.u32 %v961, 4294901760
    %1546 = vmatmul.mubr.f32.gmra.mrb[0].mxu0 %v1545
    %v1547 = vpop.f32.mrb[0].mxu0
    %v1548 = vadd.f32 %v1457, %v1547
    %v1549 = vpop.f32.mrb[0].mxu0
    %1550 = vdwg.mxu0
    %v1551 = vmax.f32 %v1530, 0.0
    %v1552 = vmax.f32 %v1536, 0.0
    %v1553 = vmax.f32 %v1542, 0.0
    %v1554 = vmax.f32 %v1548, 0.0
    %vm1555 = vcmask 261120
    %v1557 = vsel %vm1555, %v149, 0
    %v1560 = vsel %vm1555, %v150, 0
    %1562 = vmatprep.subr.mxu0 0.0
    %v1563 = vand.u32 %v1551, 4294901760
    %1564 = vmatpush1.msra.mxu0 %v1563
    %1565 = vmatprep.subr.mxu0 0.0
    %v1566 = vand.u32 %v1552, 4294901760
    %1567 = vmatpush1.msra.mxu0 %v1566
    %1568 = vmatprep.subr.mxu0 0.0
    %v1569 = vand.u32 %v1553, 4294901760
    %1570 = vmatpush1.msra.mxu0 %v1569
    %1571 = vmatprep.subr.mxu0 0.0
    %v1572 = vand.u32 %v1554, 4294901760
    %1573 = vmatpush1.msra.mxu0 %v1572
    %1574 = vmatprep.subr.mxu0 0.0
    %1575 = vmatpush1.msra.mxu0 0.0
    %1576 = vmatprep.subr.mxu0 0.0
    %1577 = vmatpush1.msra.mxu0 0.0
    %1578 = vmatprep.subr.mxu0 0.0
    %1579 = vmatpush1.msra.mxu0 0.0
    %1580 = vmatprep.subr.mxu0 0.0
    %1581 = vmatpush1.msra.mxu0 0.0
    %1582 = vmatprep.subr.mxu0 0.0
    %1583 = vmatpush1.msra.mxu0 0.0
    %1584 = vmatprep.subr.mxu0 0.0
    %1585 = vmatpush1.msra.mxu0 0.0
    %1586 = vmatprep.subr.mxu0 0.0
    %1587 = vmatpush1.msra.mxu0 0.0
    %1588 = vmatprep.subr.mxu0 0.0
    %1589 = vmatpush1.msra.mxu0 0.0
    %1590 = vmatprep.subr.mxu0 0.0
    %1591 = vmatpush1.msra.mxu0 0.0
    %1592 = vmatprep.subr.mxu0 0.0
    %1593 = vmatpush1.msra.mxu0 0.0
    %1594 = vmatprep.subr.mxu0 0.0
    %1595 = vmatpush1.msra.mxu0 0.0
    %1596 = vmatprep.subr.mxu0 0.0
    %1597 = vmatpush1.msra.mxu0 0.0
    %1598 = vmatprep.subr.mxu0 0.0
    %1599 = vmatpush1.msra.mxu0 0.0
    %1600 = vmatprep.subr.mxu0 0.0
    %1601 = vmatpush1.msra.mxu0 0.0
    %1602 = vmatprep.subr.mxu0 0.0
    %1603 = vmatpush1.msra.mxu0 0.0
    %1604 = vmatprep.subr.mxu0 0.0
    %1605 = vmatpush1.msra.mxu0 0.0
    %1606 = vmatprep.subr.mxu0 0.0
    %1607 = vmatpush1.msra.mxu0 0.0
    %1608 = vmatprep.subr.mxu0 0.0
    %1609 = vmatpush1.msra.mxu0 0.0
    %1610 = vmatprep.subr.mxu0 0.0
    %1611 = vmatpush1.msra.mxu0 0.0
    %1612 = vmatprep.subr.mxu0 0.0
    %1613 = vmatpush1.msra.mxu0 0.0
    %1614 = vmatprep.subr.mxu0 0.0
    %1615 = vmatpush1.msra.mxu0 0.0
    %1616 = vmatprep.subr.mxu0 0.0
    %1617 = vmatpush1.msra.mxu0 0.0
    %1618 = vmatprep.subr.mxu0 0.0
    %1619 = vmatpush1.msra.mxu0 0.0
    %1620 = vmatprep.subr.mxu0 0.0
    %1621 = vmatpush1.msra.mxu0 0.0
    %1622 = vmatprep.subr.mxu0 0.0
    %1623 = vmatpush1.msra.mxu0 0.0
    %1624 = vmatprep.subr.mxu0 0.0
    %1625 = vmatpush1.msra.mxu0 0.0
    %1626 = vmatprep.subr.mxu0 0.0
    %1627 = vmatpush1.msra.mxu0 0.0
    %1628 = vmatprep.subr.mxu0 0.0
    %1629 = vmatpush1.msra.mxu0 0.0
    %1630 = vmatprep.mubr.f32.mxu0 0.0
    %v1631 = vand.u32 %v1557, 4294901760
    %v1632 = vsub.f32 %v1557, %v1631
    %v1633 = vand.u32 %v1632, 4294901760
    %v1634 = vsub.f32 %v1632, %v1633
    %v1635 = vand.u32 %v1634, 4294901760
    %1636 = vmatmul.mubr.f32.gmra.mrb[0].mxu0 %v1635
    %v1637 = vpop.f32.mrb[0].mxu0
    %v1638 = vadd.f32 0.0, %v1637
    %v1639 = vpop.f32.mrb[0].mxu0
    %1640 = vmatprep.mubr.f32.mxu0 0.0
    %v1641 = vand.u32 %v1560, 4294901760
    %v1642 = vsub.f32 %v1560, %v1641
    %v1643 = vand.u32 %v1642, 4294901760
    %v1644 = vsub.f32 %v1642, %v1643
    %v1645 = vand.u32 %v1644, 4294901760
    %1646 = vmatmul.mubr.f32.gmra.mrb[0].mxu0 %v1645
    %v1647 = vpop.f32.mrb[0].mxu0
    %v1648 = vadd.f32 0.0, %v1647
    %v1649 = vpop.f32.mrb[0].mxu0
    %1650 = vdwg.mxu0
    %1651 = vmatprep.subr.mxu0 0.0
    %v1652 = vand.u32 %v1551, 4294901760
    %v1653 = vsub.f32 %v1551, %v1652
    %v1654 = vand.u32 %v1653, 4294901760
    %v1655 = vsub.f32 %v1653, %v1654
    %v1656 = vand.u32 %v1655, 4294901760
    %1657 = vmatpush1.msra.mxu0 %v1656
    %1658 = vmatprep.subr.mxu0 0.0
    %v1659 = vand.u32 %v1552, 4294901760
    %v1660 = vsub.f32 %v1552, %v1659
    %v1661 = vand.u32 %v1660, 4294901760
    %v1662 = vsub.f32 %v1660, %v1661
    %v1663 = vand.u32 %v1662, 4294901760
    %1664 = vmatpush1.msra.mxu0 %v1663
    %1665 = vmatprep.subr.mxu0 0.0
    %v1666 = vand.u32 %v1553, 4294901760
    %v1667 = vsub.f32 %v1553, %v1666
    %v1668 = vand.u32 %v1667, 4294901760
    %v1669 = vsub.f32 %v1667, %v1668
    %v1670 = vand.u32 %v1669, 4294901760
    %1671 = vmatpush1.msra.mxu0 %v1670
    %1672 = vmatprep.subr.mxu0 0.0
    %v1673 = vand.u32 %v1554, 4294901760
    %v1674 = vsub.f32 %v1554, %v1673
    %v1675 = vand.u32 %v1674, 4294901760
    %v1676 = vsub.f32 %v1674, %v1675
    %v1677 = vand.u32 %v1676, 4294901760
    %1678 = vmatpush1.msra.mxu0 %v1677
    %1679 = vmatprep.subr.mxu0 0.0
    %1680 = vmatpush1.msra.mxu0 0.0
    %1681 = vmatprep.subr.mxu0 0.0
    %1682 = vmatpush1.msra.mxu0 0.0
    %1683 = vmatprep.subr.mxu0 0.0
    %1684 = vmatpush1.msra.mxu0 0.0
    %1685 = vmatprep.subr.mxu0 0.0
    %1686 = vmatpush1.msra.mxu0 0.0
    %1687 = vmatprep.subr.mxu0 0.0
    %1688 = vmatpush1.msra.mxu0 0.0
    %1689 = vmatprep.subr.mxu0 0.0
    %1690 = vmatpush1.msra.mxu0 0.0
    %1691 = vmatprep.subr.mxu0 0.0
    %1692 = vmatpush1.msra.mxu0 0.0
    %1693 = vmatprep.subr.mxu0 0.0
    %1694 = vmatpush1.msra.mxu0 0.0
    %1695 = vmatprep.subr.mxu0 0.0
    %1696 = vmatpush1.msra.mxu0 0.0
    %1697 = vmatprep.subr.mxu0 0.0
    %1698 = vmatpush1.msra.mxu0 0.0
    %1699 = vmatprep.subr.mxu0 0.0
    %1700 = vmatpush1.msra.mxu0 0.0
    %1701 = vmatprep.subr.mxu0 0.0
    %1702 = vmatpush1.msra.mxu0 0.0
    %1703 = vmatprep.subr.mxu0 0.0
    %1704 = vmatpush1.msra.mxu0 0.0
    %1705 = vmatprep.subr.mxu0 0.0
    %1706 = vmatpush1.msra.mxu0 0.0
    %1707 = vmatprep.subr.mxu0 0.0
    %1708 = vmatpush1.msra.mxu0 0.0
    %1709 = vmatprep.subr.mxu0 0.0
    %1710 = vmatpush1.msra.mxu0 0.0
    %1711 = vmatprep.subr.mxu0 0.0
    %1712 = vmatpush1.msra.mxu0 0.0
    %1713 = vmatprep.subr.mxu0 0.0
    %1714 = vmatpush1.msra.mxu0 0.0
    %1715 = vmatprep.subr.mxu0 0.0
    %1716 = vmatpush1.msra.mxu0 0.0
    %1717 = vmatprep.subr.mxu0 0.0
    %1718 = vmatpush1.msra.mxu0 0.0
    %1719 = vmatprep.subr.mxu0 0.0
    %1720 = vmatpush1.msra.mxu0 0.0
    %1721 = vmatprep.subr.mxu0 0.0
    %1722 = vmatpush1.msra.mxu0 0.0
    %1723 = vmatprep.subr.mxu0 0.0
    %1724 = vmatpush1.msra.mxu0 0.0
    %1725 = vmatprep.subr.mxu0 0.0
    %1726 = vmatpush1.msra.mxu0 0.0
    %1727 = vmatprep.subr.mxu0 0.0
    %1728 = vmatpush1.msra.mxu0 0.0
    %1729 = vmatprep.subr.mxu0 0.0
    %1730 = vmatpush1.msra.mxu0 0.0
    %1731 = vmatprep.subr.mxu0 0.0
    %1732 = vmatpush1.msra.mxu0 0.0
    %1733 = vmatprep.subr.mxu0 0.0
    %1734 = vmatpush1.msra.mxu0 0.0
    %1735 = vmatprep.mubr.f32.mxu0 0.0
    %v1736 = vand.u32 %v1557, 4294901760
    %1737 = vmatmul.mubr.f32.gmra.mrb[0].mxu0 %v1736
    %v1738 = vpop.f32.mrb[0].mxu0
    %v1739 = vadd.f32 %v1638, %v1738
    %v1740 = vpop.f32.mrb[0].mxu0
    %1741 = vmatprep.mubr.f32.mxu0 0.0
    %v1742 = vand.u32 %v1560, 4294901760
    %1743 = vmatmul.mubr.f32.gmra.mrb[0].mxu0 %v1742
    %v1744 = vpop.f32.mrb[0].mxu0
    %v1745 = vadd.f32 %v1648, %v1744
    %v1746 = vpop.f32.mrb[0].mxu0
    %1747 = vdwg.mxu0
    %1748 = vmatprep.subr.mxu0 0.0
    %v1749 = vand.u32 %v1551, 4294901760
    %v1750 = vsub.f32 %v1551, %v1749
    %1751 = vmatpush1.msra.mxu0 %v1750
    %1752 = vmatprep.subr.mxu0 0.0
    %v1753 = vand.u32 %v1552, 4294901760
    %v1754 = vsub.f32 %v1552, %v1753
    %1755 = vmatpush1.msra.mxu0 %v1754
    %1756 = vmatprep.subr.mxu0 0.0
    %v1757 = vand.u32 %v1553, 4294901760
    %v1758 = vsub.f32 %v1553, %v1757
    %1759 = vmatpush1.msra.mxu0 %v1758
    %1760 = vmatprep.subr.mxu0 0.0
    %v1761 = vand.u32 %v1554, 4294901760
    %v1762 = vsub.f32 %v1554, %v1761
    %1763 = vmatpush1.msra.mxu0 %v1762
    %1764 = vmatprep.subr.mxu0 0.0
    %1765 = vmatpush1.msra.mxu0 0.0
    %1766 = vmatprep.subr.mxu0 0.0
    %1767 = vmatpush1.msra.mxu0 0.0
    %1768 = vmatprep.subr.mxu0 0.0
    %1769 = vmatpush1.msra.mxu0 0.0
    %1770 = vmatprep.subr.mxu0 0.0
    %1771 = vmatpush1.msra.mxu0 0.0
    %1772 = vmatprep.subr.mxu0 0.0
    %1773 = vmatpush1.msra.mxu0 0.0
    %1774 = vmatprep.subr.mxu0 0.0
    %1775 = vmatpush1.msra.mxu0 0.0
    %1776 = vmatprep.subr.mxu0 0.0
    %1777 = vmatpush1.msra.mxu0 0.0
    %1778 = vmatprep.subr.mxu0 0.0
    %1779 = vmatpush1.msra.mxu0 0.0
    %1780 = vmatprep.subr.mxu0 0.0
    %1781 = vmatpush1.msra.mxu0 0.0
    %1782 = vmatprep.subr.mxu0 0.0
    %1783 = vmatpush1.msra.mxu0 0.0
    %1784 = vmatprep.subr.mxu0 0.0
    %1785 = vmatpush1.msra.mxu0 0.0
    %1786 = vmatprep.subr.mxu0 0.0
    %1787 = vmatpush1.msra.mxu0 0.0
    %1788 = vmatprep.subr.mxu0 0.0
    %1789 = vmatpush1.msra.mxu0 0.0
    %1790 = vmatprep.subr.mxu0 0.0
    %1791 = vmatpush1.msra.mxu0 0.0
    %1792 = vmatprep.subr.mxu0 0.0
    %1793 = vmatpush1.msra.mxu0 0.0
    %1794 = vmatprep.subr.mxu0 0.0
    %1795 = vmatpush1.msra.mxu0 0.0
    %1796 = vmatprep.subr.mxu0 0.0
    %1797 = vmatpush1.msra.mxu0 0.0
    %1798 = vmatprep.subr.mxu0 0.0
    %1799 = vmatpush1.msra.mxu0 0.0
    %1800 = vmatprep.subr.mxu0 0.0
    %1801 = vmatpush1.msra.mxu0 0.0
    %1802 = vmatprep.subr.mxu0 0.0
    %1803 = vmatpush1.msra.mxu0 0.0
    %1804 = vmatprep.subr.mxu0 0.0
    %1805 = vmatpush1.msra.mxu0 0.0
    %1806 = vmatprep.subr.mxu0 0.0
    %1807 = vmatpush1.msra.mxu0 0.0
    %1808 = vmatprep.subr.mxu0 0.0
    %1809 = vmatpush1.msra.mxu0 0.0
    %1810 = vmatprep.subr.mxu0 0.0
    %1811 = vmatpush1.msra.mxu0 0.0
    %1812 = vmatprep.subr.mxu0 0.0
    %1813 = vmatpush1.msra.mxu0 0.0
    %1814 = vmatprep.subr.mxu0 0.0
    %1815 = vmatpush1.msra.mxu0 0.0
    %1816 = vmatprep.subr.mxu0 0.0
    %1817 = vmatpush1.msra.mxu0 0.0
    %1818 = vmatprep.subr.mxu0 0.0
    %1819 = vmatpush1.msra.mxu0 0.0
    %1820 = vmatprep.mubr.f32.mxu0 0.0
    %v1821 = vand.u32 %v1557, 4294901760
    %v1822 = vsub.f32 %v1557, %v1821
    %1823 = vmatmul.mubr.f32.gmra.mrb[0].mxu0 %v1822
    %v1824 = vpop.f32.mrb[0].mxu0
    %v1825 = vadd.f32 %v1739, %v1824
    %v1826 = vpop.f32.mrb[0].mxu0
    %1827 = vmatprep.mubr.f32.mxu0 0.0
    %v1828 = vand.u32 %v1560, 4294901760
    %v1829 = vsub.f32 %v1560, %v1828
    %1830 = vmatmul.mubr.f32.gmra.mrb[0].mxu0 %v1829
    %v1831 = vpop.f32.mrb[0].mxu0
    %v1832 = vadd.f32 %v1745, %v1831
    %v1833 = vpop.f32.mrb[0].mxu0
    %1834 = vdwg.mxu0
    %1835 = vmatprep.subr.mxu0 0.0
    %v1836 = vand.u32 %v1551, 4294901760
    %1837 = vmatpush1.msra.mxu0 %v1836
    %1838 = vmatprep.subr.mxu0 0.0
    %v1839 = vand.u32 %v1552, 4294901760
    %1840 = vmatpush1.msra.mxu0 %v1839
    %1841 = vmatprep.subr.mxu0 0.0
    %v1842 = vand.u32 %v1553, 4294901760
    %1843 = vmatpush1.msra.mxu0 %v1842
    %1844 = vmatprep.subr.mxu0 0.0
    %v1845 = vand.u32 %v1554, 4294901760
    %1846 = vmatpush1.msra.mxu0 %v1845
    %1847 = vmatprep.subr.mxu0 0.0
    %1848 = vmatpush1.msra.mxu0 0.0
    %1849 = vmatprep.subr.mxu0 0.0
    %1850 = vmatpush1.msra.mxu0 0.0
    %1851 = vmatprep.subr.mxu0 0.0
    %1852 = vmatpush1.msra.mxu0 0.0
    %1853 = vmatprep.subr.mxu0 0.0
    %1854 = vmatpush1.msra.mxu0 0.0
    %1855 = vmatprep.subr.mxu0 0.0
    %1856 = vmatpush1.msra.mxu0 0.0
    %1857 = vmatprep.subr.mxu0 0.0
    %1858 = vmatpush1.msra.mxu0 0.0
    %1859 = vmatprep.subr.mxu0 0.0
    %1860 = vmatpush1.msra.mxu0 0.0
    %1861 = vmatprep.subr.mxu0 0.0
    %1862 = vmatpush1.msra.mxu0 0.0
    %1863 = vmatprep.subr.mxu0 0.0
    %1864 = vmatpush1.msra.mxu0 0.0
    %1865 = vmatprep.subr.mxu0 0.0
    %1866 = vmatpush1.msra.mxu0 0.0
    %1867 = vmatprep.subr.mxu0 0.0
    %1868 = vmatpush1.msra.mxu0 0.0
    %1869 = vmatprep.subr.mxu0 0.0
    %1870 = vmatpush1.msra.mxu0 0.0
    %1871 = vmatprep.subr.mxu0 0.0
    %1872 = vmatpush1.msra.mxu0 0.0
    %1873 = vmatprep.subr.mxu0 0.0
    %1874 = vmatpush1.msra.mxu0 0.0
    %1875 = vmatprep.subr.mxu0 0.0
    %1876 = vmatpush1.msra.mxu0 0.0
    %1877 = vmatprep.subr.mxu0 0.0
    %1878 = vmatpush1.msra.mxu0 0.0
    %1879 = vmatprep.subr.mxu0 0.0
    %1880 = vmatpush1.msra.mxu0 0.0
    %1881 = vmatprep.subr.mxu0 0.0
    %1882 = vmatpush1.msra.mxu0 0.0
    %1883 = vmatprep.subr.mxu0 0.0
    %1884 = vmatpush1.msra.mxu0 0.0
    %1885 = vmatprep.subr.mxu0 0.0
    %1886 = vmatpush1.msra.mxu0 0.0
    %1887 = vmatprep.subr.mxu0 0.0
    %1888 = vmatpush1.msra.mxu0 0.0
    %1889 = vmatprep.subr.mxu0 0.0
    %1890 = vmatpush1.msra.mxu0 0.0
    %1891 = vmatprep.subr.mxu0 0.0
    %1892 = vmatpush1.msra.mxu0 0.0
    %1893 = vmatprep.subr.mxu0 0.0
    %1894 = vmatpush1.msra.mxu0 0.0
    %1895 = vmatprep.subr.mxu0 0.0
    %1896 = vmatpush1.msra.mxu0 0.0
    %1897 = vmatprep.subr.mxu0 0.0
    %1898 = vmatpush1.msra.mxu0 0.0
    %1899 = vmatprep.subr.mxu0 0.0
    %1900 = vmatpush1.msra.mxu0 0.0
    %1901 = vmatprep.subr.mxu0 0.0
    %1902 = vmatpush1.msra.mxu0 0.0
    %1903 = vmatprep.mubr.f32.mxu0 0.0
    %v1904 = vand.u32 %v1557, 4294901760
    %v1905 = vsub.f32 %v1557, %v1904
    %v1906 = vand.u32 %v1905, 4294901760
    %1907 = vmatmul.mubr.f32.gmra.mrb[0].mxu0 %v1906
    %v1908 = vpop.f32.mrb[0].mxu0
    %v1909 = vadd.f32 %v1825, %v1908
    %v1910 = vpop.f32.mrb[0].mxu0
    %1911 = vmatprep.mubr.f32.mxu0 0.0
    %v1912 = vand.u32 %v1560, 4294901760
    %v1913 = vsub.f32 %v1560, %v1912
    %v1914 = vand.u32 %v1913, 4294901760
    %1915 = vmatmul.mubr.f32.gmra.mrb[0].mxu0 %v1914
    %v1916 = vpop.f32.mrb[0].mxu0
    %v1917 = vadd.f32 %v1832, %v1916
    %v1918 = vpop.f32.mrb[0].mxu0
    %1919 = vdwg.mxu0
    %1920 = vmatprep.subr.mxu0 0.0
    %v1921 = vand.u32 %v1551, 4294901760
    %v1922 = vsub.f32 %v1551, %v1921
    %v1923 = vand.u32 %v1922, 4294901760
    %1924 = vmatpush1.msra.mxu0 %v1923
    %1925 = vmatprep.subr.mxu0 0.0
    %v1926 = vand.u32 %v1552, 4294901760
    %v1927 = vsub.f32 %v1552, %v1926
    %v1928 = vand.u32 %v1927, 4294901760
    %1929 = vmatpush1.msra.mxu0 %v1928
    %1930 = vmatprep.subr.mxu0 0.0
    %v1931 = vand.u32 %v1553, 4294901760
    %v1932 = vsub.f32 %v1553, %v1931
    %v1933 = vand.u32 %v1932, 4294901760
    %1934 = vmatpush1.msra.mxu0 %v1933
    %1935 = vmatprep.subr.mxu0 0.0
    %v1936 = vand.u32 %v1554, 4294901760
    %v1937 = vsub.f32 %v1554, %v1936
    %v1938 = vand.u32 %v1937, 4294901760
    %1939 = vmatpush1.msra.mxu0 %v1938
    %1940 = vmatprep.subr.mxu0 0.0
    %1941 = vmatpush1.msra.mxu0 0.0
    %1942 = vmatprep.subr.mxu0 0.0
    %1943 = vmatpush1.msra.mxu0 0.0
    %1944 = vmatprep.subr.mxu0 0.0
    %1945 = vmatpush1.msra.mxu0 0.0
    %1946 = vmatprep.subr.mxu0 0.0
    %1947 = vmatpush1.msra.mxu0 0.0
    %1948 = vmatprep.subr.mxu0 0.0
    %1949 = vmatpush1.msra.mxu0 0.0
    %1950 = vmatprep.subr.mxu0 0.0
    %1951 = vmatpush1.msra.mxu0 0.0
    %1952 = vmatprep.subr.mxu0 0.0
    %1953 = vmatpush1.msra.mxu0 0.0
    %1954 = vmatprep.subr.mxu0 0.0
    %1955 = vmatpush1.msra.mxu0 0.0
    %1956 = vmatprep.subr.mxu0 0.0
    %1957 = vmatpush1.msra.mxu0 0.0
    %1958 = vmatprep.subr.mxu0 0.0
    %1959 = vmatpush1.msra.mxu0 0.0
    %1960 = vmatprep.subr.mxu0 0.0
    %1961 = vmatpush1.msra.mxu0 0.0
    %1962 = vmatprep.subr.mxu0 0.0
    %1963 = vmatpush1.msra.mxu0 0.0
    %1964 = vmatprep.subr.mxu0 0.0
    %1965 = vmatpush1.msra.mxu0 0.0
    %1966 = vmatprep.subr.mxu0 0.0
    %1967 = vmatpush1.msra.mxu0 0.0
    %1968 = vmatprep.subr.mxu0 0.0
    %1969 = vmatpush1.msra.mxu0 0.0
    %1970 = vmatprep.subr.mxu0 0.0
    %1971 = vmatpush1.msra.mxu0 0.0
    %1972 = vmatprep.subr.mxu0 0.0
    %1973 = vmatpush1.msra.mxu0 0.0
    %1974 = vmatprep.subr.mxu0 0.0
    %1975 = vmatpush1.msra.mxu0 0.0
    %1976 = vmatprep.subr.mxu0 0.0
    %1977 = vmatpush1.msra.mxu0 0.0
    %1978 = vmatprep.subr.mxu0 0.0
    %1979 = vmatpush1.msra.mxu0 0.0
    %1980 = vmatprep.subr.mxu0 0.0
    %1981 = vmatpush1.msra.mxu0 0.0
    %1982 = vmatprep.subr.mxu0 0.0
    %1983 = vmatpush1.msra.mxu0 0.0
    %1984 = vmatprep.subr.mxu0 0.0
    %1985 = vmatpush1.msra.mxu0 0.0
    %1986 = vmatprep.subr.mxu0 0.0
    %1987 = vmatpush1.msra.mxu0 0.0
    %1988 = vmatprep.subr.mxu0 0.0
    %1989 = vmatpush1.msra.mxu0 0.0
    %1990 = vmatprep.subr.mxu0 0.0
    %1991 = vmatpush1.msra.mxu0 0.0
    %1992 = vmatprep.subr.mxu0 0.0
    %1993 = vmatpush1.msra.mxu0 0.0
    %1994 = vmatprep.subr.mxu0 0.0
    %1995 = vmatpush1.msra.mxu0 0.0
    %1996 = vmatprep.mubr.f32.mxu0 0.0
    %v1997 = vand.u32 %v1557, 4294901760
    %1998 = vmatmul.mubr.f32.gmra.mrb[0].mxu0 %v1997
    %v1999 = vpop.f32.mrb[0].mxu0
    %v2000 = vadd.f32 %v1909, %v1999
    %v2001 = vpop.f32.mrb[0].mxu0
    %2002 = vmatprep.mubr.f32.mxu0 0.0
    %v2003 = vand.u32 %v1560, 4294901760
    %2004 = vmatmul.mubr.f32.gmra.mrb[0].mxu0 %v2003
    %v2005 = vpop.f32.mrb[0].mxu0
    %v2006 = vadd.f32 %v1917, %v2005
    %v2007 = vpop.f32.mrb[0].mxu0
    %2008 = vdwg.mxu0
    %2009 = vmatprep.subr.mxu0 0.0
    %v2010 = vand.u32 %v1551, 4294901760
    %2011 = vmatpush1.msra.mxu0 %v2010
    %2012 = vmatprep.subr.mxu0 0.0
    %v2013 = vand.u32 %v1552, 4294901760
    %2014 = vmatpush1.msra.mxu0 %v2013
    %2015 = vmatprep.subr.mxu0 0.0
    %v2016 = vand.u32 %v1553, 4294901760
    %2017 = vmatpush1.msra.mxu0 %v2016
    %2018 = vmatprep.subr.mxu0 0.0
    %v2019 = vand.u32 %v1554, 4294901760
    %2020 = vmatpush1.msra.mxu0 %v2019
    %2021 = vmatprep.subr.mxu0 0.0
    %2022 = vmatpush1.msra.mxu0 0.0
    %2023 = vmatprep.subr.mxu0 0.0
    %2024 = vmatpush1.msra.mxu0 0.0
    %2025 = vmatprep.subr.mxu0 0.0
    %2026 = vmatpush1.msra.mxu0 0.0
    %2027 = vmatprep.subr.mxu0 0.0
    %2028 = vmatpush1.msra.mxu0 0.0
    %2029 = vmatprep.subr.mxu0 0.0
    %2030 = vmatpush1.msra.mxu0 0.0
    %2031 = vmatprep.subr.mxu0 0.0
    %2032 = vmatpush1.msra.mxu0 0.0
    %2033 = vmatprep.subr.mxu0 0.0
    %2034 = vmatpush1.msra.mxu0 0.0
    %2035 = vmatprep.subr.mxu0 0.0
    %2036 = vmatpush1.msra.mxu0 0.0
    %2037 = vmatprep.subr.mxu0 0.0
    %2038 = vmatpush1.msra.mxu0 0.0
    %2039 = vmatprep.subr.mxu0 0.0
    %2040 = vmatpush1.msra.mxu0 0.0
    %2041 = vmatprep.subr.mxu0 0.0
    %2042 = vmatpush1.msra.mxu0 0.0
    %2043 = vmatprep.subr.mxu0 0.0
    %2044 = vmatpush1.msra.mxu0 0.0
    %2045 = vmatprep.subr.mxu0 0.0
    %2046 = vmatpush1.msra.mxu0 0.0
    %2047 = vmatprep.subr.mxu0 0.0
    %2048 = vmatpush1.msra.mxu0 0.0
    %2049 = vmatprep.subr.mxu0 0.0
    %2050 = vmatpush1.msra.mxu0 0.0
    %2051 = vmatprep.subr.mxu0 0.0
    %2052 = vmatpush1.msra.mxu0 0.0
    %2053 = vmatprep.subr.mxu0 0.0
    %2054 = vmatpush1.msra.mxu0 0.0
    %2055 = vmatprep.subr.mxu0 0.0
    %2056 = vmatpush1.msra.mxu0 0.0
    %2057 = vmatprep.subr.mxu0 0.0
    %2058 = vmatpush1.msra.mxu0 0.0
    %2059 = vmatprep.subr.mxu0 0.0
    %2060 = vmatpush1.msra.mxu0 0.0
    %2061 = vmatprep.subr.mxu0 0.0
    %2062 = vmatpush1.msra.mxu0 0.0
    %2063 = vmatprep.subr.mxu0 0.0
    %2064 = vmatpush1.msra.mxu0 0.0
    %2065 = vmatprep.subr.mxu0 0.0
    %2066 = vmatpush1.msra.mxu0 0.0
    %2067 = vmatprep.subr.mxu0 0.0
    %2068 = vmatpush1.msra.mxu0 0.0
    %2069 = vmatprep.subr.mxu0 0.0
    %2070 = vmatpush1.msra.mxu0 0.0
    %2071 = vmatprep.subr.mxu0 0.0
    %2072 = vmatpush1.msra.mxu0 0.0
    %2073 = vmatprep.subr.mxu0 0.0
    %2074 = vmatpush1.msra.mxu0 0.0
    %2075 = vmatprep.subr.mxu0 0.0
    %2076 = vmatpush1.msra.mxu0 0.0
    %2077 = vmatprep.mubr.f32.mxu0 0.0
    %v2078 = vand.u32 %v1557, 4294901760
    %2079 = vmatmul.mubr.f32.gmra.mrb[0].mxu0 %v2078
    %v2080 = vpop.f32.mrb[0].mxu0
    %v2081 = vadd.f32 %v2000, %v2080
    %v2082 = vpop.f32.mrb[0].mxu0
    %2083 = vmatprep.mubr.f32.mxu0 0.0
    %v2084 = vand.u32 %v1560, 4294901760
    %2085 = vmatmul.mubr.f32.gmra.mrb[0].mxu0 %v2084
    %v2086 = vpop.f32.mrb[0].mxu0
    %v2087 = vadd.f32 %v2006, %v2086
    %v2088 = vpop.f32.mrb[0].mxu0
    %2089 = vdwg.mxu0
    %v2090 = vadd.f32 %v155, %v2081
    %v2091 = vadd.f32 %v156, %v2087
    %v2092 = vld [vmem:[#allocation7] sm:$0xff]
    %v2093 = vld [vmem:[#allocation7 + $0x8] sm:$0xff]
    %v2094 = vld [vmem:[#allocation7 + $0x10] sm:$0xff]
    %v2095 = vld [vmem:[#allocation7 + $0x18] sm:$0xff]
    %v2096 = vld [vmem:[#allocation7 + $0x20] sm:$0xff]
    %v2097 = vld [vmem:[#allocation7 + $0x28] sm:$0xff]
    %v2098 = vld [vmem:[#allocation7 + $0x30] sm:$0xff]
    %v2099 = vld [vmem:[#allocation7 + $0x38] sm:$0xff]
    %v2100 = vld [vmem:[#allocation7 + $0x40] sm:$0xff]
    %v2101 = vld [vmem:[#allocation7 + $0x48] sm:$0xff]
    %v2102 = vld [vmem:[#allocation7 + $0x50] sm:$0xff]
    %v2103 = vld [vmem:[#allocation7 + $0x58] sm:$0xff]
    %v2104 = vld [vmem:[#allocation7 + $0x60] sm:$0xff]
    %v2105 = vld [vmem:[#allocation7 + $0x68] sm:$0xff]
    %v2106 = vld [vmem:[#allocation7 + $0x70] sm:$0xff]
    %v2107 = vld [vmem:[#allocation7 + $0x78] sm:$0xff]
    %v2108 = vld [vmem:[%s7] sm:$0x1]
    %v2110 = vlaneseq
    %v2111 = vshrl.u32 %v2110, 7
    %v2112 = vsub.s32 0, %v2111
    %v2113 = vrot.slane %v2108, %v2112
    %2115 = vmatprep.subr.mxu0 0.0
    %v2116 = vand.u32 %v2092, 4294901760
    %2117 = vmatpush1.msra.mxu0 %v2116
    %2118 = vmatprep.subr.mxu0 0.0
    %v2119 = vand.u32 %v2093, 4294901760
    %2120 = vmatpush1.msra.mxu0 %v2119
    %2121 = vmatprep.subr.mxu0 0.0
    %v2122 = vand.u32 %v2094, 4294901760
    %2123 = vmatpush1.msra.mxu0 %v2122
    %2124 = vmatprep.subr.mxu0 0.0
    %v2125 = vand.u32 %v2095, 4294901760
    %2126 = vmatpush1.msra.mxu0 %v2125
    %2127 = vmatprep.subr.mxu0 0.0
    %v2128 = vand.u32 %v2096, 4294901760
    %2129 = vmatpush1.msra.mxu0 %v2128
    %2130 = vmatprep.subr.mxu0 0.0
    %v2131 = vand.u32 %v2097, 4294901760
    %2132 = vmatpush1.msra.mxu0 %v2131
    %2133 = vmatprep.subr.mxu0 0.0
    %v2134 = vand.u32 %v2098, 4294901760
    %2135 = vmatpush1.msra.mxu0 %v2134
    %2136 = vmatprep.subr.mxu0 0.0
    %v2137 = vand.u32 %v2099, 4294901760
    %2138 = vmatpush1.msra.mxu0 %v2137
    %2139 = vmatprep.subr.mxu0 0.0
    %v2140 = vand.u32 %v2100, 4294901760
    %2141 = vmatpush1.msra.mxu0 %v2140
    %2142 = vmatprep.subr.mxu0 0.0
    %v2143 = vand.u32 %v2101, 4294901760
    %2144 = vmatpush1.msra.mxu0 %v2143
    %2145 = vmatprep.subr.mxu0 0.0
    %v2146 = vand.u32 %v2102, 4294901760
    %2147 = vmatpush1.msra.mxu0 %v2146
    %2148 = vmatprep.subr.mxu0 0.0
    %v2149 = vand.u32 %v2103, 4294901760
    %2150 = vmatpush1.msra.mxu0 %v2149
    %2151 = vmatprep.subr.mxu0 0.0
    %v2152 = vand.u32 %v2104, 4294901760
    %2153 = vmatpush1.msra.mxu0 %v2152
    %2154 = vmatprep.subr.mxu0 0.0
    %v2155 = vand.u32 %v2105, 4294901760
    %2156 = vmatpush1.msra.mxu0 %v2155
    %2157 = vmatprep.subr.mxu0 0.0
    %v2158 = vand.u32 %v2106, 4294901760
    %2159 = vmatpush1.msra.mxu0 %v2158
    %2160 = vmatprep.subr.mxu0 0.0
    %v2161 = vand.u32 %v2107, 4294901760
    %2162 = vmatpush1.msra.mxu0 %v2161
    %2163 = vmatprep.subr.mxu0 0.0
    %2164 = vmatpush1.msra.mxu0 0.0
    %2165 = vmatprep.subr.mxu0 0.0
    %2166 = vmatpush1.msra.mxu0 0.0
    %2167 = vmatprep.subr.mxu0 0.0
    %2168 = vmatpush1.msra.mxu0 0.0
    %2169 = vmatprep.subr.mxu0 0.0
    %2170 = vmatpush1.msra.mxu0 0.0
    %2171 = vmatprep.subr.mxu0 0.0
    %2172 = vmatpush1.msra.mxu0 0.0
    %2173 = vmatprep.subr.mxu0 0.0
    %2174 = vmatpush1.msra.mxu0 0.0
    %2175 = vmatprep.subr.mxu0 0.0
    %2176 = vmatpush1.msra.mxu0 0.0
    %2177 = vmatprep.subr.mxu0 0.0
    %2178 = vmatpush1.msra.mxu0 0.0
    %2179 = vmatprep.subr.mxu0 0.0
    %2180 = vmatpush1.msra.mxu0 0.0
    %2181 = vmatprep.subr.mxu0 0.0
    %2182 = vmatpush1.msra.mxu0 0.0
    %2183 = vmatprep.subr.mxu0 0.0
    %2184 = vmatpush1.msra.mxu0 0.0
    %2185 = vmatprep.subr.mxu0 0.0
    %2186 = vmatpush1.msra.mxu0 0.0
    %2187 = vmatprep.subr.mxu0 0.0
    %2188 = vmatpush1.msra.mxu0 0.0
    %2189 = vmatprep.subr.mxu0 0.0
    %2190 = vmatpush1.msra.mxu0 0.0
    %2191 = vmatprep.subr.mxu0 0.0
    %2192 = vmatpush1.msra.mxu0 0.0
    %2193 = vmatprep.subr.mxu0 0.0
    %2194 = vmatpush1.msra.mxu0 0.0
    %2195 = vmatprep.mubr.f32.mxu0 0.0
    %v2196 = vand.u32 %v2090, 4294901760
    %v2197 = vsub.f32 %v2090, %v2196
    %v2198 = vand.u32 %v2197, 4294901760
    %v2199 = vsub.f32 %v2197, %v2198
    %v2200 = vand.u32 %v2199, 4294901760
    %2201 = vmatmul.mubr.f32.gmra.mrb[0].mxu0 %v2200
    %v2202 = vpop.f32.mrb[0].mxu0
    %v2203 = vadd.f32 %v2113, %v2202
    %v2204 = vpop.f32.mrb[0].mxu0
    %2205 = vmatprep.mubr.f32.mxu0 0.0
    %v2206 = vand.u32 %v2091, 4294901760
    %v2207 = vsub.f32 %v2091, %v2206
    %v2208 = vand.u32 %v2207, 4294901760
    %v2209 = vsub.f32 %v2207, %v2208
    %v2210 = vand.u32 %v2209, 4294901760
    %2211 = vmatmul.mubr.f32.gmra.mrb[0].mxu0 %v2210
    %v2212 = vpop.f32.mrb[0].mxu0
    %v2213 = vadd.f32 %v2113, %v2212
    %v2214 = vpop.f32.mrb[0].mxu0
    %2215 = vdwg.mxu0
    %2216 = vmatprep.subr.mxu0 0.0
    %v2217 = vand.u32 %v2092, 4294901760
    %v2218 = vsub.f32 %v2092, %v2217
    %v2219 = vand.u32 %v2218, 4294901760
    %v2220 = vsub.f32 %v2218, %v2219
    %v2221 = vand.u32 %v2220, 4294901760
    %2222 = vmatpush1.msra.mxu0 %v2221
    %2223 = vmatprep.subr.mxu0 0.0
    %v2224 = vand.u32 %v2093, 4294901760
    %v2225 = vsub.f32 %v2093, %v2224
    %v2226 = vand.u32 %v2225, 4294901760
    %v2227 = vsub.f32 %v2225, %v2226
    %v2228 = vand.u32 %v2227, 4294901760
    %2229 = vmatpush1.msra.mxu0 %v2228
    %2230 = vmatprep.subr.mxu0 0.0
    %v2231 = vand.u32 %v2094, 4294901760
    %v2232 = vsub.f32 %v2094, %v2231
    %v2233 = vand.u32 %v2232, 4294901760
    %v2234 = vsub.f32 %v2232, %v2233
    %v2235 = vand.u32 %v2234, 4294901760
    %2236 = vmatpush1.msra.mxu0 %v2235
    %2237 = vmatprep.subr.mxu0 0.0
    %v2238 = vand.u32 %v2095, 4294901760
    %v2239 = vsub.f32 %v2095, %v2238
    %v2240 = vand.u32 %v2239, 4294901760
    %v2241 = vsub.f32 %v2239, %v2240
    %v2242 = vand.u32 %v2241, 4294901760
    %2243 = vmatpush1.msra.mxu0 %v2242
    %2244 = vmatprep.subr.mxu0 0.0
    %v2245 = vand.u32 %v2096, 4294901760
    %v2246 = vsub.f32 %v2096, %v2245
    %v2247 = vand.u32 %v2246, 4294901760
    %v2248 = vsub.f32 %v2246, %v2247
    %v2249 = vand.u32 %v2248, 4294901760
    %2250 = vmatpush1.msra.mxu0 %v2249
    %2251 = vmatprep.subr.mxu0 0.0
    %v2252 = vand.u32 %v2097, 4294901760
    %v2253 = vsub.f32 %v2097, %v2252
    %v2254 = vand.u32 %v2253, 4294901760
    %v2255 = vsub.f32 %v2253, %v2254
    %v2256 = vand.u32 %v2255, 4294901760
    %2257 = vmatpush1.msra.mxu0 %v2256
    %2258 = vmatprep.subr.mxu0 0.0
    %v2259 = vand.u32 %v2098, 4294901760
    %v2260 = vsub.f32 %v2098, %v2259
    %v2261 = vand.u32 %v2260, 4294901760
    %v2262 = vsub.f32 %v2260, %v2261
    %v2263 = vand.u32 %v2262, 4294901760
    %2264 = vmatpush1.msra.mxu0 %v2263
    %2265 = vmatprep.subr.mxu0 0.0
    %v2266 = vand.u32 %v2099, 4294901760
    %v2267 = vsub.f32 %v2099, %v2266
    %v2268 = vand.u32 %v2267, 4294901760
    %v2269 = vsub.f32 %v2267, %v2268
    %v2270 = vand.u32 %v2269, 4294901760
    %2271 = vmatpush1.msra.mxu0 %v2270
    %2272 = vmatprep.subr.mxu0 0.0
    %v2273 = vand.u32 %v2100, 4294901760
    %v2274 = vsub.f32 %v2100, %v2273
    %v2275 = vand.u32 %v2274, 4294901760
    %v2276 = vsub.f32 %v2274, %v2275
    %v2277 = vand.u32 %v2276, 4294901760
    %2278 = vmatpush1.msra.mxu0 %v2277
    %2279 = vmatprep.subr.mxu0 0.0
    %v2280 = vand.u32 %v2101, 4294901760
    %v2281 = vsub.f32 %v2101, %v2280
    %v2282 = vand.u32 %v2281, 4294901760
    %v2283 = vsub.f32 %v2281, %v2282
    %v2284 = vand.u32 %v2283, 4294901760
    %2285 = vmatpush1.msra.mxu0 %v2284
    %2286 = vmatprep.subr.mxu0 0.0
    %v2287 = vand.u32 %v2102, 4294901760
    %v2288 = vsub.f32 %v2102, %v2287
    %v2289 = vand.u32 %v2288, 4294901760
    %v2290 = vsub.f32 %v2288, %v2289
    %v2291 = vand.u32 %v2290, 4294901760
    %2292 = vmatpush1.msra.mxu0 %v2291
    %2293 = vmatprep.subr.mxu0 0.0
    %v2294 = vand.u32 %v2103, 4294901760
    %v2295 = vsub.f32 %v2103, %v2294
    %v2296 = vand.u32 %v2295, 4294901760
    %v2297 = vsub.f32 %v2295, %v2296
    %v2298 = vand.u32 %v2297, 4294901760
    %2299 = vmatpush1.msra.mxu0 %v2298
    %2300 = vmatprep.subr.mxu0 0.0
    %v2301 = vand.u32 %v2104, 4294901760
    %v2302 = vsub.f32 %v2104, %v2301
    %v2303 = vand.u32 %v2302, 4294901760
    %v2304 = vsub.f32 %v2302, %v2303
    %v2305 = vand.u32 %v2304, 4294901760
    %2306 = vmatpush1.msra.mxu0 %v2305
    %2307 = vmatprep.subr.mxu0 0.0
    %v2308 = vand.u32 %v2105, 4294901760
    %v2309 = vsub.f32 %v2105, %v2308
    %v2310 = vand.u32 %v2309, 4294901760
    %v2311 = vsub.f32 %v2309, %v2310
    %v2312 = vand.u32 %v2311, 4294901760
    %2313 = vmatpush1.msra.mxu0 %v2312
    %2314 = vmatprep.subr.mxu0 0.0
    %v2315 = vand.u32 %v2106, 4294901760
    %v2316 = vsub.f32 %v2106, %v2315
    %v2317 = vand.u32 %v2316, 4294901760
    %v2318 = vsub.f32 %v2316, %v2317
    %v2319 = vand.u32 %v2318, 4294901760
    %2320 = vmatpush1.msra.mxu0 %v2319
    %2321 = vmatprep.subr.mxu0 0.0
    %v2322 = vand.u32 %v2107, 4294901760
    %v2323 = vsub.f32 %v2107, %v2322
    %v2324 = vand.u32 %v2323, 4294901760
    %v2325 = vsub.f32 %v2323, %v2324
    %v2326 = vand.u32 %v2325, 4294901760
    %2327 = vmatpush1.msra.mxu0 %v2326
    %2328 = vmatprep.subr.mxu0 0.0
    %2329 = vmatpush1.msra.mxu0 0.0
    %2330 = vmatprep.subr.mxu0 0.0
    %2331 = vmatpush1.msra.mxu0 0.0
    %2332 = vmatprep.subr.mxu0 0.0
    %2333 = vmatpush1.msra.mxu0 0.0
    %2334 = vmatprep.subr.mxu0 0.0
    %2335 = vmatpush1.msra.mxu0 0.0
    %2336 = vmatprep.subr.mxu0 0.0
    %2337 = vmatpush1.msra.mxu0 0.0
    %2338 = vmatprep.subr.mxu0 0.0
    %2339 = vmatpush1.msra.mxu0 0.0
    %2340 = vmatprep.subr.mxu0 0.0
    %2341 = vmatpush1.msra.mxu0 0.0
    %2342 = vmatprep.subr.mxu0 0.0
    %2343 = vmatpush1.msra.mxu0 0.0
    %2344 = vmatprep.subr.mxu0 0.0
    %2345 = vmatpush1.msra.mxu0 0.0
    %2346 = vmatprep.subr.mxu0 0.0
    %2347 = vmatpush1.msra.mxu0 0.0
    %2348 = vmatprep.subr.mxu0 0.0
    %2349 = vmatpush1.msra.mxu0 0.0
    %2350 = vmatprep.subr.mxu0 0.0
    %2351 = vmatpush1.msra.mxu0 0.0
    %2352 = vmatprep.subr.mxu0 0.0
    %2353 = vmatpush1.msra.mxu0 0.0
    %2354 = vmatprep.subr.mxu0 0.0
    %2355 = vmatpush1.msra.mxu0 0.0
    %2356 = vmatprep.subr.mxu0 0.0
    %2357 = vmatpush1.msra.mxu0 0.0
    %2358 = vmatprep.subr.mxu0 0.0
    %2359 = vmatpush1.msra.mxu0 0.0
    %2360 = vmatprep.mubr.f32.mxu0 0.0
    %v2361 = vand.u32 %v2090, 4294901760
    %2362 = vmatmul.mubr.f32.gmra.mrb[0].mxu0 %v2361
    %v2363 = vpop.f32.mrb[0].mxu0
    %v2364 = vadd.f32 %v2203, %v2363
    %v2365 = vpop.f32.mrb[0].mxu0
    %2366 = vmatprep.mubr.f32.mxu0 0.0
    %v2367 = vand.u32 %v2091, 4294901760
    %2368 = vmatmul.mubr.f32.gmra.mrb[0].mxu0 %v2367
    %v2369 = vpop.f32.mrb[0].mxu0
    %v2370 = vadd.f32 %v2213, %v2369
    %v2371 = vpop.f32.mrb[0].mxu0
    %2372 = vdwg.mxu0
    %2373 = vmatprep.subr.mxu0 0.0
    %v2374 = vand.u32 %v2092, 4294901760
    %v2375 = vsub.f32 %v2092, %v2374
    %2376 = vmatpush1.msra.mxu0 %v2375
    %2377 = vmatprep.subr.mxu0 0.0
    %v2378 = vand.u32 %v2093, 4294901760
    %v2379 = vsub.f32 %v2093, %v2378
    %2380 = vmatpush1.msra.mxu0 %v2379
    %2381 = vmatprep.subr.mxu0 0.0
    %v2382 = vand.u32 %v2094, 4294901760
    %v2383 = vsub.f32 %v2094, %v2382
    %2384 = vmatpush1.msra.mxu0 %v2383
    %2385 = vmatprep.subr.mxu0 0.0
    %v2386 = vand.u32 %v2095, 4294901760
    %v2387 = vsub.f32 %v2095, %v2386
    %2388 = vmatpush1.msra.mxu0 %v2387
    %2389 = vmatprep.subr.mxu0 0.0
    %v2390 = vand.u32 %v2096, 4294901760
    %v2391 = vsub.f32 %v2096, %v2390
    %2392 = vmatpush1.msra.mxu0 %v2391
    %2393 = vmatprep.subr.mxu0 0.0
    %v2394 = vand.u32 %v2097, 4294901760
    %v2395 = vsub.f32 %v2097, %v2394
    %2396 = vmatpush1.msra.mxu0 %v2395
    %2397 = vmatprep.subr.mxu0 0.0
    %v2398 = vand.u32 %v2098, 4294901760
    %v2399 = vsub.f32 %v2098, %v2398
    %2400 = vmatpush1.msra.mxu0 %v2399
    %2401 = vmatprep.subr.mxu0 0.0
    %v2402 = vand.u32 %v2099, 4294901760
    %v2403 = vsub.f32 %v2099, %v2402
    %2404 = vmatpush1.msra.mxu0 %v2403
    %2405 = vmatprep.subr.mxu0 0.0
    %v2406 = vand.u32 %v2100, 4294901760
    %v2407 = vsub.f32 %v2100, %v2406
    %2408 = vmatpush1.msra.mxu0 %v2407
    %2409 = vmatprep.subr.mxu0 0.0
    %v2410 = vand.u32 %v2101, 4294901760
    %v2411 = vsub.f32 %v2101, %v2410
    %2412 = vmatpush1.msra.mxu0 %v2411
    %2413 = vmatprep.subr.mxu0 0.0
    %v2414 = vand.u32 %v2102, 4294901760
    %v2415 = vsub.f32 %v2102, %v2414
    %2416 = vmatpush1.msra.mxu0 %v2415
    %2417 = vmatprep.subr.mxu0 0.0
    %v2418 = vand.u32 %v2103, 4294901760
    %v2419 = vsub.f32 %v2103, %v2418
    %2420 = vmatpush1.msra.mxu0 %v2419
    %2421 = vmatprep.subr.mxu0 0.0
    %v2422 = vand.u32 %v2104, 4294901760
    %v2423 = vsub.f32 %v2104, %v2422
    %2424 = vmatpush1.msra.mxu0 %v2423
    %2425 = vmatprep.subr.mxu0 0.0
    %v2426 = vand.u32 %v2105, 4294901760
    %v2427 = vsub.f32 %v2105, %v2426
    %2428 = vmatpush1.msra.mxu0 %v2427
    %2429 = vmatprep.subr.mxu0 0.0
    %v2430 = vand.u32 %v2106, 4294901760
    %v2431 = vsub.f32 %v2106, %v2430
    %2432 = vmatpush1.msra.mxu0 %v2431
    %2433 = vmatprep.subr.mxu0 0.0
    %v2434 = vand.u32 %v2107, 4294901760
    %v2435 = vsub.f32 %v2107, %v2434
    %2436 = vmatpush1.msra.mxu0 %v2435
    %2437 = vmatprep.subr.mxu0 0.0
    %2438 = vmatpush1.msra.mxu0 0.0
    %2439 = vmatprep.subr.mxu0 0.0
    %2440 = vmatpush1.msra.mxu0 0.0
    %2441 = vmatprep.subr.mxu0 0.0
    %2442 = vmatpush1.msra.mxu0 0.0
    %2443 = vmatprep.subr.mxu0 0.0
    %2444 = vmatpush1.msra.mxu0 0.0
    %2445 = vmatprep.subr.mxu0 0.0
    %2446 = vmatpush1.msra.mxu0 0.0
    %2447 = vmatprep.subr.mxu0 0.0
    %2448 = vmatpush1.msra.mxu0 0.0
    %2449 = vmatprep.subr.mxu0 0.0
    %2450 = vmatpush1.msra.mxu0 0.0
    %2451 = vmatprep.subr.mxu0 0.0
    %2452 = vmatpush1.msra.mxu0 0.0
    %2453 = vmatprep.subr.mxu0 0.0
    %2454 = vmatpush1.msra.mxu0 0.0
    %2455 = vmatprep.subr.mxu0 0.0
    %2456 = vmatpush1.msra.mxu0 0.0
    %2457 = vmatprep.subr.mxu0 0.0
    %2458 = vmatpush1.msra.mxu0 0.0
    %2459 = vmatprep.subr.mxu0 0.0
    %2460 = vmatpush1.msra.mxu0 0.0
    %2461 = vmatprep.subr.mxu0 0.0
    %2462 = vmatpush1.msra.mxu0 0.0
    %2463 = vmatprep.subr.mxu0 0.0
    %2464 = vmatpush1.msra.mxu0 0.0
    %2465 = vmatprep.subr.mxu0 0.0
    %2466 = vmatpush1.msra.mxu0 0.0
    %2467 = vmatprep.subr.mxu0 0.0
    %2468 = vmatpush1.msra.mxu0 0.0
    %2469 = vmatprep.mubr.f32.mxu0 0.0
    %v2470 = vand.u32 %v2090, 4294901760
    %v2471 = vsub.f32 %v2090, %v2470
    %2472 = vmatmul.mubr.f32.gmra.mrb[0].mxu0 %v2471
    %v2473 = vpop.f32.mrb[0].mxu0
    %v2474 = vadd.f32 %v2364, %v2473
    %v2475 = vpop.f32.mrb[0].mxu0
    %2476 = vmatprep.mubr.f32.mxu0 0.0
    %v2477 = vand.u32 %v2091, 4294901760
    %v2478 = vsub.f32 %v2091, %v2477
    %2479 = vmatmul.mubr.f32.gmra.mrb[0].mxu0 %v2478
    %v2480 = vpop.f32.mrb[0].mxu0
    %v2481 = vadd.f32 %v2370, %v2480
    %v2482 = vpop.f32.mrb[0].mxu0
    %2483 = vdwg.mxu0
    %2484 = vmatprep.subr.mxu0 0.0
    %v2485 = vand.u32 %v2092, 4294901760
    %2486 = vmatpush1.msra.mxu0 %v2485
    %2487 = vmatprep.subr.mxu0 0.0
    %v2488 = vand.u32 %v2093, 4294901760
    %2489 = vmatpush1.msra.mxu0 %v2488
    %2490 = vmatprep.subr.mxu0 0.0
    %v2491 = vand.u32 %v2094, 4294901760
    %2492 = vmatpush1.msra.mxu0 %v2491
    %2493 = vmatprep.subr.mxu0 0.0
    %v2494 = vand.u32 %v2095, 4294901760
    %2495 = vmatpush1.msra.mxu0 %v2494
    %2496 = vmatprep.subr.mxu0 0.0
    %v2497 = vand.u32 %v2096, 4294901760
    %2498 = vmatpush1.msra.mxu0 %v2497
    %2499 = vmatprep.subr.mxu0 0.0
    %v2500 = vand.u32 %v2097, 4294901760
    %2501 = vmatpush1.msra.mxu0 %v2500
    %2502 = vmatprep.subr.mxu0 0.0
    %v2503 = vand.u32 %v2098, 4294901760
    %2504 = vmatpush1.msra.mxu0 %v2503
    %2505 = vmatprep.subr.mxu0 0.0
    %v2506 = vand.u32 %v2099, 4294901760
    %2507 = vmatpush1.msra.mxu0 %v2506
    %2508 = vmatprep.subr.mxu0 0.0
    %v2509 = vand.u32 %v2100, 4294901760
    %2510 = vmatpush1.msra.mxu0 %v2509
    %2511 = vmatprep.subr.mxu0 0.0
    %v2512 = vand.u32 %v2101, 4294901760
    %2513 = vmatpush1.msra.mxu0 %v2512
    %2514 = vmatprep.subr.mxu0 0.0
    %v2515 = vand.u32 %v2102, 4294901760
    %2516 = vmatpush1.msra.mxu0 %v2515
    %2517 = vmatprep.subr.mxu0 0.0
    %v2518 = vand.u32 %v2103, 4294901760
    %2519 = vmatpush1.msra.mxu0 %v2518
    %2520 = vmatprep.subr.mxu0 0.0
    %v2521 = vand.u32 %v2104, 4294901760
    %2522 = vmatpush1.msra.mxu0 %v2521
    %2523 = vmatprep.subr.mxu0 0.0
    %v2524 = vand.u32 %v2105, 4294901760
    %2525 = vmatpush1.msra.mxu0 %v2524
    %2526 = vmatprep.subr.mxu0 0.0
    %v2527 = vand.u32 %v2106, 4294901760
    %2528 = vmatpush1.msra.mxu0 %v2527
    %2529 = vmatprep.subr.mxu0 0.0
    %v2530 = vand.u32 %v2107, 4294901760
    %2531 = vmatpush1.msra.mxu0 %v2530
    %2532 = vmatprep.subr.mxu0 0.0
    %2533 = vmatpush1.msra.mxu0 0.0
    %2534 = vmatprep.subr.mxu0 0.0
    %2535 = vmatpush1.msra.mxu0 0.0
    %2536 = vmatprep.subr.mxu0 0.0
    %2537 = vmatpush1.msra.mxu0 0.0
    %2538 = vmatprep.subr.mxu0 0.0
    %2539 = vmatpush1.msra.mxu0 0.0
    %2540 = vmatprep.subr.mxu0 0.0
    %2541 = vmatpush1.msra.mxu0 0.0
    %2542 = vmatprep.subr.mxu0 0.0
    %2543 = vmatpush1.msra.mxu0 0.0
    %2544 = vmatprep.subr.mxu0 0.0
    %2545 = vmatpush1.msra.mxu0 0.0
    %2546 = vmatprep.subr.mxu0 0.0
    %2547 = vmatpush1.msra.mxu0 0.0
    %2548 = vmatprep.subr.mxu0 0.0
    %2549 = vmatpush1.msra.mxu0 0.0
    %2550 = vmatprep.subr.mxu0 0.0
    %2551 = vmatpush1.msra.mxu0 0.0
    %2552 = vmatprep.subr.mxu0 0.0
    %2553 = vmatpush1.msra.mxu0 0.0
    %2554 = vmatprep.subr.mxu0 0.0
    %2555 = vmatpush1.msra.mxu0 0.0
    %2556 = vmatprep.subr.mxu0 0.0
    %2557 = vmatpush1.msra.mxu0 0.0
    %2558 = vmatprep.subr.mxu0 0.0
    %2559 = vmatpush1.msra.mxu0 0.0
    %2560 = vmatprep.subr.mxu0 0.0
    %2561 = vmatpush1.msra.mxu0 0.0
    %2562 = vmatprep.subr.mxu0 0.0
    %2563 = vmatpush1.msra.mxu0 0.0
    %2564 = vmatprep.mubr.f32.mxu0 0.0
    %v2565 = vand.u32 %v2090, 4294901760
    %v2566 = vsub.f32 %v2090, %v2565
    %v2567 = vand.u32 %v2566, 4294901760
    %2568 = vmatmul.mubr.f32.gmra.mrb[0].mxu0 %v2567
    %v2569 = vpop.f32.mrb[0].mxu0
    %v2570 = vadd.f32 %v2474, %v2569
    %v2571 = vpop.f32.mrb[0].mxu0
    %2572 = vmatprep.mubr.f32.mxu0 0.0
    %v2573 = vand.u32 %v2091, 4294901760
    %v2574 = vsub.f32 %v2091, %v2573
    %v2575 = vand.u32 %v2574, 4294901760
    %2576 = vmatmul.mubr.f32.gmra.mrb[0].mxu0 %v2575
    %v2577 = vpop.f32.mrb[0].mxu0
    %v2578 = vadd.f32 %v2481, %v2577
    %v2579 = vpop.f32.mrb[0].mxu0
    %2580 = vdwg.mxu0
    %2581 = vmatprep.subr.mxu0 0.0
    %v2582 = vand.u32 %v2092, 4294901760
    %v2583 = vsub.f32 %v2092, %v2582
    %v2584 = vand.u32 %v2583, 4294901760
    %2585 = vmatpush1.msra.mxu0 %v2584
    %2586 = vmatprep.subr.mxu0 0.0
    %v2587 = vand.u32 %v2093, 4294901760
    %v2588 = vsub.f32 %v2093, %v2587
    %v2589 = vand.u32 %v2588, 4294901760
    %2590 = vmatpush1.msra.mxu0 %v2589
    %2591 = vmatprep.subr.mxu0 0.0
    %v2592 = vand.u32 %v2094, 4294901760
    %v2593 = vsub.f32 %v2094, %v2592
    %v2594 = vand.u32 %v2593, 4294901760
    %2595 = vmatpush1.msra.mxu0 %v2594
    %2596 = vmatprep.subr.mxu0 0.0
    %v2597 = vand.u32 %v2095, 4294901760
    %v2598 = vsub.f32 %v2095, %v2597
    %v2599 = vand.u32 %v2598, 4294901760
    %2600 = vmatpush1.msra.mxu0 %v2599
    %2601 = vmatprep.subr.mxu0 0.0
    %v2602 = vand.u32 %v2096, 4294901760
    %v2603 = vsub.f32 %v2096, %v2602
    %v2604 = vand.u32 %v2603, 4294901760
    %2605 = vmatpush1.msra.mxu0 %v2604
    %2606 = vmatprep.subr.mxu0 0.0
    %v2607 = vand.u32 %v2097, 4294901760
    %v2608 = vsub.f32 %v2097, %v2607
    %v2609 = vand.u32 %v2608, 4294901760
    %2610 = vmatpush1.msra.mxu0 %v2609
    %2611 = vmatprep.subr.mxu0 0.0
    %v2612 = vand.u32 %v2098, 4294901760
    %v2613 = vsub.f32 %v2098, %v2612
    %v2614 = vand.u32 %v2613, 4294901760
    %2615 = vmatpush1.msra.mxu0 %v2614
    %2616 = vmatprep.subr.mxu0 0.0
    %v2617 = vand.u32 %v2099, 4294901760
    %v2618 = vsub.f32 %v2099, %v2617
    %v2619 = vand.u32 %v2618, 4294901760
    %2620 = vmatpush1.msra.mxu0 %v2619
    %2621 = vmatprep.subr.mxu0 0.0
    %v2622 = vand.u32 %v2100, 4294901760
    %v2623 = vsub.f32 %v2100, %v2622
    %v2624 = vand.u32 %v2623, 4294901760
    %2625 = vmatpush1.msra.mxu0 %v2624
    %2626 = vmatprep.subr.mxu0 0.0
    %v2627 = vand.u32 %v2101, 4294901760
    %v2628 = vsub.f32 %v2101, %v2627
    %v2629 = vand.u32 %v2628, 4294901760
    %2630 = vmatpush1.msra.mxu0 %v2629
    %2631 = vmatprep.subr.mxu0 0.0
    %v2632 = vand.u32 %v2102, 4294901760
    %v2633 = vsub.f32 %v2102, %v2632
    %v2634 = vand.u32 %v2633, 4294901760
    %2635 = vmatpush1.msra.mxu0 %v2634
    %2636 = vmatprep.subr.mxu0 0.0
    %v2637 = vand.u32 %v2103, 4294901760
    %v2638 = vsub.f32 %v2103, %v2637
    %v2639 = vand.u32 %v2638, 4294901760
    %2640 = vmatpush1.msra.mxu0 %v2639
    %2641 = vmatprep.subr.mxu0 0.0
    %v2642 = vand.u32 %v2104, 4294901760
    %v2643 = vsub.f32 %v2104, %v2642
    %v2644 = vand.u32 %v2643, 4294901760
    %2645 = vmatpush1.msra.mxu0 %v2644
    %2646 = vmatprep.subr.mxu0 0.0
    %v2647 = vand.u32 %v2105, 4294901760
    %v2648 = vsub.f32 %v2105, %v2647
    %v2649 = vand.u32 %v2648, 4294901760
    %2650 = vmatpush1.msra.mxu0 %v2649
    %2651 = vmatprep.subr.mxu0 0.0
    %v2652 = vand.u32 %v2106, 4294901760
    %v2653 = vsub.f32 %v2106, %v2652
    %v2654 = vand.u32 %v2653, 4294901760
    %2655 = vmatpush1.msra.mxu0 %v2654
    %2656 = vmatprep.subr.mxu0 0.0
    %v2657 = vand.u32 %v2107, 4294901760
    %v2658 = vsub.f32 %v2107, %v2657
    %v2659 = vand.u32 %v2658, 4294901760
    %2660 = vmatpush1.msra.mxu0 %v2659
    %2661 = vmatprep.subr.mxu0 0.0
    %2662 = vmatpush1.msra.mxu0 0.0
    %2663 = vmatprep.subr.mxu0 0.0
    %2664 = vmatpush1.msra.mxu0 0.0
    %2665 = vmatprep.subr.mxu0 0.0
    %2666 = vmatpush1.msra.mxu0 0.0
    %2667 = vmatprep.subr.mxu0 0.0
    %2668 = vmatpush1.msra.mxu0 0.0
    %2669 = vmatprep.subr.mxu0 0.0
    %2670 = vmatpush1.msra.mxu0 0.0
    %2671 = vmatprep.subr.mxu0 0.0
    %2672 = vmatpush1.msra.mxu0 0.0
    %2673 = vmatprep.subr.mxu0 0.0
    %2674 = vmatpush1.msra.mxu0 0.0
    %2675 = vmatprep.subr.mxu0 0.0
    %2676 = vmatpush1.msra.mxu0 0.0
    %2677 = vmatprep.subr.mxu0 0.0
    %2678 = vmatpush1.msra.mxu0 0.0
    %2679 = vmatprep.subr.mxu0 0.0
    %2680 = vmatpush1.msra.mxu0 0.0
    %2681 = vmatprep.subr.mxu0 0.0
    %2682 = vmatpush1.msra.mxu0 0.0
    %2683 = vmatprep.subr.mxu0 0.0
    %2684 = vmatpush1.msra.mxu0 0.0
    %2685 = vmatprep.subr.mxu0 0.0
    %2686 = vmatpush1.msra.mxu0 0.0
    %2687 = vmatprep.subr.mxu0 0.0
    %2688 = vmatpush1.msra.mxu0 0.0
    %2689 = vmatprep.subr.mxu0 0.0
    %2690 = vmatpush1.msra.mxu0 0.0
    %2691 = vmatprep.subr.mxu0 0.0
    %2692 = vmatpush1.msra.mxu0 0.0
    %2693 = vmatprep.mubr.f32.mxu0 0.0
    %v2694 = vand.u32 %v2090, 4294901760
    %2695 = vmatmul.mubr.f32.gmra.mrb[0].mxu0 %v2694
    %v2696 = vpop.f32.mrb[0].mxu0
    %v2697 = vadd.f32 %v2570, %v2696
    %v2698 = vpop.f32.mrb[0].mxu0
    %2699 = vmatprep.mubr.f32.mxu0 0.0
    %v2700 = vand.u32 %v2091, 4294901760
    %2701 = vmatmul.mubr.f32.gmra.mrb[0].mxu0 %v2700
    %v2702 = vpop.f32.mrb[0].mxu0
    %v2703 = vadd.f32 %v2578, %v2702
    %v2704 = vpop.f32.mrb[0].mxu0
    %2705 = vdwg.mxu0
    %2706 = vmatprep.subr.mxu0 0.0
    %v2707 = vand.u32 %v2092, 4294901760
    %2708 = vmatpush1.msra.mxu0 %v2707
    %2709 = vmatprep.subr.mxu0 0.0
    %v2710 = vand.u32 %v2093, 4294901760
    %2711 = vmatpush1.msra.mxu0 %v2710
    %2712 = vmatprep.subr.mxu0 0.0
    %v2713 = vand.u32 %v2094, 4294901760
    %2714 = vmatpush1.msra.mxu0 %v2713
    %2715 = vmatprep.subr.mxu0 0.0
    %v2716 = vand.u32 %v2095, 4294901760
    %2717 = vmatpush1.msra.mxu0 %v2716
    %2718 = vmatprep.subr.mxu0 0.0
    %v2719 = vand.u32 %v2096, 4294901760
    %2720 = vmatpush1.msra.mxu0 %v2719
    %2721 = vmatprep.subr.mxu0 0.0
    %v2722 = vand.u32 %v2097, 4294901760
    %2723 = vmatpush1.msra.mxu0 %v2722
    %2724 = vmatprep.subr.mxu0 0.0
    %v2725 = vand.u32 %v2098, 4294901760
    %2726 = vmatpush1.msra.mxu0 %v2725
    %2727 = vmatprep.subr.mxu0 0.0
    %v2728 = vand.u32 %v2099, 4294901760
    %2729 = vmatpush1.msra.mxu0 %v2728
    %2730 = vmatprep.subr.mxu0 0.0
    %v2731 = vand.u32 %v2100, 4294901760
    %2732 = vmatpush1.msra.mxu0 %v2731
    %2733 = vmatprep.subr.mxu0 0.0
    %v2734 = vand.u32 %v2101, 4294901760
    %2735 = vmatpush1.msra.mxu0 %v2734
    %2736 = vmatprep.subr.mxu0 0.0
    %v2737 = vand.u32 %v2102, 4294901760
    %2738 = vmatpush1.msra.mxu0 %v2737
    %2739 = vmatprep.subr.mxu0 0.0
    %v2740 = vand.u32 %v2103, 4294901760
    %2741 = vmatpush1.msra.mxu0 %v2740
    %2742 = vmatprep.subr.mxu0 0.0
    %v2743 = vand.u32 %v2104, 4294901760
    %2744 = vmatpush1.msra.mxu0 %v2743
    %2745 = vmatprep.subr.mxu0 0.0
    %v2746 = vand.u32 %v2105, 4294901760
    %2747 = vmatpush1.msra.mxu0 %v2746
    %2748 = vmatprep.subr.mxu0 0.0
    %v2749 = vand.u32 %v2106, 4294901760
    %2750 = vmatpush1.msra.mxu0 %v2749
    %2751 = vmatprep.subr.mxu0 0.0
    %v2752 = vand.u32 %v2107, 4294901760
    %2753 = vmatpush1.msra.mxu0 %v2752
    %2754 = vmatprep.subr.mxu0 0.0
    %2755 = vmatpush1.msra.mxu0 0.0
    %2756 = vmatprep.subr.mxu0 0.0
    %2757 = vmatpush1.msra.mxu0 0.0
    %2758 = vmatprep.subr.mxu0 0.0
    %2759 = vmatpush1.msra.mxu0 0.0
    %2760 = vmatprep.subr.mxu0 0.0
    %2761 = vmatpush1.msra.mxu0 0.0
    %2762 = vmatprep.subr.mxu0 0.0
    %2763 = vmatpush1.msra.mxu0 0.0
    %2764 = vmatprep.subr.mxu0 0.0
    %2765 = vmatpush1.msra.mxu0 0.0
    %2766 = vmatprep.subr.mxu0 0.0
    %2767 = vmatpush1.msra.mxu0 0.0
    %2768 = vmatprep.subr.mxu0 0.0
    %2769 = vmatpush1.msra.mxu0 0.0
    %2770 = vmatprep.subr.mxu0 0.0
    %2771 = vmatpush1.msra.mxu0 0.0
    %2772 = vmatprep.subr.mxu0 0.0
    %2773 = vmatpush1.msra.mxu0 0.0
    %2774 = vmatprep.subr.mxu0 0.0
    %2775 = vmatpush1.msra.mxu0 0.0
    %2776 = vmatprep.subr.mxu0 0.0
    %2777 = vmatpush1.msra.mxu0 0.0
    %2778 = vmatprep.subr.mxu0 0.0
    %2779 = vmatpush1.msra.mxu0 0.0
    %2780 = vmatprep.subr.mxu0 0.0
    %2781 = vmatpush1.msra.mxu0 0.0
    %2782 = vmatprep.subr.mxu0 0.0
    %2783 = vmatpush1.msra.mxu0 0.0
    %2784 = vmatprep.subr.mxu0 0.0
    %2785 = vmatpush1.msra.mxu0 0.0
    %2786 = vmatprep.mubr.f32.mxu0 0.0
    %v2787 = vand.u32 %v2090, 4294901760
    %2788 = vmatmul.mubr.f32.gmra.mrb[0].mxu0 %v2787
    %v2789 = vpop.f32.mrb[0].mxu0
    %v2790 = vadd.f32 %v2697, %v2789
    %v2791 = vpop.f32.mrb[0].mxu0
    %2792 = vmatprep.mubr.f32.mxu0 0.0
    %v2793 = vand.u32 %v2091, 4294901760
    %2794 = vmatmul.mubr.f32.gmra.mrb[0].mxu0 %v2793
    %v2795 = vpop.f32.mrb[0].mxu0
    %v2796 = vadd.f32 %v2703, %v2795
    %v2797 = vpop.f32.mrb[0].mxu0
    %2798 = vdwg.mxu0
    %v2799 = vmax.f32 %v2790, 0.0
    %v2800 = vmax.f32 %v2796, 0.0
    %v2801 = vld [vmem:[#allocation8] sm:$0xff]
    %v2802 = vld [vmem:[#allocation8 + $0x8] sm:$0xff]
    %v2803 = vld [vmem:[#allocation8 + $0x10] sm:$0xff]
    %v2804 = vld [vmem:[#allocation8 + $0x18] sm:$0xff]
    %v2805 = vld [vmem:[#allocation8 + $0x20] sm:$0xff]
    %v2806 = vld [vmem:[#allocation8 + $0x28] sm:$0xff]
    %v2807 = vld [vmem:[#allocation8 + $0x30] sm:$0xff]
    %v2808 = vld [vmem:[#allocation8 + $0x38] sm:$0xff]
    %v2809 = vld [vmem:[#allocation8 + $0x40] sm:$0xff]
    %v2810 = vld [vmem:[#allocation8 + $0x48] sm:$0xff]
    %v2811 = vld [vmem:[#allocation8 + $0x50] sm:$0xff]
    %v2812 = vld [vmem:[#allocation8 + $0x58] sm:$0xff]
    %v2813 = vld [vmem:[#allocation8 + $0x60] sm:$0xff]
    %v2814 = vld [vmem:[#allocation8 + $0x68] sm:$0xff]
    %v2815 = vld [vmem:[#allocation8 + $0x70] sm:$0xff]
    %v2816 = vld [vmem:[#allocation8 + $0x78] sm:$0xff]
    %v2817 = vld [vmem:[%s9] sm:$0x1]
    %v2819 = vlaneseq
    %v2820 = vshrl.u32 %v2819, 7
    %v2821 = vsub.s32 0, %v2820
    %v2822 = vrot.slane %v2817, %v2821
    %2824 = vmatprep.subr.mxu0 0.0
    %v2825 = vand.u32 %v2801, 4294901760
    %2826 = vmatpush1.msra.mxu0 %v2825
    %2827 = vmatprep.subr.mxu0 0.0
    %v2828 = vand.u32 %v2802, 4294901760
    %2829 = vmatpush1.msra.mxu0 %v2828
    %2830 = vmatprep.subr.mxu0 0.0
    %v2831 = vand.u32 %v2803, 4294901760
    %2832 = vmatpush1.msra.mxu0 %v2831
    %2833 = vmatprep.subr.mxu0 0.0
    %v2834 = vand.u32 %v2804, 4294901760
    %2835 = vmatpush1.msra.mxu0 %v2834
    %2836 = vmatprep.subr.mxu0 0.0
    %v2837 = vand.u32 %v2805, 4294901760
    %2838 = vmatpush1.msra.mxu0 %v2837
    %2839 = vmatprep.subr.mxu0 0.0
    %v2840 = vand.u32 %v2806, 4294901760
    %2841 = vmatpush1.msra.mxu0 %v2840
    %2842 = vmatprep.subr.mxu0 0.0
    %v2843 = vand.u32 %v2807, 4294901760
    %2844 = vmatpush1.msra.mxu0 %v2843
    %2845 = vmatprep.subr.mxu0 0.0
    %v2846 = vand.u32 %v2808, 4294901760
    %2847 = vmatpush1.msra.mxu0 %v2846
    %2848 = vmatprep.subr.mxu0 0.0
    %v2849 = vand.u32 %v2809, 4294901760
    %2850 = vmatpush1.msra.mxu0 %v2849
    %2851 = vmatprep.subr.mxu0 0.0
    %v2852 = vand.u32 %v2810, 4294901760
    %2853 = vmatpush1.msra.mxu0 %v2852
    %2854 = vmatprep.subr.mxu0 0.0
    %v2855 = vand.u32 %v2811, 4294901760
    %2856 = vmatpush1.msra.mxu0 %v2855
    %2857 = vmatprep.subr.mxu0 0.0
    %v2858 = vand.u32 %v2812, 4294901760
    %2859 = vmatpush1.msra.mxu0 %v2858
    %2860 = vmatprep.subr.mxu0 0.0
    %v2861 = vand.u32 %v2813, 4294901760
    %2862 = vmatpush1.msra.mxu0 %v2861
    %2863 = vmatprep.subr.mxu0 0.0
    %v2864 = vand.u32 %v2814, 4294901760
    %2865 = vmatpush1.msra.mxu0 %v2864
    %2866 = vmatprep.subr.mxu0 0.0
    %v2867 = vand.u32 %v2815, 4294901760
    %2868 = vmatpush1.msra.mxu0 %v2867
    %2869 = vmatprep.subr.mxu0 0.0
    %v2870 = vand.u32 %v2816, 4294901760
    %2871 = vmatpush1.msra.mxu0 %v2870
    %2872 = vmatprep.subr.mxu0 0.0
    %2873 = vmatpush1.msra.mxu0 0.0
    %2874 = vmatprep.subr.mxu0 0.0
    %2875 = vmatpush1.msra.mxu0 0.0
    %2876 = vmatprep.subr.mxu0 0.0
    %2877 = vmatpush1.msra.mxu0 0.0
    %2878 = vmatprep.subr.mxu0 0.0
    %2879 = vmatpush1.msra.mxu0 0.0
    %2880 = vmatprep.subr.mxu0 0.0
    %2881 = vmatpush1.msra.mxu0 0.0
    %2882 = vmatprep.subr.mxu0 0.0
    %2883 = vmatpush1.msra.mxu0 0.0
    %2884 = vmatprep.subr.mxu0 0.0
    %2885 = vmatpush1.msra.mxu0 0.0
    %2886 = vmatprep.subr.mxu0 0.0
    %2887 = vmatpush1.msra.mxu0 0.0
    %2888 = vmatprep.subr.mxu0 0.0
    %2889 = vmatpush1.msra.mxu0 0.0
    %2890 = vmatprep.subr.mxu0 0.0
    %2891 = vmatpush1.msra.mxu0 0.0
    %2892 = vmatprep.subr.mxu0 0.0
    %2893 = vmatpush1.msra.mxu0 0.0
    %2894 = vmatprep.subr.mxu0 0.0
    %2895 = vmatpush1.msra.mxu0 0.0
    %2896 = vmatprep.subr.mxu0 0.0
    %2897 = vmatpush1.msra.mxu0 0.0
    %2898 = vmatprep.subr.mxu0 0.0
    %2899 = vmatpush1.msra.mxu0 0.0
    %2900 = vmatprep.subr.mxu0 0.0
    %2901 = vmatpush1.msra.mxu0 0.0
    %2902 = vmatprep.subr.mxu0 0.0
    %2903 = vmatpush1.msra.mxu0 0.0
    %2904 = vmatprep.mubr.f32.mxu0 0.0
    %v2905 = vand.u32 %v2799, 4294901760
    %v2906 = vsub.f32 %v2799, %v2905
    %v2907 = vand.u32 %v2906, 4294901760
    %v2908 = vsub.f32 %v2906, %v2907
    %v2909 = vand.u32 %v2908, 4294901760
    %2910 = vmatmul.mubr.f32.gmra.mrb[0].mxu0 %v2909
    %v2911 = vpop.f32.mrb[0].mxu0
    %v2912 = vadd.f32 %v2822, %v2911
    %v2913 = vpop.f32.mrb[0].mxu0
    %2914 = vmatprep.mubr.f32.mxu0 0.0
    %v2915 = vand.u32 %v2800, 4294901760
    %v2916 = vsub.f32 %v2800, %v2915
    %v2917 = vand.u32 %v2916, 4294901760
    %v2918 = vsub.f32 %v2916, %v2917
    %v2919 = vand.u32 %v2918, 4294901760
    %2920 = vmatmul.mubr.f32.gmra.mrb[0].mxu0 %v2919
    %v2921 = vpop.f32.mrb[0].mxu0
    %v2922 = vadd.f32 %v2822, %v2921
    %v2923 = vpop.f32.mrb[0].mxu0
    %2924 = vdwg.mxu0
    %2925 = vmatprep.subr.mxu0 0.0
    %v2926 = vand.u32 %v2801, 4294901760
    %v2927 = vsub.f32 %v2801, %v2926
    %v2928 = vand.u32 %v2927, 4294901760
    %v2929 = vsub.f32 %v2927, %v2928
    %v2930 = vand.u32 %v2929, 4294901760
    %2931 = vmatpush1.msra.mxu0 %v2930
    %2932 = vmatprep.subr.mxu0 0.0
    %v2933 = vand.u32 %v2802, 4294901760
    %v2934 = vsub.f32 %v2802, %v2933
    %v2935 = vand.u32 %v2934, 4294901760
    %v2936 = vsub.f32 %v2934, %v2935
    %v2937 = vand.u32 %v2936, 4294901760
    %2938 = vmatpush1.msra.mxu0 %v2937
    %2939 = vmatprep.subr.mxu0 0.0
    %v2940 = vand.u32 %v2803, 4294901760
    %v2941 = vsub.f32 %v2803, %v2940
    %v2942 = vand.u32 %v2941, 4294901760
    %v2943 = vsub.f32 %v2941, %v2942
    %v2944 = vand.u32 %v2943, 4294901760
    %2945 = vmatpush1.msra.mxu0 %v2944
    %2946 = vmatprep.subr.mxu0 0.0
    %v2947 = vand.u32 %v2804, 4294901760
    %v2948 = vsub.f32 %v2804, %v2947
    %v2949 = vand.u32 %v2948, 4294901760
    %v2950 = vsub.f32 %v2948, %v2949
    %v2951 = vand.u32 %v2950, 4294901760
    %2952 = vmatpush1.msra.mxu0 %v2951
    %2953 = vmatprep.subr.mxu0 0.0
    %v2954 = vand.u32 %v2805, 4294901760
    %v2955 = vsub.f32 %v2805, %v2954
    %v2956 = vand.u32 %v2955, 4294901760
    %v2957 = vsub.f32 %v2955, %v2956
    %v2958 = vand.u32 %v2957, 4294901760
    %2959 = vmatpush1.msra.mxu0 %v2958
    %2960 = vmatprep.subr.mxu0 0.0
    %v2961 = vand.u32 %v2806, 4294901760
    %v2962 = vsub.f32 %v2806, %v2961
    %v2963 = vand.u32 %v2962, 4294901760
    %v2964 = vsub.f32 %v2962, %v2963
    %v2965 = vand.u32 %v2964, 4294901760
    %2966 = vmatpush1.msra.mxu0 %v2965
    %2967 = vmatprep.subr.mxu0 0.0
    %v2968 = vand.u32 %v2807, 4294901760
    %v2969 = vsub.f32 %v2807, %v2968
    %v2970 = vand.u32 %v2969, 4294901760
    %v2971 = vsub.f32 %v2969, %v2970
    %v2972 = vand.u32 %v2971, 4294901760
    %2973 = vmatpush1.msra.mxu0 %v2972
    %2974 = vmatprep.subr.mxu0 0.0
    %v2975 = vand.u32 %v2808, 4294901760
    %v2976 = vsub.f32 %v2808, %v2975
    %v2977 = vand.u32 %v2976, 4294901760
    %v2978 = vsub.f32 %v2976, %v2977
    %v2979 = vand.u32 %v2978, 4294901760
    %2980 = vmatpush1.msra.mxu0 %v2979
    %2981 = vmatprep.subr.mxu0 0.0
    %v2982 = vand.u32 %v2809, 4294901760
    %v2983 = vsub.f32 %v2809, %v2982
    %v2984 = vand.u32 %v2983, 4294901760
    %v2985 = vsub.f32 %v2983, %v2984
    %v2986 = vand.u32 %v2985, 4294901760
    %2987 = vmatpush1.msra.mxu0 %v2986
    %2988 = vmatprep.subr.mxu0 0.0
    %v2989 = vand.u32 %v2810, 4294901760
    %v2990 = vsub.f32 %v2810, %v2989
    %v2991 = vand.u32 %v2990, 4294901760
    %v2992 = vsub.f32 %v2990, %v2991
    %v2993 = vand.u32 %v2992, 4294901760
    %2994 = vmatpush1.msra.mxu0 %v2993
    %2995 = vmatprep.subr.mxu0 0.0
    %v2996 = vand.u32 %v2811, 4294901760
    %v2997 = vsub.f32 %v2811, %v2996
    %v2998 = vand.u32 %v2997, 4294901760
    %v2999 = vsub.f32 %v2997, %v2998
    %v3000 = vand.u32 %v2999, 4294901760
    %3001 = vmatpush1.msra.mxu0 %v3000
    %3002 = vmatprep.subr.mxu0 0.0
    %v3003 = vand.u32 %v2812, 4294901760
    %v3004 = vsub.f32 %v2812, %v3003
    %v3005 = vand.u32 %v3004, 4294901760
    %v3006 = vsub.f32 %v3004, %v3005
    %v3007 = vand.u32 %v3006, 4294901760
    %3008 = vmatpush1.msra.mxu0 %v3007
    %3009 = vmatprep.subr.mxu0 0.0
    %v3010 = vand.u32 %v2813, 4294901760
    %v3011 = vsub.f32 %v2813, %v3010
    %v3012 = vand.u32 %v3011, 4294901760
    %v3013 = vsub.f32 %v3011, %v3012
    %v3014 = vand.u32 %v3013, 4294901760
    %3015 = vmatpush1.msra.mxu0 %v3014
    %3016 = vmatprep.subr.mxu0 0.0
    %v3017 = vand.u32 %v2814, 4294901760
    %v3018 = vsub.f32 %v2814, %v3017
    %v3019 = vand.u32 %v3018, 4294901760
    %v3020 = vsub.f32 %v3018, %v3019
    %v3021 = vand.u32 %v3020, 4294901760
    %3022 = vmatpush1.msra.mxu0 %v3021
    %3023 = vmatprep.subr.mxu0 0.0
    %v3024 = vand.u32 %v2815, 4294901760
    %v3025 = vsub.f32 %v2815, %v3024
    %v3026 = vand.u32 %v3025, 4294901760
    %v3027 = vsub.f32 %v3025, %v3026
    %v3028 = vand.u32 %v3027, 4294901760
    %3029 = vmatpush1.msra.mxu0 %v3028
    %3030 = vmatprep.subr.mxu0 0.0
    %v3031 = vand.u32 %v2816, 4294901760
    %v3032 = vsub.f32 %v2816, %v3031
    %v3033 = vand.u32 %v3032, 4294901760
    %v3034 = vsub.f32 %v3032, %v3033
    %v3035 = vand.u32 %v3034, 4294901760
    %3036 = vmatpush1.msra.mxu0 %v3035
    %3037 = vmatprep.subr.mxu0 0.0
    %3038 = vmatpush1.msra.mxu0 0.0
    %3039 = vmatprep.subr.mxu0 0.0
    %3040 = vmatpush1.msra.mxu0 0.0
    %3041 = vmatprep.subr.mxu0 0.0
    %3042 = vmatpush1.msra.mxu0 0.0
    %3043 = vmatprep.subr.mxu0 0.0
    %3044 = vmatpush1.msra.mxu0 0.0
    %3045 = vmatprep.subr.mxu0 0.0
    %3046 = vmatpush1.msra.mxu0 0.0
    %3047 = vmatprep.subr.mxu0 0.0
    %3048 = vmatpush1.msra.mxu0 0.0
    %3049 = vmatprep.subr.mxu0 0.0
    %3050 = vmatpush1.msra.mxu0 0.0
    %3051 = vmatprep.subr.mxu0 0.0
    %3052 = vmatpush1.msra.mxu0 0.0
    %3053 = vmatprep.subr.mxu0 0.0
    %3054 = vmatpush1.msra.mxu0 0.0
    %3055 = vmatprep.subr.mxu0 0.0
    %3056 = vmatpush1.msra.mxu0 0.0
    %3057 = vmatprep.subr.mxu0 0.0
    %3058 = vmatpush1.msra.mxu0 0.0
    %3059 = vmatprep.subr.mxu0 0.0
    %3060 = vmatpush1.msra.mxu0 0.0
    %3061 = vmatprep.subr.mxu0 0.0
    %3062 = vmatpush1.msra.mxu0 0.0
    %3063 = vmatprep.subr.mxu0 0.0
    %3064 = vmatpush1.msra.mxu0 0.0
    %3065 = vmatprep.subr.mxu0 0.0
    %3066 = vmatpush1.msra.mxu0 0.0
    %3067 = vmatprep.subr.mxu0 0.0
    %3068 = vmatpush1.msra.mxu0 0.0
    %3069 = vmatprep.mubr.f32.mxu0 0.0
    %v3070 = vand.u32 %v2799, 4294901760
    %3071 = vmatmul.mubr.f32.gmra.mrb[0].mxu0 %v3070
    %v3072 = vpop.f32.mrb[0].mxu0
    %v3073 = vadd.f32 %v2912, %v3072
    %v3074 = vpop.f32.mrb[0].mxu0
    %3075 = vmatprep.mubr.f32.mxu0 0.0
    %v3076 = vand.u32 %v2800, 4294901760
    %3077 = vmatmul.mubr.f32.gmra.mrb[0].mxu0 %v3076
    %v3078 = vpop.f32.mrb[0].mxu0
    %v3079 = vadd.f32 %v2922, %v3078
    %v3080 = vpop.f32.mrb[0].mxu0
    %3081 = vdwg.mxu0
    %3082 = vmatprep.subr.mxu0 0.0
    %v3083 = vand.u32 %v2801, 4294901760
    %v3084 = vsub.f32 %v2801, %v3083
    %3085 = vmatpush1.msra.mxu0 %v3084
    %3086 = vmatprep.subr.mxu0 0.0
    %v3087 = vand.u32 %v2802, 4294901760
    %v3088 = vsub.f32 %v2802, %v3087
    %3089 = vmatpush1.msra.mxu0 %v3088
    %3090 = vmatprep.subr.mxu0 0.0
    %v3091 = vand.u32 %v2803, 4294901760
    %v3092 = vsub.f32 %v2803, %v3091
    %3093 = vmatpush1.msra.mxu0 %v3092
    %3094 = vmatprep.subr.mxu0 0.0
    %v3095 = vand.u32 %v2804, 4294901760
    %v3096 = vsub.f32 %v2804, %v3095
    %3097 = vmatpush1.msra.mxu0 %v3096
    %3098 = vmatprep.subr.mxu0 0.0
    %v3099 = vand.u32 %v2805, 4294901760
    %v3100 = vsub.f32 %v2805, %v3099
    %3101 = vmatpush1.msra.mxu0 %v3100
    %3102 = vmatprep.subr.mxu0 0.0
    %v3103 = vand.u32 %v2806, 4294901760
    %v3104 = vsub.f32 %v2806, %v3103
    %3105 = vmatpush1.msra.mxu0 %v3104
    %3106 = vmatprep.subr.mxu0 0.0
    %v3107 = vand.u32 %v2807, 4294901760
    %v3108 = vsub.f32 %v2807, %v3107
    %3109 = vmatpush1.msra.mxu0 %v3108
    %3110 = vmatprep.subr.mxu0 0.0
    %v3111 = vand.u32 %v2808, 4294901760
    %v3112 = vsub.f32 %v2808, %v3111
    %3113 = vmatpush1.msra.mxu0 %v3112
    %3114 = vmatprep.subr.mxu0 0.0
    %v3115 = vand.u32 %v2809, 4294901760
    %v3116 = vsub.f32 %v2809, %v3115
    %3117 = vmatpush1.msra.mxu0 %v3116
    %3118 = vmatprep.subr.mxu0 0.0
    %v3119 = vand.u32 %v2810, 4294901760
    %v3120 = vsub.f32 %v2810, %v3119
    %3121 = vmatpush1.msra.mxu0 %v3120
    %3122 = vmatprep.subr.mxu0 0.0
    %v3123 = vand.u32 %v2811, 4294901760
    %v3124 = vsub.f32 %v2811, %v3123
    %3125 = vmatpush1.msra.mxu0 %v3124
    %3126 = vmatprep.subr.mxu0 0.0
    %v3127 = vand.u32 %v2812, 4294901760
    %v3128 = vsub.f32 %v2812, %v3127
    %3129 = vmatpush1.msra.mxu0 %v3128
    %3130 = vmatprep.subr.mxu0 0.0
    %v3131 = vand.u32 %v2813, 4294901760
    %v3132 = vsub.f32 %v2813, %v3131
    %3133 = vmatpush1.msra.mxu0 %v3132
    %3134 = vmatprep.subr.mxu0 0.0
    %v3135 = vand.u32 %v2814, 4294901760
    %v3136 = vsub.f32 %v2814, %v3135
    %3137 = vmatpush1.msra.mxu0 %v3136
    %3138 = vmatprep.subr.mxu0 0.0
    %v3139 = vand.u32 %v2815, 4294901760
    %v3140 = vsub.f32 %v2815, %v3139
    %3141 = vmatpush1.msra.mxu0 %v3140
    %3142 = vmatprep.subr.mxu0 0.0
    %v3143 = vand.u32 %v2816, 4294901760
    %v3144 = vsub.f32 %v2816, %v3143
    %3145 = vmatpush1.msra.mxu0 %v3144
    %3146 = vmatprep.subr.mxu0 0.0
    %3147 = vmatpush1.msra.mxu0 0.0
    %3148 = vmatprep.subr.mxu0 0.0
    %3149 = vmatpush1.msra.mxu0 0.0
    %3150 = vmatprep.subr.mxu0 0.0
    %3151 = vmatpush1.msra.mxu0 0.0
    %3152 = vmatprep.subr.mxu0 0.0
    %3153 = vmatpush1.msra.mxu0 0.0
    %3154 = vmatprep.subr.mxu0 0.0
    %3155 = vmatpush1.msra.mxu0 0.0
    %3156 = vmatprep.subr.mxu0 0.0
    %3157 = vmatpush1.msra.mxu0 0.0
    %3158 = vmatprep.subr.mxu0 0.0
    %3159 = vmatpush1.msra.mxu0 0.0
    %3160 = vmatprep.subr.mxu0 0.0
    %3161 = vmatpush1.msra.mxu0 0.0
    %3162 = vmatprep.subr.mxu0 0.0
    %3163 = vmatpush1.msra.mxu0 0.0
    %3164 = vmatprep.subr.mxu0 0.0
    %3165 = vmatpush1.msra.mxu0 0.0
    %3166 = vmatprep.subr.mxu0 0.0
    %3167 = vmatpush1.msra.mxu0 0.0
    %3168 = vmatprep.subr.mxu0 0.0
    %3169 = vmatpush1.msra.mxu0 0.0
    %3170 = vmatprep.subr.mxu0 0.0
    %3171 = vmatpush1.msra.mxu0 0.0
    %3172 = vmatprep.subr.mxu0 0.0
    %3173 = vmatpush1.msra.mxu0 0.0
    %3174 = vmatprep.subr.mxu0 0.0
    %3175 = vmatpush1.msra.mxu0 0.0
    %3176 = vmatprep.subr.mxu0 0.0
    %3177 = vmatpush1.msra.mxu0 0.0
    %3178 = vmatprep.mubr.f32.mxu0 0.0
    %v3179 = vand.u32 %v2799, 4294901760
    %v3180 = vsub.f32 %v2799, %v3179
    %3181 = vmatmul.mubr.f32.gmra.mrb[0].mxu0 %v3180
    %v3182 = vpop.f32.mrb[0].mxu0
    %v3183 = vadd.f32 %v3073, %v3182
    %v3184 = vpop.f32.mrb[0].mxu0
    %3185 = vmatprep.mubr.f32.mxu0 0.0
    %v3186 = vand.u32 %v2800, 4294901760
    %v3187 = vsub.f32 %v2800, %v3186
    %3188 = vmatmul.mubr.f32.gmra.mrb[0].mxu0 %v3187
    %v3189 = vpop.f32.mrb[0].mxu0
    %v3190 = vadd.f32 %v3079, %v3189
    %v3191 = vpop.f32.mrb[0].mxu0
    %3192 = vdwg.mxu0
    %3193 = vmatprep.subr.mxu0 0.0
    %v3194 = vand.u32 %v2801, 4294901760
    %3195 = vmatpush1.msra.mxu0 %v3194
    %3196 = vmatprep.subr.mxu0 0.0
    %v3197 = vand.u32 %v2802, 4294901760
    %3198 = vmatpush1.msra.mxu0 %v3197
    %3199 = vmatprep.subr.mxu0 0.0
    %v3200 = vand.u32 %v2803, 4294901760
    %3201 = vmatpush1.msra.mxu0 %v3200
    %3202 = vmatprep.subr.mxu0 0.0
    %v3203 = vand.u32 %v2804, 4294901760
    %3204 = vmatpush1.msra.mxu0 %v3203
    %3205 = vmatprep.subr.mxu0 0.0
    %v3206 = vand.u32 %v2805, 4294901760
    %3207 = vmatpush1.msra.mxu0 %v3206
    %3208 = vmatprep.subr.mxu0 0.0
    %v3209 = vand.u32 %v2806, 4294901760
    %3210 = vmatpush1.msra.mxu0 %v3209
    %3211 = vmatprep.subr.mxu0 0.0
    %v3212 = vand.u32 %v2807, 4294901760
    %3213 = vmatpush1.msra.mxu0 %v3212
    %3214 = vmatprep.subr.mxu0 0.0
    %v3215 = vand.u32 %v2808, 4294901760
    %3216 = vmatpush1.msra.mxu0 %v3215
    %3217 = vmatprep.subr.mxu0 0.0
    %v3218 = vand.u32 %v2809, 4294901760
    %3219 = vmatpush1.msra.mxu0 %v3218
    %3220 = vmatprep.subr.mxu0 0.0
    %v3221 = vand.u32 %v2810, 4294901760
    %3222 = vmatpush1.msra.mxu0 %v3221
    %3223 = vmatprep.subr.mxu0 0.0
    %v3224 = vand.u32 %v2811, 4294901760
    %3225 = vmatpush1.msra.mxu0 %v3224
    %3226 = vmatprep.subr.mxu0 0.0
    %v3227 = vand.u32 %v2812, 4294901760
    %3228 = vmatpush1.msra.mxu0 %v3227
    %3229 = vmatprep.subr.mxu0 0.0
    %v3230 = vand.u32 %v2813, 4294901760
    %3231 = vmatpush1.msra.mxu0 %v3230
    %3232 = vmatprep.subr.mxu0 0.0
    %v3233 = vand.u32 %v2814, 4294901760
    %3234 = vmatpush1.msra.mxu0 %v3233
    %3235 = vmatprep.subr.mxu0 0.0
    %v3236 = vand.u32 %v2815, 4294901760
    %3237 = vmatpush1.msra.mxu0 %v3236
    %3238 = vmatprep.subr.mxu0 0.0
    %v3239 = vand.u32 %v2816, 4294901760
    %3240 = vmatpush1.msra.mxu0 %v3239
    %3241 = vmatprep.subr.mxu0 0.0
    %3242 = vmatpush1.msra.mxu0 0.0
    %3243 = vmatprep.subr.mxu0 0.0
    %3244 = vmatpush1.msra.mxu0 0.0
    %3245 = vmatprep.subr.mxu0 0.0
    %3246 = vmatpush1.msra.mxu0 0.0
    %3247 = vmatprep.subr.mxu0 0.0
    %3248 = vmatpush1.msra.mxu0 0.0
    %3249 = vmatprep.subr.mxu0 0.0
    %3250 = vmatpush1.msra.mxu0 0.0
    %3251 = vmatprep.subr.mxu0 0.0
    %3252 = vmatpush1.msra.mxu0 0.0
    %3253 = vmatprep.subr.mxu0 0.0
    %3254 = vmatpush1.msra.mxu0 0.0
    %3255 = vmatprep.subr.mxu0 0.0
    %3256 = vmatpush1.msra.mxu0 0.0
    %3257 = vmatprep.subr.mxu0 0.0
    %3258 = vmatpush1.msra.mxu0 0.0
    %3259 = vmatprep.subr.mxu0 0.0
    %3260 = vmatpush1.msra.mxu0 0.0
    %3261 = vmatprep.subr.mxu0 0.0
    %3262 = vmatpush1.msra.mxu0 0.0
    %3263 = vmatprep.subr.mxu0 0.0
    %3264 = vmatpush1.msra.mxu0 0.0
    %3265 = vmatprep.subr.mxu0 0.0
    %3266 = vmatpush1.msra.mxu0 0.0
    %3267 = vmatprep.subr.mxu0 0.0
    %3268 = vmatpush1.msra.mxu0 0.0
    %3269 = vmatprep.subr.mxu0 0.0
    %3270 = vmatpush1.msra.mxu0 0.0
    %3271 = vmatprep.subr.mxu0 0.0
    %3272 = vmatpush1.msra.mxu0 0.0
    %3273 = vmatprep.mubr.f32.mxu0 0.0
    %v3274 = vand.u32 %v2799, 4294901760
    %v3275 = vsub.f32 %v2799, %v3274
    %v3276 = vand.u32 %v3275, 4294901760
    %3277 = vmatmul.mubr.f32.gmra.mrb[0].mxu0 %v3276
    %v3278 = vpop.f32.mrb[0].mxu0
    %v3279 = vadd.f32 %v3183, %v3278
    %v3280 = vpop.f32.mrb[0].mxu0
    %3281 = vmatprep.mubr.f32.mxu0 0.0
    %v3282 = vand.u32 %v2800, 4294901760
    %v3283 = vsub.f32 %v2800, %v3282
    %v3284 = vand.u32 %v3283, 4294901760
    %3285 = vmatmul.mubr.f32.gmra.mrb[0].mxu0 %v3284
    %v3286 = vpop.f32.mrb[0].mxu0
    %v3287 = vadd.f32 %v3190, %v3286
    %v3288 = vpop.f32.mrb[0].mxu0
    %3289 = vdwg.mxu0
    %3290 = vmatprep.subr.mxu0 0.0
    %v3291 = vand.u32 %v2801, 4294901760
    %v3292 = vsub.f32 %v2801, %v3291
    %v3293 = vand.u32 %v3292, 4294901760
    %3294 = vmatpush1.msra.mxu0 %v3293
    %3295 = vmatprep.subr.mxu0 0.0
    %v3296 = vand.u32 %v2802, 4294901760
    %v3297 = vsub.f32 %v2802, %v3296
    %v3298 = vand.u32 %v3297, 4294901760
    %3299 = vmatpush1.msra.mxu0 %v3298
    %3300 = vmatprep.subr.mxu0 0.0
    %v3301 = vand.u32 %v2803, 4294901760
    %v3302 = vsub.f32 %v2803, %v3301
    %v3303 = vand.u32 %v3302, 4294901760
    %3304 = vmatpush1.msra.mxu0 %v3303
    %3305 = vmatprep.subr.mxu0 0.0
    %v3306 = vand.u32 %v2804, 4294901760
    %v3307 = vsub.f32 %v2804, %v3306
    %v3308 = vand.u32 %v3307, 4294901760
    %3309 = vmatpush1.msra.mxu0 %v3308
    %3310 = vmatprep.subr.mxu0 0.0
    %v3311 = vand.u32 %v2805, 4294901760
    %v3312 = vsub.f32 %v2805, %v3311
    %v3313 = vand.u32 %v3312, 4294901760
    %3314 = vmatpush1.msra.mxu0 %v3313
    %3315 = vmatprep.subr.mxu0 0.0
    %v3316 = vand.u32 %v2806, 4294901760
    %v3317 = vsub.f32 %v2806, %v3316
    %v3318 = vand.u32 %v3317, 4294901760
    %3319 = vmatpush1.msra.mxu0 %v3318
    %3320 = vmatprep.subr.mxu0 0.0
    %v3321 = vand.u32 %v2807, 4294901760
    %v3322 = vsub.f32 %v2807, %v3321
    %v3323 = vand.u32 %v3322, 4294901760
    %3324 = vmatpush1.msra.mxu0 %v3323
    %3325 = vmatprep.subr.mxu0 0.0
    %v3326 = vand.u32 %v2808, 4294901760
    %v3327 = vsub.f32 %v2808, %v3326
    %v3328 = vand.u32 %v3327, 4294901760
    %3329 = vmatpush1.msra.mxu0 %v3328
    %3330 = vmatprep.subr.mxu0 0.0
    %v3331 = vand.u32 %v2809, 4294901760
    %v3332 = vsub.f32 %v2809, %v3331
    %v3333 = vand.u32 %v3332, 4294901760
    %3334 = vmatpush1.msra.mxu0 %v3333
    %3335 = vmatprep.subr.mxu0 0.0
    %v3336 = vand.u32 %v2810, 4294901760
    %v3337 = vsub.f32 %v2810, %v3336
    %v3338 = vand.u32 %v3337, 4294901760
    %3339 = vmatpush1.msra.mxu0 %v3338
    %3340 = vmatprep.subr.mxu0 0.0
    %v3341 = vand.u32 %v2811, 4294901760
    %v3342 = vsub.f32 %v2811, %v3341
    %v3343 = vand.u32 %v3342, 4294901760
    %3344 = vmatpush1.msra.mxu0 %v3343
    %3345 = vmatprep.subr.mxu0 0.0
    %v3346 = vand.u32 %v2812, 4294901760
    %v3347 = vsub.f32 %v2812, %v3346
    %v3348 = vand.u32 %v3347, 4294901760
    %3349 = vmatpush1.msra.mxu0 %v3348
    %3350 = vmatprep.subr.mxu0 0.0
    %v3351 = vand.u32 %v2813, 4294901760
    %v3352 = vsub.f32 %v2813, %v3351
    %v3353 = vand.u32 %v3352, 4294901760
    %3354 = vmatpush1.msra.mxu0 %v3353
    %3355 = vmatprep.subr.mxu0 0.0
    %v3356 = vand.u32 %v2814, 4294901760
    %v3357 = vsub.f32 %v2814, %v3356
    %v3358 = vand.u32 %v3357, 4294901760
    %3359 = vmatpush1.msra.mxu0 %v3358
    %3360 = vmatprep.subr.mxu0 0.0
    %v3361 = vand.u32 %v2815, 4294901760
    %v3362 = vsub.f32 %v2815, %v3361
    %v3363 = vand.u32 %v3362, 4294901760
    %3364 = vmatpush1.msra.mxu0 %v3363
    %3365 = vmatprep.subr.mxu0 0.0
    %v3366 = vand.u32 %v2816, 4294901760
    %v3367 = vsub.f32 %v2816, %v3366
    %v3368 = vand.u32 %v3367, 4294901760
    %3369 = vmatpush1.msra.mxu0 %v3368
    %3370 = vmatprep.subr.mxu0 0.0
    %3371 = vmatpush1.msra.mxu0 0.0
    %3372 = vmatprep.subr.mxu0 0.0
    %3373 = vmatpush1.msra.mxu0 0.0
    %3374 = vmatprep.subr.mxu0 0.0
    %3375 = vmatpush1.msra.mxu0 0.0
    %3376 = vmatprep.subr.mxu0 0.0
    %3377 = vmatpush1.msra.mxu0 0.0
    %3378 = vmatprep.subr.mxu0 0.0
    %3379 = vmatpush1.msra.mxu0 0.0
    %3380 = vmatprep.subr.mxu0 0.0
    %3381 = vmatpush1.msra.mxu0 0.0
    %3382 = vmatprep.subr.mxu0 0.0
    %3383 = vmatpush1.msra.mxu0 0.0
    %3384 = vmatprep.subr.mxu0 0.0
    %3385 = vmatpush1.msra.mxu0 0.0
    %3386 = vmatprep.subr.mxu0 0.0
    %3387 = vmatpush1.msra.mxu0 0.0
    %3388 = vmatprep.subr.mxu0 0.0
    %3389 = vmatpush1.msra.mxu0 0.0
    %3390 = vmatprep.subr.mxu0 0.0
    %3391 = vmatpush1.msra.mxu0 0.0
    %3392 = vmatprep.subr.mxu0 0.0
    %3393 = vmatpush1.msra.mxu0 0.0
    %3394 = vmatprep.subr.mxu0 0.0
    %3395 = vmatpush1.msra.mxu0 0.0
    %3396 = vmatprep.subr.mxu0 0.0
    %3397 = vmatpush1.msra.mxu0 0.0
    %3398 = vmatprep.subr.mxu0 0.0
    %3399 = vmatpush1.msra.mxu0 0.0
    %3400 = vmatprep.subr.mxu0 0.0
    %3401 = vmatpush1.msra.mxu0 0.0
    %3402 = vmatprep.mubr.f32.mxu0 0.0
    %v3403 = vand.u32 %v2799, 4294901760
    %3404 = vmatmul.mubr.f32.gmra.mrb[0].mxu0 %v3403
    %v3405 = vpop.f32.mrb[0].mxu0
    %v3406 = vadd.f32 %v3279, %v3405
    %v3407 = vpop.f32.mrb[0].mxu0
    %3408 = vmatprep.mubr.f32.mxu0 0.0
    %v3409 = vand.u32 %v2800, 4294901760
    %3410 = vmatmul.mubr.f32.gmra.mrb[0].mxu0 %v3409
    %v3411 = vpop.f32.mrb[0].mxu0
    %v3412 = vadd.f32 %v3287, %v3411
    %v3413 = vpop.f32.mrb[0].mxu0
    %3414 = vdwg.mxu0
    %3415 = vmatprep.subr.mxu0 0.0
    %v3416 = vand.u32 %v2801, 4294901760
    %3417 = vmatpush1.msra.mxu0 %v3416
    %3418 = vmatprep.subr.mxu0 0.0
    %v3419 = vand.u32 %v2802, 4294901760
    %3420 = vmatpush1.msra.mxu0 %v3419
    %3421 = vmatprep.subr.mxu0 0.0
    %v3422 = vand.u32 %v2803, 4294901760
    %3423 = vmatpush1.msra.mxu0 %v3422
    %3424 = vmatprep.subr.mxu0 0.0
    %v3425 = vand.u32 %v2804, 4294901760
    %3426 = vmatpush1.msra.mxu0 %v3425
    %3427 = vmatprep.subr.mxu0 0.0
    %v3428 = vand.u32 %v2805, 4294901760
    %3429 = vmatpush1.msra.mxu0 %v3428
    %3430 = vmatprep.subr.mxu0 0.0
    %v3431 = vand.u32 %v2806, 4294901760
    %3432 = vmatpush1.msra.mxu0 %v3431
    %3433 = vmatprep.subr.mxu0 0.0
    %v3434 = vand.u32 %v2807, 4294901760
    %3435 = vmatpush1.msra.mxu0 %v3434
    %3436 = vmatprep.subr.mxu0 0.0
    %v3437 = vand.u32 %v2808, 4294901760
    %3438 = vmatpush1.msra.mxu0 %v3437
    %3439 = vmatprep.subr.mxu0 0.0
    %v3440 = vand.u32 %v2809, 4294901760
    %3441 = vmatpush1.msra.mxu0 %v3440
    %3442 = vmatprep.subr.mxu0 0.0
    %v3443 = vand.u32 %v2810, 4294901760
    %3444 = vmatpush1.msra.mxu0 %v3443
    %3445 = vmatprep.subr.mxu0 0.0
    %v3446 = vand.u32 %v2811, 4294901760
    %3447 = vmatpush1.msra.mxu0 %v3446
    %3448 = vmatprep.subr.mxu0 0.0
    %v3449 = vand.u32 %v2812, 4294901760
    %3450 = vmatpush1.msra.mxu0 %v3449
    %3451 = vmatprep.subr.mxu0 0.0
    %v3452 = vand.u32 %v2813, 4294901760
    %3453 = vmatpush1.msra.mxu0 %v3452
    %3454 = vmatprep.subr.mxu0 0.0
    %v3455 = vand.u32 %v2814, 4294901760
    %3456 = vmatpush1.msra.mxu0 %v3455
    %3457 = vmatprep.subr.mxu0 0.0
    %v3458 = vand.u32 %v2815, 4294901760
    %3459 = vmatpush1.msra.mxu0 %v3458
    %3460 = vmatprep.subr.mxu0 0.0
    %v3461 = vand.u32 %v2816, 4294901760
    %3462 = vmatpush1.msra.mxu0 %v3461
    %3463 = vmatprep.subr.mxu0 0.0
    %3464 = vmatpush1.msra.mxu0 0.0
    %3465 = vmatprep.subr.mxu0 0.0
    %3466 = vmatpush1.msra.mxu0 0.0
    %3467 = vmatprep.subr.mxu0 0.0
    %3468 = vmatpush1.msra.mxu0 0.0
    %3469 = vmatprep.subr.mxu0 0.0
    %3470 = vmatpush1.msra.mxu0 0.0
    %3471 = vmatprep.subr.mxu0 0.0
    %3472 = vmatpush1.msra.mxu0 0.0
    %3473 = vmatprep.subr.mxu0 0.0
    %3474 = vmatpush1.msra.mxu0 0.0
    %3475 = vmatprep.subr.mxu0 0.0
    %3476 = vmatpush1.msra.mxu0 0.0
    %3477 = vmatprep.subr.mxu0 0.0
    %3478 = vmatpush1.msra.mxu0 0.0
    %3479 = vmatprep.subr.mxu0 0.0
    %3480 = vmatpush1.msra.mxu0 0.0
    %3481 = vmatprep.subr.mxu0 0.0
    %3482 = vmatpush1.msra.mxu0 0.0
    %3483 = vmatprep.subr.mxu0 0.0
    %3484 = vmatpush1.msra.mxu0 0.0
    %3485 = vmatprep.subr.mxu0 0.0
    %3486 = vmatpush1.msra.mxu0 0.0
    %3487 = vmatprep.subr.mxu0 0.0
    %3488 = vmatpush1.msra.mxu0 0.0
    %3489 = vmatprep.subr.mxu0 0.0
    %3490 = vmatpush1.msra.mxu0 0.0
    %3491 = vmatprep.subr.mxu0 0.0
    %3492 = vmatpush1.msra.mxu0 0.0
    %3493 = vmatprep.subr.mxu0 0.0
    %3494 = vmatpush1.msra.mxu0 0.0
    %3495 = vmatprep.mubr.f32.mxu0 0.0
    %v3496 = vand.u32 %v2799, 4294901760
    %3497 = vmatmul.mubr.f32.gmra.mrb[0].mxu0 %v3496
    %v3498 = vpop.f32.mrb[0].mxu0
    %v3499 = vadd.f32 %v3406, %v3498
    %v3500 = vpop.f32.mrb[0].mxu0
    %3501 = vmatprep.mubr.f32.mxu0 0.0
    %v3502 = vand.u32 %v2800, 4294901760
    %3503 = vmatmul.mubr.f32.gmra.mrb[0].mxu0 %v3502
    %v3504 = vpop.f32.mrb[0].mxu0
    %v3505 = vadd.f32 %v3412, %v3504
    %v3506 = vpop.f32.mrb[0].mxu0
    %3507 = vdwg.mxu0
    %v3508 = vmul.f32 %v3499, %v143
    %v3509 = vmul.f32 %v3505, %v144
    %v3510 = vadd.f32 %v3508, %v3509
    %v3511 = vrot.slane %v3510, 4
    %v3512 = vadd.f32 %v3510, %v3511
    %v3513 = vrot.slane %v3512, 2
    %v3514 = vadd.f32 %v3512, %v3513
    %v3515 = vrot.slane %v3514, 1
    %v3516 = vadd.f32 %v3514, %v3515
    %v3517 = vmul.f32 %v3516, 0.1
    %v3518 = vsub.f32 %v3499, %v3517
    %v3519 = vsub.f32 %v3505, %v3517
    %v3520 = vmul.f32 %v3518, %v143
    %v3521 = vmul.f32 %v3519, %v144
    %v3522 = vmul.f32 %v3520, %v3520
    %v3523 = vmul.f32 %v3521, %v3521
    %v3524 = vadd.f32 %v3522, %v3523
    %v3525 = vrot.slane %v3524, 4
    %v3526 = vadd.f32 %v3524, %v3525
    %v3527 = vrot.slane %v3526, 2
    %v3528 = vadd.f32 %v3526, %v3527
    %v3529 = vrot.slane %v3528, 1
    %v3530 = vadd.f32 %v3528, %v3529
    %v3531 = vmul.f32 %v3530, 0.1
    %v3532 = vmax.f32 %v3531, 0.0
    %v3533 = vadd.f32 %v3532, 1e-05
    %v3534 = vrsqrt.pop %v3533
    %v3535 = vmul.f32 %v3518, %v3534
    %v3536 = vmul.f32 %v3519, %v3534
    %v3537 = vld [vmem:[%s10] sm:$0x1]
    %v3539 = vlaneseq
    %v3540 = vshrl.u32 %v3539, 7
    %v3541 = vsub.s32 0, %v3540
    %v3542 = vrot.slane %v3537, %v3541
    %v3544 = vmul.f32 %v3535, %v3542
    %v3545 = vmul.f32 %v3536, %v3542
    %v3546 = vld [vmem:[%s11] sm:$0x1]
    %v3548 = vlaneseq
    %v3549 = vshrl.u32 %v3548, 7
    %v3550 = vsub.s32 0, %v3549
    %v3551 = vrot.slane %v3546, %v3550
    %v3553 = vadd.f32 %v3544, %v3551
    %v3554 = vadd.f32 %v3545, %v3551
    %v3555 = vmax.f32 %v3553, 0.0
    %v3556 = vmax.f32 %v3554, 0.0
    %v3557 = vmul.f32 %v3555, %v143
    %v3558 = vmul.f32 %v3556, %v144
    %s3559 = scalar_lea.vmem [#allocation5], 128
    %v3560 = vld [vmem:[%s3559] sm:$0xff]
    %v3561 = vld [vmem:[%s3559 + $0x8] sm:$0xff]
    %v3562 = vld [vmem:[%s3559 + $0x10] sm:$0xff]
    %v3563 = vld [vmem:[%s3559 + $0x18] sm:$0xff]
    %v3564 = vld [vmem:[%s3559 + $0x20] sm:$0xff]
    %v3565 = vld [vmem:[%s3559 + $0x28] sm:$0xff]
    %v3566 = vld [vmem:[%s3559 + $0x30] sm:$0xff]
    %v3567 = vld [vmem:[%s3559 + $0x38] sm:$0xff]
    %v3568 = vld [vmem:[%s3559 + $0x40] sm:$0xff]
    %v3569 = vld [vmem:[%s3559 + $0x48] sm:$0xff]
    %v3570 = vld [vmem:[%s3559 + $0x50] sm:$0xff]
    %v3571 = vld [vmem:[%s3559 + $0x58] sm:$0xff]
    %v3572 = vld [vmem:[%s3559 + $0x60] sm:$0xff]
    %v3573 = vld [vmem:[%s3559 + $0x68] sm:$0xff]
    %v3574 = vld [vmem:[%s3559 + $0x70] sm:$0xff]
    %v3575 = vld [vmem:[%s3559 + $0x78] sm:$0xff]
    %s3576 = scalar_lea.vmem %s5, 1
    %v3577 = vld [vmem:[%s3576] sm:$0x1]
    %v3579 = vlaneseq
    %v3580 = vshrl.u32 %v3579, 7
    %v3581 = vsub.s32 0, %v3580
    %v3582 = vrot.slane %v3577, %v3581
    %3584 = vmatprep.subr.mxu0 0.0
    %v3585 = vand.u32 %v3560, 4294901760
    %3586 = vmatpush1.msra.mxu0 %v3585
    %3587 = vmatprep.subr.mxu0 0.0
    %v3588 = vand.u32 %v3561, 4294901760
    %3589 = vmatpush1.msra.mxu0 %v3588
    %3590 = vmatprep.subr.mxu0 0.0
    %v3591 = vand.u32 %v3562, 4294901760
    %3592 = vmatpush1.msra.mxu0 %v3591
    %3593 = vmatprep.subr.mxu0 0.0
    %v3594 = vand.u32 %v3563, 4294901760
    %3595 = vmatpush1.msra.mxu0 %v3594
    %3596 = vmatprep.subr.mxu0 0.0
    %v3597 = vand.u32 %v3564, 4294901760
    %3598 = vmatpush1.msra.mxu0 %v3597
    %3599 = vmatprep.subr.mxu0 0.0
    %v3600 = vand.u32 %v3565, 4294901760
    %3601 = vmatpush1.msra.mxu0 %v3600
    %3602 = vmatprep.subr.mxu0 0.0
    %v3603 = vand.u32 %v3566, 4294901760
    %3604 = vmatpush1.msra.mxu0 %v3603
    %3605 = vmatprep.subr.mxu0 0.0
    %v3606 = vand.u32 %v3567, 4294901760
    %3607 = vmatpush1.msra.mxu0 %v3606
    %3608 = vmatprep.subr.mxu0 0.0
    %v3609 = vand.u32 %v3568, 4294901760
    %3610 = vmatpush1.msra.mxu0 %v3609
    %3611 = vmatprep.subr.mxu0 0.0
    %v3612 = vand.u32 %v3569, 4294901760
    %3613 = vmatpush1.msra.mxu0 %v3612
    %3614 = vmatprep.subr.mxu0 0.0
    %v3615 = vand.u32 %v3570, 4294901760
    %3616 = vmatpush1.msra.mxu0 %v3615
    %3617 = vmatprep.subr.mxu0 0.0
    %v3618 = vand.u32 %v3571, 4294901760
    %3619 = vmatpush1.msra.mxu0 %v3618
    %3620 = vmatprep.subr.mxu0 0.0
    %v3621 = vand.u32 %v3572, 4294901760
    %3622 = vmatpush1.msra.mxu0 %v3621
    %3623 = vmatprep.subr.mxu0 0.0
    %v3624 = vand.u32 %v3573, 4294901760
    %3625 = vmatpush1.msra.mxu0 %v3624
    %3626 = vmatprep.subr.mxu0 0.0
    %v3627 = vand.u32 %v3574, 4294901760
    %3628 = vmatpush1.msra.mxu0 %v3627
    %3629 = vmatprep.subr.mxu0 0.0
    %v3630 = vand.u32 %v3575, 4294901760
    %3631 = vmatpush1.msra.mxu0 %v3630
    %3632 = vmatprep.subr.mxu0 0.0
    %3633 = vmatpush1.msra.mxu0 0.0
    %3634 = vmatprep.subr.mxu0 0.0
    %3635 = vmatpush1.msra.mxu0 0.0
    %3636 = vmatprep.subr.mxu0 0.0
    %3637 = vmatpush1.msra.mxu0 0.0
    %3638 = vmatprep.subr.mxu0 0.0
    %3639 = vmatpush1.msra.mxu0 0.0
    %3640 = vmatprep.subr.mxu0 0.0
    %3641 = vmatpush1.msra.mxu0 0.0
    %3642 = vmatprep.subr.mxu0 0.0
    %3643 = vmatpush1.msra.mxu0 0.0
    %3644 = vmatprep.subr.mxu0 0.0
    %3645 = vmatpush1.msra.mxu0 0.0
    %3646 = vmatprep.subr.mxu0 0.0
    %3647 = vmatpush1.msra.mxu0 0.0
    %3648 = vmatprep.subr.mxu0 0.0
    %3649 = vmatpush1.msra.mxu0 0.0
    %3650 = vmatprep.subr.mxu0 0.0
    %3651 = vmatpush1.msra.mxu0 0.0
    %3652 = vmatprep.subr.mxu0 0.0
    %3653 = vmatpush1.msra.mxu0 0.0
    %3654 = vmatprep.subr.mxu0 0.0
    %3655 = vmatpush1.msra.mxu0 0.0
    %3656 = vmatprep.subr.mxu0 0.0
    %3657 = vmatpush1.msra.mxu0 0.0
    %3658 = vmatprep.subr.mxu0 0.0
    %3659 = vmatpush1.msra.mxu0 0.0
    %3660 = vmatprep.subr.mxu0 0.0
    %3661 = vmatpush1.msra.mxu0 0.0
    %3662 = vmatprep.subr.mxu0 0.0
    %3663 = vmatpush1.msra.mxu0 0.0
    %3664 = vmatprep.mubr.f32.mxu0 0.0
    %v3665 = vand.u32 %v151, 4294901760
    %v3666 = vsub.f32 %v151, %v3665
    %v3667 = vand.u32 %v3666, 4294901760
    %v3668 = vsub.f32 %v3666, %v3667
    %v3669 = vand.u32 %v3668, 4294901760
    %3670 = vmatmul.mubr.f32.gmra.mrb[0].mxu0 %v3669
    %v3671 = vpop.f32.mrb[0].mxu0
    %v3672 = vadd.f32 %v3582, %v3671
    %v3673 = vpop.f32.mrb[0].mxu0
    %3674 = vmatprep.mubr.f32.mxu0 0.0
    %v3675 = vand.u32 %v152, 4294901760
    %v3676 = vsub.f32 %v152, %v3675
    %v3677 = vand.u32 %v3676, 4294901760
    %v3678 = vsub.f32 %v3676, %v3677
    %v3679 = vand.u32 %v3678, 4294901760
    %3680 = vmatmul.mubr.f32.gmra.mrb[0].mxu0 %v3679
    %v3681 = vpop.f32.mrb[0].mxu0
    %v3682 = vadd.f32 %v3582, %v3681
    %v3683 = vpop.f32.mrb[0].mxu0
    %3684 = vmatprep.mubr.f32.mxu0 0.0
    %v3685 = vand.u32 %v153, 4294901760
    %v3686 = vsub.f32 %v153, %v3685
    %v3687 = vand.u32 %v3686, 4294901760
    %v3688 = vsub.f32 %v3686, %v3687
    %v3689 = vand.u32 %v3688, 4294901760
    %3690 = vmatmul.mubr.f32.gmra.mrb[0].mxu0 %v3689
    %v3691 = vpop.f32.mrb[0].mxu0
    %v3692 = vadd.f32 %v3582, %v3691
    %v3693 = vpop.f32.mrb[0].mxu0
    %3694 = vmatprep.mubr.f32.mxu0 0.0
    %v3695 = vand.u32 %v154, 4294901760
    %v3696 = vsub.f32 %v154, %v3695
    %v3697 = vand.u32 %v3696, 4294901760
    %v3698 = vsub.f32 %v3696, %v3697
    %v3699 = vand.u32 %v3698, 4294901760
    %3700 = vmatmul.mubr.f32.gmra.mrb[0].mxu0 %v3699
    %v3701 = vpop.f32.mrb[0].mxu0
    %v3702 = vadd.f32 %v3582, %v3701
    %v3703 = vpop.f32.mrb[0].mxu0
    %3704 = vdwg.mxu0
    %3705 = vmatprep.subr.mxu0 0.0
    %v3706 = vand.u32 %v3560, 4294901760
    %v3707 = vsub.f32 %v3560, %v3706
    %v3708 = vand.u32 %v3707, 4294901760
    %v3709 = vsub.f32 %v3707, %v3708
    %v3710 = vand.u32 %v3709, 4294901760
    %3711 = vmatpush1.msra.mxu0 %v3710
    %3712 = vmatprep.subr.mxu0 0.0
    %v3713 = vand.u32 %v3561, 4294901760
    %v3714 = vsub.f32 %v3561, %v3713
    %v3715 = vand.u32 %v3714, 4294901760
    %v3716 = vsub.f32 %v3714, %v3715
    %v3717 = vand.u32 %v3716, 4294901760
    %3718 = vmatpush1.msra.mxu0 %v3717
    %3719 = vmatprep.subr.mxu0 0.0
    %v3720 = vand.u32 %v3562, 4294901760
    %v3721 = vsub.f32 %v3562, %v3720
    %v3722 = vand.u32 %v3721, 4294901760
    %v3723 = vsub.f32 %v3721, %v3722
    %v3724 = vand.u32 %v3723, 4294901760
    %3725 = vmatpush1.msra.mxu0 %v3724
    %3726 = vmatprep.subr.mxu0 0.0
    %v3727 = vand.u32 %v3563, 4294901760
    %v3728 = vsub.f32 %v3563, %v3727
    %v3729 = vand.u32 %v3728, 4294901760
    %v3730 = vsub.f32 %v3728, %v3729
    %v3731 = vand.u32 %v3730, 4294901760
    %3732 = vmatpush1.msra.mxu0 %v3731
    %3733 = vmatprep.subr.mxu0 0.0
    %v3734 = vand.u32 %v3564, 4294901760
    %v3735 = vsub.f32 %v3564, %v3734
    %v3736 = vand.u32 %v3735, 4294901760
    %v3737 = vsub.f32 %v3735, %v3736
    %v3738 = vand.u32 %v3737, 4294901760
    %3739 = vmatpush1.msra.mxu0 %v3738
    %3740 = vmatprep.subr.mxu0 0.0
    %v3741 = vand.u32 %v3565, 4294901760
    %v3742 = vsub.f32 %v3565, %v3741
    %v3743 = vand.u32 %v3742, 4294901760
    %v3744 = vsub.f32 %v3742, %v3743
    %v3745 = vand.u32 %v3744, 4294901760
    %3746 = vmatpush1.msra.mxu0 %v3745
    %3747 = vmatprep.subr.mxu0 0.0
    %v3748 = vand.u32 %v3566, 4294901760
    %v3749 = vsub.f32 %v3566, %v3748
    %v3750 = vand.u32 %v3749, 4294901760
    %v3751 = vsub.f32 %v3749, %v3750
    %v3752 = vand.u32 %v3751, 4294901760
    %3753 = vmatpush1.msra.mxu0 %v3752
    %3754 = vmatprep.subr.mxu0 0.0
    %v3755 = vand.u32 %v3567, 4294901760
    %v3756 = vsub.f32 %v3567, %v3755
    %v3757 = vand.u32 %v3756, 4294901760
    %v3758 = vsub.f32 %v3756, %v3757
    %v3759 = vand.u32 %v3758, 4294901760
    %3760 = vmatpush1.msra.mxu0 %v3759
    %3761 = vmatprep.subr.mxu0 0.0
    %v3762 = vand.u32 %v3568, 4294901760
    %v3763 = vsub.f32 %v3568, %v3762
    %v3764 = vand.u32 %v3763, 4294901760
    %v3765 = vsub.f32 %v3763, %v3764
    %v3766 = vand.u32 %v3765, 4294901760
    %3767 = vmatpush1.msra.mxu0 %v3766
    %3768 = vmatprep.subr.mxu0 0.0
    %v3769 = vand.u32 %v3569, 4294901760
    %v3770 = vsub.f32 %v3569, %v3769
    %v3771 = vand.u32 %v3770, 4294901760
    %v3772 = vsub.f32 %v3770, %v3771
    %v3773 = vand.u32 %v3772, 4294901760
    %3774 = vmatpush1.msra.mxu0 %v3773
    %3775 = vmatprep.subr.mxu0 0.0
    %v3776 = vand.u32 %v3570, 4294901760
    %v3777 = vsub.f32 %v3570, %v3776
    %v3778 = vand.u32 %v3777, 4294901760
    %v3779 = vsub.f32 %v3777, %v3778
    %v3780 = vand.u32 %v3779, 4294901760
    %3781 = vmatpush1.msra.mxu0 %v3780
    %3782 = vmatprep.subr.mxu0 0.0
    %v3783 = vand.u32 %v3571, 4294901760
    %v3784 = vsub.f32 %v3571, %v3783
    %v3785 = vand.u32 %v3784, 4294901760
    %v3786 = vsub.f32 %v3784, %v3785
    %v3787 = vand.u32 %v3786, 4294901760
    %3788 = vmatpush1.msra.mxu0 %v3787
    %3789 = vmatprep.subr.mxu0 0.0
    %v3790 = vand.u32 %v3572, 4294901760
    %v3791 = vsub.f32 %v3572, %v3790
    %v3792 = vand.u32 %v3791, 4294901760
    %v3793 = vsub.f32 %v3791, %v3792
    %v3794 = vand.u32 %v3793, 4294901760
    %3795 = vmatpush1.msra.mxu0 %v3794
    %3796 = vmatprep.subr.mxu0 0.0
    %v3797 = vand.u32 %v3573, 4294901760
    %v3798 = vsub.f32 %v3573, %v3797
    %v3799 = vand.u32 %v3798, 4294901760
    %v3800 = vsub.f32 %v3798, %v3799
    %v3801 = vand.u32 %v3800, 4294901760
    %3802 = vmatpush1.msra.mxu0 %v3801
    %3803 = vmatprep.subr.mxu0 0.0
    %v3804 = vand.u32 %v3574, 4294901760
    %v3805 = vsub.f32 %v3574, %v3804
    %v3806 = vand.u32 %v3805, 4294901760
    %v3807 = vsub.f32 %v3805, %v3806
    %v3808 = vand.u32 %v3807, 4294901760
    %3809 = vmatpush1.msra.mxu0 %v3808
    %3810 = vmatprep.subr.mxu0 0.0
    %v3811 = vand.u32 %v3575, 4294901760
    %v3812 = vsub.f32 %v3575, %v3811
    %v3813 = vand.u32 %v3812, 4294901760
    %v3814 = vsub.f32 %v3812, %v3813
    %v3815 = vand.u32 %v3814, 4294901760
    %3816 = vmatpush1.msra.mxu0 %v3815
    %3817 = vmatprep.subr.mxu0 0.0
    %3818 = vmatpush1.msra.mxu0 0.0
    %3819 = vmatprep.subr.mxu0 0.0
    %3820 = vmatpush1.msra.mxu0 0.0
    %3821 = vmatprep.subr.mxu0 0.0
    %3822 = vmatpush1.msra.mxu0 0.0
    %3823 = vmatprep.subr.mxu0 0.0
    %3824 = vmatpush1.msra.mxu0 0.0
    %3825 = vmatprep.subr.mxu0 0.0
    %3826 = vmatpush1.msra.mxu0 0.0
    %3827 = vmatprep.subr.mxu0 0.0
    %3828 = vmatpush1.msra.mxu0 0.0
    %3829 = vmatprep.subr.mxu0 0.0
    %3830 = vmatpush1.msra.mxu0 0.0
    %3831 = vmatprep.subr.mxu0 0.0
    %3832 = vmatpush1.msra.mxu0 0.0
    %3833 = vmatprep.subr.mxu0 0.0
    %3834 = vmatpush1.msra.mxu0 0.0
    %3835 = vmatprep.subr.mxu0 0.0
    %3836 = vmatpush1.msra.mxu0 0.0
    %3837 = vmatprep.subr.mxu0 0.0
    %3838 = vmatpush1.msra.mxu0 0.0
    %3839 = vmatprep.subr.mxu0 0.0
    %3840 = vmatpush1.msra.mxu0 0.0
    %3841 = vmatprep.subr.mxu0 0.0
    %3842 = vmatpush1.msra.mxu0 0.0
    %3843 = vmatprep.subr.mxu0 0.0
    %3844 = vmatpush1.msra.mxu0 0.0
    %3845 = vmatprep.subr.mxu0 0.0
    %3846 = vmatpush1.msra.mxu0 0.0
    %3847 = vmatprep.subr.mxu0 0.0
    %3848 = vmatpush1.msra.mxu0 0.0
    %3849 = vmatprep.mubr.f32.mxu0 0.0
    %v3850 = vand.u32 %v151, 4294901760
    %3851 = vmatmul.mubr.f32.gmra.mrb[0].mxu0 %v3850
    %v3852 = vpop.f32.mrb[0].mxu0
    %v3853 = vadd.f32 %v3672, %v3852
    %v3854 = vpop.f32.mrb[0].mxu0
    %3855 = vmatprep.mubr.f32.mxu0 0.0
    %v3856 = vand.u32 %v152, 4294901760
    %3857 = vmatmul.mubr.f32.gmra.mrb[0].mxu0 %v3856
    %v3858 = vpop.f32.mrb[0].mxu0
    %v3859 = vadd.f32 %v3682, %v3858
    %v3860 = vpop.f32.mrb[0].mxu0
    %3861 = vmatprep.mubr.f32.mxu0 0.0
    %v3862 = vand.u32 %v153, 4294901760
    %3863 = vmatmul.mubr.f32.gmra.mrb[0].mxu0 %v3862
    %v3864 = vpop.f32.mrb[0].mxu0
    %v3865 = vadd.f32 %v3692, %v3864
    %v3866 = vpop.f32.mrb[0].mxu0
    %3867 = vmatprep.mubr.f32.mxu0 0.0
    %v3868 = vand.u32 %v154, 4294901760
    %3869 = vmatmul.mubr.f32.gmra.mrb[0].mxu0 %v3868
    %v3870 = vpop.f32.mrb[0].mxu0
    %v3871 = vadd.f32 %v3702, %v3870
    %v3872 = vpop.f32.mrb[0].mxu0
    %3873 = vdwg.mxu0
    %3874 = vmatprep.subr.mxu0 0.0
    %v3875 = vand.u32 %v3560, 4294901760
    %v3876 = vsub.f32 %v3560, %v3875
    %3877 = vmatpush1.msra.mxu0 %v3876
    %3878 = vmatprep.subr.mxu0 0.0
    %v3879 = vand.u32 %v3561, 4294901760
    %v3880 = vsub.f32 %v3561, %v3879
    %3881 = vmatpush1.msra.mxu0 %v3880
    %3882 = vmatprep.subr.mxu0 0.0
    %v3883 = vand.u32 %v3562, 4294901760
    %v3884 = vsub.f32 %v3562, %v3883
    %3885 = vmatpush1.msra.mxu0 %v3884
    %3886 = vmatprep.subr.mxu0 0.0
    %v3887 = vand.u32 %v3563, 4294901760
    %v3888 = vsub.f32 %v3563, %v3887
    %3889 = vmatpush1.msra.mxu0 %v3888
    %3890 = vmatprep.subr.mxu0 0.0
    %v3891 = vand.u32 %v3564, 4294901760
    %v3892 = vsub.f32 %v3564, %v3891
    %3893 = vmatpush1.msra.mxu0 %v3892
    %3894 = vmatprep.subr.mxu0 0.0
    %v3895 = vand.u32 %v3565, 4294901760
    %v3896 = vsub.f32 %v3565, %v3895
    %3897 = vmatpush1.msra.mxu0 %v3896
    %3898 = vmatprep.subr.mxu0 0.0
    %v3899 = vand.u32 %v3566, 4294901760
    %v3900 = vsub.f32 %v3566, %v3899
    %3901 = vmatpush1.msra.mxu0 %v3900
    %3902 = vmatprep.subr.mxu0 0.0
    %v3903 = vand.u32 %v3567, 4294901760
    %v3904 = vsub.f32 %v3567, %v3903
    %3905 = vmatpush1.msra.mxu0 %v3904
    %3906 = vmatprep.subr.mxu0 0.0
    %v3907 = vand.u32 %v3568, 4294901760
    %v3908 = vsub.f32 %v3568, %v3907
    %3909 = vmatpush1.msra.mxu0 %v3908
    %3910 = vmatprep.subr.mxu0 0.0
    %v3911 = vand.u32 %v3569, 4294901760
    %v3912 = vsub.f32 %v3569, %v3911
    %3913 = vmatpush1.msra.mxu0 %v3912
    %3914 = vmatprep.subr.mxu0 0.0
    %v3915 = vand.u32 %v3570, 4294901760
    %v3916 = vsub.f32 %v3570, %v3915
    %3917 = vmatpush1.msra.mxu0 %v3916
    %3918 = vmatprep.subr.mxu0 0.0
    %v3919 = vand.u32 %v3571, 4294901760
    %v3920 = vsub.f32 %v3571, %v3919
    %3921 = vmatpush1.msra.mxu0 %v3920
    %3922 = vmatprep.subr.mxu0 0.0
    %v3923 = vand.u32 %v3572, 4294901760
    %v3924 = vsub.f32 %v3572, %v3923
    %3925 = vmatpush1.msra.mxu0 %v3924
    %3926 = vmatprep.subr.mxu0 0.0
    %v3927 = vand.u32 %v3573, 4294901760
    %v3928 = vsub.f32 %v3573, %v3927
    %3929 = vmatpush1.msra.mxu0 %v3928
    %3930 = vmatprep.subr.mxu0 0.0
    %v3931 = vand.u32 %v3574, 4294901760
    %v3932 = vsub.f32 %v3574, %v3931
    %3933 = vmatpush1.msra.mxu0 %v3932
    %3934 = vmatprep.subr.mxu0 0.0
    %v3935 = vand.u32 %v3575, 4294901760
    %v3936 = vsub.f32 %v3575, %v3935
    %3937 = vmatpush1.msra.mxu0 %v3936
    %3938 = vmatprep.subr.mxu0 0.0
    %3939 = vmatpush1.msra.mxu0 0.0
    %3940 = vmatprep.subr.mxu0 0.0
    %3941 = vmatpush1.msra.mxu0 0.0
    %3942 = vmatprep.subr.mxu0 0.0
    %3943 = vmatpush1.msra.mxu0 0.0
    %3944 = vmatprep.subr.mxu0 0.0
    %3945 = vmatpush1.msra.mxu0 0.0
    %3946 = vmatprep.subr.mxu0 0.0
    %3947 = vmatpush1.msra.mxu0 0.0
    %3948 = vmatprep.subr.mxu0 0.0
    %3949 = vmatpush1.msra.mxu0 0.0
    %3950 = vmatprep.subr.mxu0 0.0
    %3951 = vmatpush1.msra.mxu0 0.0
    %3952 = vmatprep.subr.mxu0 0.0
    %3953 = vmatpush1.msra.mxu0 0.0
    %3954 = vmatprep.subr.mxu0 0.0
    %3955 = vmatpush1.msra.mxu0 0.0
    %3956 = vmatprep.subr.mxu0 0.0
    %3957 = vmatpush1.msra.mxu0 0.0
    %3958 = vmatprep.subr.mxu0 0.0
    %3959 = vmatpush1.msra.mxu0 0.0
    %3960 = vmatprep.subr.mxu0 0.0
    %3961 = vmatpush1.msra.mxu0 0.0
    %3962 = vmatprep.subr.mxu0 0.0
    %3963 = vmatpush1.msra.mxu0 0.0
    %3964 = vmatprep.subr.mxu0 0.0
    %3965 = vmatpush1.msra.mxu0 0.0
    %3966 = vmatprep.subr.mxu0 0.0
    %3967 = vmatpush1.msra.mxu0 0.0
    %3968 = vmatprep.subr.mxu0 0.0
    %3969 = vmatpush1.msra.mxu0 0.0
    %3970 = vmatprep.mubr.f32.mxu0 0.0
    %v3971 = vand.u32 %v151, 4294901760
    %v3972 = vsub.f32 %v151, %v3971
    %3973 = vmatmul.mubr.f32.gmra.mrb[0].mxu0 %v3972
    %v3974 = vpop.f32.mrb[0].mxu0
    %v3975 = vadd.f32 %v3853, %v3974
    %v3976 = vpop.f32.mrb[0].mxu0
    %3977 = vmatprep.mubr.f32.mxu0 0.0
    %v3978 = vand.u32 %v152, 4294901760
    %v3979 = vsub.f32 %v152, %v3978
    %3980 = vmatmul.mubr.f32.gmra.mrb[0].mxu0 %v3979
    %v3981 = vpop.f32.mrb[0].mxu0
    %v3982 = vadd.f32 %v3859, %v3981
    %v3983 = vpop.f32.mrb[0].mxu0
    %3984 = vmatprep.mubr.f32.mxu0 0.0
    %v3985 = vand.u32 %v153, 4294901760
    %v3986 = vsub.f32 %v153, %v3985
    %3987 = vmatmul.mubr.f32.gmra.mrb[0].mxu0 %v3986
    %v3988 = vpop.f32.mrb[0].mxu0
    %v3989 = vadd.f32 %v3865, %v3988
    %v3990 = vpop.f32.mrb[0].mxu0
    %3991 = vmatprep.mubr.f32.mxu0 0.0
    %v3992 = vand.u32 %v154, 4294901760
    %v3993 = vsub.f32 %v154, %v3992
    %3994 = vmatmul.mubr.f32.gmra.mrb[0].mxu0 %v3993
    %v3995 = vpop.f32.mrb[0].mxu0
    %v3996 = vadd.f32 %v3871, %v3995
    %v3997 = vpop.f32.mrb[0].mxu0
    %3998 = vdwg.mxu0
    %3999 = vmatprep.subr.mxu0 0.0
    %v4000 = vand.u32 %v3560, 4294901760
    %4001 = vmatpush1.msra.mxu0 %v4000
    %4002 = vmatprep.subr.mxu0 0.0
    %v4003 = vand.u32 %v3561, 4294901760
    %4004 = vmatpush1.msra.mxu0 %v4003
    %4005 = vmatprep.subr.mxu0 0.0
    %v4006 = vand.u32 %v3562, 4294901760
    %4007 = vmatpush1.msra.mxu0 %v4006
    %4008 = vmatprep.subr.mxu0 0.0
    %v4009 = vand.u32 %v3563, 4294901760
    %4010 = vmatpush1.msra.mxu0 %v4009
    %4011 = vmatprep.subr.mxu0 0.0
    %v4012 = vand.u32 %v3564, 4294901760
    %4013 = vmatpush1.msra.mxu0 %v4012
    %4014 = vmatprep.subr.mxu0 0.0
    %v4015 = vand.u32 %v3565, 4294901760
    %4016 = vmatpush1.msra.mxu0 %v4015
    %4017 = vmatprep.subr.mxu0 0.0
    %v4018 = vand.u32 %v3566, 4294901760
    %4019 = vmatpush1.msra.mxu0 %v4018
    %4020 = vmatprep.subr.mxu0 0.0
    %v4021 = vand.u32 %v3567, 4294901760
    %4022 = vmatpush1.msra.mxu0 %v4021
    %4023 = vmatprep.subr.mxu0 0.0
    %v4024 = vand.u32 %v3568, 4294901760
    %4025 = vmatpush1.msra.mxu0 %v4024
    %4026 = vmatprep.subr.mxu0 0.0
    %v4027 = vand.u32 %v3569, 4294901760
    %4028 = vmatpush1.msra.mxu0 %v4027
    %4029 = vmatprep.subr.mxu0 0.0
    %v4030 = vand.u32 %v3570, 4294901760
    %4031 = vmatpush1.msra.mxu0 %v4030
    %4032 = vmatprep.subr.mxu0 0.0
    %v4033 = vand.u32 %v3571, 4294901760
    %4034 = vmatpush1.msra.mxu0 %v4033
    %4035 = vmatprep.subr.mxu0 0.0
    %v4036 = vand.u32 %v3572, 4294901760
    %4037 = vmatpush1.msra.mxu0 %v4036
    %4038 = vmatprep.subr.mxu0 0.0
    %v4039 = vand.u32 %v3573, 4294901760
    %4040 = vmatpush1.msra.mxu0 %v4039
    %4041 = vmatprep.subr.mxu0 0.0
    %v4042 = vand.u32 %v3574, 4294901760
    %4043 = vmatpush1.msra.mxu0 %v4042
    %4044 = vmatprep.subr.mxu0 0.0
    %v4045 = vand.u32 %v3575, 4294901760
    %4046 = vmatpush1.msra.mxu0 %v4045
    %4047 = vmatprep.subr.mxu0 0.0
    %4048 = vmatpush1.msra.mxu0 0.0
    %4049 = vmatprep.subr.mxu0 0.0
    %4050 = vmatpush1.msra.mxu0 0.0
    %4051 = vmatprep.subr.mxu0 0.0
    %4052 = vmatpush1.msra.mxu0 0.0
    %4053 = vmatprep.subr.mxu0 0.0
    %4054 = vmatpush1.msra.mxu0 0.0
    %4055 = vmatprep.subr.mxu0 0.0
    %4056 = vmatpush1.msra.mxu0 0.0
    %4057 = vmatprep.subr.mxu0 0.0
    %4058 = vmatpush1.msra.mxu0 0.0
    %4059 = vmatprep.subr.mxu0 0.0
    %4060 = vmatpush1.msra.mxu0 0.0
    %4061 = vmatprep.subr.mxu0 0.0
    %4062 = vmatpush1.msra.mxu0 0.0
    %4063 = vmatprep.subr.mxu0 0.0
    %4064 = vmatpush1.msra.mxu0 0.0
    %4065 = vmatprep.subr.mxu0 0.0
    %4066 = vmatpush1.msra.mxu0 0.0
    %4067 = vmatprep.subr.mxu0 0.0
    %4068 = vmatpush1.msra.mxu0 0.0
    %4069 = vmatprep.subr.mxu0 0.0
    %4070 = vmatpush1.msra.mxu0 0.0
    %4071 = vmatprep.subr.mxu0 0.0
    %4072 = vmatpush1.msra.mxu0 0.0
    %4073 = vmatprep.subr.mxu0 0.0
    %4074 = vmatpush1.msra.mxu0 0.0
    %4075 = vmatprep.subr.mxu0 0.0
    %4076 = vmatpush1.msra.mxu0 0.0
    %4077 = vmatprep.subr.mxu0 0.0
    %4078 = vmatpush1.msra.mxu0 0.0
    %4079 = vmatprep.mubr.f32.mxu0 0.0
    %v4080 = vand.u32 %v151, 4294901760
    %v4081 = vsub.f32 %v151, %v4080
    %v4082 = vand.u32 %v4081, 4294901760
    %4083 = vmatmul.mubr.f32.gmra.mrb[0].mxu0 %v4082
    %v4084 = vpop.f32.mrb[0].mxu0
    %v4085 = vadd.f32 %v3975, %v4084
    %v4086 = vpop.f32.mrb[0].mxu0
    %4087 = vmatprep.mubr.f32.mxu0 0.0
    %v4088 = vand.u32 %v152, 4294901760
    %v4089 = vsub.f32 %v152, %v4088
    %v4090 = vand.u32 %v4089, 4294901760
    %4091 = vmatmul.mubr.f32.gmra.mrb[0].mxu0 %v4090
    %v4092 = vpop.f32.mrb[0].mxu0
    %v4093 = vadd.f32 %v3982, %v4092
    %v4094 = vpop.f32.mrb[0].mxu0
    %4095 = vmatprep.mubr.f32.mxu0 0.0
    %v4096 = vand.u32 %v153, 4294901760
    %v4097 = vsub.f32 %v153, %v4096
    %v4098 = vand.u32 %v4097, 4294901760
    %4099 = vmatmul.mubr.f32.gmra.mrb[0].mxu0 %v4098
    %v4100 = vpop.f32.mrb[0].mxu0
    %v4101 = vadd.f32 %v3989, %v4100
    %v4102 = vpop.f32.mrb[0].mxu0
    %4103 = vmatprep.mubr.f32.mxu0 0.0
    %v4104 = vand.u32 %v154, 4294901760
    %v4105 = vsub.f32 %v154, %v4104
    %v4106 = vand.u32 %v4105, 4294901760
    %4107 = vmatmul.mubr.f32.gmra.mrb[0].mxu0 %v4106
    %v4108 = vpop.f32.mrb[0].mxu0
    %v4109 = vadd.f32 %v3996, %v4108
    %v4110 = vpop.f32.mrb[0].mxu0
    %4111 = vdwg.mxu0
    %4112 = vmatprep.subr.mxu0 0.0
    %v4113 = vand.u32 %v3560, 4294901760
    %v4114 = vsub.f32 %v3560, %v4113
    %v4115 = vand.u32 %v4114, 4294901760
    %4116 = vmatpush1.msra.mxu0 %v4115
    %4117 = vmatprep.subr.mxu0 0.0
    %v4118 = vand.u32 %v3561, 4294901760
    %v4119 = vsub.f32 %v3561, %v4118
    %v4120 = vand.u32 %v4119, 4294901760
    %4121 = vmatpush1.msra.mxu0 %v4120
    %4122 = vmatprep.subr.mxu0 0.0
    %v4123 = vand.u32 %v3562, 4294901760
    %v4124 = vsub.f32 %v3562, %v4123
    %v4125 = vand.u32 %v4124, 4294901760
    %4126 = vmatpush1.msra.mxu0 %v4125
    %4127 = vmatprep.subr.mxu0 0.0
    %v4128 = vand.u32 %v3563, 4294901760
    %v4129 = vsub.f32 %v3563, %v4128
    %v4130 = vand.u32 %v4129, 4294901760
    %4131 = vmatpush1.msra.mxu0 %v4130
    %4132 = vmatprep.subr.mxu0 0.0
    %v4133 = vand.u32 %v3564, 4294901760
    %v4134 = vsub.f32 %v3564, %v4133
    %v4135 = vand.u32 %v4134, 4294901760
    %4136 = vmatpush1.msra.mxu0 %v4135
    %4137 = vmatprep.subr.mxu0 0.0
    %v4138 = vand.u32 %v3565, 4294901760
    %v4139 = vsub.f32 %v3565, %v4138
    %v4140 = vand.u32 %v4139, 4294901760
    %4141 = vmatpush1.msra.mxu0 %v4140
    %4142 = vmatprep.subr.mxu0 0.0
    %v4143 = vand.u32 %v3566, 4294901760
    %v4144 = vsub.f32 %v3566, %v4143
    %v4145 = vand.u32 %v4144, 4294901760
    %4146 = vmatpush1.msra.mxu0 %v4145
    %4147 = vmatprep.subr.mxu0 0.0
    %v4148 = vand.u32 %v3567, 4294901760
    %v4149 = vsub.f32 %v3567, %v4148
    %v4150 = vand.u32 %v4149, 4294901760
    %4151 = vmatpush1.msra.mxu0 %v4150
    %4152 = vmatprep.subr.mxu0 0.0
    %v4153 = vand.u32 %v3568, 4294901760
    %v4154 = vsub.f32 %v3568, %v4153
    %v4155 = vand.u32 %v4154, 4294901760
    %4156 = vmatpush1.msra.mxu0 %v4155
    %4157 = vmatprep.subr.mxu0 0.0
    %v4158 = vand.u32 %v3569, 4294901760
    %v4159 = vsub.f32 %v3569, %v4158
    %v4160 = vand.u32 %v4159, 4294901760
    %4161 = vmatpush1.msra.mxu0 %v4160
    %4162 = vmatprep.subr.mxu0 0.0
    %v4163 = vand.u32 %v3570, 4294901760
    %v4164 = vsub.f32 %v3570, %v4163
    %v4165 = vand.u32 %v4164, 4294901760
    %4166 = vmatpush1.msra.mxu0 %v4165
    %4167 = vmatprep.subr.mxu0 0.0
    %v4168 = vand.u32 %v3571, 4294901760
    %v4169 = vsub.f32 %v3571, %v4168
    %v4170 = vand.u32 %v4169, 4294901760
    %4171 = vmatpush1.msra.mxu0 %v4170
    %4172 = vmatprep.subr.mxu0 0.0
    %v4173 = vand.u32 %v3572, 4294901760
    %v4174 = vsub.f32 %v3572, %v4173
    %v4175 = vand.u32 %v4174, 4294901760
    %4176 = vmatpush1.msra.mxu0 %v4175
    %4177 = vmatprep.subr.mxu0 0.0
    %v4178 = vand.u32 %v3573, 4294901760
    %v4179 = vsub.f32 %v3573, %v4178
    %v4180 = vand.u32 %v4179, 4294901760
    %4181 = vmatpush1.msra.mxu0 %v4180
    %4182 = vmatprep.subr.mxu0 0.0
    %v4183 = vand.u32 %v3574, 4294901760
    %v4184 = vsub.f32 %v3574, %v4183
    %v4185 = vand.u32 %v4184, 4294901760
    %4186 = vmatpush1.msra.mxu0 %v4185
    %4187 = vmatprep.subr.mxu0 0.0
    %v4188 = vand.u32 %v3575, 4294901760
    %v4189 = vsub.f32 %v3575, %v4188
    %v4190 = vand.u32 %v4189, 4294901760
    %4191 = vmatpush1.msra.mxu0 %v4190
    %4192 = vmatprep.subr.mxu0 0.0
    %4193 = vmatpush1.msra.mxu0 0.0
    %4194 = vmatprep.subr.mxu0 0.0
    %4195 = vmatpush1.msra.mxu0 0.0
    %4196 = vmatprep.subr.mxu0 0.0
    %4197 = vmatpush1.msra.mxu0 0.0
    %4198 = vmatprep.subr.mxu0 0.0
    %4199 = vmatpush1.msra.mxu0 0.0
    %4200 = vmatprep.subr.mxu0 0.0
    %4201 = vmatpush1.msra.mxu0 0.0
    %4202 = vmatprep.subr.mxu0 0.0
    %4203 = vmatpush1.msra.mxu0 0.0
    %4204 = vmatprep.subr.mxu0 0.0
    %4205 = vmatpush1.msra.mxu0 0.0
    %4206 = vmatprep.subr.mxu0 0.0
    %4207 = vmatpush1.msra.mxu0 0.0
    %4208 = vmatprep.subr.mxu0 0.0
    %4209 = vmatpush1.msra.mxu0 0.0
    %4210 = vmatprep.subr.mxu0 0.0
    %4211 = vmatpush1.msra.mxu0 0.0
    %4212 = vmatprep.subr.mxu0 0.0
    %4213 = vmatpush1.msra.mxu0 0.0
    %4214 = vmatprep.subr.mxu0 0.0
    %4215 = vmatpush1.msra.mxu0 0.0
    %4216 = vmatprep.subr.mxu0 0.0
    %4217 = vmatpush1.msra.mxu0 0.0
    %4218 = vmatprep.subr.mxu0 0.0
    %4219 = vmatpush1.msra.mxu0 0.0
    %4220 = vmatprep.subr.mxu0 0.0
    %4221 = vmatpush1.msra.mxu0 0.0
    %4222 = vmatprep.subr.mxu0 0.0
    %4223 = vmatpush1.msra.mxu0 0.0
    %4224 = vmatprep.mubr.f32.mxu0 0.0
    %v4225 = vand.u32 %v151, 4294901760
    %4226 = vmatmul.mubr.f32.gmra.mrb[0].mxu0 %v4225
    %v4227 = vpop.f32.mrb[0].mxu0
    %v4228 = vadd.f32 %v4085, %v4227
    %v4229 = vpop.f32.mrb[0].mxu0
    %4230 = vmatprep.mubr.f32.mxu0 0.0
    %v4231 = vand.u32 %v152, 4294901760
    %4232 = vmatmul.mubr.f32.gmra.mrb[0].mxu0 %v4231
    %v4233 = vpop.f32.mrb[0].mxu0
    %v4234 = vadd.f32 %v4093, %v4233
    %v4235 = vpop.f32.mrb[0].mxu0
    %4236 = vmatprep.mubr.f32.mxu0 0.0
    %v4237 = vand.u32 %v153, 4294901760
    %4238 = vmatmul.mubr.f32.gmra.mrb[0].mxu0 %v4237
    %v4239 = vpop.f32.mrb[0].mxu0
    %v4240 = vadd.f32 %v4101, %v4239
    %v4241 = vpop.f32.mrb[0].mxu0
    %4242 = vmatprep.mubr.f32.mxu0 0.0
    %v4243 = vand.u32 %v154, 4294901760
    %4244 = vmatmul.mubr.f32.gmra.mrb[0].mxu0 %v4243
    %v4245 = vpop.f32.mrb[0].mxu0
    %v4246 = vadd.f32 %v4109, %v4245
    %v4247 = vpop.f32.mrb[0].mxu0
    %4248 = vdwg.mxu0
    %4249 = vmatprep.subr.mxu0 0.0
    %v4250 = vand.u32 %v3560, 4294901760
    %4251 = vmatpush1.msra.mxu0 %v4250
    %4252 = vmatprep.subr.mxu0 0.0
    %v4253 = vand.u32 %v3561, 4294901760
    %4254 = vmatpush1.msra.mxu0 %v4253
    %4255 = vmatprep.subr.mxu0 0.0
    %v4256 = vand.u32 %v3562, 4294901760
    %4257 = vmatpush1.msra.mxu0 %v4256
    %4258 = vmatprep.subr.mxu0 0.0
    %v4259 = vand.u32 %v3563, 4294901760
    %4260 = vmatpush1.msra.mxu0 %v4259
    %4261 = vmatprep.subr.mxu0 0.0
    %v4262 = vand.u32 %v3564, 4294901760
    %4263 = vmatpush1.msra.mxu0 %v4262
    %4264 = vmatprep.subr.mxu0 0.0
    %v4265 = vand.u32 %v3565, 4294901760
    %4266 = vmatpush1.msra.mxu0 %v4265
    %4267 = vmatprep.subr.mxu0 0.0
    %v4268 = vand.u32 %v3566, 4294901760
    %4269 = vmatpush1.msra.mxu0 %v4268
    %4270 = vmatprep.subr.mxu0 0.0
    %v4271 = vand.u32 %v3567, 4294901760
    %4272 = vmatpush1.msra.mxu0 %v4271
    %4273 = vmatprep.subr.mxu0 0.0
    %v4274 = vand.u32 %v3568, 4294901760
    %4275 = vmatpush1.msra.mxu0 %v4274
    %4276 = vmatprep.subr.mxu0 0.0
    %v4277 = vand.u32 %v3569, 4294901760
    %4278 = vmatpush1.msra.mxu0 %v4277
    %4279 = vmatprep.subr.mxu0 0.0
    %v4280 = vand.u32 %v3570, 4294901760
    %4281 = vmatpush1.msra.mxu0 %v4280
    %4282 = vmatprep.subr.mxu0 0.0
    %v4283 = vand.u32 %v3571, 4294901760
    %4284 = vmatpush1.msra.mxu0 %v4283
    %4285 = vmatprep.subr.mxu0 0.0
    %v4286 = vand.u32 %v3572, 4294901760
    %4287 = vmatpush1.msra.mxu0 %v4286
    %4288 = vmatprep.subr.mxu0 0.0
    %v4289 = vand.u32 %v3573, 4294901760
    %4290 = vmatpush1.msra.mxu0 %v4289
    %4291 = vmatprep.subr.mxu0 0.0
    %v4292 = vand.u32 %v3574, 4294901760
    %4293 = vmatpush1.msra.mxu0 %v4292
    %4294 = vmatprep.subr.mxu0 0.0
    %v4295 = vand.u32 %v3575, 4294901760
    %4296 = vmatpush1.msra.mxu0 %v4295
    %4297 = vmatprep.subr.mxu0 0.0
    %4298 = vmatpush1.msra.mxu0 0.0
    %4299 = vmatprep.subr.mxu0 0.0
    %4300 = vmatpush1.msra.mxu0 0.0
    %4301 = vmatprep.subr.mxu0 0.0
    %4302 = vmatpush1.msra.mxu0 0.0
    %4303 = vmatprep.subr.mxu0 0.0
    %4304 = vmatpush1.msra.mxu0 0.0
    %4305 = vmatprep.subr.mxu0 0.0
    %4306 = vmatpush1.msra.mxu0 0.0
    %4307 = vmatprep.subr.mxu0 0.0
    %4308 = vmatpush1.msra.mxu0 0.0
    %4309 = vmatprep.subr.mxu0 0.0
    %4310 = vmatpush1.msra.mxu0 0.0
    %4311 = vmatprep.subr.mxu0 0.0
    %4312 = vmatpush1.msra.mxu0 0.0
    %4313 = vmatprep.subr.mxu0 0.0
    %4314 = vmatpush1.msra.mxu0 0.0
    %4315 = vmatprep.subr.mxu0 0.0
    %4316 = vmatpush1.msra.mxu0 0.0
    %4317 = vmatprep.subr.mxu0 0.0
    %4318 = vmatpush1.msra.mxu0 0.0
    %4319 = vmatprep.subr.mxu0 0.0
    %4320 = vmatpush1.msra.mxu0 0.0
    %4321 = vmatprep.subr.mxu0 0.0
    %4322 = vmatpush1.msra.mxu0 0.0
    %4323 = vmatprep.subr.mxu0 0.0
    %4324 = vmatpush1.msra.mxu0 0.0
    %4325 = vmatprep.subr.mxu0 0.0
    %4326 = vmatpush1.msra.mxu0 0.0
    %4327 = vmatprep.subr.mxu0 0.0
    %4328 = vmatpush1.msra.mxu0 0.0
    %4329 = vmatprep.mubr.f32.mxu0 0.0
    %v4330 = vand.u32 %v151, 4294901760
    %4331 = vmatmul.mubr.f32.gmra.mrb[0].mxu0 %v4330
    %v4332 = vpop.f32.mrb[0].mxu0
    %v4333 = vadd.f32 %v4228, %v4332
    %v4334 = vpop.f32.mrb[0].mxu0
    %4335 = vmatprep.mubr.f32.mxu0 0.0
    %v4336 = vand.u32 %v152, 4294901760
    %4337 = vmatmul.mubr.f32.gmra.mrb[0].mxu0 %v4336
    %v4338 = vpop.f32.mrb[0].mxu0
    %v4339 = vadd.f32 %v4234, %v4338
    %v4340 = vpop.f32.mrb[0].mxu0
    %4341 = vmatprep.mubr.f32.mxu0 0.0
    %v4342 = vand.u32 %v153, 4294901760
    %4343 = vmatmul.mubr.f32.gmra.mrb[0].mxu0 %v4342
    %v4344 = vpop.f32.mrb[0].mxu0
    %v4345 = vadd.f32 %v4240, %v4344
    %v4346 = vpop.f32.mrb[0].mxu0
    %4347 = vmatprep.mubr.f32.mxu0 0.0
    %v4348 = vand.u32 %v154, 4294901760
    %4349 = vmatmul.mubr.f32.gmra.mrb[0].mxu0 %v4348
    %v4350 = vpop.f32.mrb[0].mxu0
    %v4351 = vadd.f32 %v4246, %v4350
    %v4352 = vpop.f32.mrb[0].mxu0
    %4353 = vdwg.mxu0
    %4354 = vmatprep.subr.mxu0 0.0
    %v4355 = vand.u32 %v3557, 4294901760
    %4356 = vmatpush1.msra.mxu0 %v4355
    %4357 = vmatprep.subr.mxu0 0.0
    %v4358 = vand.u32 %v3558, 4294901760
    %4359 = vmatpush1.msra.mxu0 %v4358
    %4360 = vmatprep.subr.mxu0 0.0
    %4361 = vmatpush1.msra.mxu0 0.0
    %4362 = vmatprep.subr.mxu0 0.0
    %4363 = vmatpush1.msra.mxu0 0.0
    %4364 = vmatprep.subr.mxu0 0.0
    %4365 = vmatpush1.msra.mxu0 0.0
    %4366 = vmatprep.subr.mxu0 0.0
    %4367 = vmatpush1.msra.mxu0 0.0
    %4368 = vmatprep.subr.mxu0 0.0
    %4369 = vmatpush1.msra.mxu0 0.0
    %4370 = vmatprep.subr.mxu0 0.0
    %4371 = vmatpush1.msra.mxu0 0.0
    %4372 = vmatprep.subr.mxu0 0.0
    %4373 = vmatpush1.msra.mxu0 0.0
    %4374 = vmatprep.subr.mxu0 0.0
    %4375 = vmatpush1.msra.mxu0 0.0
    %4376 = vmatprep.subr.mxu0 0.0
    %4377 = vmatpush1.msra.mxu0 0.0
    %4378 = vmatprep.subr.mxu0 0.0
    %4379 = vmatpush1.msra.mxu0 0.0
    %4380 = vmatprep.subr.mxu0 0.0
    %4381 = vmatpush1.msra.mxu0 0.0
    %4382 = vmatprep.subr.mxu0 0.0
    %4383 = vmatpush1.msra.mxu0 0.0
    %4384 = vmatprep.subr.mxu0 0.0
    %4385 = vmatpush1.msra.mxu0 0.0
    %4386 = vmatprep.subr.mxu0 0.0
    %4387 = vmatpush1.msra.mxu0 0.0
    %4388 = vmatprep.subr.mxu0 0.0
    %4389 = vmatpush1.msra.mxu0 0.0
    %4390 = vmatprep.subr.mxu0 0.0
    %4391 = vmatpush1.msra.mxu0 0.0
    %4392 = vmatprep.subr.mxu0 0.0
    %4393 = vmatpush1.msra.mxu0 0.0
    %4394 = vmatprep.subr.mxu0 0.0
    %4395 = vmatpush1.msra.mxu0 0.0
    %4396 = vmatprep.subr.mxu0 0.0
    %4397 = vmatpush1.msra.mxu0 0.0
    %4398 = vmatprep.subr.mxu0 0.0
    %4399 = vmatpush1.msra.mxu0 0.0
    %4400 = vmatprep.subr.mxu0 0.0
    %4401 = vmatpush1.msra.mxu0 0.0
    %4402 = vmatprep.subr.mxu0 0.0
    %4403 = vmatpush1.msra.mxu0 0.0
    %4404 = vmatprep.subr.mxu0 0.0
    %4405 = vmatpush1.msra.mxu0 0.0
    %4406 = vmatprep.subr.mxu0 0.0
    %4407 = vmatpush1.msra.mxu0 0.0
    %4408 = vmatprep.subr.mxu0 0.0
    %4409 = vmatpush1.msra.mxu0 0.0
    %4410 = vmatprep.subr.mxu0 0.0
    %4411 = vmatpush1.msra.mxu0 0.0
    %4412 = vmatprep.subr.mxu0 0.0
    %4413 = vmatpush1.msra.mxu0 0.0
    %4414 = vmatprep.subr.mxu0 0.0
    %4415 = vmatpush1.msra.mxu0 0.0
    %4416 = vmatprep.subr.mxu0 0.0
    %4417 = vmatpush1.msra.mxu0 0.0
    %4418 = vmatprep.subr.mxu0 0.0
    %4419 = vmatpush1.msra.mxu0 0.0
    %4420 = vmatprep.mubr.f32.mxu0 0.0
    %v4421 = vand.u32 %v952, 4294901760
    %v4422 = vsub.f32 %v952, %v4421
    %v4423 = vand.u32 %v4422, 4294901760
    %v4424 = vsub.f32 %v4422, %v4423
    %v4425 = vand.u32 %v4424, 4294901760
    %4426 = vmatmul.mubr.f32.gmra.mrb[0].mxu0 %v4425
    %v4427 = vpop.f32.mrb[0].mxu0
    %v4428 = vadd.f32 %v4333, %v4427
    %v4429 = vpop.f32.mrb[0].mxu0
    %4430 = vmatprep.mubr.f32.mxu0 0.0
    %v4431 = vand.u32 %v955, 4294901760
    %v4432 = vsub.f32 %v955, %v4431
    %v4433 = vand.u32 %v4432, 4294901760
    %v4434 = vsub.f32 %v4432, %v4433
    %v4435 = vand.u32 %v4434, 4294901760
    %4436 = vmatmul.mubr.f32.gmra.mrb[0].mxu0 %v4435
    %v4437 = vpop.f32.mrb[0].mxu0
    %v4438 = vadd.f32 %v4339, %v4437
    %v4439 = vpop.f32.mrb[0].mxu0
    %4440 = vmatprep.mubr.f32.mxu0 0.0
    %v4441 = vand.u32 %v958, 4294901760
    %v4442 = vsub.f32 %v958, %v4441
    %v4443 = vand.u32 %v4442, 4294901760
    %v4444 = vsub.f32 %v4442, %v4443
    %v4445 = vand.u32 %v4444, 4294901760
    %4446 = vmatmul.mubr.f32.gmra.mrb[0].mxu0 %v4445
    %v4447 = vpop.f32.mrb[0].mxu0
    %v4448 = vadd.f32 %v4345, %v4447
    %v4449 = vpop.f32.mrb[0].mxu0
    %4450 = vmatprep.mubr.f32.mxu0 0.0
    %v4451 = vand.u32 %v961, 4294901760
    %v4452 = vsub.f32 %v961, %v4451
    %v4453 = vand.u32 %v4452, 4294901760
    %v4454 = vsub.f32 %v4452, %v4453
    %v4455 = vand.u32 %v4454, 4294901760
    %4456 = vmatmul.mubr.f32.gmra.mrb[0].mxu0 %v4455
    %v4457 = vpop.f32.mrb[0].mxu0
    %v4458 = vadd.f32 %v4351, %v4457
    %v4459 = vpop.f32.mrb[0].mxu0
    %4460 = vdwg.mxu0
    %4461 = vmatprep.subr.mxu0 0.0
    %v4462 = vand.u32 %v3557, 4294901760
    %v4463 = vsub.f32 %v3557, %v4462
    %v4464 = vand.u32 %v4463, 4294901760
    %v4465 = vsub.f32 %v4463, %v4464
    %v4466 = vand.u32 %v4465, 4294901760
    %4467 = vmatpush1.msra.mxu0 %v4466
    %4468 = vmatprep.subr.mxu0 0.0
    %v4469 = vand.u32 %v3558, 4294901760
    %v4470 = vsub.f32 %v3558, %v4469
    %v4471 = vand.u32 %v4470, 4294901760
    %v4472 = vsub.f32 %v4470, %v4471
    %v4473 = vand.u32 %v4472, 4294901760
    %4474 = vmatpush1.msra.mxu0 %v4473
    %4475 = vmatprep.subr.mxu0 0.0
    %4476 = vmatpush1.msra.mxu0 0.0
    %4477 = vmatprep.subr.mxu0 0.0
    %4478 = vmatpush1.msra.mxu0 0.0
    %4479 = vmatprep.subr.mxu0 0.0
    %4480 = vmatpush1.msra.mxu0 0.0
    %4481 = vmatprep.subr.mxu0 0.0
    %4482 = vmatpush1.msra.mxu0 0.0
    %4483 = vmatprep.subr.mxu0 0.0
    %4484 = vmatpush1.msra.mxu0 0.0
    %4485 = vmatprep.subr.mxu0 0.0
    %4486 = vmatpush1.msra.mxu0 0.0
    %4487 = vmatprep.subr.mxu0 0.0
    %4488 = vmatpush1.msra.mxu0 0.0
    %4489 = vmatprep.subr.mxu0 0.0
    %4490 = vmatpush1.msra.mxu0 0.0
    %4491 = vmatprep.subr.mxu0 0.0
    %4492 = vmatpush1.msra.mxu0 0.0
    %4493 = vmatprep.subr.mxu0 0.0
    %4494 = vmatpush1.msra.mxu0 0.0
    %4495 = vmatprep.subr.mxu0 0.0
    %4496 = vmatpush1.msra.mxu0 0.0
    %4497 = vmatprep.subr.mxu0 0.0
    %4498 = vmatpush1.msra.mxu0 0.0
    %4499 = vmatprep.subr.mxu0 0.0
    %4500 = vmatpush1.msra.mxu0 0.0
    %4501 = vmatprep.subr.mxu0 0.0
    %4502 = vmatpush1.msra.mxu0 0.0
    %4503 = vmatprep.subr.mxu0 0.0
    %4504 = vmatpush1.msra.mxu0 0.0
    %4505 = vmatprep.subr.mxu0 0.0
    %4506 = vmatpush1.msra.mxu0 0.0
    %4507 = vmatprep.subr.mxu0 0.0
    %4508 = vmatpush1.msra.mxu0 0.0
    %4509 = vmatprep.subr.mxu0 0.0
    %4510 = vmatpush1.msra.mxu0 0.0
    %4511 = vmatprep.subr.mxu0 0.0
    %4512 = vmatpush1.msra.mxu0 0.0
    %4513 = vmatprep.subr.mxu0 0.0
    %4514 = vmatpush1.msra.mxu0 0.0
    %4515 = vmatprep.subr.mxu0 0.0
    %4516 = vmatpush1.msra.mxu0 0.0
    %4517 = vmatprep.subr.mxu0 0.0
    %4518 = vmatpush1.msra.mxu0 0.0
    %4519 = vmatprep.subr.mxu0 0.0
    %4520 = vmatpush1.msra.mxu0 0.0
    %4521 = vmatprep.subr.mxu0 0.0
    %4522 = vmatpush1.msra.mxu0 0.0
    %4523 = vmatprep.subr.mxu0 0.0
    %4524 = vmatpush1.msra.mxu0 0.0
    %4525 = vmatprep.subr.mxu0 0.0
    %4526 = vmatpush1.msra.mxu0 0.0
    %4527 = vmatprep.subr.mxu0 0.0
    %4528 = vmatpush1.msra.mxu0 0.0
    %4529 = vmatprep.subr.mxu0 0.0
    %4530 = vmatpush1.msra.mxu0 0.0
    %4531 = vmatprep.subr.mxu0 0.0
    %4532 = vmatpush1.msra.mxu0 0.0
    %4533 = vmatprep.subr.mxu0 0.0
    %4534 = vmatpush1.msra.mxu0 0.0
    %4535 = vmatprep.mubr.f32.mxu0 0.0
    %v4536 = vand.u32 %v952, 4294901760
    %4537 = vmatmul.mubr.f32.gmra.mrb[0].mxu0 %v4536
    %v4538 = vpop.f32.mrb[0].mxu0
    %v4539 = vadd.f32 %v4428, %v4538
    %v4540 = vpop.f32.mrb[0].mxu0
    %4541 = vmatprep.mubr.f32.mxu0 0.0
    %v4542 = vand.u32 %v955, 4294901760
    %4543 = vmatmul.mubr.f32.gmra.mrb[0].mxu0 %v4542
    %v4544 = vpop.f32.mrb[0].mxu0
    %v4545 = vadd.f32 %v4438, %v4544
    %v4546 = vpop.f32.mrb[0].mxu0
    %4547 = vmatprep.mubr.f32.mxu0 0.0
    %v4548 = vand.u32 %v958, 4294901760
    %4549 = vmatmul.mubr.f32.gmra.mrb[0].mxu0 %v4548
    %v4550 = vpop.f32.mrb[0].mxu0
    %v4551 = vadd.f32 %v4448, %v4550
    %v4552 = vpop.f32.mrb[0].mxu0
    %4553 = vmatprep.mubr.f32.mxu0 0.0
    %v4554 = vand.u32 %v961, 4294901760
    %4555 = vmatmul.mubr.f32.gmra.mrb[0].mxu0 %v4554
    %v4556 = vpop.f32.mrb[0].mxu0
    %v4557 = vadd.f32 %v4458, %v4556
    %v4558 = vpop.f32.mrb[0].mxu0
    %4559 = vdwg.mxu0
    %4560 = vmatprep.subr.mxu0 0.0
    %v4561 = vand.u32 %v3557, 4294901760
    %v4562 = vsub.f32 %v3557, %v4561
    %4563 = vmatpush1.msra.mxu0 %v4562
    %4564 = vmatprep.subr.mxu0 0.0
    %v4565 = vand.u32 %v3558, 4294901760
    %v4566 = vsub.f32 %v3558, %v4565
    %4567 = vmatpush1.msra.mxu0 %v4566
    %4568 = vmatprep.subr.mxu0 0.0
    %4569 = vmatpush1.msra.mxu0 0.0
    %4570 = vmatprep.subr.mxu0 0.0
    %4571 = vmatpush1.msra.mxu0 0.0
    %4572 = vmatprep.subr.mxu0 0.0
    %4573 = vmatpush1.msra.mxu0 0.0
    %4574 = vmatprep.subr.mxu0 0.0
    %4575 = vmatpush1.msra.mxu0 0.0
    %4576 = vmatprep.subr.mxu0 0.0
    %4577 = vmatpush1.msra.mxu0 0.0
    %4578 = vmatprep.subr.mxu0 0.0
    %4579 = vmatpush1.msra.mxu0 0.0
    %4580 = vmatprep.subr.mxu0 0.0
    %4581 = vmatpush1.msra.mxu0 0.0
    %4582 = vmatprep.subr.mxu0 0.0
    %4583 = vmatpush1.msra.mxu0 0.0
    %4584 = vmatprep.subr.mxu0 0.0
    %4585 = vmatpush1.msra.mxu0 0.0
    %4586 = vmatprep.subr.mxu0 0.0
    %4587 = vmatpush1.msra.mxu0 0.0
    %4588 = vmatprep.subr.mxu0 0.0
    %4589 = vmatpush1.msra.mxu0 0.0
    %4590 = vmatprep.subr.mxu0 0.0
    %4591 = vmatpush1.msra.mxu0 0.0
    %4592 = vmatprep.subr.mxu0 0.0
    %4593 = vmatpush1.msra.mxu0 0.0
    %4594 = vmatprep.subr.mxu0 0.0
    %4595 = vmatpush1.msra.mxu0 0.0
    %4596 = vmatprep.subr.mxu0 0.0
    %4597 = vmatpush1.msra.mxu0 0.0
    %4598 = vmatprep.subr.mxu0 0.0
    %4599 = vmatpush1.msra.mxu0 0.0
    %4600 = vmatprep.subr.mxu0 0.0
    %4601 = vmatpush1.msra.mxu0 0.0
    %4602 = vmatprep.subr.mxu0 0.0
    %4603 = vmatpush1.msra.mxu0 0.0
    %4604 = vmatprep.subr.mxu0 0.0
    %4605 = vmatpush1.msra.mxu0 0.0
    %4606 = vmatprep.subr.mxu0 0.0
    %4607 = vmatpush1.msra.mxu0 0.0
    %4608 = vmatprep.subr.mxu0 0.0
    %4609 = vmatpush1.msra.mxu0 0.0
    %4610 = vmatprep.subr.mxu0 0.0
    %4611 = vmatpush1.msra.mxu0 0.0
    %4612 = vmatprep.subr.mxu0 0.0
    %4613 = vmatpush1.msra.mxu0 0.0
    %4614 = vmatprep.subr.mxu0 0.0
    %4615 = vmatpush1.msra.mxu0 0.0
    %4616 = vmatprep.subr.mxu0 0.0
    %4617 = vmatpush1.msra.mxu0 0.0
    %4618 = vmatprep.subr.mxu0 0.0
    %4619 = vmatpush1.msra.mxu0 0.0
    %4620 = vmatprep.subr.mxu0 0.0
    %4621 = vmatpush1.msra.mxu0 0.0
    %4622 = vmatprep.subr.mxu0 0.0
    %4623 = vmatpush1.msra.mxu0 0.0
    %4624 = vmatprep.subr.mxu0 0.0
    %4625 = vmatpush1.msra.mxu0 0.0
    %4626 = vmatprep.subr.mxu0 0.0
    %4627 = vmatpush1.msra.mxu0 0.0
    %4628 = vmatprep.mubr.f32.mxu0 0.0
    %v4629 = vand.u32 %v952, 4294901760
    %v4630 = vsub.f32 %v952, %v4629
    %4631 = vmatmul.mubr.f32.gmra.mrb[0].mxu0 %v4630
    %v4632 = vpop.f32.mrb[0].mxu0
    %v4633 = vadd.f32 %v4539, %v4632
    %v4634 = vpop.f32.mrb[0].mxu0
    %4635 = vmatprep.mubr.f32.mxu0 0.0
    %v4636 = vand.u32 %v955, 4294901760
    %v4637 = vsub.f32 %v955, %v4636
    %4638 = vmatmul.mubr.f32.gmra.mrb[0].mxu0 %v4637
    %v4639 = vpop.f32.mrb[0].mxu0
    %v4640 = vadd.f32 %v4545, %v4639
    %v4641 = vpop.f32.mrb[0].mxu0
    %4642 = vmatprep.mubr.f32.mxu0 0.0
    %v4643 = vand.u32 %v958, 4294901760
    %v4644 = vsub.f32 %v958, %v4643
    %4645 = vmatmul.mubr.f32.gmra.mrb[0].mxu0 %v4644
    %v4646 = vpop.f32.mrb[0].mxu0
    %v4647 = vadd.f32 %v4551, %v4646
    %v4648 = vpop.f32.mrb[0].mxu0
    %4649 = vmatprep.mubr.f32.mxu0 0.0
    %v4650 = vand.u32 %v961, 4294901760
    %v4651 = vsub.f32 %v961, %v4650
    %4652 = vmatmul.mubr.f32.gmra.mrb[0].mxu0 %v4651
    %v4653 = vpop.f32.mrb[0].mxu0
    %v4654 = vadd.f32 %v4557, %v4653
    %v4655 = vpop.f32.mrb[0].mxu0
    %4656 = vdwg.mxu0
    %4657 = vmatprep.subr.mxu0 0.0
    %v4658 = vand.u32 %v3557, 4294901760
    %4659 = vmatpush1.msra.mxu0 %v4658
    %4660 = vmatprep.subr.mxu0 0.0
    %v4661 = vand.u32 %v3558, 4294901760
    %4662 = vmatpush1.msra.mxu0 %v4661
    %4663 = vmatprep.subr.mxu0 0.0
    %4664 = vmatpush1.msra.mxu0 0.0
    %4665 = vmatprep.subr.mxu0 0.0
    %4666 = vmatpush1.msra.mxu0 0.0
    %4667 = vmatprep.subr.mxu0 0.0
    %4668 = vmatpush1.msra.mxu0 0.0
    %4669 = vmatprep.subr.mxu0 0.0
    %4670 = vmatpush1.msra.mxu0 0.0
    %4671 = vmatprep.subr.mxu0 0.0
    %4672 = vmatpush1.msra.mxu0 0.0
    %4673 = vmatprep.subr.mxu0 0.0
    %4674 = vmatpush1.msra.mxu0 0.0
    %4675 = vmatprep.subr.mxu0 0.0
    %4676 = vmatpush1.msra.mxu0 0.0
    %4677 = vmatprep.subr.mxu0 0.0
    %4678 = vmatpush1.msra.mxu0 0.0
    %4679 = vmatprep.subr.mxu0 0.0
    %4680 = vmatpush1.msra.mxu0 0.0
    %4681 = vmatprep.subr.mxu0 0.0
    %4682 = vmatpush1.msra.mxu0 0.0
    %4683 = vmatprep.subr.mxu0 0.0
    %4684 = vmatpush1.msra.mxu0 0.0
    %4685 = vmatprep.subr.mxu0 0.0
    %4686 = vmatpush1.msra.mxu0 0.0
    %4687 = vmatprep.subr.mxu0 0.0
    %4688 = vmatpush1.msra.mxu0 0.0
    %4689 = vmatprep.subr.mxu0 0.0
    %4690 = vmatpush1.msra.mxu0 0.0
    %4691 = vmatprep.subr.mxu0 0.0
    %4692 = vmatpush1.msra.mxu0 0.0
    %4693 = vmatprep.subr.mxu0 0.0
    %4694 = vmatpush1.msra.mxu0 0.0
    %4695 = vmatprep.subr.mxu0 0.0
    %4696 = vmatpush1.msra.mxu0 0.0
    %4697 = vmatprep.subr.mxu0 0.0
    %4698 = vmatpush1.msra.mxu0 0.0
    %4699 = vmatprep.subr.mxu0 0.0
    %4700 = vmatpush1.msra.mxu0 0.0
    %4701 = vmatprep.subr.mxu0 0.0
    %4702 = vmatpush1.msra.mxu0 0.0
    %4703 = vmatprep.subr.mxu0 0.0
    %4704 = vmatpush1.msra.mxu0 0.0
    %4705 = vmatprep.subr.mxu0 0.0
    %4706 = vmatpush1.msra.mxu0 0.0
    %4707 = vmatprep.subr.mxu0 0.0
    %4708 = vmatpush1.msra.mxu0 0.0
    %4709 = vmatprep.subr.mxu0 0.0
    %4710 = vmatpush1.msra.mxu0 0.0
    %4711 = vmatprep.subr.mxu0 0.0
    %4712 = vmatpush1.msra.mxu0 0.0
    %4713 = vmatprep.subr.mxu0 0.0
    %4714 = vmatpush1.msra.mxu0 0.0
    %4715 = vmatprep.subr.mxu0 0.0
    %4716 = vmatpush1.msra.mxu0 0.0
    %4717 = vmatprep.subr.mxu0 0.0
    %4718 = vmatpush1.msra.mxu0 0.0
    %4719 = vmatprep.subr.mxu0 0.0
    %4720 = vmatpush1.msra.mxu0 0.0
    %4721 = vmatprep.subr.mxu0 0.0
    %4722 = vmatpush1.msra.mxu0 0.0
    %4723 = vmatprep.mubr.f32.mxu0 0.0
    %v4724 = vand.u32 %v952, 4294901760
    %v4725 = vsub.f32 %v952, %v4724
    %v4726 = vand.u32 %v4725, 4294901760
    %4727 = vmatmul.mubr.f32.gmra.mrb[0].mxu0 %v4726
    %v4728 = vpop.f32.mrb[0].mxu0
    %v4729 = vadd.f32 %v4633, %v4728
    %v4730 = vpop.f32.mrb[0].mxu0
    %4731 = vmatprep.mubr.f32.mxu0 0.0
    %v4732 = vand.u32 %v955, 4294901760
    %v4733 = vsub.f32 %v955, %v4732
    %v4734 = vand.u32 %v4733, 4294901760
    %4735 = vmatmul.mubr.f32.gmra.mrb[0].mxu0 %v4734
    %v4736 = vpop.f32.mrb[0].mxu0
    %v4737 = vadd.f32 %v4640, %v4736
    %v4738 = vpop.f32.mrb[0].mxu0
    %4739 = vmatprep.mubr.f32.mxu0 0.0
    %v4740 = vand.u32 %v958, 4294901760
    %v4741 = vsub.f32 %v958, %v4740
    %v4742 = vand.u32 %v4741, 4294901760
    %4743 = vmatmul.mubr.f32.gmra.mrb[0].mxu0 %v4742
    %v4744 = vpop.f32.mrb[0].mxu0
    %v4745 = vadd.f32 %v4647, %v4744
    %v4746 = vpop.f32.mrb[0].mxu0
    %4747 = vmatprep.mubr.f32.mxu0 0.0
    %v4748 = vand.u32 %v961, 4294901760
    %v4749 = vsub.f32 %v961, %v4748
    %v4750 = vand.u32 %v4749, 4294901760
    %4751 = vmatmul.mubr.f32.gmra.mrb[0].mxu0 %v4750
    %v4752 = vpop.f32.mrb[0].mxu0
    %v4753 = vadd.f32 %v4654, %v4752
    %v4754 = vpop.f32.mrb[0].mxu0
    %4755 = vdwg.mxu0
    %4756 = vmatprep.subr.mxu0 0.0
    %v4757 = vand.u32 %v3557, 4294901760
    %v4758 = vsub.f32 %v3557, %v4757
    %v4759 = vand.u32 %v4758, 4294901760
    %4760 = vmatpush1.msra.mxu0 %v4759
    %4761 = vmatprep.subr.mxu0 0.0
    %v4762 = vand.u32 %v3558, 4294901760
    %v4763 = vsub.f32 %v3558, %v4762
    %v4764 = vand.u32 %v4763, 4294901760
    %4765 = vmatpush1.msra.mxu0 %v4764
    %4766 = vmatprep.subr.mxu0 0.0
    %4767 = vmatpush1.msra.mxu0 0.0
    %4768 = vmatprep.subr.mxu0 0.0
    %4769 = vmatpush1.msra.mxu0 0.0
    %4770 = vmatprep.subr.mxu0 0.0
    %4771 = vmatpush1.msra.mxu0 0.0
    %4772 = vmatprep.subr.mxu0 0.0
    %4773 = vmatpush1.msra.mxu0 0.0
    %4774 = vmatprep.subr.mxu0 0.0
    %4775 = vmatpush1.msra.mxu0 0.0
    %4776 = vmatprep.subr.mxu0 0.0
    %4777 = vmatpush1.msra.mxu0 0.0
    %4778 = vmatprep.subr.mxu0 0.0
    %4779 = vmatpush1.msra.mxu0 0.0
    %4780 = vmatprep.subr.mxu0 0.0
    %4781 = vmatpush1.msra.mxu0 0.0
    %4782 = vmatprep.subr.mxu0 0.0
    %4783 = vmatpush1.msra.mxu0 0.0
    %4784 = vmatprep.subr.mxu0 0.0
    %4785 = vmatpush1.msra.mxu0 0.0
    %4786 = vmatprep.subr.mxu0 0.0
    %4787 = vmatpush1.msra.mxu0 0.0
    %4788 = vmatprep.subr.mxu0 0.0
    %4789 = vmatpush1.msra.mxu0 0.0
    %4790 = vmatprep.subr.mxu0 0.0
    %4791 = vmatpush1.msra.mxu0 0.0
    %4792 = vmatprep.subr.mxu0 0.0
    %4793 = vmatpush1.msra.mxu0 0.0
    %4794 = vmatprep.subr.mxu0 0.0
    %4795 = vmatpush1.msra.mxu0 0.0
    %4796 = vmatprep.subr.mxu0 0.0
    %4797 = vmatpush1.msra.mxu0 0.0
    %4798 = vmatprep.subr.mxu0 0.0
    %4799 = vmatpush1.msra.mxu0 0.0
    %4800 = vmatprep.subr.mxu0 0.0
    %4801 = vmatpush1.msra.mxu0 0.0
    %4802 = vmatprep.subr.mxu0 0.0
    %4803 = vmatpush1.msra.mxu0 0.0
    %4804 = vmatprep.subr.mxu0 0.0
    %4805 = vmatpush1.msra.mxu0 0.0
    %4806 = vmatprep.subr.mxu0 0.0
    %4807 = vmatpush1.msra.mxu0 0.0
    %4808 = vmatprep.subr.mxu0 0.0
    %4809 = vmatpush1.msra.mxu0 0.0
    %4810 = vmatprep.subr.mxu0 0.0
    %4811 = vmatpush1.msra.mxu0 0.0
    %4812 = vmatprep.subr.mxu0 0.0
    %4813 = vmatpush1.msra.mxu0 0.0
    %4814 = vmatprep.subr.mxu0 0.0
    %4815 = vmatpush1.msra.mxu0 0.0
    %4816 = vmatprep.subr.mxu0 0.0
    %4817 = vmatpush1.msra.mxu0 0.0
    %4818 = vmatprep.subr.mxu0 0.0
    %4819 = vmatpush1.msra.mxu0 0.0
    %4820 = vmatprep.subr.mxu0 0.0
    %4821 = vmatpush1.msra.mxu0 0.0
    %4822 = vmatprep.subr.mxu0 0.0
    %4823 = vmatpush1.msra.mxu0 0.0
    %4824 = vmatprep.subr.mxu0 0.0
    %4825 = vmatpush1.msra.mxu0 0.0
    %4826 = vmatprep.mubr.f32.mxu0 0.0
    %v4827 = vand.u32 %v952, 4294901760
    %4828 = vmatmul.mubr.f32.gmra.mrb[0].mxu0 %v4827
    %v4829 = vpop.f32.mrb[0].mxu0
    %v4830 = vadd.f32 %v4729, %v4829
    %v4831 = vpop.f32.mrb[0].mxu0
    %4832 = vmatprep.mubr.f32.mxu0 0.0
    %v4833 = vand.u32 %v955, 4294901760
    %4834 = vmatmul.mubr.f32.gmra.mrb[0].mxu0 %v4833
    %v4835 = vpop.f32.mrb[0].mxu0
    %v4836 = vadd.f32 %v4737, %v4835
    %v4837 = vpop.f32.mrb[0].mxu0
    %4838 = vmatprep.mubr.f32.mxu0 0.0
    %v4839 = vand.u32 %v958, 4294901760
    %4840 = vmatmul.mubr.f32.gmra.mrb[0].mxu0 %v4839
    %v4841 = vpop.f32.mrb[0].mxu0
    %v4842 = vadd.f32 %v4745, %v4841
    %v4843 = vpop.f32.mrb[0].mxu0
    %4844 = vmatprep.mubr.f32.mxu0 0.0
    %v4845 = vand.u32 %v961, 4294901760
    %4846 = vmatmul.mubr.f32.gmra.mrb[0].mxu0 %v4845
    %v4847 = vpop.f32.mrb[0].mxu0
    %v4848 = vadd.f32 %v4753, %v4847
    %v4849 = vpop.f32.mrb[0].mxu0
    %4850 = vdwg.mxu0
    %4851 = vmatprep.subr.mxu0 0.0
    %v4852 = vand.u32 %v3557, 4294901760
    %4853 = vmatpush1.msra.mxu0 %v4852
    %4854 = vmatprep.subr.mxu0 0.0
    %v4855 = vand.u32 %v3558, 4294901760
    %4856 = vmatpush1.msra.mxu0 %v4855
    %4857 = vmatprep.subr.mxu0 0.0
    %4858 = vmatpush1.msra.mxu0 0.0
    %4859 = vmatprep.subr.mxu0 0.0
    %4860 = vmatpush1.msra.mxu0 0.0
    %4861 = vmatprep.subr.mxu0 0.0
    %4862 = vmatpush1.msra.mxu0 0.0
    %4863 = vmatprep.subr.mxu0 0.0
    %4864 = vmatpush1.msra.mxu0 0.0
    %4865 = vmatprep.subr.mxu0 0.0
    %4866 = vmatpush1.msra.mxu0 0.0
    %4867 = vmatprep.subr.mxu0 0.0
    %4868 = vmatpush1.msra.mxu0 0.0
    %4869 = vmatprep.subr.mxu0 0.0
    %4870 = vmatpush1.msra.mxu0 0.0
    %4871 = vmatprep.subr.mxu0 0.0
    %4872 = vmatpush1.msra.mxu0 0.0
    %4873 = vmatprep.subr.mxu0 0.0
    %4874 = vmatpush1.msra.mxu0 0.0
    %4875 = vmatprep.subr.mxu0 0.0
    %4876 = vmatpush1.msra.mxu0 0.0
    %4877 = vmatprep.subr.mxu0 0.0
    %4878 = vmatpush1.msra.mxu0 0.0
    %4879 = vmatprep.subr.mxu0 0.0
    %4880 = vmatpush1.msra.mxu0 0.0
    %4881 = vmatprep.subr.mxu0 0.0
    %4882 = vmatpush1.msra.mxu0 0.0
    %4883 = vmatprep.subr.mxu0 0.0
    %4884 = vmatpush1.msra.mxu0 0.0
    %4885 = vmatprep.subr.mxu0 0.0
    %4886 = vmatpush1.msra.mxu0 0.0
    %4887 = vmatprep.subr.mxu0 0.0
    %4888 = vmatpush1.msra.mxu0 0.0
    %4889 = vmatprep.subr.mxu0 0.0
    %4890 = vmatpush1.msra.mxu0 0.0
    %4891 = vmatprep.subr.mxu0 0.0
    %4892 = vmatpush1.msra.mxu0 0.0
    %4893 = vmatprep.subr.mxu0 0.0
    %4894 = vmatpush1.msra.mxu0 0.0
    %4895 = vmatprep.subr.mxu0 0.0
    %4896 = vmatpush1.msra.mxu0 0.0
    %4897 = vmatprep.subr.mxu0 0.0
    %4898 = vmatpush1.msra.mxu0 0.0
    %4899 = vmatprep.subr.mxu0 0.0
    %4900 = vmatpush1.msra.mxu0 0.0
    %4901 = vmatprep.subr.mxu0 0.0
    %4902 = vmatpush1.msra.mxu0 0.0
    %4903 = vmatprep.subr.mxu0 0.0
    %4904 = vmatpush1.msra.mxu0 0.0
    %4905 = vmatprep.subr.mxu0 0.0
    %4906 = vmatpush1.msra.mxu0 0.0
    %4907 = vmatprep.subr.mxu0 0.0
    %4908 = vmatpush1.msra.mxu0 0.0
    %4909 = vmatprep.subr.mxu0 0.0
    %4910 = vmatpush1.msra.mxu0 0.0
    %4911 = vmatprep.subr.mxu0 0.0
    %4912 = vmatpush1.msra.mxu0 0.0
    %4913 = vmatprep.subr.mxu0 0.0
    %4914 = vmatpush1.msra.mxu0 0.0
    %4915 = vmatprep.subr.mxu0 0.0
    %4916 = vmatpush1.msra.mxu0 0.0
    %4917 = vmatprep.mubr.f32.mxu0 0.0
    %v4918 = vand.u32 %v952, 4294901760
    %4919 = vmatmul.mubr.f32.gmra.mrb[0].mxu0 %v4918
    %v4920 = vpop.f32.mrb[0].mxu0
    %v4921 = vadd.f32 %v4830, %v4920
    %v4922 = vpop.f32.mrb[0].mxu0
    %4923 = vmatprep.mubr.f32.mxu0 0.0
    %v4924 = vand.u32 %v955, 4294901760
    %4925 = vmatmul.mubr.f32.gmra.mrb[0].mxu0 %v4924
    %v4926 = vpop.f32.mrb[0].mxu0
    %v4927 = vadd.f32 %v4836, %v4926
    %v4928 = vpop.f32.mrb[0].mxu0
    %4929 = vmatprep.mubr.f32.mxu0 0.0
    %v4930 = vand.u32 %v958, 4294901760
    %4931 = vmatmul.mubr.f32.gmra.mrb[0].mxu0 %v4930
    %v4932 = vpop.f32.mrb[0].mxu0
    %v4933 = vadd.f32 %v4842, %v4932
    %v4934 = vpop.f32.mrb[0].mxu0
    %4935 = vmatprep.mubr.f32.mxu0 0.0
    %v4936 = vand.u32 %v961, 4294901760
    %4937 = vmatmul.mubr.f32.gmra.mrb[0].mxu0 %v4936
    %v4938 = vpop.f32.mrb[0].mxu0
    %v4939 = vadd.f32 %v4848, %v4938
    %v4940 = vpop.f32.mrb[0].mxu0
    %4941 = vdwg.mxu0
    %v4942 = vmax.f32 %v4921, 0.0
    %v4943 = vmax.f32 %v4927, 0.0
    %v4944 = vmax.f32 %v4933, 0.0
    %v4945 = vmax.f32 %v4939, 0.0
    %4946 = vmatprep.subr.mxu0 0.0
    %v4947 = vand.u32 %v4942, 4294901760
    %4948 = vmatpush1.msra.mxu0 %v4947
    %4949 = vmatprep.subr.mxu0 0.0
    %v4950 = vand.u32 %v4943, 4294901760
    %4951 = vmatpush1.msra.mxu0 %v4950
    %4952 = vmatprep.subr.mxu0 0.0
    %v4953 = vand.u32 %v4944, 4294901760
    %4954 = vmatpush1.msra.mxu0 %v4953
    %4955 = vmatprep.subr.mxu0 0.0
    %v4956 = vand.u32 %v4945, 4294901760
    %4957 = vmatpush1.msra.mxu0 %v4956
    %4958 = vmatprep.subr.mxu0 0.0
    %4959 = vmatpush1.msra.mxu0 0.0
    %4960 = vmatprep.subr.mxu0 0.0
    %4961 = vmatpush1.msra.mxu0 0.0
    %4962 = vmatprep.subr.mxu0 0.0
    %4963 = vmatpush1.msra.mxu0 0.0
    %4964 = vmatprep.subr.mxu0 0.0
    %4965 = vmatpush1.msra.mxu0 0.0
    %4966 = vmatprep.subr.mxu0 0.0
    %4967 = vmatpush1.msra.mxu0 0.0
    %4968 = vmatprep.subr.mxu0 0.0
    %4969 = vmatpush1.msra.mxu0 0.0
    %4970 = vmatprep.subr.mxu0 0.0
    %4971 = vmatpush1.msra.mxu0 0.0
    %4972 = vmatprep.subr.mxu0 0.0
    %4973 = vmatpush1.msra.mxu0 0.0
    %4974 = vmatprep.subr.mxu0 0.0
    %4975 = vmatpush1.msra.mxu0 0.0
    %4976 = vmatprep.subr.mxu0 0.0
    %4977 = vmatpush1.msra.mxu0 0.0
    %4978 = vmatprep.subr.mxu0 0.0
    %4979 = vmatpush1.msra.mxu0 0.0
    %4980 = vmatprep.subr.mxu0 0.0
    %4981 = vmatpush1.msra.mxu0 0.0
    %4982 = vmatprep.subr.mxu0 0.0
    %4983 = vmatpush1.msra.mxu0 0.0
    %4984 = vmatprep.subr.mxu0 0.0
    %4985 = vmatpush1.msra.mxu0 0.0
    %4986 = vmatprep.subr.mxu0 0.0
    %4987 = vmatpush1.msra.mxu0 0.0
    %4988 = vmatprep.subr.mxu0 0.0
    %4989 = vmatpush1.msra.mxu0 0.0
    %4990 = vmatprep.subr.mxu0 0.0
    %4991 = vmatpush1.msra.mxu0 0.0
    %4992 = vmatprep.subr.mxu0 0.0
    %4993 = vmatpush1.msra.mxu0 0.0
    %4994 = vmatprep.subr.mxu0 0.0
    %4995 = vmatpush1.msra.mxu0 0.0
    %4996 = vmatprep.subr.mxu0 0.0
    %4997 = vmatpush1.msra.mxu0 0.0
    %4998 = vmatprep.subr.mxu0 0.0
    %4999 = vmatpush1.msra.mxu0 0.0
    %5000 = vmatprep.subr.mxu0 0.0
    %5001 = vmatpush1.msra.mxu0 0.0
    %5002 = vmatprep.subr.mxu0 0.0
    %5003 = vmatpush1.msra.mxu0 0.0
    %5004 = vmatprep.subr.mxu0 0.0
    %5005 = vmatpush1.msra.mxu0 0.0
    %5006 = vmatprep.subr.mxu0 0.0
    %5007 = vmatpush1.msra.mxu0 0.0
    %5008 = vmatprep.subr.mxu0 0.0
    %5009 = vmatpush1.msra.mxu0 0.0
    %5010 = vmatprep.subr.mxu0 0.0
    %5011 = vmatpush1.msra.mxu0 0.0
    %5012 = vmatprep.subr.mxu0 0.0
    %5013 = vmatpush1.msra.mxu0 0.0
    %5014 = vmatprep.mubr.f32.mxu0 0.0
    %v5015 = vand.u32 %v1557, 4294901760
    %v5016 = vsub.f32 %v1557, %v5015
    %v5017 = vand.u32 %v5016, 4294901760
    %v5018 = vsub.f32 %v5016, %v5017
    %v5019 = vand.u32 %v5018, 4294901760
    %5020 = vmatmul.mubr.f32.gmra.mrb[0].mxu0 %v5019
    %v5021 = vpop.f32.mrb[0].mxu0
    %v5022 = vadd.f32 0.0, %v5021
    %v5023 = vpop.f32.mrb[0].mxu0
    %5024 = vmatprep.mubr.f32.mxu0 0.0
    %v5025 = vand.u32 %v1560, 4294901760
    %v5026 = vsub.f32 %v1560, %v5025
    %v5027 = vand.u32 %v5026, 4294901760
    %v5028 = vsub.f32 %v5026, %v5027
    %v5029 = vand.u32 %v5028, 4294901760
    %5030 = vmatmul.mubr.f32.gmra.mrb[0].mxu0 %v5029
    %v5031 = vpop.f32.mrb[0].mxu0
    %v5032 = vadd.f32 0.0, %v5031
    %v5033 = vpop.f32.mrb[0].mxu0
    %5034 = vdwg.mxu0
    %5035 = vmatprep.subr.mxu0 0.0
    %v5036 = vand.u32 %v4942, 4294901760
    %v5037 = vsub.f32 %v4942, %v5036
    %v5038 = vand.u32 %v5037, 4294901760
    %v5039 = vsub.f32 %v5037, %v5038
    %v5040 = vand.u32 %v5039, 4294901760
    %5041 = vmatpush1.msra.mxu0 %v5040
    %5042 = vmatprep.subr.mxu0 0.0
    %v5043 = vand.u32 %v4943, 4294901760
    %v5044 = vsub.f32 %v4943, %v5043
    %v5045 = vand.u32 %v5044, 4294901760
    %v5046 = vsub.f32 %v5044, %v5045
    %v5047 = vand.u32 %v5046, 4294901760
    %5048 = vmatpush1.msra.mxu0 %v5047
    %5049 = vmatprep.subr.mxu0 0.0
    %v5050 = vand.u32 %v4944, 4294901760
    %v5051 = vsub.f32 %v4944, %v5050
    %v5052 = vand.u32 %v5051, 4294901760
    %v5053 = vsub.f32 %v5051, %v5052
    %v5054 = vand.u32 %v5053, 4294901760
    %5055 = vmatpush1.msra.mxu0 %v5054
    %5056 = vmatprep.subr.mxu0 0.0
    %v5057 = vand.u32 %v4945, 4294901760
    %v5058 = vsub.f32 %v4945, %v5057
    %v5059 = vand.u32 %v5058, 4294901760
    %v5060 = vsub.f32 %v5058, %v5059
    %v5061 = vand.u32 %v5060, 4294901760
    %5062 = vmatpush1.msra.mxu0 %v5061
    %5063 = vmatprep.subr.mxu0 0.0
    %5064 = vmatpush1.msra.mxu0 0.0
    %5065 = vmatprep.subr.mxu0 0.0
    %5066 = vmatpush1.msra.mxu0 0.0
    %5067 = vmatprep.subr.mxu0 0.0
    %5068 = vmatpush1.msra.mxu0 0.0
    %5069 = vmatprep.subr.mxu0 0.0
    %5070 = vmatpush1.msra.mxu0 0.0
    %5071 = vmatprep.subr.mxu0 0.0
    %5072 = vmatpush1.msra.mxu0 0.0
    %5073 = vmatprep.subr.mxu0 0.0
    %5074 = vmatpush1.msra.mxu0 0.0
    %5075 = vmatprep.subr.mxu0 0.0
    %5076 = vmatpush1.msra.mxu0 0.0
    %5077 = vmatprep.subr.mxu0 0.0
    %5078 = vmatpush1.msra.mxu0 0.0
    %5079 = vmatprep.subr.mxu0 0.0
    %5080 = vmatpush1.msra.mxu0 0.0
    %5081 = vmatprep.subr.mxu0 0.0
    %5082 = vmatpush1.msra.mxu0 0.0
    %5083 = vmatprep.subr.mxu0 0.0
    %5084 = vmatpush1.msra.mxu0 0.0
    %5085 = vmatprep.subr.mxu0 0.0
    %5086 = vmatpush1.msra.mxu0 0.0
    %5087 = vmatprep.subr.mxu0 0.0
    %5088 = vmatpush1.msra.mxu0 0.0
    %5089 = vmatprep.subr.mxu0 0.0
    %5090 = vmatpush1.msra.mxu0 0.0
    %5091 = vmatprep.subr.mxu0 0.0
    %5092 = vmatpush1.msra.mxu0 0.0
    %5093 = vmatprep.subr.mxu0 0.0
    %5094 = vmatpush1.msra.mxu0 0.0
    %5095 = vmatprep.subr.mxu0 0.0
    %5096 = vmatpush1.msra.mxu0 0.0
    %5097 = vmatprep.subr.mxu0 0.0
    %5098 = vmatpush1.msra.mxu0 0.0
    %5099 = vmatprep.subr.mxu0 0.0
    %5100 = vmatpush1.msra.mxu0 0.0
    %5101 = vmatprep.subr.mxu0 0.0
    %5102 = vmatpush1.msra.mxu0 0.0
    %5103 = vmatprep.subr.mxu0 0.0
    %5104 = vmatpush1.msra.mxu0 0.0
    %5105 = vmatprep.subr.mxu0 0.0
    %5106 = vmatpush1.msra.mxu0 0.0
    %5107 = vmatprep.subr.mxu0 0.0
    %5108 = vmatpush1.msra.mxu0 0.0
    %5109 = vmatprep.subr.mxu0 0.0
    %5110 = vmatpush1.msra.mxu0 0.0
    %5111 = vmatprep.subr.mxu0 0.0
    %5112 = vmatpush1.msra.mxu0 0.0
    %5113 = vmatprep.subr.mxu0 0.0
    %5114 = vmatpush1.msra.mxu0 0.0
    %5115 = vmatprep.subr.mxu0 0.0
    %5116 = vmatpush1.msra.mxu0 0.0
    %5117 = vmatprep.subr.mxu0 0.0
    %5118 = vmatpush1.msra.mxu0 0.0
    %5119 = vmatprep.mubr.f32.mxu0 0.0
    %v5120 = vand.u32 %v1557, 4294901760
    %5121 = vmatmul.mubr.f32.gmra.mrb[0].mxu0 %v5120
    %v5122 = vpop.f32.mrb[0].mxu0
    %v5123 = vadd.f32 %v5022, %v5122
    %v5124 = vpop.f32.mrb[0].mxu0
    %5125 = vmatprep.mubr.f32.mxu0 0.0
    %v5126 = vand.u32 %v1560, 4294901760
    %5127 = vmatmul.mubr.f32.gmra.mrb[0].mxu0 %v5126
    %v5128 = vpop.f32.mrb[0].mxu0
    %v5129 = vadd.f32 %v5032, %v5128
    %v5130 = vpop.f32.mrb[0].mxu0
    %5131 = vdwg.mxu0
    %5132 = vmatprep.subr.mxu0 0.0
    %v5133 = vand.u32 %v4942, 4294901760
    %v5134 = vsub.f32 %v4942, %v5133
    %5135 = vmatpush1.msra.mxu0 %v5134
    %5136 = vmatprep.subr.mxu0 0.0
    %v5137 = vand.u32 %v4943, 4294901760
    %v5138 = vsub.f32 %v4943, %v5137
    %5139 = vmatpush1.msra.mxu0 %v5138
    %5140 = vmatprep.subr.mxu0 0.0
    %v5141 = vand.u32 %v4944, 4294901760
    %v5142 = vsub.f32 %v4944, %v5141
    %5143 = vmatpush1.msra.mxu0 %v5142
    %5144 = vmatprep.subr.mxu0 0.0
    %v5145 = vand.u32 %v4945, 4294901760
    %v5146 = vsub.f32 %v4945, %v5145
    %5147 = vmatpush1.msra.mxu0 %v5146
    %5148 = vmatprep.subr.mxu0 0.0
    %5149 = vmatpush1.msra.mxu0 0.0
    %5150 = vmatprep.subr.mxu0 0.0
    %5151 = vmatpush1.msra.mxu0 0.0
    %5152 = vmatprep.subr.mxu0 0.0
    %5153 = vmatpush1.msra.mxu0 0.0
    %5154 = vmatprep.subr.mxu0 0.0
    %5155 = vmatpush1.msra.mxu0 0.0
    %5156 = vmatprep.subr.mxu0 0.0
    %5157 = vmatpush1.msra.mxu0 0.0
    %5158 = vmatprep.subr.mxu0 0.0
    %5159 = vmatpush1.msra.mxu0 0.0
    %5160 = vmatprep.subr.mxu0 0.0
    %5161 = vmatpush1.msra.mxu0 0.0
    %5162 = vmatprep.subr.mxu0 0.0
    %5163 = vmatpush1.msra.mxu0 0.0
    %5164 = vmatprep.subr.mxu0 0.0
    %5165 = vmatpush1.msra.mxu0 0.0
    %5166 = vmatprep.subr.mxu0 0.0
    %5167 = vmatpush1.msra.mxu0 0.0
    %5168 = vmatprep.subr.mxu0 0.0
    %5169 = vmatpush1.msra.mxu0 0.0
    %5170 = vmatprep.subr.mxu0 0.0
    %5171 = vmatpush1.msra.mxu0 0.0
    %5172 = vmatprep.subr.mxu0 0.0
    %5173 = vmatpush1.msra.mxu0 0.0
    %5174 = vmatprep.subr.mxu0 0.0
    %5175 = vmatpush1.msra.mxu0 0.0
    %5176 = vmatprep.subr.mxu0 0.0
    %5177 = vmatpush1.msra.mxu0 0.0
    %5178 = vmatprep.subr.mxu0 0.0
    %5179 = vmatpush1.msra.mxu0 0.0
    %5180 = vmatprep.subr.mxu0 0.0
    %5181 = vmatpush1.msra.mxu0 0.0
    %5182 = vmatprep.subr.mxu0 0.0
    %5183 = vmatpush1.msra.mxu0 0.0
    %5184 = vmatprep.subr.mxu0 0.0
    %5185 = vmatpush1.msra.mxu0 0.0
    %5186 = vmatprep.subr.mxu0 0.0
    %5187 = vmatpush1.msra.mxu0 0.0
    %5188 = vmatprep.subr.mxu0 0.0
    %5189 = vmatpush1.msra.mxu0 0.0
    %5190 = vmatprep.subr.mxu0 0.0
    %5191 = vmatpush1.msra.mxu0 0.0
    %5192 = vmatprep.subr.mxu0 0.0
    %5193 = vmatpush1.msra.mxu0 0.0
    %5194 = vmatprep.subr.mxu0 0.0
    %5195 = vmatpush1.msra.mxu0 0.0
    %5196 = vmatprep.subr.mxu0 0.0
    %5197 = vmatpush1.msra.mxu0 0.0
    %5198 = vmatprep.subr.mxu0 0.0
    %5199 = vmatpush1.msra.mxu0 0.0
    %5200 = vmatprep.subr.mxu0 0.0
    %5201 = vmatpush1.msra.mxu0 0.0
    %5202 = vmatprep.subr.mxu0 0.0
    %5203 = vmatpush1.msra.mxu0 0.0
    %5204 = vmatprep.mubr.f32.mxu0 0.0
    %v5205 = vand.u32 %v1557, 4294901760
    %v5206 = vsub.f32 %v1557, %v5205
    %5207 = vmatmul.mubr.f32.gmra.mrb[0].mxu0 %v5206
    %v5208 = vpop.f32.mrb[0].mxu0
    %v5209 = vadd.f32 %v5123, %v5208
    %v5210 = vpop.f32.mrb[0].mxu0
    %5211 = vmatprep.mubr.f32.mxu0 0.0
    %v5212 = vand.u32 %v1560, 4294901760
    %v5213 = vsub.f32 %v1560, %v5212
    %5214 = vmatmul.mubr.f32.gmra.mrb[0].mxu0 %v5213
    %v5215 = vpop.f32.mrb[0].mxu0
    %v5216 = vadd.f32 %v5129, %v5215
    %v5217 = vpop.f32.mrb[0].mxu0
    %5218 = vdwg.mxu0
    %5219 = vmatprep.subr.mxu0 0.0
    %v5220 = vand.u32 %v4942, 4294901760
    %5221 = vmatpush1.msra.mxu0 %v5220
    %5222 = vmatprep.subr.mxu0 0.0
    %v5223 = vand.u32 %v4943, 4294901760
    %5224 = vmatpush1.msra.mxu0 %v5223
    %5225 = vmatprep.subr.mxu0 0.0
    %v5226 = vand.u32 %v4944, 4294901760
    %5227 = vmatpush1.msra.mxu0 %v5226
    %5228 = vmatprep.subr.mxu0 0.0
    %v5229 = vand.u32 %v4945, 4294901760
    %5230 = vmatpush1.msra.mxu0 %v5229
    %5231 = vmatprep.subr.mxu0 0.0
    %5232 = vmatpush1.msra.mxu0 0.0
    %5233 = vmatprep.subr.mxu0 0.0
    %5234 = vmatpush1.msra.mxu0 0.0
    %5235 = vmatprep.subr.mxu0 0.0
    %5236 = vmatpush1.msra.mxu0 0.0
    %5237 = vmatprep.subr.mxu0 0.0
    %5238 = vmatpush1.msra.mxu0 0.0
    %5239 = vmatprep.subr.mxu0 0.0
    %5240 = vmatpush1.msra.mxu0 0.0
    %5241 = vmatprep.subr.mxu0 0.0
    %5242 = vmatpush1.msra.mxu0 0.0
    %5243 = vmatprep.subr.mxu0 0.0
    %5244 = vmatpush1.msra.mxu0 0.0
    %5245 = vmatprep.subr.mxu0 0.0
    %5246 = vmatpush1.msra.mxu0 0.0
    %5247 = vmatprep.subr.mxu0 0.0
    %5248 = vmatpush1.msra.mxu0 0.0
    %5249 = vmatprep.subr.mxu0 0.0
    %5250 = vmatpush1.msra.mxu0 0.0
    %5251 = vmatprep.subr.mxu0 0.0
    %5252 = vmatpush1.msra.mxu0 0.0
    %5253 = vmatprep.subr.mxu0 0.0
    %5254 = vmatpush1.msra.mxu0 0.0
    %5255 = vmatprep.subr.mxu0 0.0
    %5256 = vmatpush1.msra.mxu0 0.0
    %5257 = vmatprep.subr.mxu0 0.0
    %5258 = vmatpush1.msra.mxu0 0.0
    %5259 = vmatprep.subr.mxu0 0.0
    %5260 = vmatpush1.msra.mxu0 0.0
    %5261 = vmatprep.subr.mxu0 0.0
    %5262 = vmatpush1.msra.mxu0 0.0
    %5263 = vmatprep.subr.mxu0 0.0
    %5264 = vmatpush1.msra.mxu0 0.0
    %5265 = vmatprep.subr.mxu0 0.0
    %5266 = vmatpush1.msra.mxu0 0.0
    %5267 = vmatprep.subr.mxu0 0.0
    %5268 = vmatpush1.msra.mxu0 0.0
    %5269 = vmatprep.subr.mxu0 0.0
    %5270 = vmatpush1.msra.mxu0 0.0
    %5271 = vmatprep.subr.mxu0 0.0
    %5272 = vmatpush1.msra.mxu0 0.0
    %5273 = vmatprep.subr.mxu0 0.0
    %5274 = vmatpush1.msra.mxu0 0.0
    %5275 = vmatprep.subr.mxu0 0.0
    %5276 = vmatpush1.msra.mxu0 0.0
    %5277 = vmatprep.subr.mxu0 0.0
    %5278 = vmatpush1.msra.mxu0 0.0
    %5279 = vmatprep.subr.mxu0 0.0
    %5280 = vmatpush1.msra.mxu0 0.0
    %5281 = vmatprep.subr.mxu0 0.0
    %5282 = vmatpush1.msra.mxu0 0.0
    %5283 = vmatprep.subr.mxu0 0.0
    %5284 = vmatpush1.msra.mxu0 0.0
    %5285 = vmatprep.subr.mxu0 0.0
    %5286 = vmatpush1.msra.mxu0 0.0
    %5287 = vmatprep.mubr.f32.mxu0 0.0
    %v5288 = vand.u32 %v1557, 4294901760
    %v5289 = vsub.f32 %v1557, %v5288
    %v5290 = vand.u32 %v5289, 4294901760
    %5291 = vmatmul.mubr.f32.gmra.mrb[0].mxu0 %v5290
    %v5292 = vpop.f32.mrb[0].mxu0
    %v5293 = vadd.f32 %v5209, %v5292
    %v5294 = vpop.f32.mrb[0].mxu0
    %5295 = vmatprep.mubr.f32.mxu0 0.0
    %v5296 = vand.u32 %v1560, 4294901760
    %v5297 = vsub.f32 %v1560, %v5296
    %v5298 = vand.u32 %v5297, 4294901760
    %5299 = vmatmul.mubr.f32.gmra.mrb[0].mxu0 %v5298
    %v5300 = vpop.f32.mrb[0].mxu0
    %v5301 = vadd.f32 %v5216, %v5300
    %v5302 = vpop.f32.mrb[0].mxu0
    %5303 = vdwg.mxu0
    %5304 = vmatprep.subr.mxu0 0.0
    %v5305 = vand.u32 %v4942, 4294901760
    %v5306 = vsub.f32 %v4942, %v5305
    %v5307 = vand.u32 %v5306, 4294901760
    %5308 = vmatpush1.msra.mxu0 %v5307
    %5309 = vmatprep.subr.mxu0 0.0
    %v5310 = vand.u32 %v4943, 4294901760
    %v5311 = vsub.f32 %v4943, %v5310
    %v5312 = vand.u32 %v5311, 4294901760
    %5313 = vmatpush1.msra.mxu0 %v5312
    %5314 = vmatprep.subr.mxu0 0.0
    %v5315 = vand.u32 %v4944, 4294901760
    %v5316 = vsub.f32 %v4944, %v5315
    %v5317 = vand.u32 %v5316, 4294901760
    %5318 = vmatpush1.msra.mxu0 %v5317
    %5319 = vmatprep.subr.mxu0 0.0
    %v5320 = vand.u32 %v4945, 4294901760
    %v5321 = vsub.f32 %v4945, %v5320
    %v5322 = vand.u32 %v5321, 4294901760
    %5323 = vmatpush1.msra.mxu0 %v5322
    %5324 = vmatprep.subr.mxu0 0.0
    %5325 = vmatpush1.msra.mxu0 0.0
    %5326 = vmatprep.subr.mxu0 0.0
    %5327 = vmatpush1.msra.mxu0 0.0
    %5328 = vmatprep.subr.mxu0 0.0
    %5329 = vmatpush1.msra.mxu0 0.0
    %5330 = vmatprep.subr.mxu0 0.0
    %5331 = vmatpush1.msra.mxu0 0.0
    %5332 = vmatprep.subr.mxu0 0.0
    %5333 = vmatpush1.msra.mxu0 0.0
    %5334 = vmatprep.subr.mxu0 0.0
    %5335 = vmatpush1.msra.mxu0 0.0
    %5336 = vmatprep.subr.mxu0 0.0
    %5337 = vmatpush1.msra.mxu0 0.0
    %5338 = vmatprep.subr.mxu0 0.0
    %5339 = vmatpush1.msra.mxu0 0.0
    %5340 = vmatprep.subr.mxu0 0.0
    %5341 = vmatpush1.msra.mxu0 0.0
    %5342 = vmatprep.subr.mxu0 0.0
    %5343 = vmatpush1.msra.mxu0 0.0
    %5344 = vmatprep.subr.mxu0 0.0
    %5345 = vmatpush1.msra.mxu0 0.0
    %5346 = vmatprep.subr.mxu0 0.0
    %5347 = vmatpush1.msra.mxu0 0.0
    %5348 = vmatprep.subr.mxu0 0.0
    %5349 = vmatpush1.msra.mxu0 0.0
    %5350 = vmatprep.subr.mxu0 0.0
    %5351 = vmatpush1.msra.mxu0 0.0
    %5352 = vmatprep.subr.mxu0 0.0
    %5353 = vmatpush1.msra.mxu0 0.0
    %5354 = vmatprep.subr.mxu0 0.0
    %5355 = vmatpush1.msra.mxu0 0.0
    %5356 = vmatprep.subr.mxu0 0.0
    %5357 = vmatpush1.msra.mxu0 0.0
    %5358 = vmatprep.subr.mxu0 0.0
    %5359 = vmatpush1.msra.mxu0 0.0
    %5360 = vmatprep.subr.mxu0 0.0
    %5361 = vmatpush1.msra.mxu0 0.0
    %5362 = vmatprep.subr.mxu0 0.0
    %5363 = vmatpush1.msra.mxu0 0.0
    %5364 = vmatprep.subr.mxu0 0.0
    %5365 = vmatpush1.msra.mxu0 0.0
    %5366 = vmatprep.subr.mxu0 0.0
    %5367 = vmatpush1.msra.mxu0 0.0
    %5368 = vmatprep.subr.mxu0 0.0
    %5369 = vmatpush1.msra.mxu0 0.0
    %5370 = vmatprep.subr.mxu0 0.0
    %5371 = vmatpush1.msra.mxu0 0.0
    %5372 = vmatprep.subr.mxu0 0.0
    %5373 = vmatpush1.msra.mxu0 0.0
    %5374 = vmatprep.subr.mxu0 0.0
    %5375 = vmatpush1.msra.mxu0 0.0
    %5376 = vmatprep.subr.mxu0 0.0
    %5377 = vmatpush1.msra.mxu0 0.0
    %5378 = vmatprep.subr.mxu0 0.0
    %5379 = vmatpush1.msra.mxu0 0.0
    %5380 = vmatprep.mubr.f32.mxu0 0.0
    %v5381 = vand.u32 %v1557, 4294901760
    %5382 = vmatmul.mubr.f32.gmra.mrb[0].mxu0 %v5381
    %v5383 = vpop.f32.mrb[0].mxu0
    %v5384 = vadd.f32 %v5293, %v5383
    %v5385 = vpop.f32.mrb[0].mxu0
    %5386 = vmatprep.mubr.f32.mxu0 0.0
    %v5387 = vand.u32 %v1560, 4294901760
    %5388 = vmatmul.mubr.f32.gmra.mrb[0].mxu0 %v5387
    %v5389 = vpop.f32.mrb[0].mxu0
    %v5390 = vadd.f32 %v5301, %v5389
    %v5391 = vpop.f32.mrb[0].mxu0
    %5392 = vdwg.mxu0
    %5393 = vmatprep.subr.mxu0 0.0
    %v5394 = vand.u32 %v4942, 4294901760
    %5395 = vmatpush1.msra.mxu0 %v5394
    %5396 = vmatprep.subr.mxu0 0.0
    %v5397 = vand.u32 %v4943, 4294901760
    %5398 = vmatpush1.msra.mxu0 %v5397
    %5399 = vmatprep.subr.mxu0 0.0
    %v5400 = vand.u32 %v4944, 4294901760
    %5401 = vmatpush1.msra.mxu0 %v5400
    %5402 = vmatprep.subr.mxu0 0.0
    %v5403 = vand.u32 %v4945, 4294901760
    %5404 = vmatpush1.msra.mxu0 %v5403
    %5405 = vmatprep.subr.mxu0 0.0
    %5406 = vmatpush1.msra.mxu0 0.0
    %5407 = vmatprep.subr.mxu0 0.0
    %5408 = vmatpush1.msra.mxu0 0.0
    %5409 = vmatprep.subr.mxu0 0.0
    %5410 = vmatpush1.msra.mxu0 0.0
    %5411 = vmatprep.subr.mxu0 0.0
    %5412 = vmatpush1.msra.mxu0 0.0
    %5413 = vmatprep.subr.mxu0 0.0
    %5414 = vmatpush1.msra.mxu0 0.0
    %5415 = vmatprep.subr.mxu0 0.0
    %5416 = vmatpush1.msra.mxu0 0.0
    %5417 = vmatprep.subr.mxu0 0.0
    %5418 = vmatpush1.msra.mxu0 0.0
    %5419 = vmatprep.subr.mxu0 0.0
    %5420 = vmatpush1.msra.mxu0 0.0
    %5421 = vmatprep.subr.mxu0 0.0
    %5422 = vmatpush1.msra.mxu0 0.0
    %5423 = vmatprep.subr.mxu0 0.0
    %5424 = vmatpush1.msra.mxu0 0.0
    %5425 = vmatprep.subr.mxu0 0.0
    %5426 = vmatpush1.msra.mxu0 0.0
    %5427 = vmatprep.subr.mxu0 0.0
    %5428 = vmatpush1.msra.mxu0 0.0
    %5429 = vmatprep.subr.mxu0 0.0
    %5430 = vmatpush1.msra.mxu0 0.0
    %5431 = vmatprep.subr.mxu0 0.0
    %5432 = vmatpush1.msra.mxu0 0.0
    %5433 = vmatprep.subr.mxu0 0.0
    %5434 = vmatpush1.msra.mxu0 0.0
    %5435 = vmatprep.subr.mxu0 0.0
    %5436 = vmatpush1.msra.mxu0 0.0
    %5437 = vmatprep.subr.mxu0 0.0
    %5438 = vmatpush1.msra.mxu0 0.0
    %5439 = vmatprep.subr.mxu0 0.0
    %5440 = vmatpush1.msra.mxu0 0.0
    %5441 = vmatprep.subr.mxu0 0.0
    %5442 = vmatpush1.msra.mxu0 0.0
    %5443 = vmatprep.subr.mxu0 0.0
    %5444 = vmatpush1.msra.mxu0 0.0
    %5445 = vmatprep.subr.mxu0 0.0
    %5446 = vmatpush1.msra.mxu0 0.0
    %5447 = vmatprep.subr.mxu0 0.0
    %5448 = vmatpush1.msra.mxu0 0.0
    %5449 = vmatprep.subr.mxu0 0.0
    %5450 = vmatpush1.msra.mxu0 0.0
    %5451 = vmatprep.subr.mxu0 0.0
    %5452 = vmatpush1.msra.mxu0 0.0
    %5453 = vmatprep.subr.mxu0 0.0
    %5454 = vmatpush1.msra.mxu0 0.0
    %5455 = vmatprep.subr.mxu0 0.0
    %5456 = vmatpush1.msra.mxu0 0.0
    %5457 = vmatprep.subr.mxu0 0.0
    %5458 = vmatpush1.msra.mxu0 0.0
    %5459 = vmatprep.subr.mxu0 0.0
    %5460 = vmatpush1.msra.mxu0 0.0
    %5461 = vmatprep.mubr.f32.mxu0 0.0
    %v5462 = vand.u32 %v1557, 4294901760
    %5463 = vmatmul.mubr.f32.gmra.mrb[0].mxu0 %v5462
    %v5464 = vpop.f32.mrb[0].mxu0
    %v5465 = vadd.f32 %v5384, %v5464
    %v5466 = vpop.f32.mrb[0].mxu0
    %5467 = vmatprep.mubr.f32.mxu0 0.0
    %v5468 = vand.u32 %v1560, 4294901760
    %5469 = vmatmul.mubr.f32.gmra.mrb[0].mxu0 %v5468
    %v5470 = vpop.f32.mrb[0].mxu0
    %v5471 = vadd.f32 %v5390, %v5470
    %v5472 = vpop.f32.mrb[0].mxu0
    %5473 = vdwg.mxu0
    %v5474 = vadd.f32 %v3557, %v5465
    %v5475 = vadd.f32 %v3558, %v5471
    %s5476 = scalar_lea.vmem [#allocation7], 128
    %v5477 = vld [vmem:[%s5476] sm:$0xff]
    %v5478 = vld [vmem:[%s5476 + $0x8] sm:$0xff]
    %v5479 = vld [vmem:[%s5476 + $0x10] sm:$0xff]
    %v5480 = vld [vmem:[%s5476 + $0x18] sm:$0xff]
    %v5481 = vld [vmem:[%s5476 + $0x20] sm:$0xff]
    %v5482 = vld [vmem:[%s5476 + $0x28] sm:$0xff]
    %v5483 = vld [vmem:[%s5476 + $0x30] sm:$0xff]
    %v5484 = vld [vmem:[%s5476 + $0x38] sm:$0xff]
    %v5485 = vld [vmem:[%s5476 + $0x40] sm:$0xff]
    %v5486 = vld [vmem:[%s5476 + $0x48] sm:$0xff]
    %v5487 = vld [vmem:[%s5476 + $0x50] sm:$0xff]
    %v5488 = vld [vmem:[%s5476 + $0x58] sm:$0xff]
    %v5489 = vld [vmem:[%s5476 + $0x60] sm:$0xff]
    %v5490 = vld [vmem:[%s5476 + $0x68] sm:$0xff]
    %v5491 = vld [vmem:[%s5476 + $0x70] sm:$0xff]
    %v5492 = vld [vmem:[%s5476 + $0x78] sm:$0xff]
    %s5493 = scalar_lea.vmem %s7, 1
    %v5494 = vld [vmem:[%s5493] sm:$0x1]
    %v5496 = vlaneseq
    %v5497 = vshrl.u32 %v5496, 7
    %v5498 = vsub.s32 0, %v5497
    %v5499 = vrot.slane %v5494, %v5498
    %5501 = vmatprep.subr.mxu0 0.0
    %v5502 = vand.u32 %v5477, 4294901760
    %5503 = vmatpush1.msra.mxu0 %v5502
    %5504 = vmatprep.subr.mxu0 0.0
    %v5505 = vand.u32 %v5478, 4294901760
    %5506 = vmatpush1.msra.mxu0 %v5505
    %5507 = vmatprep.subr.mxu0 0.0
    %v5508 = vand.u32 %v5479, 4294901760
    %5509 = vmatpush1.msra.mxu0 %v5508
    %5510 = vmatprep.subr.mxu0 0.0
    %v5511 = vand.u32 %v5480, 4294901760
    %5512 = vmatpush1.msra.mxu0 %v5511
    %5513 = vmatprep.subr.mxu0 0.0
    %v5514 = vand.u32 %v5481, 4294901760
    %5515 = vmatpush1.msra.mxu0 %v5514
    %5516 = vmatprep.subr.mxu0 0.0
    %v5517 = vand.u32 %v5482, 4294901760
    %5518 = vmatpush1.msra.mxu0 %v5517
    %5519 = vmatprep.subr.mxu0 0.0
    %v5520 = vand.u32 %v5483, 4294901760
    %5521 = vmatpush1.msra.mxu0 %v5520
    %5522 = vmatprep.subr.mxu0 0.0
    %v5523 = vand.u32 %v5484, 4294901760
    %5524 = vmatpush1.msra.mxu0 %v5523
    %5525 = vmatprep.subr.mxu0 0.0
    %v5526 = vand.u32 %v5485, 4294901760
    %5527 = vmatpush1.msra.mxu0 %v5526
    %5528 = vmatprep.subr.mxu0 0.0
    %v5529 = vand.u32 %v5486, 4294901760
    %5530 = vmatpush1.msra.mxu0 %v5529
    %5531 = vmatprep.subr.mxu0 0.0
    %v5532 = vand.u32 %v5487, 4294901760
    %5533 = vmatpush1.msra.mxu0 %v5532
    %5534 = vmatprep.subr.mxu0 0.0
    %v5535 = vand.u32 %v5488, 4294901760
    %5536 = vmatpush1.msra.mxu0 %v5535
    %5537 = vmatprep.subr.mxu0 0.0
    %v5538 = vand.u32 %v5489, 4294901760
    %5539 = vmatpush1.msra.mxu0 %v5538
    %5540 = vmatprep.subr.mxu0 0.0
    %v5541 = vand.u32 %v5490, 4294901760
    %5542 = vmatpush1.msra.mxu0 %v5541
    %5543 = vmatprep.subr.mxu0 0.0
    %v5544 = vand.u32 %v5491, 4294901760
    %5545 = vmatpush1.msra.mxu0 %v5544
    %5546 = vmatprep.subr.mxu0 0.0
    %v5547 = vand.u32 %v5492, 4294901760
    %5548 = vmatpush1.msra.mxu0 %v5547
    %5549 = vmatprep.subr.mxu0 0.0
    %5550 = vmatpush1.msra.mxu0 0.0
    %5551 = vmatprep.subr.mxu0 0.0
    %5552 = vmatpush1.msra.mxu0 0.0
    %5553 = vmatprep.subr.mxu0 0.0
    %5554 = vmatpush1.msra.mxu0 0.0
    %5555 = vmatprep.subr.mxu0 0.0
    %5556 = vmatpush1.msra.mxu0 0.0
    %5557 = vmatprep.subr.mxu0 0.0
    %5558 = vmatpush1.msra.mxu0 0.0
    %5559 = vmatprep.subr.mxu0 0.0
    %5560 = vmatpush1.msra.mxu0 0.0
    %5561 = vmatprep.subr.mxu0 0.0
    %5562 = vmatpush1.msra.mxu0 0.0
    %5563 = vmatprep.subr.mxu0 0.0
    %5564 = vmatpush1.msra.mxu0 0.0
    %5565 = vmatprep.subr.mxu0 0.0
    %5566 = vmatpush1.msra.mxu0 0.0
    %5567 = vmatprep.subr.mxu0 0.0
    %5568 = vmatpush1.msra.mxu0 0.0
    %5569 = vmatprep.subr.mxu0 0.0
    %5570 = vmatpush1.msra.mxu0 0.0
    %5571 = vmatprep.subr.mxu0 0.0
    %5572 = vmatpush1.msra.mxu0 0.0
    %5573 = vmatprep.subr.mxu0 0.0
    %5574 = vmatpush1.msra.mxu0 0.0
    %5575 = vmatprep.subr.mxu0 0.0
    %5576 = vmatpush1.msra.mxu0 0.0
    %5577 = vmatprep.subr.mxu0 0.0
    %5578 = vmatpush1.msra.mxu0 0.0
    %5579 = vmatprep.subr.mxu0 0.0
    %5580 = vmatpush1.msra.mxu0 0.0
    %5581 = vmatprep.mubr.f32.mxu0 0.0
    %v5582 = vand.u32 %v5474, 4294901760
    %v5583 = vsub.f32 %v5474, %v5582
    %v5584 = vand.u32 %v5583, 4294901760
    %v5585 = vsub.f32 %v5583, %v5584
    %v5586 = vand.u32 %v5585, 4294901760
    %5587 = vmatmul.mubr.f32.gmra.mrb[0].mxu0 %v5586
    %v5588 = vpop.f32.mrb[0].mxu0
    %v5589 = vadd.f32 %v5499, %v5588
    %v5590 = vpop.f32.mrb[0].mxu0
    %5591 = vmatprep.mubr.f32.mxu0 0.0
    %v5592 = vand.u32 %v5475, 4294901760
    %v5593 = vsub.f32 %v5475, %v5592
    %v5594 = vand.u32 %v5593, 4294901760
    %v5595 = vsub.f32 %v5593, %v5594
    %v5596 = vand.u32 %v5595, 4294901760
    %5597 = vmatmul.mubr.f32.gmra.mrb[0].mxu0 %v5596
    %v5598 = vpop.f32.mrb[0].mxu0
    %v5599 = vadd.f32 %v5499, %v5598
    %v5600 = vpop.f32.mrb[0].mxu0
    %5601 = vdwg.mxu0
    %5602 = vmatprep.subr.mxu0 0.0
    %v5603 = vand.u32 %v5477, 4294901760
    %v5604 = vsub.f32 %v5477, %v5603
    %v5605 = vand.u32 %v5604, 4294901760
    %v5606 = vsub.f32 %v5604, %v5605
    %v5607 = vand.u32 %v5606, 4294901760
    %5608 = vmatpush1.msra.mxu0 %v5607
    %5609 = vmatprep.subr.mxu0 0.0
    %v5610 = vand.u32 %v5478, 4294901760
    %v5611 = vsub.f32 %v5478, %v5610
    %v5612 = vand.u32 %v5611, 4294901760
    %v5613 = vsub.f32 %v5611, %v5612
    %v5614 = vand.u32 %v5613, 4294901760
    %5615 = vmatpush1.msra.mxu0 %v5614
    %5616 = vmatprep.subr.mxu0 0.0
    %v5617 = vand.u32 %v5479, 4294901760
    %v5618 = vsub.f32 %v5479, %v5617
    %v5619 = vand.u32 %v5618, 4294901760
    %v5620 = vsub.f32 %v5618, %v5619
    %v5621 = vand.u32 %v5620, 4294901760
    %5622 = vmatpush1.msra.mxu0 %v5621
    %5623 = vmatprep.subr.mxu0 0.0
    %v5624 = vand.u32 %v5480, 4294901760
    %v5625 = vsub.f32 %v5480, %v5624
    %v5626 = vand.u32 %v5625, 4294901760
    %v5627 = vsub.f32 %v5625, %v5626
    %v5628 = vand.u32 %v5627, 4294901760
    %5629 = vmatpush1.msra.mxu0 %v5628
    %5630 = vmatprep.subr.mxu0 0.0
    %v5631 = vand.u32 %v5481, 4294901760
    %v5632 = vsub.f32 %v5481, %v5631
    %v5633 = vand.u32 %v5632, 4294901760
    %v5634 = vsub.f32 %v5632, %v5633
    %v5635 = vand.u32 %v5634, 4294901760
    %5636 = vmatpush1.msra.mxu0 %v5635
    %5637 = vmatprep.subr.mxu0 0.0
    %v5638 = vand.u32 %v5482, 4294901760
    %v5639 = vsub.f32 %v5482, %v5638
    %v5640 = vand.u32 %v5639, 4294901760
    %v5641 = vsub.f32 %v5639, %v5640
    %v5642 = vand.u32 %v5641, 4294901760
    %5643 = vmatpush1.msra.mxu0 %v5642
    %5644 = vmatprep.subr.mxu0 0.0
    %v5645 = vand.u32 %v5483, 4294901760
    %v5646 = vsub.f32 %v5483, %v5645
    %v5647 = vand.u32 %v5646, 4294901760
    %v5648 = vsub.f32 %v5646, %v5647
    %v5649 = vand.u32 %v5648, 4294901760
    %5650 = vmatpush1.msra.mxu0 %v5649
    %5651 = vmatprep.subr.mxu0 0.0
    %v5652 = vand.u32 %v5484, 4294901760
    %v5653 = vsub.f32 %v5484, %v5652
    %v5654 = vand.u32 %v5653, 4294901760
    %v5655 = vsub.f32 %v5653, %v5654
    %v5656 = vand.u32 %v5655, 4294901760
    %5657 = vmatpush1.msra.mxu0 %v5656
    %5658 = vmatprep.subr.mxu0 0.0
    %v5659 = vand.u32 %v5485, 4294901760
    %v5660 = vsub.f32 %v5485, %v5659
    %v5661 = vand.u32 %v5660, 4294901760
    %v5662 = vsub.f32 %v5660, %v5661
    %v5663 = vand.u32 %v5662, 4294901760
    %5664 = vmatpush1.msra.mxu0 %v5663
    %5665 = vmatprep.subr.mxu0 0.0
    %v5666 = vand.u32 %v5486, 4294901760
    %v5667 = vsub.f32 %v5486, %v5666
    %v5668 = vand.u32 %v5667, 4294901760
    %v5669 = vsub.f32 %v5667, %v5668
    %v5670 = vand.u32 %v5669, 4294901760
    %5671 = vmatpush1.msra.mxu0 %v5670
    %5672 = vmatprep.subr.mxu0 0.0
    %v5673 = vand.u32 %v5487, 4294901760
    %v5674 = vsub.f32 %v5487, %v5673
    %v5675 = vand.u32 %v5674, 4294901760
    %v5676 = vsub.f32 %v5674, %v5675
    %v5677 = vand.u32 %v5676, 4294901760
    %5678 = vmatpush1.msra.mxu0 %v5677
    %5679 = vmatprep.subr.mxu0 0.0
    %v5680 = vand.u32 %v5488, 4294901760
    %v5681 = vsub.f32 %v5488, %v5680
    %v5682 = vand.u32 %v5681, 4294901760
    %v5683 = vsub.f32 %v5681, %v5682
    %v5684 = vand.u32 %v5683, 4294901760
    %5685 = vmatpush1.msra.mxu0 %v5684
    %5686 = vmatprep.subr.mxu0 0.0
    %v5687 = vand.u32 %v5489, 4294901760
    %v5688 = vsub.f32 %v5489, %v5687
    %v5689 = vand.u32 %v5688, 4294901760
    %v5690 = vsub.f32 %v5688, %v5689
    %v5691 = vand.u32 %v5690, 4294901760
    %5692 = vmatpush1.msra.mxu0 %v5691
    %5693 = vmatprep.subr.mxu0 0.0
    %v5694 = vand.u32 %v5490, 4294901760
    %v5695 = vsub.f32 %v5490, %v5694
    %v5696 = vand.u32 %v5695, 4294901760
    %v5697 = vsub.f32 %v5695, %v5696
    %v5698 = vand.u32 %v5697, 4294901760
    %5699 = vmatpush1.msra.mxu0 %v5698
    %5700 = vmatprep.subr.mxu0 0.0
    %v5701 = vand.u32 %v5491, 4294901760
    %v5702 = vsub.f32 %v5491, %v5701
    %v5703 = vand.u32 %v5702, 4294901760
    %v5704 = vsub.f32 %v5702, %v5703
    %v5705 = vand.u32 %v5704, 4294901760
    %5706 = vmatpush1.msra.mxu0 %v5705
    %5707 = vmatprep.subr.mxu0 0.0
    %v5708 = vand.u32 %v5492, 4294901760
    %v5709 = vsub.f32 %v5492, %v5708
    %v5710 = vand.u32 %v5709, 4294901760
    %v5711 = vsub.f32 %v5709, %v5710
    %v5712 = vand.u32 %v5711, 4294901760
    %5713 = vmatpush1.msra.mxu0 %v5712
    %5714 = vmatprep.subr.mxu0 0.0
    %5715 = vmatpush1.msra.mxu0 0.0
    %5716 = vmatprep.subr.mxu0 0.0
    %5717 = vmatpush1.msra.mxu0 0.0
    %5718 = vmatprep.subr.mxu0 0.0
    %5719 = vmatpush1.msra.mxu0 0.0
    %5720 = vmatprep.subr.mxu0 0.0
    %5721 = vmatpush1.msra.mxu0 0.0
    %5722 = vmatprep.subr.mxu0 0.0
    %5723 = vmatpush1.msra.mxu0 0.0
    %5724 = vmatprep.subr.mxu0 0.0
    %5725 = vmatpush1.msra.mxu0 0.0
    %5726 = vmatprep.subr.mxu0 0.0
    %5727 = vmatpush1.msra.mxu0 0.0
    %5728 = vmatprep.subr.mxu0 0.0
    %5729 = vmatpush1.msra.mxu0 0.0
    %5730 = vmatprep.subr.mxu0 0.0
    %5731 = vmatpush1.msra.mxu0 0.0
    %5732 = vmatprep.subr.mxu0 0.0
    %5733 = vmatpush1.msra.mxu0 0.0
    %5734 = vmatprep.subr.mxu0 0.0
    %5735 = vmatpush1.msra.mxu0 0.0
    %5736 = vmatprep.subr.mxu0 0.0
    %5737 = vmatpush1.msra.mxu0 0.0
    %5738 = vmatprep.subr.mxu0 0.0
    %5739 = vmatpush1.msra.mxu0 0.0
    %5740 = vmatprep.subr.mxu0 0.0
    %5741 = vmatpush1.msra.mxu0 0.0
    %5742 = vmatprep.subr.mxu0 0.0
    %5743 = vmatpush1.msra.mxu0 0.0
    %5744 = vmatprep.subr.mxu0 0.0
    %5745 = vmatpush1.msra.mxu0 0.0
    %5746 = vmatprep.mubr.f32.mxu0 0.0
    %v5747 = vand.u32 %v5474, 4294901760
    %5748 = vmatmul.mubr.f32.gmra.mrb[0].mxu0 %v5747
    %v5749 = vpop.f32.mrb[0].mxu0
    %v5750 = vadd.f32 %v5589, %v5749
    %v5751 = vpop.f32.mrb[0].mxu0
    %5752 = vmatprep.mubr.f32.mxu0 0.0
    %v5753 = vand.u32 %v5475, 4294901760
    %5754 = vmatmul.mubr.f32.gmra.mrb[0].mxu0 %v5753
    %v5755 = vpop.f32.mrb[0].mxu0
    %v5756 = vadd.f32 %v5599, %v5755
    %v5757 = vpop.f32.mrb[0].mxu0
    %5758 = vdwg.mxu0
    %5759 = vmatprep.subr.mxu0 0.0
    %v5760 = vand.u32 %v5477, 4294901760
    %v5761 = vsub.f32 %v5477, %v5760
    %5762 = vmatpush1.msra.mxu0 %v5761
    %5763 = vmatprep.subr.mxu0 0.0
    %v5764 = vand.u32 %v5478, 4294901760
    %v5765 = vsub.f32 %v5478, %v5764
    %5766 = vmatpush1.msra.mxu0 %v5765
    %5767 = vmatprep.subr.mxu0 0.0
    %v5768 = vand.u32 %v5479, 4294901760
    %v5769 = vsub.f32 %v5479, %v5768
    %5770 = vmatpush1.msra.mxu0 %v5769
    %5771 = vmatprep.subr.mxu0 0.0
    %v5772 = vand.u32 %v5480, 4294901760
    %v5773 = vsub.f32 %v5480, %v5772
    %5774 = vmatpush1.msra.mxu0 %v5773
    %5775 = vmatprep.subr.mxu0 0.0
    %v5776 = vand.u32 %v5481, 4294901760
    %v5777 = vsub.f32 %v5481, %v5776
    %5778 = vmatpush1.msra.mxu0 %v5777
    %5779 = vmatprep.subr.mxu0 0.0
    %v5780 = vand.u32 %v5482, 4294901760
    %v5781 = vsub.f32 %v5482, %v5780
    %5782 = vmatpush1.msra.mxu0 %v5781
    %5783 = vmatprep.subr.mxu0 0.0
    %v5784 = vand.u32 %v5483, 4294901760
    %v5785 = vsub.f32 %v5483, %v5784
    %5786 = vmatpush1.msra.mxu0 %v5785
    %5787 = vmatprep.subr.mxu0 0.0
    %v5788 = vand.u32 %v5484, 4294901760
    %v5789 = vsub.f32 %v5484, %v5788
    %5790 = vmatpush1.msra.mxu0 %v5789
    %5791 = vmatprep.subr.mxu0 0.0
    %v5792 = vand.u32 %v5485, 4294901760
    %v5793 = vsub.f32 %v5485, %v5792
    %5794 = vmatpush1.msra.mxu0 %v5793
    %5795 = vmatprep.subr.mxu0 0.0
    %v5796 = vand.u32 %v5486, 4294901760
    %v5797 = vsub.f32 %v5486, %v5796
    %5798 = vmatpush1.msra.mxu0 %v5797
    %5799 = vmatprep.subr.mxu0 0.0
    %v5800 = vand.u32 %v5487, 4294901760
    %v5801 = vsub.f32 %v5487, %v5800
    %5802 = vmatpush1.msra.mxu0 %v5801
    %5803 = vmatprep.subr.mxu0 0.0
    %v5804 = vand.u32 %v5488, 4294901760
    %v5805 = vsub.f32 %v5488, %v5804
    %5806 = vmatpush1.msra.mxu0 %v5805
    %5807 = vmatprep.subr.mxu0 0.0
    %v5808 = vand.u32 %v5489, 4294901760
    %v5809 = vsub.f32 %v5489, %v5808
    %5810 = vmatpush1.msra.mxu0 %v5809
    %5811 = vmatprep.subr.mxu0 0.0
    %v5812 = vand.u32 %v5490, 4294901760
    %v5813 = vsub.f32 %v5490, %v5812
    %5814 = vmatpush1.msra.mxu0 %v5813
    %5815 = vmatprep.subr.mxu0 0.0
    %v5816 = vand.u32 %v5491, 4294901760
    %v5817 = vsub.f32 %v5491, %v5816
    %5818 = vmatpush1.msra.mxu0 %v5817
    %5819 = vmatprep.subr.mxu0 0.0
    %v5820 = vand.u32 %v5492, 4294901760
    %v5821 = vsub.f32 %v5492, %v5820
    %5822 = vmatpush1.msra.mxu0 %v5821
    %5823 = vmatprep.subr.mxu0 0.0
    %5824 = vmatpush1.msra.mxu0 0.0
    %5825 = vmatprep.subr.mxu0 0.0
    %5826 = vmatpush1.msra.mxu0 0.0
    %5827 = vmatprep.subr.mxu0 0.0
    %5828 = vmatpush1.msra.mxu0 0.0
    %5829 = vmatprep.subr.mxu0 0.0
    %5830 = vmatpush1.msra.mxu0 0.0
    %5831 = vmatprep.subr.mxu0 0.0
    %5832 = vmatpush1.msra.mxu0 0.0
    %5833 = vmatprep.subr.mxu0 0.0
    %5834 = vmatpush1.msra.mxu0 0.0
    %5835 = vmatprep.subr.mxu0 0.0
    %5836 = vmatpush1.msra.mxu0 0.0
    %5837 = vmatprep.subr.mxu0 0.0
    %5838 = vmatpush1.msra.mxu0 0.0
    %5839 = vmatprep.subr.mxu0 0.0
    %5840 = vmatpush1.msra.mxu0 0.0
    %5841 = vmatprep.subr.mxu0 0.0
    %5842 = vmatpush1.msra.mxu0 0.0
    %5843 = vmatprep.subr.mxu0 0.0
    %5844 = vmatpush1.msra.mxu0 0.0
    %5845 = vmatprep.subr.mxu0 0.0
    %5846 = vmatpush1.msra.mxu0 0.0
    %5847 = vmatprep.subr.mxu0 0.0
    %5848 = vmatpush1.msra.mxu0 0.0
    %5849 = vmatprep.subr.mxu0 0.0
    %5850 = vmatpush1.msra.mxu0 0.0
    %5851 = vmatprep.subr.mxu0 0.0
    %5852 = vmatpush1.msra.mxu0 0.0
    %5853 = vmatprep.subr.mxu0 0.0
    %5854 = vmatpush1.msra.mxu0 0.0
    %5855 = vmatprep.mubr.f32.mxu0 0.0
    %v5856 = vand.u32 %v5474, 4294901760
    %v5857 = vsub.f32 %v5474, %v5856
    %5858 = vmatmul.mubr.f32.gmra.mrb[0].mxu0 %v5857
    %v5859 = vpop.f32.mrb[0].mxu0
    %v5860 = vadd.f32 %v5750, %v5859
    %v5861 = vpop.f32.mrb[0].mxu0
    %5862 = vmatprep.mubr.f32.mxu0 0.0
    %v5863 = vand.u32 %v5475, 4294901760
    %v5864 = vsub.f32 %v5475, %v5863
    %5865 = vmatmul.mubr.f32.gmra.mrb[0].mxu0 %v5864
    %v5866 = vpop.f32.mrb[0].mxu0
    %v5867 = vadd.f32 %v5756, %v5866
    %v5868 = vpop.f32.mrb[0].mxu0
    %5869 = vdwg.mxu0
    %5870 = vmatprep.subr.mxu0 0.0
    %v5871 = vand.u32 %v5477, 4294901760
    %5872 = vmatpush1.msra.mxu0 %v5871
    %5873 = vmatprep.subr.mxu0 0.0
    %v5874 = vand.u32 %v5478, 4294901760
    %5875 = vmatpush1.msra.mxu0 %v5874
    %5876 = vmatprep.subr.mxu0 0.0
    %v5877 = vand.u32 %v5479, 4294901760
    %5878 = vmatpush1.msra.mxu0 %v5877
    %5879 = vmatprep.subr.mxu0 0.0
    %v5880 = vand.u32 %v5480, 4294901760
    %5881 = vmatpush1.msra.mxu0 %v5880
    %5882 = vmatprep.subr.mxu0 0.0
    %v5883 = vand.u32 %v5481, 4294901760
    %5884 = vmatpush1.msra.mxu0 %v5883
    %5885 = vmatprep.subr.mxu0 0.0
    %v5886 = vand.u32 %v5482, 4294901760
    %5887 = vmatpush1.msra.mxu0 %v5886
    %5888 = vmatprep.subr.mxu0 0.0
    %v5889 = vand.u32 %v5483, 4294901760
    %5890 = vmatpush1.msra.mxu0 %v5889
    %5891 = vmatprep.subr.mxu0 0.0
    %v5892 = vand.u32 %v5484, 4294901760
    %5893 = vmatpush1.msra.mxu0 %v5892
    %5894 = vmatprep.subr.mxu0 0.0
    %v5895 = vand.u32 %v5485, 4294901760
    %5896 = vmatpush1.msra.mxu0 %v5895
    %5897 = vmatprep.subr.mxu0 0.0
    %v5898 = vand.u32 %v5486, 4294901760
    %5899 = vmatpush1.msra.mxu0 %v5898
    %5900 = vmatprep.subr.mxu0 0.0
    %v5901 = vand.u32 %v5487, 4294901760
    %5902 = vmatpush1.msra.mxu0 %v5901
    %5903 = vmatprep.subr.mxu0 0.0
    %v5904 = vand.u32 %v5488, 4294901760
    %5905 = vmatpush1.msra.mxu0 %v5904
    %5906 = vmatprep.subr.mxu0 0.0
    %v5907 = vand.u32 %v5489, 4294901760
    %5908 = vmatpush1.msra.mxu0 %v5907
    %5909 = vmatprep.subr.mxu0 0.0
    %v5910 = vand.u32 %v5490, 4294901760
    %5911 = vmatpush1.msra.mxu0 %v5910
    %5912 = vmatprep.subr.mxu0 0.0
    %v5913 = vand.u32 %v5491, 4294901760
    %5914 = vmatpush1.msra.mxu0 %v5913
    %5915 = vmatprep.subr.mxu0 0.0
    %v5916 = vand.u32 %v5492, 4294901760
    %5917 = vmatpush1.msra.mxu0 %v5916
    %5918 = vmatprep.subr.mxu0 0.0
    %5919 = vmatpush1.msra.mxu0 0.0
    %5920 = vmatprep.subr.mxu0 0.0
    %5921 = vmatpush1.msra.mxu0 0.0
    %5922 = vmatprep.subr.mxu0 0.0
    %5923 = vmatpush1.msra.mxu0 0.0
    %5924 = vmatprep.subr.mxu0 0.0
    %5925 = vmatpush1.msra.mxu0 0.0
    %5926 = vmatprep.subr.mxu0 0.0
    %5927 = vmatpush1.msra.mxu0 0.0
    %5928 = vmatprep.subr.mxu0 0.0
    %5929 = vmatpush1.msra.mxu0 0.0
    %5930 = vmatprep.subr.mxu0 0.0
    %5931 = vmatpush1.msra.mxu0 0.0
    %5932 = vmatprep.subr.mxu0 0.0
    %5933 = vmatpush1.msra.mxu0 0.0
    %5934 = vmatprep.subr.mxu0 0.0
    %5935 = vmatpush1.msra.mxu0 0.0
    %5936 = vmatprep.subr.mxu0 0.0
    %5937 = vmatpush1.msra.mxu0 0.0
    %5938 = vmatprep.subr.mxu0 0.0
    %5939 = vmatpush1.msra.mxu0 0.0
    %5940 = vmatprep.subr.mxu0 0.0
    %5941 = vmatpush1.msra.mxu0 0.0
    %5942 = vmatprep.subr.mxu0 0.0
    %5943 = vmatpush1.msra.mxu0 0.0
    %5944 = vmatprep.subr.mxu0 0.0
    %5945 = vmatpush1.msra.mxu0 0.0
    %5946 = vmatprep.subr.mxu0 0.0
    %5947 = vmatpush1.msra.mxu0 0.0
    %5948 = vmatprep.subr.mxu0 0.0
    %5949 = vmatpush1.msra.mxu0 0.0
    %5950 = vmatprep.mubr.f32.mxu0 0.0
    %v5951 = vand.u32 %v5474, 4294901760
    %v5952 = vsub.f32 %v5474, %v5951
    %v5953 = vand.u32 %v5952, 4294901760
    %5954 = vmatmul.mubr.f32.gmra.mrb[0].mxu0 %v5953
    %v5955 = vpop.f32.mrb[0].mxu0
    %v5956 = vadd.f32 %v5860, %v5955
    %v5957 = vpop.f32.mrb[0].mxu0
    %5958 = vmatprep.mubr.f32.mxu0 0.0
    %v5959 = vand.u32 %v5475, 4294901760
    %v5960 = vsub.f32 %v5475, %v5959
    %v5961 = vand.u32 %v5960, 4294901760
    %5962 = vmatmul.mubr.f32.gmra.mrb[0].mxu0 %v5961
    %v5963 = vpop.f32.mrb[0].mxu0
    %v5964 = vadd.f32 %v5867, %v5963
    %v5965 = vpop.f32.mrb[0].mxu0
    %5966 = vdwg.mxu0
    %5967 = vmatprep.subr.mxu0 0.0
    %v5968 = vand.u32 %v5477, 4294901760
    %v5969 = vsub.f32 %v5477, %v5968
    %v5970 = vand.u32 %v5969, 4294901760
    %5971 = vmatpush1.msra.mxu0 %v5970
    %5972 = vmatprep.subr.mxu0 0.0
    %v5973 = vand.u32 %v5478, 4294901760
    %v5974 = vsub.f32 %v5478, %v5973
    %v5975 = vand.u32 %v5974, 4294901760
    %5976 = vmatpush1.msra.mxu0 %v5975
    %5977 = vmatprep.subr.mxu0 0.0
    %v5978 = vand.u32 %v5479, 4294901760
    %v5979 = vsub.f32 %v5479, %v5978
    %v5980 = vand.u32 %v5979, 4294901760
    %5981 = vmatpush1.msra.mxu0 %v5980
    %5982 = vmatprep.subr.mxu0 0.0
    %v5983 = vand.u32 %v5480, 4294901760
    %v5984 = vsub.f32 %v5480, %v5983
    %v5985 = vand.u32 %v5984, 4294901760
    %5986 = vmatpush1.msra.mxu0 %v5985
    %5987 = vmatprep.subr.mxu0 0.0
    %v5988 = vand.u32 %v5481, 4294901760
    %v5989 = vsub.f32 %v5481, %v5988
    %v5990 = vand.u32 %v5989, 4294901760
    %5991 = vmatpush1.msra.mxu0 %v5990
    %5992 = vmatprep.subr.mxu0 0.0
    %v5993 = vand.u32 %v5482, 4294901760
    %v5994 = vsub.f32 %v5482, %v5993
    %v5995 = vand.u32 %v5994, 4294901760
    %5996 = vmatpush1.msra.mxu0 %v5995
    %5997 = vmatprep.subr.mxu0 0.0
    %v5998 = vand.u32 %v5483, 4294901760
    %v5999 = vsub.f32 %v5483, %v5998
    %v6000 = vand.u32 %v5999, 4294901760
    %6001 = vmatpush1.msra.mxu0 %v6000
    %6002 = vmatprep.subr.mxu0 0.0
    %v6003 = vand.u32 %v5484, 4294901760
    %v6004 = vsub.f32 %v5484, %v6003
    %v6005 = vand.u32 %v6004, 4294901760
    %6006 = vmatpush1.msra.mxu0 %v6005
    %6007 = vmatprep.subr.mxu0 0.0
    %v6008 = vand.u32 %v5485, 4294901760
    %v6009 = vsub.f32 %v5485, %v6008
    %v6010 = vand.u32 %v6009, 4294901760
    %6011 = vmatpush1.msra.mxu0 %v6010
    %6012 = vmatprep.subr.mxu0 0.0
    %v6013 = vand.u32 %v5486, 4294901760
    %v6014 = vsub.f32 %v5486, %v6013
    %v6015 = vand.u32 %v6014, 4294901760
    %6016 = vmatpush1.msra.mxu0 %v6015
    %6017 = vmatprep.subr.mxu0 0.0
    %v6018 = vand.u32 %v5487, 4294901760
    %v6019 = vsub.f32 %v5487, %v6018
    %v6020 = vand.u32 %v6019, 4294901760
    %6021 = vmatpush1.msra.mxu0 %v6020
    %6022 = vmatprep.subr.mxu0 0.0
    %v6023 = vand.u32 %v5488, 4294901760
    %v6024 = vsub.f32 %v5488, %v6023
    %v6025 = vand.u32 %v6024, 4294901760
    %6026 = vmatpush1.msra.mxu0 %v6025
    %6027 = vmatprep.subr.mxu0 0.0
    %v6028 = vand.u32 %v5489, 4294901760
    %v6029 = vsub.f32 %v5489, %v6028
    %v6030 = vand.u32 %v6029, 4294901760
    %6031 = vmatpush1.msra.mxu0 %v6030
    %6032 = vmatprep.subr.mxu0 0.0
    %v6033 = vand.u32 %v5490, 4294901760
    %v6034 = vsub.f32 %v5490, %v6033
    %v6035 = vand.u32 %v6034, 4294901760
    %6036 = vmatpush1.msra.mxu0 %v6035
    %6037 = vmatprep.subr.mxu0 0.0
    %v6038 = vand.u32 %v5491, 4294901760
    %v6039 = vsub.f32 %v5491, %v6038
    %v6040 = vand.u32 %v6039, 4294901760
    %6041 = vmatpush1.msra.mxu0 %v6040
    %6042 = vmatprep.subr.mxu0 0.0
    %v6043 = vand.u32 %v5492, 4294901760
    %v6044 = vsub.f32 %v5492, %v6043
    %v6045 = vand.u32 %v6044, 4294901760
    %6046 = vmatpush1.msra.mxu0 %v6045
    %6047 = vmatprep.subr.mxu0 0.0
    %6048 = vmatpush1.msra.mxu0 0.0
    %6049 = vmatprep.subr.mxu0 0.0
    %6050 = vmatpush1.msra.mxu0 0.0
    %6051 = vmatprep.subr.mxu0 0.0
    %6052 = vmatpush1.msra.mxu0 0.0
    %6053 = vmatprep.subr.mxu0 0.0
    %6054 = vmatpush1.msra.mxu0 0.0
    %6055 = vmatprep.subr.mxu0 0.0
    %6056 = vmatpush1.msra.mxu0 0.0
    %6057 = vmatprep.subr.mxu0 0.0
    %6058 = vmatpush1.msra.mxu0 0.0
    %6059 = vmatprep.subr.mxu0 0.0
    %6060 = vmatpush1.msra.mxu0 0.0
    %6061 = vmatprep.subr.mxu0 0.0
    %6062 = vmatpush1.msra.mxu0 0.0
    %6063 = vmatprep.subr.mxu0 0.0
    %6064 = vmatpush1.msra.mxu0 0.0
    %6065 = vmatprep.subr.mxu0 0.0
    %6066 = vmatpush1.msra.mxu0 0.0
    %6067 = vmatprep.subr.mxu0 0.0
    %6068 = vmatpush1.msra.mxu0 0.0
    %6069 = vmatprep.subr.mxu0 0.0
    %6070 = vmatpush1.msra.mxu0 0.0
    %6071 = vmatprep.subr.mxu0 0.0
    %6072 = vmatpush1.msra.mxu0 0.0
    %6073 = vmatprep.subr.mxu0 0.0
    %6074 = vmatpush1.msra.mxu0 0.0
    %6075 = vmatprep.subr.mxu0 0.0
    %6076 = vmatpush1.msra.mxu0 0.0
    %6077 = vmatprep.subr.mxu0 0.0
    %6078 = vmatpush1.msra.mxu0 0.0
    %6079 = vmatprep.mubr.f32.mxu0 0.0
    %v6080 = vand.u32 %v5474, 4294901760
    %6081 = vmatmul.mubr.f32.gmra.mrb[0].mxu0 %v6080
    %v6082 = vpop.f32.mrb[0].mxu0
    %v6083 = vadd.f32 %v5956, %v6082
    %v6084 = vpop.f32.mrb[0].mxu0
    %6085 = vmatprep.mubr.f32.mxu0 0.0
    %v6086 = vand.u32 %v5475, 4294901760
    %6087 = vmatmul.mubr.f32.gmra.mrb[0].mxu0 %v6086
    %v6088 = vpop.f32.mrb[0].mxu0
    %v6089 = vadd.f32 %v5964, %v6088
    %v6090 = vpop.f32.mrb[0].mxu0
    %6091 = vdwg.mxu0
    %6092 = vmatprep.subr.mxu0 0.0
    %v6093 = vand.u32 %v5477, 4294901760
    %6094 = vmatpush1.msra.mxu0 %v6093
    %6095 = vmatprep.subr.mxu0 0.0
    %v6096 = vand.u32 %v5478, 4294901760
    %6097 = vmatpush1.msra.mxu0 %v6096
    %6098 = vmatprep.subr.mxu0 0.0
    %v6099 = vand.u32 %v5479, 4294901760
    %6100 = vmatpush1.msra.mxu0 %v6099
    %6101 = vmatprep.subr.mxu0 0.0
    %v6102 = vand.u32 %v5480, 4294901760
    %6103 = vmatpush1.msra.mxu0 %v6102
    %6104 = vmatprep.subr.mxu0 0.0
    %v6105 = vand.u32 %v5481, 4294901760
    %6106 = vmatpush1.msra.mxu0 %v6105
    %6107 = vmatprep.subr.mxu0 0.0
    %v6108 = vand.u32 %v5482, 4294901760
    %6109 = vmatpush1.msra.mxu0 %v6108
    %6110 = vmatprep.subr.mxu0 0.0
    %v6111 = vand.u32 %v5483, 4294901760
    %6112 = vmatpush1.msra.mxu0 %v6111
    %6113 = vmatprep.subr.mxu0 0.0
    %v6114 = vand.u32 %v5484, 4294901760
    %6115 = vmatpush1.msra.mxu0 %v6114
    %6116 = vmatprep.subr.mxu0 0.0
    %v6117 = vand.u32 %v5485, 4294901760
    %6118 = vmatpush1.msra.mxu0 %v6117
    %6119 = vmatprep.subr.mxu0 0.0
    %v6120 = vand.u32 %v5486, 4294901760
    %6121 = vmatpush1.msra.mxu0 %v6120
    %6122 = vmatprep.subr.mxu0 0.0
    %v6123 = vand.u32 %v5487, 4294901760
    %6124 = vmatpush1.msra.mxu0 %v6123
    %6125 = vmatprep.subr.mxu0 0.0
    %v6126 = vand.u32 %v5488, 4294901760
    %6127 = vmatpush1.msra.mxu0 %v6126
    %6128 = vmatprep.subr.mxu0 0.0
    %v6129 = vand.u32 %v5489, 4294901760
    %6130 = vmatpush1.msra.mxu0 %v6129
    %6131 = vmatprep.subr.mxu0 0.0
    %v6132 = vand.u32 %v5490, 4294901760
    %6133 = vmatpush1.msra.mxu0 %v6132
    %6134 = vmatprep.subr.mxu0 0.0
    %v6135 = vand.u32 %v5491, 4294901760
    %6136 = vmatpush1.msra.mxu0 %v6135
    %6137 = vmatprep.subr.mxu0 0.0
    %v6138 = vand.u32 %v5492, 4294901760
    %6139 = vmatpush1.msra.mxu0 %v6138
    %6140 = vmatprep.subr.mxu0 0.0
    %6141 = vmatpush1.msra.mxu0 0.0
    %6142 = vmatprep.subr.mxu0 0.0
    %6143 = vmatpush1.msra.mxu0 0.0
    %6144 = vmatprep.subr.mxu0 0.0
    %6145 = vmatpush1.msra.mxu0 0.0
    %6146 = vmatprep.subr.mxu0 0.0
    %6147 = vmatpush1.msra.mxu0 0.0
    %6148 = vmatprep.subr.mxu0 0.0
    %6149 = vmatpush1.msra.mxu0 0.0
    %6150 = vmatprep.subr.mxu0 0.0
    %6151 = vmatpush1.msra.mxu0 0.0
    %6152 = vmatprep.subr.mxu0 0.0
    %6153 = vmatpush1.msra.mxu0 0.0
    %6154 = vmatprep.subr.mxu0 0.0
    %6155 = vmatpush1.msra.mxu0 0.0
    %6156 = vmatprep.subr.mxu0 0.0
    %6157 = vmatpush1.msra.mxu0 0.0
    %6158 = vmatprep.subr.mxu0 0.0
    %6159 = vmatpush1.msra.mxu0 0.0
    %6160 = vmatprep.subr.mxu0 0.0
    %6161 = vmatpush1.msra.mxu0 0.0
    %6162 = vmatprep.subr.mxu0 0.0
    %6163 = vmatpush1.msra.mxu0 0.0
    %6164 = vmatprep.subr.mxu0 0.0
    %6165 = vmatpush1.msra.mxu0 0.0
    %6166 = vmatprep.subr.mxu0 0.0
    %6167 = vmatpush1.msra.mxu0 0.0
    %6168 = vmatprep.subr.mxu0 0.0
    %6169 = vmatpush1.msra.mxu0 0.0
    %6170 = vmatprep.subr.mxu0 0.0
    %6171 = vmatpush1.msra.mxu0 0.0
    %6172 = vmatprep.mubr.f32.mxu0 0.0
    %v6173 = vand.u32 %v5474, 4294901760
    %6174 = vmatmul.mubr.f32.gmra.mrb[0].mxu0 %v6173
    %v6175 = vpop.f32.mrb[0].mxu0
    %v6176 = vadd.f32 %v6083, %v6175
    %v6177 = vpop.f32.mrb[0].mxu0
    %6178 = vmatprep.mubr.f32.mxu0 0.0
    %v6179 = vand.u32 %v5475, 4294901760
    %6180 = vmatmul.mubr.f32.gmra.mrb[0].mxu0 %v6179
    %v6181 = vpop.f32.mrb[0].mxu0
    %v6182 = vadd.f32 %v6089, %v6181
    %v6183 = vpop.f32.mrb[0].mxu0
    %6184 = vdwg.mxu0
    %v6185 = vmax.f32 %v6176, 0.0
    %v6186 = vmax.f32 %v6182, 0.0
    %s6187 = scalar_lea.vmem [#allocation8], 128
    %v6188 = vld [vmem:[%s6187] sm:$0xff]
    %v6189 = vld [vmem:[%s6187 + $0x8] sm:$0xff]
    %v6190 = vld [vmem:[%s6187 + $0x10] sm:$0xff]
    %v6191 = vld [vmem:[%s6187 + $0x18] sm:$0xff]
    %v6192 = vld [vmem:[%s6187 + $0x20] sm:$0xff]
    %v6193 = vld [vmem:[%s6187 + $0x28] sm:$0xff]
    %v6194 = vld [vmem:[%s6187 + $0x30] sm:$0xff]
    %v6195 = vld [vmem:[%s6187 + $0x38] sm:$0xff]
    %v6196 = vld [vmem:[%s6187 + $0x40] sm:$0xff]
    %v6197 = vld [vmem:[%s6187 + $0x48] sm:$0xff]
    %v6198 = vld [vmem:[%s6187 + $0x50] sm:$0xff]
    %v6199 = vld [vmem:[%s6187 + $0x58] sm:$0xff]
    %v6200 = vld [vmem:[%s6187 + $0x60] sm:$0xff]
    %v6201 = vld [vmem:[%s6187 + $0x68] sm:$0xff]
    %v6202 = vld [vmem:[%s6187 + $0x70] sm:$0xff]
    %v6203 = vld [vmem:[%s6187 + $0x78] sm:$0xff]
    %s6204 = scalar_lea.vmem %s9, 1
    %v6205 = vld [vmem:[%s6204] sm:$0x1]
    %v6207 = vlaneseq
    %v6208 = vshrl.u32 %v6207, 7
    %v6209 = vsub.s32 0, %v6208
    %v6210 = vrot.slane %v6205, %v6209
    %6212 = vmatprep.subr.mxu0 0.0
    %v6213 = vand.u32 %v6188, 4294901760
    %6214 = vmatpush1.msra.mxu0 %v6213
    %6215 = vmatprep.subr.mxu0 0.0
    %v6216 = vand.u32 %v6189, 4294901760
    %6217 = vmatpush1.msra.mxu0 %v6216
    %6218 = vmatprep.subr.mxu0 0.0
    %v6219 = vand.u32 %v6190, 4294901760
    %6220 = vmatpush1.msra.mxu0 %v6219
    %6221 = vmatprep.subr.mxu0 0.0
    %v6222 = vand.u32 %v6191, 4294901760
    %6223 = vmatpush1.msra.mxu0 %v6222
    %6224 = vmatprep.subr.mxu0 0.0
    %v6225 = vand.u32 %v6192, 4294901760
    %6226 = vmatpush1.msra.mxu0 %v6225
    %6227 = vmatprep.subr.mxu0 0.0
    %v6228 = vand.u32 %v6193, 4294901760
    %6229 = vmatpush1.msra.mxu0 %v6228
    %6230 = vmatprep.subr.mxu0 0.0
    %v6231 = vand.u32 %v6194, 4294901760
    %6232 = vmatpush1.msra.mxu0 %v6231
    %6233 = vmatprep.subr.mxu0 0.0
    %v6234 = vand.u32 %v6195, 4294901760
    %6235 = vmatpush1.msra.mxu0 %v6234
    %6236 = vmatprep.subr.mxu0 0.0
    %v6237 = vand.u32 %v6196, 4294901760
    %6238 = vmatpush1.msra.mxu0 %v6237
    %6239 = vmatprep.subr.mxu0 0.0
    %v6240 = vand.u32 %v6197, 4294901760
    %6241 = vmatpush1.msra.mxu0 %v6240
    %6242 = vmatprep.subr.mxu0 0.0
    %v6243 = vand.u32 %v6198, 4294901760
    %6244 = vmatpush1.msra.mxu0 %v6243
    %6245 = vmatprep.subr.mxu0 0.0
    %v6246 = vand.u32 %v6199, 4294901760
    %6247 = vmatpush1.msra.mxu0 %v6246
    %6248 = vmatprep.subr.mxu0 0.0
    %v6249 = vand.u32 %v6200, 4294901760
    %6250 = vmatpush1.msra.mxu0 %v6249
    %6251 = vmatprep.subr.mxu0 0.0
    %v6252 = vand.u32 %v6201, 4294901760
    %6253 = vmatpush1.msra.mxu0 %v6252
    %6254 = vmatprep.subr.mxu0 0.0
    %v6255 = vand.u32 %v6202, 4294901760
    %6256 = vmatpush1.msra.mxu0 %v6255
    %6257 = vmatprep.subr.mxu0 0.0
    %v6258 = vand.u32 %v6203, 4294901760
    %6259 = vmatpush1.msra.mxu0 %v6258
    %6260 = vmatprep.subr.mxu0 0.0
    %6261 = vmatpush1.msra.mxu0 0.0
    %6262 = vmatprep.subr.mxu0 0.0
    %6263 = vmatpush1.msra.mxu0 0.0
    %6264 = vmatprep.subr.mxu0 0.0
    %6265 = vmatpush1.msra.mxu0 0.0
    %6266 = vmatprep.subr.mxu0 0.0
    %6267 = vmatpush1.msra.mxu0 0.0
    %6268 = vmatprep.subr.mxu0 0.0
    %6269 = vmatpush1.msra.mxu0 0.0
    %6270 = vmatprep.subr.mxu0 0.0
    %6271 = vmatpush1.msra.mxu0 0.0
    %6272 = vmatprep.subr.mxu0 0.0
    %6273 = vmatpush1.msra.mxu0 0.0
    %6274 = vmatprep.subr.mxu0 0.0
    %6275 = vmatpush1.msra.mxu0 0.0
    %6276 = vmatprep.subr.mxu0 0.0
    %6277 = vmatpush1.msra.mxu0 0.0
    %6278 = vmatprep.subr.mxu0 0.0
    %6279 = vmatpush1.msra.mxu0 0.0
    %6280 = vmatprep.subr.mxu0 0.0
    %6281 = vmatpush1.msra.mxu0 0.0
    %6282 = vmatprep.subr.mxu0 0.0
    %6283 = vmatpush1.msra.mxu0 0.0
    %6284 = vmatprep.subr.mxu0 0.0
    %6285 = vmatpush1.msra.mxu0 0.0
    %6286 = vmatprep.subr.mxu0 0.0
    %6287 = vmatpush1.msra.mxu0 0.0
    %6288 = vmatprep.subr.mxu0 0.0
    %6289 = vmatpush1.msra.mxu0 0.0
    %6290 = vmatprep.subr.mxu0 0.0
    %6291 = vmatpush1.msra.mxu0 0.0
    %6292 = vmatprep.mubr.f32.mxu0 0.0
    %v6293 = vand.u32 %v6185, 4294901760
    %v6294 = vsub.f32 %v6185, %v6293
    %v6295 = vand.u32 %v6294, 4294901760
    %v6296 = vsub.f32 %v6294, %v6295
    %v6297 = vand.u32 %v6296, 4294901760
    %6298 = vmatmul.mubr.f32.gmra.mrb[0].mxu0 %v6297
    %v6299 = vpop.f32.mrb[0].mxu0
    %v6300 = vadd.f32 %v6210, %v6299
    %v6301 = vpop.f32.mrb[0].mxu0
    %6302 = vmatprep.mubr.f32.mxu0 0.0
    %v6303 = vand.u32 %v6186, 4294901760
    %v6304 = vsub.f32 %v6186, %v6303
    %v6305 = vand.u32 %v6304, 4294901760
    %v6306 = vsub.f32 %v6304, %v6305
    %v6307 = vand.u32 %v6306, 4294901760
    %6308 = vmatmul.mubr.f32.gmra.mrb[0].mxu0 %v6307
    %v6309 = vpop.f32.mrb[0].mxu0
    %v6310 = vadd.f32 %v6210, %v6309
    %v6311 = vpop.f32.mrb[0].mxu0
    %6312 = vdwg.mxu0
    %6313 = vmatprep.subr.mxu0 0.0
    %v6314 = vand.u32 %v6188, 4294901760
    %v6315 = vsub.f32 %v6188, %v6314
    %v6316 = vand.u32 %v6315, 4294901760
    %v6317 = vsub.f32 %v6315, %v6316
    %v6318 = vand.u32 %v6317, 4294901760
    %6319 = vmatpush1.msra.mxu0 %v6318
    %6320 = vmatprep.subr.mxu0 0.0
    %v6321 = vand.u32 %v6189, 4294901760
    %v6322 = vsub.f32 %v6189, %v6321
    %v6323 = vand.u32 %v6322, 4294901760
    %v6324 = vsub.f32 %v6322, %v6323
    %v6325 = vand.u32 %v6324, 4294901760
    %6326 = vmatpush1.msra.mxu0 %v6325
    %6327 = vmatprep.subr.mxu0 0.0
    %v6328 = vand.u32 %v6190, 4294901760
    %v6329 = vsub.f32 %v6190, %v6328
    %v6330 = vand.u32 %v6329, 4294901760
    %v6331 = vsub.f32 %v6329, %v6330
    %v6332 = vand.u32 %v6331, 4294901760
    %6333 = vmatpush1.msra.mxu0 %v6332
    %6334 = vmatprep.subr.mxu0 0.0
    %v6335 = vand.u32 %v6191, 4294901760
    %v6336 = vsub.f32 %v6191, %v6335
    %v6337 = vand.u32 %v6336, 4294901760
    %v6338 = vsub.f32 %v6336, %v6337
    %v6339 = vand.u32 %v6338, 4294901760
    %6340 = vmatpush1.msra.mxu0 %v6339
    %6341 = vmatprep.subr.mxu0 0.0
    %v6342 = vand.u32 %v6192, 4294901760
    %v6343 = vsub.f32 %v6192, %v6342
    %v6344 = vand.u32 %v6343, 4294901760
    %v6345 = vsub.f32 %v6343, %v6344
    %v6346 = vand.u32 %v6345, 4294901760
    %6347 = vmatpush1.msra.mxu0 %v6346
    %6348 = vmatprep.subr.mxu0 0.0
    %v6349 = vand.u32 %v6193, 4294901760
    %v6350 = vsub.f32 %v6193, %v6349
    %v6351 = vand.u32 %v6350, 4294901760
    %v6352 = vsub.f32 %v6350, %v6351
    %v6353 = vand.u32 %v6352, 4294901760
    %6354 = vmatpush1.msra.mxu0 %v6353
    %6355 = vmatprep.subr.mxu0 0.0
    %v6356 = vand.u32 %v6194, 4294901760
    %v6357 = vsub.f32 %v6194, %v6356
    %v6358 = vand.u32 %v6357, 4294901760
    %v6359 = vsub.f32 %v6357, %v6358
    %v6360 = vand.u32 %v6359, 4294901760
    %6361 = vmatpush1.msra.mxu0 %v6360
    %6362 = vmatprep.subr.mxu0 0.0
    %v6363 = vand.u32 %v6195, 4294901760
    %v6364 = vsub.f32 %v6195, %v6363
    %v6365 = vand.u32 %v6364, 4294901760
    %v6366 = vsub.f32 %v6364, %v6365
    %v6367 = vand.u32 %v6366, 4294901760
    %6368 = vmatpush1.msra.mxu0 %v6367
    %6369 = vmatprep.subr.mxu0 0.0
    %v6370 = vand.u32 %v6196, 4294901760
    %v6371 = vsub.f32 %v6196, %v6370
    %v6372 = vand.u32 %v6371, 4294901760
    %v6373 = vsub.f32 %v6371, %v6372
    %v6374 = vand.u32 %v6373, 4294901760
    %6375 = vmatpush1.msra.mxu0 %v6374
    %6376 = vmatprep.subr.mxu0 0.0
    %v6377 = vand.u32 %v6197, 4294901760
    %v6378 = vsub.f32 %v6197, %v6377
    %v6379 = vand.u32 %v6378, 4294901760
    %v6380 = vsub.f32 %v6378, %v6379
    %v6381 = vand.u32 %v6380, 4294901760
    %6382 = vmatpush1.msra.mxu0 %v6381
    %6383 = vmatprep.subr.mxu0 0.0
    %v6384 = vand.u32 %v6198, 4294901760
    %v6385 = vsub.f32 %v6198, %v6384
    %v6386 = vand.u32 %v6385, 4294901760
    %v6387 = vsub.f32 %v6385, %v6386
    %v6388 = vand.u32 %v6387, 4294901760
    %6389 = vmatpush1.msra.mxu0 %v6388
    %6390 = vmatprep.subr.mxu0 0.0
    %v6391 = vand.u32 %v6199, 4294901760
    %v6392 = vsub.f32 %v6199, %v6391
    %v6393 = vand.u32 %v6392, 4294901760
    %v6394 = vsub.f32 %v6392, %v6393
    %v6395 = vand.u32 %v6394, 4294901760
    %6396 = vmatpush1.msra.mxu0 %v6395
    %6397 = vmatprep.subr.mxu0 0.0
    %v6398 = vand.u32 %v6200, 4294901760
    %v6399 = vsub.f32 %v6200, %v6398
    %v6400 = vand.u32 %v6399, 4294901760
    %v6401 = vsub.f32 %v6399, %v6400
    %v6402 = vand.u32 %v6401, 4294901760
    %6403 = vmatpush1.msra.mxu0 %v6402
    %6404 = vmatprep.subr.mxu0 0.0
    %v6405 = vand.u32 %v6201, 4294901760
    %v6406 = vsub.f32 %v6201, %v6405
    %v6407 = vand.u32 %v6406, 4294901760
    %v6408 = vsub.f32 %v6406, %v6407
    %v6409 = vand.u32 %v6408, 4294901760
    %6410 = vmatpush1.msra.mxu0 %v6409
    %6411 = vmatprep.subr.mxu0 0.0
    %v6412 = vand.u32 %v6202, 4294901760
    %v6413 = vsub.f32 %v6202, %v6412
    %v6414 = vand.u32 %v6413, 4294901760
    %v6415 = vsub.f32 %v6413, %v6414
    %v6416 = vand.u32 %v6415, 4294901760
    %6417 = vmatpush1.msra.mxu0 %v6416
    %6418 = vmatprep.subr.mxu0 0.0
    %v6419 = vand.u32 %v6203, 4294901760
    %v6420 = vsub.f32 %v6203, %v6419
    %v6421 = vand.u32 %v6420, 4294901760
    %v6422 = vsub.f32 %v6420, %v6421
    %v6423 = vand.u32 %v6422, 4294901760
    %6424 = vmatpush1.msra.mxu0 %v6423
    %6425 = vmatprep.subr.mxu0 0.0
    %6426 = vmatpush1.msra.mxu0 0.0
    %6427 = vmatprep.subr.mxu0 0.0
    %6428 = vmatpush1.msra.mxu0 0.0
    %6429 = vmatprep.subr.mxu0 0.0
    %6430 = vmatpush1.msra.mxu0 0.0
    %6431 = vmatprep.subr.mxu0 0.0
    %6432 = vmatpush1.msra.mxu0 0.0
    %6433 = vmatprep.subr.mxu0 0.0
    %6434 = vmatpush1.msra.mxu0 0.0
    %6435 = vmatprep.subr.mxu0 0.0
    %6436 = vmatpush1.msra.mxu0 0.0
    %6437 = vmatprep.subr.mxu0 0.0
    %6438 = vmatpush1.msra.mxu0 0.0
    %6439 = vmatprep.subr.mxu0 0.0
    %6440 = vmatpush1.msra.mxu0 0.0
    %6441 = vmatprep.subr.mxu0 0.0
    %6442 = vmatpush1.msra.mxu0 0.0
    %6443 = vmatprep.subr.mxu0 0.0
    %6444 = vmatpush1.msra.mxu0 0.0
    %6445 = vmatprep.subr.mxu0 0.0
    %6446 = vmatpush1.msra.mxu0 0.0
    %6447 = vmatprep.subr.mxu0 0.0
    %6448 = vmatpush1.msra.mxu0 0.0
    %6449 = vmatprep.subr.mxu0 0.0
    %6450 = vmatpush1.msra.mxu0 0.0
    %6451 = vmatprep.subr.mxu0 0.0
    %6452 = vmatpush1.msra.mxu0 0.0
    %6453 = vmatprep.subr.mxu0 0.0
    %6454 = vmatpush1.msra.mxu0 0.0
    %6455 = vmatprep.subr.mxu0 0.0
    %6456 = vmatpush1.msra.mxu0 0.0
    %6457 = vmatprep.mubr.f32.mxu0 0.0
    %v6458 = vand.u32 %v6185, 4294901760
    %6459 = vmatmul.mubr.f32.gmra.mrb[0].mxu0 %v6458
    %v6460 = vpop.f32.mrb[0].mxu0
    %v6461 = vadd.f32 %v6300, %v6460
    %v6462 = vpop.f32.mrb[0].mxu0
    %6463 = vmatprep.mubr.f32.mxu0 0.0
    %v6464 = vand.u32 %v6186, 4294901760
    %6465 = vmatmul.mubr.f32.gmra.mrb[0].mxu0 %v6464
    %v6466 = vpop.f32.mrb[0].mxu0
    %v6467 = vadd.f32 %v6310, %v6466
    %v6468 = vpop.f32.mrb[0].mxu0
    %6469 = vdwg.mxu0
    %6470 = vmatprep.subr.mxu0 0.0
    %v6471 = vand.u32 %v6188, 4294901760
    %v6472 = vsub.f32 %v6188, %v6471
    %6473 = vmatpush1.msra.mxu0 %v6472
    %6474 = vmatprep.subr.mxu0 0.0
    %v6475 = vand.u32 %v6189, 4294901760
    %v6476 = vsub.f32 %v6189, %v6475
    %6477 = vmatpush1.msra.mxu0 %v6476
    %6478 = vmatprep.subr.mxu0 0.0
    %v6479 = vand.u32 %v6190, 4294901760
    %v6480 = vsub.f32 %v6190, %v6479
    %6481 = vmatpush1.msra.mxu0 %v6480
    %6482 = vmatprep.subr.mxu0 0.0
    %v6483 = vand.u32 %v6191, 4294901760
    %v6484 = vsub.f32 %v6191, %v6483
    %6485 = vmatpush1.msra.mxu0 %v6484
    %6486 = vmatprep.subr.mxu0 0.0
    %v6487 = vand.u32 %v6192, 4294901760
    %v6488 = vsub.f32 %v6192, %v6487
    %6489 = vmatpush1.msra.mxu0 %v6488
    %6490 = vmatprep.subr.mxu0 0.0
    %v6491 = vand.u32 %v6193, 4294901760
    %v6492 = vsub.f32 %v6193, %v6491
    %6493 = vmatpush1.msra.mxu0 %v6492
    %6494 = vmatprep.subr.mxu0 0.0
    %v6495 = vand.u32 %v6194, 4294901760
    %v6496 = vsub.f32 %v6194, %v6495
    %6497 = vmatpush1.msra.mxu0 %v6496
    %6498 = vmatprep.subr.mxu0 0.0
    %v6499 = vand.u32 %v6195, 4294901760
    %v6500 = vsub.f32 %v6195, %v6499
    %6501 = vmatpush1.msra.mxu0 %v6500
    %6502 = vmatprep.subr.mxu0 0.0
    %v6503 = vand.u32 %v6196, 4294901760
    %v6504 = vsub.f32 %v6196, %v6503
    %6505 = vmatpush1.msra.mxu0 %v6504
    %6506 = vmatprep.subr.mxu0 0.0
    %v6507 = vand.u32 %v6197, 4294901760
    %v6508 = vsub.f32 %v6197, %v6507
    %6509 = vmatpush1.msra.mxu0 %v6508
    %6510 = vmatprep.subr.mxu0 0.0
    %v6511 = vand.u32 %v6198, 4294901760
    %v6512 = vsub.f32 %v6198, %v6511
    %6513 = vmatpush1.msra.mxu0 %v6512
    %6514 = vmatprep.subr.mxu0 0.0
    %v6515 = vand.u32 %v6199, 4294901760
    %v6516 = vsub.f32 %v6199, %v6515
    %6517 = vmatpush1.msra.mxu0 %v6516
    %6518 = vmatprep.subr.mxu0 0.0
    %v6519 = vand.u32 %v6200, 4294901760
    %v6520 = vsub.f32 %v6200, %v6519
    %6521 = vmatpush1.msra.mxu0 %v6520
    %6522 = vmatprep.subr.mxu0 0.0
    %v6523 = vand.u32 %v6201, 4294901760
    %v6524 = vsub.f32 %v6201, %v6523
    %6525 = vmatpush1.msra.mxu0 %v6524
    %6526 = vmatprep.subr.mxu0 0.0
    %v6527 = vand.u32 %v6202, 4294901760
    %v6528 = vsub.f32 %v6202, %v6527
    %6529 = vmatpush1.msra.mxu0 %v6528
    %6530 = vmatprep.subr.mxu0 0.0
    %v6531 = vand.u32 %v6203, 4294901760
    %v6532 = vsub.f32 %v6203, %v6531
    %6533 = vmatpush1.msra.mxu0 %v6532
    %6534 = vmatprep.subr.mxu0 0.0
    %6535 = vmatpush1.msra.mxu0 0.0
    %6536 = vmatprep.subr.mxu0 0.0
    %6537 = vmatpush1.msra.mxu0 0.0
    %6538 = vmatprep.subr.mxu0 0.0
    %6539 = vmatpush1.msra.mxu0 0.0
    %6540 = vmatprep.subr.mxu0 0.0
    %6541 = vmatpush1.msra.mxu0 0.0
    %6542 = vmatprep.subr.mxu0 0.0
    %6543 = vmatpush1.msra.mxu0 0.0
    %6544 = vmatprep.subr.mxu0 0.0
    %6545 = vmatpush1.msra.mxu0 0.0
    %6546 = vmatprep.subr.mxu0 0.0
    %6547 = vmatpush1.msra.mxu0 0.0
    %6548 = vmatprep.subr.mxu0 0.0
    %6549 = vmatpush1.msra.mxu0 0.0
    %6550 = vmatprep.subr.mxu0 0.0
    %6551 = vmatpush1.msra.mxu0 0.0
    %6552 = vmatprep.subr.mxu0 0.0
    %6553 = vmatpush1.msra.mxu0 0.0
    %6554 = vmatprep.subr.mxu0 0.0
    %6555 = vmatpush1.msra.mxu0 0.0
    %6556 = vmatprep.subr.mxu0 0.0
    %6557 = vmatpush1.msra.mxu0 0.0
    %6558 = vmatprep.subr.mxu0 0.0
    %6559 = vmatpush1.msra.mxu0 0.0
    %6560 = vmatprep.subr.mxu0 0.0
    %6561 = vmatpush1.msra.mxu0 0.0
    %6562 = vmatprep.subr.mxu0 0.0
    %6563 = vmatpush1.msra.mxu0 0.0
    %6564 = vmatprep.subr.mxu0 0.0
    %6565 = vmatpush1.msra.mxu0 0.0
    %6566 = vmatprep.mubr.f32.mxu0 0.0
    %v6567 = vand.u32 %v6185, 4294901760
    %v6568 = vsub.f32 %v6185, %v6567
    %6569 = vmatmul.mubr.f32.gmra.mrb[0].mxu0 %v6568
    %v6570 = vpop.f32.mrb[0].mxu0
    %v6571 = vadd.f32 %v6461, %v6570
    %v6572 = vpop.f32.mrb[0].mxu0
    %6573 = vmatprep.mubr.f32.mxu0 0.0
    %v6574 = vand.u32 %v6186, 4294901760
    %v6575 = vsub.f32 %v6186, %v6574
    %6576 = vmatmul.mubr.f32.gmra.mrb[0].mxu0 %v6575
    %v6577 = vpop.f32.mrb[0].mxu0
    %v6578 = vadd.f32 %v6467, %v6577
    %v6579 = vpop.f32.mrb[0].mxu0
    %6580 = vdwg.mxu0
    %6581 = vmatprep.subr.mxu0 0.0
    %v6582 = vand.u32 %v6188, 4294901760
    %6583 = vmatpush1.msra.mxu0 %v6582
    %6584 = vmatprep.subr.mxu0 0.0
    %v6585 = vand.u32 %v6189, 4294901760
    %6586 = vmatpush1.msra.mxu0 %v6585
    %6587 = vmatprep.subr.mxu0 0.0
    %v6588 = vand.u32 %v6190, 4294901760
    %6589 = vmatpush1.msra.mxu0 %v6588
    %6590 = vmatprep.subr.mxu0 0.0
    %v6591 = vand.u32 %v6191, 4294901760
    %6592 = vmatpush1.msra.mxu0 %v6591
    %6593 = vmatprep.subr.mxu0 0.0
    %v6594 = vand.u32 %v6192, 4294901760
    %6595 = vmatpush1.msra.mxu0 %v6594
    %6596 = vmatprep.subr.mxu0 0.0
    %v6597 = vand.u32 %v6193, 4294901760
    %6598 = vmatpush1.msra.mxu0 %v6597
    %6599 = vmatprep.subr.mxu0 0.0
    %v6600 = vand.u32 %v6194, 4294901760
    %6601 = vmatpush1.msra.mxu0 %v6600
    %6602 = vmatprep.subr.mxu0 0.0
    %v6603 = vand.u32 %v6195, 4294901760
    %6604 = vmatpush1.msra.mxu0 %v6603
    %6605 = vmatprep.subr.mxu0 0.0
    %v6606 = vand.u32 %v6196, 4294901760
    %6607 = vmatpush1.msra.mxu0 %v6606
    %6608 = vmatprep.subr.mxu0 0.0
    %v6609 = vand.u32 %v6197, 4294901760
    %6610 = vmatpush1.msra.mxu0 %v6609
    %6611 = vmatprep.subr.mxu0 0.0
    %v6612 = vand.u32 %v6198, 4294901760
    %6613 = vmatpush1.msra.mxu0 %v6612
    %6614 = vmatprep.subr.mxu0 0.0
    %v6615 = vand.u32 %v6199, 4294901760
    %6616 = vmatpush1.msra.mxu0 %v6615
    %6617 = vmatprep.subr.mxu0 0.0
    %v6618 = vand.u32 %v6200, 4294901760
    %6619 = vmatpush1.msra.mxu0 %v6618
    %6620 = vmatprep.subr.mxu0 0.0
    %v6621 = vand.u32 %v6201, 4294901760
    %6622 = vmatpush1.msra.mxu0 %v6621
    %6623 = vmatprep.subr.mxu0 0.0
    %v6624 = vand.u32 %v6202, 4294901760
    %6625 = vmatpush1.msra.mxu0 %v6624
    %6626 = vmatprep.subr.mxu0 0.0
    %v6627 = vand.u32 %v6203, 4294901760
    %6628 = vmatpush1.msra.mxu0 %v6627
    %6629 = vmatprep.subr.mxu0 0.0
    %6630 = vmatpush1.msra.mxu0 0.0
    %6631 = vmatprep.subr.mxu0 0.0
    %6632 = vmatpush1.msra.mxu0 0.0
    %6633 = vmatprep.subr.mxu0 0.0
    %6634 = vmatpush1.msra.mxu0 0.0
    %6635 = vmatprep.subr.mxu0 0.0
    %6636 = vmatpush1.msra.mxu0 0.0
    %6637 = vmatprep.subr.mxu0 0.0
    %6638 = vmatpush1.msra.mxu0 0.0
    %6639 = vmatprep.subr.mxu0 0.0
    %6640 = vmatpush1.msra.mxu0 0.0
    %6641 = vmatprep.subr.mxu0 0.0
    %6642 = vmatpush1.msra.mxu0 0.0
    %6643 = vmatprep.subr.mxu0 0.0
    %6644 = vmatpush1.msra.mxu0 0.0
    %6645 = vmatprep.subr.mxu0 0.0
    %6646 = vmatpush1.msra.mxu0 0.0
    %6647 = vmatprep.subr.mxu0 0.0
    %6648 = vmatpush1.msra.mxu0 0.0
    %6649 = vmatprep.subr.mxu0 0.0
    %6650 = vmatpush1.msra.mxu0 0.0
    %6651 = vmatprep.subr.mxu0 0.0
    %6652 = vmatpush1.msra.mxu0 0.0
    %6653 = vmatprep.subr.mxu0 0.0
    %6654 = vmatpush1.msra.mxu0 0.0
    %6655 = vmatprep.subr.mxu0 0.0
    %6656 = vmatpush1.msra.mxu0 0.0
    %6657 = vmatprep.subr.mxu0 0.0
    %6658 = vmatpush1.msra.mxu0 0.0
    %6659 = vmatprep.subr.mxu0 0.0
    %6660 = vmatpush1.msra.mxu0 0.0
    %6661 = vmatprep.mubr.f32.mxu0 0.0
    %v6662 = vand.u32 %v6185, 4294901760
    %v6663 = vsub.f32 %v6185, %v6662
    %v6664 = vand.u32 %v6663, 4294901760
    %6665 = vmatmul.mubr.f32.gmra.mrb[0].mxu0 %v6664
    %v6666 = vpop.f32.mrb[0].mxu0
    %v6667 = vadd.f32 %v6571, %v6666
    %v6668 = vpop.f32.mrb[0].mxu0
    %6669 = vmatprep.mubr.f32.mxu0 0.0
    %v6670 = vand.u32 %v6186, 4294901760
    %v6671 = vsub.f32 %v6186, %v6670
    %v6672 = vand.u32 %v6671, 4294901760
    %6673 = vmatmul.mubr.f32.gmra.mrb[0].mxu0 %v6672
    %v6674 = vpop.f32.mrb[0].mxu0
    %v6675 = vadd.f32 %v6578, %v6674
    %v6676 = vpop.f32.mrb[0].mxu0
    %6677 = vdwg.mxu0
    %6678 = vmatprep.subr.mxu0 0.0
    %v6679 = vand.u32 %v6188, 4294901760
    %v6680 = vsub.f32 %v6188, %v6679
    %v6681 = vand.u32 %v6680, 4294901760
    %6682 = vmatpush1.msra.mxu0 %v6681
    %6683 = vmatprep.subr.mxu0 0.0
    %v6684 = vand.u32 %v6189, 4294901760
    %v6685 = vsub.f32 %v6189, %v6684
    %v6686 = vand.u32 %v6685, 4294901760
    %6687 = vmatpush1.msra.mxu0 %v6686
    %6688 = vmatprep.subr.mxu0 0.0
    %v6689 = vand.u32 %v6190, 4294901760
    %v6690 = vsub.f32 %v6190, %v6689
    %v6691 = vand.u32 %v6690, 4294901760
    %6692 = vmatpush1.msra.mxu0 %v6691
    %6693 = vmatprep.subr.mxu0 0.0
    %v6694 = vand.u32 %v6191, 4294901760
    %v6695 = vsub.f32 %v6191, %v6694
    %v6696 = vand.u32 %v6695, 4294901760
    %6697 = vmatpush1.msra.mxu0 %v6696
    %6698 = vmatprep.subr.mxu0 0.0
    %v6699 = vand.u32 %v6192, 4294901760
    %v6700 = vsub.f32 %v6192, %v6699
    %v6701 = vand.u32 %v6700, 4294901760
    %6702 = vmatpush1.msra.mxu0 %v6701
    %6703 = vmatprep.subr.mxu0 0.0
    %v6704 = vand.u32 %v6193, 4294901760
    %v6705 = vsub.f32 %v6193, %v6704
    %v6706 = vand.u32 %v6705, 4294901760
    %6707 = vmatpush1.msra.mxu0 %v6706
    %6708 = vmatprep.subr.mxu0 0.0
    %v6709 = vand.u32 %v6194, 4294901760
    %v6710 = vsub.f32 %v6194, %v6709
    %v6711 = vand.u32 %v6710, 4294901760
    %6712 = vmatpush1.msra.mxu0 %v6711
    %6713 = vmatprep.subr.mxu0 0.0
    %v6714 = vand.u32 %v6195, 4294901760
    %v6715 = vsub.f32 %v6195, %v6714
    %v6716 = vand.u32 %v6715, 4294901760
    %6717 = vmatpush1.msra.mxu0 %v6716
    %6718 = vmatprep.subr.mxu0 0.0
    %v6719 = vand.u32 %v6196, 4294901760
    %v6720 = vsub.f32 %v6196, %v6719
    %v6721 = vand.u32 %v6720, 4294901760
    %6722 = vmatpush1.msra.mxu0 %v6721
    %6723 = vmatprep.subr.mxu0 0.0
    %v6724 = vand.u32 %v6197, 4294901760
    %v6725 = vsub.f32 %v6197, %v6724
    %v6726 = vand.u32 %v6725, 4294901760
    %6727 = vmatpush1.msra.mxu0 %v6726
    %6728 = vmatprep.subr.mxu0 0.0
    %v6729 = vand.u32 %v6198, 4294901760
    %v6730 = vsub.f32 %v6198, %v6729
    %v6731 = vand.u32 %v6730, 4294901760
    %6732 = vmatpush1.msra.mxu0 %v6731
    %6733 = vmatprep.subr.mxu0 0.0
    %v6734 = vand.u32 %v6199, 4294901760
    %v6735 = vsub.f32 %v6199, %v6734
    %v6736 = vand.u32 %v6735, 4294901760
    %6737 = vmatpush1.msra.mxu0 %v6736
    %6738 = vmatprep.subr.mxu0 0.0
    %v6739 = vand.u32 %v6200, 4294901760
    %v6740 = vsub.f32 %v6200, %v6739
    %v6741 = vand.u32 %v6740, 4294901760
    %6742 = vmatpush1.msra.mxu0 %v6741
    %6743 = vmatprep.subr.mxu0 0.0
    %v6744 = vand.u32 %v6201, 4294901760
    %v6745 = vsub.f32 %v6201, %v6744
    %v6746 = vand.u32 %v6745, 4294901760
    %6747 = vmatpush1.msra.mxu0 %v6746
    %6748 = vmatprep.subr.mxu0 0.0
    %v6749 = vand.u32 %v6202, 4294901760
    %v6750 = vsub.f32 %v6202, %v6749
    %v6751 = vand.u32 %v6750, 4294901760
    %6752 = vmatpush1.msra.mxu0 %v6751
    %6753 = vmatprep.subr.mxu0 0.0
    %v6754 = vand.u32 %v6203, 4294901760
    %v6755 = vsub.f32 %v6203, %v6754
    %v6756 = vand.u32 %v6755, 4294901760
    %6757 = vmatpush1.msra.mxu0 %v6756
    %6758 = vmatprep.subr.mxu0 0.0
    %6759 = vmatpush1.msra.mxu0 0.0
    %6760 = vmatprep.subr.mxu0 0.0
    %6761 = vmatpush1.msra.mxu0 0.0
    %6762 = vmatprep.subr.mxu0 0.0
    %6763 = vmatpush1.msra.mxu0 0.0
    %6764 = vmatprep.subr.mxu0 0.0
    %6765 = vmatpush1.msra.mxu0 0.0
    %6766 = vmatprep.subr.mxu0 0.0
    %6767 = vmatpush1.msra.mxu0 0.0
    %6768 = vmatprep.subr.mxu0 0.0
    %6769 = vmatpush1.msra.mxu0 0.0
    %6770 = vmatprep.subr.mxu0 0.0
    %6771 = vmatpush1.msra.mxu0 0.0
    %6772 = vmatprep.subr.mxu0 0.0
    %6773 = vmatpush1.msra.mxu0 0.0
    %6774 = vmatprep.subr.mxu0 0.0
    %6775 = vmatpush1.msra.mxu0 0.0
    %6776 = vmatprep.subr.mxu0 0.0
    %6777 = vmatpush1.msra.mxu0 0.0
    %6778 = vmatprep.subr.mxu0 0.0
    %6779 = vmatpush1.msra.mxu0 0.0
    %6780 = vmatprep.subr.mxu0 0.0
    %6781 = vmatpush1.msra.mxu0 0.0
    %6782 = vmatprep.subr.mxu0 0.0
    %6783 = vmatpush1.msra.mxu0 0.0
    %6784 = vmatprep.subr.mxu0 0.0
    %6785 = vmatpush1.msra.mxu0 0.0
    %6786 = vmatprep.subr.mxu0 0.0
    %6787 = vmatpush1.msra.mxu0 0.0
    %6788 = vmatprep.subr.mxu0 0.0
    %6789 = vmatpush1.msra.mxu0 0.0
    %6790 = vmatprep.mubr.f32.mxu0 0.0
    %v6791 = vand.u32 %v6185, 4294901760
    %6792 = vmatmul.mubr.f32.gmra.mrb[0].mxu0 %v6791
    %v6793 = vpop.f32.mrb[0].mxu0
    %v6794 = vadd.f32 %v6667, %v6793
    %v6795 = vpop.f32.mrb[0].mxu0
    %6796 = vmatprep.mubr.f32.mxu0 0.0
    %v6797 = vand.u32 %v6186, 4294901760
    %6798 = vmatmul.mubr.f32.gmra.mrb[0].mxu0 %v6797
    %v6799 = vpop.f32.mrb[0].mxu0
    %v6800 = vadd.f32 %v6675, %v6799
    %v6801 = vpop.f32.mrb[0].mxu0
    %6802 = vdwg.mxu0
    %6803 = vmatprep.subr.mxu0 0.0
    %v6804 = vand.u32 %v6188, 4294901760
    %6805 = vmatpush1.msra.mxu0 %v6804
    %6806 = vmatprep.subr.mxu0 0.0
    %v6807 = vand.u32 %v6189, 4294901760
    %6808 = vmatpush1.msra.mxu0 %v6807
    %6809 = vmatprep.subr.mxu0 0.0
    %v6810 = vand.u32 %v6190, 4294901760
    %6811 = vmatpush1.msra.mxu0 %v6810
    %6812 = vmatprep.subr.mxu0 0.0
    %v6813 = vand.u32 %v6191, 4294901760
    %6814 = vmatpush1.msra.mxu0 %v6813
    %6815 = vmatprep.subr.mxu0 0.0
    %v6816 = vand.u32 %v6192, 4294901760
    %6817 = vmatpush1.msra.mxu0 %v6816
    %6818 = vmatprep.subr.mxu0 0.0
    %v6819 = vand.u32 %v6193, 4294901760
    %6820 = vmatpush1.msra.mxu0 %v6819
    %6821 = vmatprep.subr.mxu0 0.0
    %v6822 = vand.u32 %v6194, 4294901760
    %6823 = vmatpush1.msra.mxu0 %v6822
    %6824 = vmatprep.subr.mxu0 0.0
    %v6825 = vand.u32 %v6195, 4294901760
    %6826 = vmatpush1.msra.mxu0 %v6825
    %6827 = vmatprep.subr.mxu0 0.0
    %v6828 = vand.u32 %v6196, 4294901760
    %6829 = vmatpush1.msra.mxu0 %v6828
    %6830 = vmatprep.subr.mxu0 0.0
    %v6831 = vand.u32 %v6197, 4294901760
    %6832 = vmatpush1.msra.mxu0 %v6831
    %6833 = vmatprep.subr.mxu0 0.0
    %v6834 = vand.u32 %v6198, 4294901760
    %6835 = vmatpush1.msra.mxu0 %v6834
    %6836 = vmatprep.subr.mxu0 0.0
    %v6837 = vand.u32 %v6199, 4294901760
    %6838 = vmatpush1.msra.mxu0 %v6837
    %6839 = vmatprep.subr.mxu0 0.0
    %v6840 = vand.u32 %v6200, 4294901760
    %6841 = vmatpush1.msra.mxu0 %v6840
    %6842 = vmatprep.subr.mxu0 0.0
    %v6843 = vand.u32 %v6201, 4294901760
    %6844 = vmatpush1.msra.mxu0 %v6843
    %6845 = vmatprep.subr.mxu0 0.0
    %v6846 = vand.u32 %v6202, 4294901760
    %6847 = vmatpush1.msra.mxu0 %v6846
    %6848 = vmatprep.subr.mxu0 0.0
    %v6849 = vand.u32 %v6203, 4294901760
    %6850 = vmatpush1.msra.mxu0 %v6849
    %6851 = vmatprep.subr.mxu0 0.0
    %6852 = vmatpush1.msra.mxu0 0.0
    %6853 = vmatprep.subr.mxu0 0.0
    %6854 = vmatpush1.msra.mxu0 0.0
    %6855 = vmatprep.subr.mxu0 0.0
    %6856 = vmatpush1.msra.mxu0 0.0
    %6857 = vmatprep.subr.mxu0 0.0
    %6858 = vmatpush1.msra.mxu0 0.0
    %6859 = vmatprep.subr.mxu0 0.0
    %6860 = vmatpush1.msra.mxu0 0.0
    %6861 = vmatprep.subr.mxu0 0.0
    %6862 = vmatpush1.msra.mxu0 0.0
    %6863 = vmatprep.subr.mxu0 0.0
    %6864 = vmatpush1.msra.mxu0 0.0
    %6865 = vmatprep.subr.mxu0 0.0
    %6866 = vmatpush1.msra.mxu0 0.0
    %6867 = vmatprep.subr.mxu0 0.0
    %6868 = vmatpush1.msra.mxu0 0.0
    %6869 = vmatprep.subr.mxu0 0.0
    %6870 = vmatpush1.msra.mxu0 0.0
    %6871 = vmatprep.subr.mxu0 0.0
    %6872 = vmatpush1.msra.mxu0 0.0
    %6873 = vmatprep.subr.mxu0 0.0
    %6874 = vmatpush1.msra.mxu0 0.0
    %6875 = vmatprep.subr.mxu0 0.0
    %6876 = vmatpush1.msra.mxu0 0.0
    %6877 = vmatprep.subr.mxu0 0.0
    %6878 = vmatpush1.msra.mxu0 0.0
    %6879 = vmatprep.subr.mxu0 0.0
    %6880 = vmatpush1.msra.mxu0 0.0
    %6881 = vmatprep.subr.mxu0 0.0
    %6882 = vmatpush1.msra.mxu0 0.0
    %6883 = vmatprep.mubr.f32.mxu0 0.0
    %v6884 = vand.u32 %v6185, 4294901760
    %6885 = vmatmul.mubr.f32.gmra.mrb[0].mxu0 %v6884
    %v6886 = vpop.f32.mrb[0].mxu0
    %v6887 = vadd.f32 %v6794, %v6886
    %v6888 = vpop.f32.mrb[0].mxu0
    %6889 = vmatprep.mubr.f32.mxu0 0.0
    %v6890 = vand.u32 %v6186, 4294901760
    %6891 = vmatmul.mubr.f32.gmra.mrb[0].mxu0 %v6890
    %v6892 = vpop.f32.mrb[0].mxu0
    %v6893 = vadd.f32 %v6800, %v6892
    %v6894 = vpop.f32.mrb[0].mxu0
    %6895 = vdwg.mxu0
    %v6896 = vmul.f32 %v6887, %v143
    %v6897 = vmul.f32 %v6893, %v144
    %v6898 = vadd.f32 %v6896, %v6897
    %v6899 = vrot.slane %v6898, 4
    %v6900 = vadd.f32 %v6898, %v6899
    %v6901 = vrot.slane %v6900, 2
    %v6902 = vadd.f32 %v6900, %v6901
    %v6903 = vrot.slane %v6902, 1
    %v6904 = vadd.f32 %v6902, %v6903
    %v6905 = vmul.f32 %v6904, 0.1
    %v6906 = vsub.f32 %v6887, %v6905
    %v6907 = vsub.f32 %v6893, %v6905
    %v6908 = vmul.f32 %v6906, %v143
    %v6909 = vmul.f32 %v6907, %v144
    %v6910 = vmul.f32 %v6908, %v6908
    %v6911 = vmul.f32 %v6909, %v6909
    %v6912 = vadd.f32 %v6910, %v6911
    %v6913 = vrot.slane %v6912, 4
    %v6914 = vadd.f32 %v6912, %v6913
    %v6915 = vrot.slane %v6914, 2
    %v6916 = vadd.f32 %v6914, %v6915
    %v6917 = vrot.slane %v6916, 1
    %v6918 = vadd.f32 %v6916, %v6917
    %v6919 = vmul.f32 %v6918, 0.1
    %v6920 = vmax.f32 %v6919, 0.0
    %v6921 = vadd.f32 %v6920, 1e-05
    %v6922 = vrsqrt.pop %v6921
    %v6923 = vmul.f32 %v6906, %v6922
    %v6924 = vmul.f32 %v6907, %v6922
    %s6925 = scalar_lea.vmem %s10, 1
    %v6926 = vld [vmem:[%s6925] sm:$0x1]
    %v6928 = vlaneseq
    %v6929 = vshrl.u32 %v6928, 7
    %v6930 = vsub.s32 0, %v6929
    %v6931 = vrot.slane %v6926, %v6930
    %v6933 = vmul.f32 %v6923, %v6931
    %v6934 = vmul.f32 %v6924, %v6931
    %s6935 = scalar_lea.vmem %s11, 1
    %v6936 = vld [vmem:[%s6935] sm:$0x1]
    %v6938 = vlaneseq
    %v6939 = vshrl.u32 %v6938, 7
    %v6940 = vsub.s32 0, %v6939
    %v6941 = vrot.slane %v6936, %v6940
    %v6943 = vadd.f32 %v6933, %v6941
    %v6944 = vadd.f32 %v6934, %v6941
    %v6945 = vmax.f32 %v6943, 0.0
    %v6946 = vmax.f32 %v6944, 0.0
    %v6947 = vmul.f32 %v6945, %v143
    %v6948 = vmul.f32 %v6946, %v144
    %v6949 = vld [vmem:[#allocation10] sm:$0xff]
    %v6950 = vld [vmem:[#allocation10 + $0x8] sm:$0xff]
    %v6951 = vld [vmem:[#allocation10 + $0x10] sm:$0xff]
    %v6952 = vld [vmem:[#allocation10 + $0x18] sm:$0xff]
    %v6953 = vld [vmem:[#allocation10 + $0x20] sm:$0xff]
    %v6954 = vld [vmem:[#allocation10 + $0x28] sm:$0xff]
    %v6955 = vld [vmem:[#allocation10 + $0x30] sm:$0xff]
    %v6956 = vld [vmem:[#allocation10 + $0x38] sm:$0xff]
    %v6957 = vld [vmem:[#allocation10 + $0x40] sm:$0xff]
    %v6958 = vld [vmem:[#allocation10 + $0x48] sm:$0xff]
    %v6959 = vld [vmem:[#allocation10 + $0x50] sm:$0xff]
    %v6960 = vld [vmem:[#allocation10 + $0x58] sm:$0xff]
    %v6961 = vld [vmem:[#allocation10 + $0x60] sm:$0xff]
    %v6962 = vld [vmem:[#allocation10 + $0x68] sm:$0xff]
    %v6963 = vld [vmem:[#allocation10 + $0x70] sm:$0xff]
    %v6964 = vld [vmem:[#allocation10 + $0x78] sm:$0xff]
    %v6965 = vld [vmem:[%s13] sm:$0x1]
    %v6967 = vlaneseq
    %v6968 = vshrl.u32 %v6967, 7
    %v6969 = vsub.s32 0, %v6968
    %v6970 = vrot.slane %v6965, %v6969
    %6972 = vmatprep.subr.mxu0 0.0
    %v6973 = vand.u32 %v6949, 4294901760
    %6974 = vmatpush1.msra.mxu0 %v6973
    %6975 = vmatprep.subr.mxu0 0.0
    %v6976 = vand.u32 %v6950, 4294901760
    %6977 = vmatpush1.msra.mxu0 %v6976
    %6978 = vmatprep.subr.mxu0 0.0
    %v6979 = vand.u32 %v6951, 4294901760
    %6980 = vmatpush1.msra.mxu0 %v6979
    %6981 = vmatprep.subr.mxu0 0.0
    %v6982 = vand.u32 %v6952, 4294901760
    %6983 = vmatpush1.msra.mxu0 %v6982
    %6984 = vmatprep.subr.mxu0 0.0
    %v6985 = vand.u32 %v6953, 4294901760
    %6986 = vmatpush1.msra.mxu0 %v6985
    %6987 = vmatprep.subr.mxu0 0.0
    %v6988 = vand.u32 %v6954, 4294901760
    %6989 = vmatpush1.msra.mxu0 %v6988
    %6990 = vmatprep.subr.mxu0 0.0
    %v6991 = vand.u32 %v6955, 4294901760
    %6992 = vmatpush1.msra.mxu0 %v6991
    %6993 = vmatprep.subr.mxu0 0.0
    %v6994 = vand.u32 %v6956, 4294901760
    %6995 = vmatpush1.msra.mxu0 %v6994
    %6996 = vmatprep.subr.mxu0 0.0
    %v6997 = vand.u32 %v6957, 4294901760
    %6998 = vmatpush1.msra.mxu0 %v6997
    %6999 = vmatprep.subr.mxu0 0.0
    %v7000 = vand.u32 %v6958, 4294901760
    %7001 = vmatpush1.msra.mxu0 %v7000
    %7002 = vmatprep.subr.mxu0 0.0
    %v7003 = vand.u32 %v6959, 4294901760
    %7004 = vmatpush1.msra.mxu0 %v7003
    %7005 = vmatprep.subr.mxu0 0.0
    %v7006 = vand.u32 %v6960, 4294901760
    %7007 = vmatpush1.msra.mxu0 %v7006
    %7008 = vmatprep.subr.mxu0 0.0
    %v7009 = vand.u32 %v6961, 4294901760
    %7010 = vmatpush1.msra.mxu0 %v7009
    %7011 = vmatprep.subr.mxu0 0.0
    %v7012 = vand.u32 %v6962, 4294901760
    %7013 = vmatpush1.msra.mxu0 %v7012
    %7014 = vmatprep.subr.mxu0 0.0
    %v7015 = vand.u32 %v6963, 4294901760
    %7016 = vmatpush1.msra.mxu0 %v7015
    %7017 = vmatprep.subr.mxu0 0.0
    %v7018 = vand.u32 %v6964, 4294901760
    %7019 = vmatpush1.msra.mxu0 %v7018
    %7020 = vmatprep.subr.mxu0 0.0
    %7021 = vmatpush1.msra.mxu0 0.0
    %7022 = vmatprep.subr.mxu0 0.0
    %7023 = vmatpush1.msra.mxu0 0.0
    %7024 = vmatprep.subr.mxu0 0.0
    %7025 = vmatpush1.msra.mxu0 0.0
    %7026 = vmatprep.subr.mxu0 0.0
    %7027 = vmatpush1.msra.mxu0 0.0
    %7028 = vmatprep.subr.mxu0 0.0
    %7029 = vmatpush1.msra.mxu0 0.0
    %7030 = vmatprep.subr.mxu0 0.0
    %7031 = vmatpush1.msra.mxu0 0.0
    %7032 = vmatprep.subr.mxu0 0.0
    %7033 = vmatpush1.msra.mxu0 0.0
    %7034 = vmatprep.subr.mxu0 0.0
    %7035 = vmatpush1.msra.mxu0 0.0
    %7036 = vmatprep.subr.mxu0 0.0
    %7037 = vmatpush1.msra.mxu0 0.0
    %7038 = vmatprep.subr.mxu0 0.0
    %7039 = vmatpush1.msra.mxu0 0.0
    %7040 = vmatprep.subr.mxu0 0.0
    %7041 = vmatpush1.msra.mxu0 0.0
    %7042 = vmatprep.subr.mxu0 0.0
    %7043 = vmatpush1.msra.mxu0 0.0
    %7044 = vmatprep.subr.mxu0 0.0
    %7045 = vmatpush1.msra.mxu0 0.0
    %7046 = vmatprep.subr.mxu0 0.0
    %7047 = vmatpush1.msra.mxu0 0.0
    %7048 = vmatprep.subr.mxu0 0.0
    %7049 = vmatpush1.msra.mxu0 0.0
    %7050 = vmatprep.subr.mxu0 0.0
    %7051 = vmatpush1.msra.mxu0 0.0
    %7052 = vmatprep.mubr.f32.mxu0 0.0
    %v7053 = vand.u32 %v6947, 4294901760
    %v7054 = vsub.f32 %v6947, %v7053
    %v7055 = vand.u32 %v7054, 4294901760
    %v7056 = vsub.f32 %v7054, %v7055
    %v7057 = vand.u32 %v7056, 4294901760
    %7058 = vmatmul.mubr.f32.gmra.mrb[0].mxu0 %v7057
    %v7059 = vpop.f32.mrb[0].mxu0
    %v7060 = vadd.f32 %v6970, %v7059
    %v7061 = vpop.f32.mrb[0].mxu0
    %7062 = vmatprep.mubr.f32.mxu0 0.0
    %v7063 = vand.u32 %v6948, 4294901760
    %v7064 = vsub.f32 %v6948, %v7063
    %v7065 = vand.u32 %v7064, 4294901760
    %v7066 = vsub.f32 %v7064, %v7065
    %v7067 = vand.u32 %v7066, 4294901760
    %7068 = vmatmul.mubr.f32.gmra.mrb[0].mxu0 %v7067
    %v7069 = vpop.f32.mrb[0].mxu0
    %v7070 = vadd.f32 %v6970, %v7069
    %v7071 = vpop.f32.mrb[0].mxu0
    %7072 = vdwg.mxu0
    %7073 = vmatprep.subr.mxu0 0.0
    %v7074 = vand.u32 %v6949, 4294901760
    %v7075 = vsub.f32 %v6949, %v7074
    %v7076 = vand.u32 %v7075, 4294901760
    %v7077 = vsub.f32 %v7075, %v7076
    %v7078 = vand.u32 %v7077, 4294901760
    %7079 = vmatpush1.msra.mxu0 %v7078
    %7080 = vmatprep.subr.mxu0 0.0
    %v7081 = vand.u32 %v6950, 4294901760
    %v7082 = vsub.f32 %v6950, %v7081
    %v7083 = vand.u32 %v7082, 4294901760
    %v7084 = vsub.f32 %v7082, %v7083
    %v7085 = vand.u32 %v7084, 4294901760
    %7086 = vmatpush1.msra.mxu0 %v7085
    %7087 = vmatprep.subr.mxu0 0.0
    %v7088 = vand.u32 %v6951, 4294901760
    %v7089 = vsub.f32 %v6951, %v7088
    %v7090 = vand.u32 %v7089, 4294901760
    %v7091 = vsub.f32 %v7089, %v7090
    %v7092 = vand.u32 %v7091, 4294901760
    %7093 = vmatpush1.msra.mxu0 %v7092
    %7094 = vmatprep.subr.mxu0 0.0
    %v7095 = vand.u32 %v6952, 4294901760
    %v7096 = vsub.f32 %v6952, %v7095
    %v7097 = vand.u32 %v7096, 4294901760
    %v7098 = vsub.f32 %v7096, %v7097
    %v7099 = vand.u32 %v7098, 4294901760
    %7100 = vmatpush1.msra.mxu0 %v7099
    %7101 = vmatprep.subr.mxu0 0.0
    %v7102 = vand.u32 %v6953, 4294901760
    %v7103 = vsub.f32 %v6953, %v7102
    %v7104 = vand.u32 %v7103, 4294901760
    %v7105 = vsub.f32 %v7103, %v7104
    %v7106 = vand.u32 %v7105, 4294901760
    %7107 = vmatpush1.msra.mxu0 %v7106
    %7108 = vmatprep.subr.mxu0 0.0
    %v7109 = vand.u32 %v6954, 4294901760
    %v7110 = vsub.f32 %v6954, %v7109
    %v7111 = vand.u32 %v7110, 4294901760
    %v7112 = vsub.f32 %v7110, %v7111
    %v7113 = vand.u32 %v7112, 4294901760
    %7114 = vmatpush1.msra.mxu0 %v7113
    %7115 = vmatprep.subr.mxu0 0.0
    %v7116 = vand.u32 %v6955, 4294901760
    %v7117 = vsub.f32 %v6955, %v7116
    %v7118 = vand.u32 %v7117, 4294901760
    %v7119 = vsub.f32 %v7117, %v7118
    %v7120 = vand.u32 %v7119, 4294901760
    %7121 = vmatpush1.msra.mxu0 %v7120
    %7122 = vmatprep.subr.mxu0 0.0
    %v7123 = vand.u32 %v6956, 4294901760
    %v7124 = vsub.f32 %v6956, %v7123
    %v7125 = vand.u32 %v7124, 4294901760
    %v7126 = vsub.f32 %v7124, %v7125
    %v7127 = vand.u32 %v7126, 4294901760
    %7128 = vmatpush1.msra.mxu0 %v7127
    %7129 = vmatprep.subr.mxu0 0.0
    %v7130 = vand.u32 %v6957, 4294901760
    %v7131 = vsub.f32 %v6957, %v7130
    %v7132 = vand.u32 %v7131, 4294901760
    %v7133 = vsub.f32 %v7131, %v7132
    %v7134 = vand.u32 %v7133, 4294901760
    %7135 = vmatpush1.msra.mxu0 %v7134
    %7136 = vmatprep.subr.mxu0 0.0
    %v7137 = vand.u32 %v6958, 4294901760
    %v7138 = vsub.f32 %v6958, %v7137
    %v7139 = vand.u32 %v7138, 4294901760
    %v7140 = vsub.f32 %v7138, %v7139
    %v7141 = vand.u32 %v7140, 4294901760
    %7142 = vmatpush1.msra.mxu0 %v7141
    %7143 = vmatprep.subr.mxu0 0.0
    %v7144 = vand.u32 %v6959, 4294901760
    %v7145 = vsub.f32 %v6959, %v7144
    %v7146 = vand.u32 %v7145, 4294901760
    %v7147 = vsub.f32 %v7145, %v7146
    %v7148 = vand.u32 %v7147, 4294901760
    %7149 = vmatpush1.msra.mxu0 %v7148
    %7150 = vmatprep.subr.mxu0 0.0
    %v7151 = vand.u32 %v6960, 4294901760
    %v7152 = vsub.f32 %v6960, %v7151
    %v7153 = vand.u32 %v7152, 4294901760
    %v7154 = vsub.f32 %v7152, %v7153
    %v7155 = vand.u32 %v7154, 4294901760
    %7156 = vmatpush1.msra.mxu0 %v7155
    %7157 = vmatprep.subr.mxu0 0.0
    %v7158 = vand.u32 %v6961, 4294901760
    %v7159 = vsub.f32 %v6961, %v7158
    %v7160 = vand.u32 %v7159, 4294901760
    %v7161 = vsub.f32 %v7159, %v7160
    %v7162 = vand.u32 %v7161, 4294901760
    %7163 = vmatpush1.msra.mxu0 %v7162
    %7164 = vmatprep.subr.mxu0 0.0
    %v7165 = vand.u32 %v6962, 4294901760
    %v7166 = vsub.f32 %v6962, %v7165
    %v7167 = vand.u32 %v7166, 4294901760
    %v7168 = vsub.f32 %v7166, %v7167
    %v7169 = vand.u32 %v7168, 4294901760
    %7170 = vmatpush1.msra.mxu0 %v7169
    %7171 = vmatprep.subr.mxu0 0.0
    %v7172 = vand.u32 %v6963, 4294901760
    %v7173 = vsub.f32 %v6963, %v7172
    %v7174 = vand.u32 %v7173, 4294901760
    %v7175 = vsub.f32 %v7173, %v7174
    %v7176 = vand.u32 %v7175, 4294901760
    %7177 = vmatpush1.msra.mxu0 %v7176
    %7178 = vmatprep.subr.mxu0 0.0
    %v7179 = vand.u32 %v6964, 4294901760
    %v7180 = vsub.f32 %v6964, %v7179
    %v7181 = vand.u32 %v7180, 4294901760
    %v7182 = vsub.f32 %v7180, %v7181
    %v7183 = vand.u32 %v7182, 4294901760
    %7184 = vmatpush1.msra.mxu0 %v7183
    %7185 = vmatprep.subr.mxu0 0.0
    %7186 = vmatpush1.msra.mxu0 0.0
    %7187 = vmatprep.subr.mxu0 0.0
    %7188 = vmatpush1.msra.mxu0 0.0
    %7189 = vmatprep.subr.mxu0 0.0
    %7190 = vmatpush1.msra.mxu0 0.0
    %7191 = vmatprep.subr.mxu0 0.0
    %7192 = vmatpush1.msra.mxu0 0.0
    %7193 = vmatprep.subr.mxu0 0.0
    %7194 = vmatpush1.msra.mxu0 0.0
    %7195 = vmatprep.subr.mxu0 0.0
    %7196 = vmatpush1.msra.mxu0 0.0
    %7197 = vmatprep.subr.mxu0 0.0
    %7198 = vmatpush1.msra.mxu0 0.0
    %7199 = vmatprep.subr.mxu0 0.0
    %7200 = vmatpush1.msra.mxu0 0.0
    %7201 = vmatprep.subr.mxu0 0.0
    %7202 = vmatpush1.msra.mxu0 0.0
    %7203 = vmatprep.subr.mxu0 0.0
    %7204 = vmatpush1.msra.mxu0 0.0
    %7205 = vmatprep.subr.mxu0 0.0
    %7206 = vmatpush1.msra.mxu0 0.0
    %7207 = vmatprep.subr.mxu0 0.0
    %7208 = vmatpush1.msra.mxu0 0.0
    %7209 = vmatprep.subr.mxu0 0.0
    %7210 = vmatpush1.msra.mxu0 0.0
    %7211 = vmatprep.subr.mxu0 0.0
    %7212 = vmatpush1.msra.mxu0 0.0
    %7213 = vmatprep.subr.mxu0 0.0
    %7214 = vmatpush1.msra.mxu0 0.0
    %7215 = vmatprep.subr.mxu0 0.0
    %7216 = vmatpush1.msra.mxu0 0.0
    %7217 = vmatprep.mubr.f32.mxu0 0.0
    %v7218 = vand.u32 %v6947, 4294901760
    %7219 = vmatmul.mubr.f32.gmra.mrb[0].mxu0 %v7218
    %v7220 = vpop.f32.mrb[0].mxu0
    %v7221 = vadd.f32 %v7060, %v7220
    %v7222 = vpop.f32.mrb[0].mxu0
    %7223 = vmatprep.mubr.f32.mxu0 0.0
    %v7224 = vand.u32 %v6948, 4294901760
    %7225 = vmatmul.mubr.f32.gmra.mrb[0].mxu0 %v7224
    %v7226 = vpop.f32.mrb[0].mxu0
    %v7227 = vadd.f32 %v7070, %v7226
    %v7228 = vpop.f32.mrb[0].mxu0
    %7229 = vdwg.mxu0
    %7230 = vmatprep.subr.mxu0 0.0
    %v7231 = vand.u32 %v6949, 4294901760
    %v7232 = vsub.f32 %v6949, %v7231
    %7233 = vmatpush1.msra.mxu0 %v7232
    %7234 = vmatprep.subr.mxu0 0.0
    %v7235 = vand.u32 %v6950, 4294901760
    %v7236 = vsub.f32 %v6950, %v7235
    %7237 = vmatpush1.msra.mxu0 %v7236
    %7238 = vmatprep.subr.mxu0 0.0
    %v7239 = vand.u32 %v6951, 4294901760
    %v7240 = vsub.f32 %v6951, %v7239
    %7241 = vmatpush1.msra.mxu0 %v7240
    %7242 = vmatprep.subr.mxu0 0.0
    %v7243 = vand.u32 %v6952, 4294901760
    %v7244 = vsub.f32 %v6952, %v7243
    %7245 = vmatpush1.msra.mxu0 %v7244
    %7246 = vmatprep.subr.mxu0 0.0
    %v7247 = vand.u32 %v6953, 4294901760
    %v7248 = vsub.f32 %v6953, %v7247
    %7249 = vmatpush1.msra.mxu0 %v7248
    %7250 = vmatprep.subr.mxu0 0.0
    %v7251 = vand.u32 %v6954, 4294901760
    %v7252 = vsub.f32 %v6954, %v7251
    %7253 = vmatpush1.msra.mxu0 %v7252
    %7254 = vmatprep.subr.mxu0 0.0
    %v7255 = vand.u32 %v6955, 4294901760
    %v7256 = vsub.f32 %v6955, %v7255
    %7257 = vmatpush1.msra.mxu0 %v7256
    %7258 = vmatprep.subr.mxu0 0.0
    %v7259 = vand.u32 %v6956, 4294901760
    %v7260 = vsub.f32 %v6956, %v7259
    %7261 = vmatpush1.msra.mxu0 %v7260
    %7262 = vmatprep.subr.mxu0 0.0
    %v7263 = vand.u32 %v6957, 4294901760
    %v7264 = vsub.f32 %v6957, %v7263
    %7265 = vmatpush1.msra.mxu0 %v7264
    %7266 = vmatprep.subr.mxu0 0.0
    %v7267 = vand.u32 %v6958, 4294901760
    %v7268 = vsub.f32 %v6958, %v7267
    %7269 = vmatpush1.msra.mxu0 %v7268
    %7270 = vmatprep.subr.mxu0 0.0
    %v7271 = vand.u32 %v6959, 4294901760
    %v7272 = vsub.f32 %v6959, %v7271
    %7273 = vmatpush1.msra.mxu0 %v7272
    %7274 = vmatprep.subr.mxu0 0.0
    %v7275 = vand.u32 %v6960, 4294901760
    %v7276 = vsub.f32 %v6960, %v7275
    %7277 = vmatpush1.msra.mxu0 %v7276
    %7278 = vmatprep.subr.mxu0 0.0
    %v7279 = vand.u32 %v6961, 4294901760
    %v7280 = vsub.f32 %v6961, %v7279
    %7281 = vmatpush1.msra.mxu0 %v7280
    %7282 = vmatprep.subr.mxu0 0.0
    %v7283 = vand.u32 %v6962, 4294901760
    %v7284 = vsub.f32 %v6962, %v7283
    %7285 = vmatpush1.msra.mxu0 %v7284
    %7286 = vmatprep.subr.mxu0 0.0
    %v7287 = vand.u32 %v6963, 4294901760
    %v7288 = vsub.f32 %v6963, %v7287
    %7289 = vmatpush1.msra.mxu0 %v7288
    %7290 = vmatprep.subr.mxu0 0.0
    %v7291 = vand.u32 %v6964, 4294901760
    %v7292 = vsub.f32 %v6964, %v7291
    %7293 = vmatpush1.msra.mxu0 %v7292
    %7294 = vmatprep.subr.mxu0 0.0
    %7295 = vmatpush1.msra.mxu0 0.0
    %7296 = vmatprep.subr.mxu0 0.0
    %7297 = vmatpush1.msra.mxu0 0.0
    %7298 = vmatprep.subr.mxu0 0.0
    %7299 = vmatpush1.msra.mxu0 0.0
    %7300 = vmatprep.subr.mxu0 0.0
    %7301 = vmatpush1.msra.mxu0 0.0
    %7302 = vmatprep.subr.mxu0 0.0
    %7303 = vmatpush1.msra.mxu0 0.0
    %7304 = vmatprep.subr.mxu0 0.0
    %7305 = vmatpush1.msra.mxu0 0.0
    %7306 = vmatprep.subr.mxu0 0.0
    %7307 = vmatpush1.msra.mxu0 0.0
    %7308 = vmatprep.subr.mxu0 0.0
    %7309 = vmatpush1.msra.mxu0 0.0
    %7310 = vmatprep.subr.mxu0 0.0
    %7311 = vmatpush1.msra.mxu0 0.0
    %7312 = vmatprep.subr.mxu0 0.0
    %7313 = vmatpush1.msra.mxu0 0.0
    %7314 = vmatprep.subr.mxu0 0.0
    %7315 = vmatpush1.msra.mxu0 0.0
    %7316 = vmatprep.subr.mxu0 0.0
    %7317 = vmatpush1.msra.mxu0 0.0
    %7318 = vmatprep.subr.mxu0 0.0
    %7319 = vmatpush1.msra.mxu0 0.0
    %7320 = vmatprep.subr.mxu0 0.0
    %7321 = vmatpush1.msra.mxu0 0.0
    %7322 = vmatprep.subr.mxu0 0.0
    %7323 = vmatpush1.msra.mxu0 0.0
    %7324 = vmatprep.subr.mxu0 0.0
    %7325 = vmatpush1.msra.mxu0 0.0
    %7326 = vmatprep.mubr.f32.mxu0 0.0
    %v7327 = vand.u32 %v6947, 4294901760
    %v7328 = vsub.f32 %v6947, %v7327
    %7329 = vmatmul.mubr.f32.gmra.mrb[0].mxu0 %v7328
    %v7330 = vpop.f32.mrb[0].mxu0
    %v7331 = vadd.f32 %v7221, %v7330
    %v7332 = vpop.f32.mrb[0].mxu0
    %7333 = vmatprep.mubr.f32.mxu0 0.0
    %v7334 = vand.u32 %v6948, 4294901760
    %v7335 = vsub.f32 %v6948, %v7334
    %7336 = vmatmul.mubr.f32.gmra.mrb[0].mxu0 %v7335
    %v7337 = vpop.f32.mrb[0].mxu0
    %v7338 = vadd.f32 %v7227, %v7337
    %v7339 = vpop.f32.mrb[0].mxu0
    %7340 = vdwg.mxu0
    %7341 = vmatprep.subr.mxu0 0.0
    %v7342 = vand.u32 %v6949, 4294901760
    %7343 = vmatpush1.msra.mxu0 %v7342
    %7344 = vmatprep.subr.mxu0 0.0
    %v7345 = vand.u32 %v6950, 4294901760
    %7346 = vmatpush1.msra.mxu0 %v7345
    %7347 = vmatprep.subr.mxu0 0.0
    %v7348 = vand.u32 %v6951, 4294901760
    %7349 = vmatpush1.msra.mxu0 %v7348
    %7350 = vmatprep.subr.mxu0 0.0
    %v7351 = vand.u32 %v6952, 4294901760
    %7352 = vmatpush1.msra.mxu0 %v7351
    %7353 = vmatprep.subr.mxu0 0.0
    %v7354 = vand.u32 %v6953, 4294901760
    %7355 = vmatpush1.msra.mxu0 %v7354
    %7356 = vmatprep.subr.mxu0 0.0
    %v7357 = vand.u32 %v6954, 4294901760
    %7358 = vmatpush1.msra.mxu0 %v7357
    %7359 = vmatprep.subr.mxu0 0.0
    %v7360 = vand.u32 %v6955, 4294901760
    %7361 = vmatpush1.msra.mxu0 %v7360
    %7362 = vmatprep.subr.mxu0 0.0
    %v7363 = vand.u32 %v6956, 4294901760
    %7364 = vmatpush1.msra.mxu0 %v7363
    %7365 = vmatprep.subr.mxu0 0.0
    %v7366 = vand.u32 %v6957, 4294901760
    %7367 = vmatpush1.msra.mxu0 %v7366
    %7368 = vmatprep.subr.mxu0 0.0
    %v7369 = vand.u32 %v6958, 4294901760
    %7370 = vmatpush1.msra.mxu0 %v7369
    %7371 = vmatprep.subr.mxu0 0.0
    %v7372 = vand.u32 %v6959, 4294901760
    %7373 = vmatpush1.msra.mxu0 %v7372
    %7374 = vmatprep.subr.mxu0 0.0
    %v7375 = vand.u32 %v6960, 4294901760
    %7376 = vmatpush1.msra.mxu0 %v7375
    %7377 = vmatprep.subr.mxu0 0.0
    %v7378 = vand.u32 %v6961, 4294901760
    %7379 = vmatpush1.msra.mxu0 %v7378
    %7380 = vmatprep.subr.mxu0 0.0
    %v7381 = vand.u32 %v6962, 4294901760
    %7382 = vmatpush1.msra.mxu0 %v7381
    %7383 = vmatprep.subr.mxu0 0.0
    %v7384 = vand.u32 %v6963, 4294901760
    %7385 = vmatpush1.msra.mxu0 %v7384
    %7386 = vmatprep.subr.mxu0 0.0
    %v7387 = vand.u32 %v6964, 4294901760
    %7388 = vmatpush1.msra.mxu0 %v7387
    %7389 = vmatprep.subr.mxu0 0.0
    %7390 = vmatpush1.msra.mxu0 0.0
    %7391 = vmatprep.subr.mxu0 0.0
    %7392 = vmatpush1.msra.mxu0 0.0
    %7393 = vmatprep.subr.mxu0 0.0
    %7394 = vmatpush1.msra.mxu0 0.0
    %7395 = vmatprep.subr.mxu0 0.0
    %7396 = vmatpush1.msra.mxu0 0.0
    %7397 = vmatprep.subr.mxu0 0.0
    %7398 = vmatpush1.msra.mxu0 0.0
    %7399 = vmatprep.subr.mxu0 0.0
    %7400 = vmatpush1.msra.mxu0 0.0
    %7401 = vmatprep.subr.mxu0 0.0
    %7402 = vmatpush1.msra.mxu0 0.0
    %7403 = vmatprep.subr.mxu0 0.0
    %7404 = vmatpush1.msra.mxu0 0.0
    %7405 = vmatprep.subr.mxu0 0.0
    %7406 = vmatpush1.msra.mxu0 0.0
    %7407 = vmatprep.subr.mxu0 0.0
    %7408 = vmatpush1.msra.mxu0 0.0
    %7409 = vmatprep.subr.mxu0 0.0
    %7410 = vmatpush1.msra.mxu0 0.0
    %7411 = vmatprep.subr.mxu0 0.0
    %7412 = vmatpush1.msra.mxu0 0.0
    %7413 = vmatprep.subr.mxu0 0.0
    %7414 = vmatpush1.msra.mxu0 0.0
    %7415 = vmatprep.subr.mxu0 0.0
    %7416 = vmatpush1.msra.mxu0 0.0
    %7417 = vmatprep.subr.mxu0 0.0
    %7418 = vmatpush1.msra.mxu0 0.0
    %7419 = vmatprep.subr.mxu0 0.0
    %7420 = vmatpush1.msra.mxu0 0.0
    %7421 = vmatprep.mubr.f32.mxu0 0.0
    %v7422 = vand.u32 %v6947, 4294901760
    %v7423 = vsub.f32 %v6947, %v7422
    %v7424 = vand.u32 %v7423, 4294901760
    %7425 = vmatmul.mubr.f32.gmra.mrb[0].mxu0 %v7424
    %v7426 = vpop.f32.mrb[0].mxu0
    %v7427 = vadd.f32 %v7331, %v7426
    %v7428 = vpop.f32.mrb[0].mxu0
    %7429 = vmatprep.mubr.f32.mxu0 0.0
    %v7430 = vand.u32 %v6948, 4294901760
    %v7431 = vsub.f32 %v6948, %v7430
    %v7432 = vand.u32 %v7431, 4294901760
    %7433 = vmatmul.mubr.f32.gmra.mrb[0].mxu0 %v7432
    %v7434 = vpop.f32.mrb[0].mxu0
    %v7435 = vadd.f32 %v7338, %v7434
    %v7436 = vpop.f32.mrb[0].mxu0
    %7437 = vdwg.mxu0
    %7438 = vmatprep.subr.mxu0 0.0
    %v7439 = vand.u32 %v6949, 4294901760
    %v7440 = vsub.f32 %v6949, %v7439
    %v7441 = vand.u32 %v7440, 4294901760
    %7442 = vmatpush1.msra.mxu0 %v7441
    %7443 = vmatprep.subr.mxu0 0.0
    %v7444 = vand.u32 %v6950, 4294901760
    %v7445 = vsub.f32 %v6950, %v7444
    %v7446 = vand.u32 %v7445, 4294901760
    %7447 = vmatpush1.msra.mxu0 %v7446
    %7448 = vmatprep.subr.mxu0 0.0
    %v7449 = vand.u32 %v6951, 4294901760
    %v7450 = vsub.f32 %v6951, %v7449
    %v7451 = vand.u32 %v7450, 4294901760
    %7452 = vmatpush1.msra.mxu0 %v7451
    %7453 = vmatprep.subr.mxu0 0.0
    %v7454 = vand.u32 %v6952, 4294901760
    %v7455 = vsub.f32 %v6952, %v7454
    %v7456 = vand.u32 %v7455, 4294901760
    %7457 = vmatpush1.msra.mxu0 %v7456
    %7458 = vmatprep.subr.mxu0 0.0
    %v7459 = vand.u32 %v6953, 4294901760
    %v7460 = vsub.f32 %v6953, %v7459
    %v7461 = vand.u32 %v7460, 4294901760
    %7462 = vmatpush1.msra.mxu0 %v7461
    %7463 = vmatprep.subr.mxu0 0.0
    %v7464 = vand.u32 %v6954, 4294901760
    %v7465 = vsub.f32 %v6954, %v7464
    %v7466 = vand.u32 %v7465, 4294901760
    %7467 = vmatpush1.msra.mxu0 %v7466
    %7468 = vmatprep.subr.mxu0 0.0
    %v7469 = vand.u32 %v6955, 4294901760
    %v7470 = vsub.f32 %v6955, %v7469
    %v7471 = vand.u32 %v7470, 4294901760
    %7472 = vmatpush1.msra.mxu0 %v7471
    %7473 = vmatprep.subr.mxu0 0.0
    %v7474 = vand.u32 %v6956, 4294901760
    %v7475 = vsub.f32 %v6956, %v7474
    %v7476 = vand.u32 %v7475, 4294901760
    %7477 = vmatpush1.msra.mxu0 %v7476
    %7478 = vmatprep.subr.mxu0 0.0
    %v7479 = vand.u32 %v6957, 4294901760
    %v7480 = vsub.f32 %v6957, %v7479
    %v7481 = vand.u32 %v7480, 4294901760
    %7482 = vmatpush1.msra.mxu0 %v7481
    %7483 = vmatprep.subr.mxu0 0.0
    %v7484 = vand.u32 %v6958, 4294901760
    %v7485 = vsub.f32 %v6958, %v7484
    %v7486 = vand.u32 %v7485, 4294901760
    %7487 = vmatpush1.msra.mxu0 %v7486
    %7488 = vmatprep.subr.mxu0 0.0
    %v7489 = vand.u32 %v6959, 4294901760
    %v7490 = vsub.f32 %v6959, %v7489
    %v7491 = vand.u32 %v7490, 4294901760
    %7492 = vmatpush1.msra.mxu0 %v7491
    %7493 = vmatprep.subr.mxu0 0.0
    %v7494 = vand.u32 %v6960, 4294901760
    %v7495 = vsub.f32 %v6960, %v7494
    %v7496 = vand.u32 %v7495, 4294901760
    %7497 = vmatpush1.msra.mxu0 %v7496
    %7498 = vmatprep.subr.mxu0 0.0
    %v7499 = vand.u32 %v6961, 4294901760
    %v7500 = vsub.f32 %v6961, %v7499
    %v7501 = vand.u32 %v7500, 4294901760
    %7502 = vmatpush1.msra.mxu0 %v7501
    %7503 = vmatprep.subr.mxu0 0.0
    %v7504 = vand.u32 %v6962, 4294901760
    %v7505 = vsub.f32 %v6962, %v7504
    %v7506 = vand.u32 %v7505, 4294901760
    %7507 = vmatpush1.msra.mxu0 %v7506
    %7508 = vmatprep.subr.mxu0 0.0
    %v7509 = vand.u32 %v6963, 4294901760
    %v7510 = vsub.f32 %v6963, %v7509
    %v7511 = vand.u32 %v7510, 4294901760
    %7512 = vmatpush1.msra.mxu0 %v7511
    %7513 = vmatprep.subr.mxu0 0.0
    %v7514 = vand.u32 %v6964, 4294901760
    %v7515 = vsub.f32 %v6964, %v7514
    %v7516 = vand.u32 %v7515, 4294901760
    %7517 = vmatpush1.msra.mxu0 %v7516
    %7518 = vmatprep.subr.mxu0 0.0
    %7519 = vmatpush1.msra.mxu0 0.0
    %7520 = vmatprep.subr.mxu0 0.0
    %7521 = vmatpush1.msra.mxu0 0.0
    %7522 = vmatprep.subr.mxu0 0.0
    %7523 = vmatpush1.msra.mxu0 0.0
    %7524 = vmatprep.subr.mxu0 0.0
    %7525 = vmatpush1.msra.mxu0 0.0
    %7526 = vmatprep.subr.mxu0 0.0
    %7527 = vmatpush1.msra.mxu0 0.0
    %7528 = vmatprep.subr.mxu0 0.0
    %7529 = vmatpush1.msra.mxu0 0.0
    %7530 = vmatprep.subr.mxu0 0.0
    %7531 = vmatpush1.msra.mxu0 0.0
    %7532 = vmatprep.subr.mxu0 0.0
    %7533 = vmatpush1.msra.mxu0 0.0
    %7534 = vmatprep.subr.mxu0 0.0
    %7535 = vmatpush1.msra.mxu0 0.0
    %7536 = vmatprep.subr.mxu0 0.0
    %7537 = vmatpush1.msra.mxu0 0.0
    %7538 = vmatprep.subr.mxu0 0.0
    %7539 = vmatpush1.msra.mxu0 0.0
    %7540 = vmatprep.subr.mxu0 0.0
    %7541 = vmatpush1.msra.mxu0 0.0
    %7542 = vmatprep.subr.mxu0 0.0
    %7543 = vmatpush1.msra.mxu0 0.0
    %7544 = vmatprep.subr.mxu0 0.0
    %7545 = vmatpush1.msra.mxu0 0.0
    %7546 = vmatprep.subr.mxu0 0.0
    %7547 = vmatpush1.msra.mxu0 0.0
    %7548 = vmatprep.subr.mxu0 0.0
    %7549 = vmatpush1.msra.mxu0 0.0
    %7550 = vmatprep.mubr.f32.mxu0 0.0
    %v7551 = vand.u32 %v6947, 4294901760
    %7552 = vmatmul.mubr.f32.gmra.mrb[0].mxu0 %v7551
    %v7553 = vpop.f32.mrb[0].mxu0
    %v7554 = vadd.f32 %v7427, %v7553
    %v7555 = vpop.f32.mrb[0].mxu0
    %7556 = vmatprep.mubr.f32.mxu0 0.0
    %v7557 = vand.u32 %v6948, 4294901760
    %7558 = vmatmul.mubr.f32.gmra.mrb[0].mxu0 %v7557
    %v7559 = vpop.f32.mrb[0].mxu0
    %v7560 = vadd.f32 %v7435, %v7559
    %v7561 = vpop.f32.mrb[0].mxu0
    %7562 = vdwg.mxu0
    %7563 = vmatprep.subr.mxu0 0.0
    %v7564 = vand.u32 %v6949, 4294901760
    %7565 = vmatpush1.msra.mxu0 %v7564
    %7566 = vmatprep.subr.mxu0 0.0
    %v7567 = vand.u32 %v6950, 4294901760
    %7568 = vmatpush1.msra.mxu0 %v7567
    %7569 = vmatprep.subr.mxu0 0.0
    %v7570 = vand.u32 %v6951, 4294901760
    %7571 = vmatpush1.msra.mxu0 %v7570
    %7572 = vmatprep.subr.mxu0 0.0
    %v7573 = vand.u32 %v6952, 4294901760
    %7574 = vmatpush1.msra.mxu0 %v7573
    %7575 = vmatprep.subr.mxu0 0.0
    %v7576 = vand.u32 %v6953, 4294901760
    %7577 = vmatpush1.msra.mxu0 %v7576
    %7578 = vmatprep.subr.mxu0 0.0
    %v7579 = vand.u32 %v6954, 4294901760
    %7580 = vmatpush1.msra.mxu0 %v7579
    %7581 = vmatprep.subr.mxu0 0.0
    %v7582 = vand.u32 %v6955, 4294901760
    %7583 = vmatpush1.msra.mxu0 %v7582
    %7584 = vmatprep.subr.mxu0 0.0
    %v7585 = vand.u32 %v6956, 4294901760
    %7586 = vmatpush1.msra.mxu0 %v7585
    %7587 = vmatprep.subr.mxu0 0.0
    %v7588 = vand.u32 %v6957, 4294901760
    %7589 = vmatpush1.msra.mxu0 %v7588
    %7590 = vmatprep.subr.mxu0 0.0
    %v7591 = vand.u32 %v6958, 4294901760
    %7592 = vmatpush1.msra.mxu0 %v7591
    %7593 = vmatprep.subr.mxu0 0.0
    %v7594 = vand.u32 %v6959, 4294901760
    %7595 = vmatpush1.msra.mxu0 %v7594
    %7596 = vmatprep.subr.mxu0 0.0
    %v7597 = vand.u32 %v6960, 4294901760
    %7598 = vmatpush1.msra.mxu0 %v7597
    %7599 = vmatprep.subr.mxu0 0.0
    %v7600 = vand.u32 %v6961, 4294901760
    %7601 = vmatpush1.msra.mxu0 %v7600
    %7602 = vmatprep.subr.mxu0 0.0
    %v7603 = vand.u32 %v6962, 4294901760
    %7604 = vmatpush1.msra.mxu0 %v7603
    %7605 = vmatprep.subr.mxu0 0.0
    %v7606 = vand.u32 %v6963, 4294901760
    %7607 = vmatpush1.msra.mxu0 %v7606
    %7608 = vmatprep.subr.mxu0 0.0
    %v7609 = vand.u32 %v6964, 4294901760
    %7610 = vmatpush1.msra.mxu0 %v7609
    %7611 = vmatprep.subr.mxu0 0.0
    %7612 = vmatpush1.msra.mxu0 0.0
    %7613 = vmatprep.subr.mxu0 0.0
    %7614 = vmatpush1.msra.mxu0 0.0
    %7615 = vmatprep.subr.mxu0 0.0
    %7616 = vmatpush1.msra.mxu0 0.0
    %7617 = vmatprep.subr.mxu0 0.0
    %7618 = vmatpush1.msra.mxu0 0.0
    %7619 = vmatprep.subr.mxu0 0.0
    %7620 = vmatpush1.msra.mxu0 0.0
    %7621 = vmatprep.subr.mxu0 0.0
    %7622 = vmatpush1.msra.mxu0 0.0
    %7623 = vmatprep.subr.mxu0 0.0
    %7624 = vmatpush1.msra.mxu0 0.0
    %7625 = vmatprep.subr.mxu0 0.0
    %7626 = vmatpush1.msra.mxu0 0.0
    %7627 = vmatprep.subr.mxu0 0.0
    %7628 = vmatpush1.msra.mxu0 0.0
    %7629 = vmatprep.subr.mxu0 0.0
    %7630 = vmatpush1.msra.mxu0 0.0
    %7631 = vmatprep.subr.mxu0 0.0
    %7632 = vmatpush1.msra.mxu0 0.0
    %7633 = vmatprep.subr.mxu0 0.0
    %7634 = vmatpush1.msra.mxu0 0.0
    %7635 = vmatprep.subr.mxu0 0.0
    %7636 = vmatpush1.msra.mxu0 0.0
    %7637 = vmatprep.subr.mxu0 0.0
    %7638 = vmatpush1.msra.mxu0 0.0
    %7639 = vmatprep.subr.mxu0 0.0
    %7640 = vmatpush1.msra.mxu0 0.0
    %7641 = vmatprep.subr.mxu0 0.0
    %7642 = vmatpush1.msra.mxu0 0.0
    %7643 = vmatprep.mubr.f32.mxu0 0.0
    %v7644 = vand.u32 %v6947, 4294901760
    %7645 = vmatmul.mubr.f32.gmra.mrb[0].mxu0 %v7644
    %v7646 = vpop.f32.mrb[0].mxu0
    %v7647 = vadd.f32 %v7554, %v7646
    %v7648 = vpop.f32.mrb[0].mxu0
    %7649 = vmatprep.mubr.f32.mxu0 0.0
    %v7650 = vand.u32 %v6948, 4294901760
    %7651 = vmatmul.mubr.f32.gmra.mrb[0].mxu0 %v7650
    %v7652 = vpop.f32.mrb[0].mxu0
    %v7653 = vadd.f32 %v7560, %v7652
    %v7654 = vpop.f32.mrb[0].mxu0
    %7655 = vdwg.mxu0
    %v7656 = vmax.f32 %v7647, 0.0
    %v7657 = vmax.f32 %v7653, 0.0
    %v7658 = vld [vmem:[#allocation11] sm:$0xff]
    %v7659 = vld [vmem:[#allocation11 + $0x8] sm:$0xff]
    %v7660 = vld [vmem:[#allocation11 + $0x10] sm:$0xff]
    %v7661 = vld [vmem:[#allocation11 + $0x18] sm:$0xff]
    %v7662 = vld [vmem:[#allocation11 + $0x20] sm:$0xff]
    %v7663 = vld [vmem:[#allocation11 + $0x28] sm:$0xff]
    %v7664 = vld [vmem:[#allocation11 + $0x30] sm:$0xff]
    %v7665 = vld [vmem:[#allocation11 + $0x38] sm:$0xff]
    %v7666 = vld [vmem:[#allocation11 + $0x40] sm:$0xff]
    %v7667 = vld [vmem:[#allocation11 + $0x48] sm:$0xff]
    %v7668 = vld [vmem:[#allocation11 + $0x50] sm:$0xff]
    %v7669 = vld [vmem:[#allocation11 + $0x58] sm:$0xff]
    %v7670 = vld [vmem:[#allocation11 + $0x60] sm:$0xff]
    %v7671 = vld [vmem:[#allocation11 + $0x68] sm:$0xff]
    %v7672 = vld [vmem:[#allocation11 + $0x70] sm:$0xff]
    %v7673 = vld [vmem:[#allocation11 + $0x78] sm:$0xff]
    %v7674 = vld [vmem:[%s15] sm:$0x1]
    %v7676 = vlaneseq
    %v7677 = vshrl.u32 %v7676, 7
    %v7678 = vsub.s32 0, %v7677
    %v7679 = vrot.slane %v7674, %v7678
    %7681 = vmatprep.subr.mxu0 0.0
    %v7682 = vand.u32 %v7658, 4294901760
    %7683 = vmatpush1.msra.mxu0 %v7682
    %7684 = vmatprep.subr.mxu0 0.0
    %v7685 = vand.u32 %v7659, 4294901760
    %7686 = vmatpush1.msra.mxu0 %v7685
    %7687 = vmatprep.subr.mxu0 0.0
    %v7688 = vand.u32 %v7660, 4294901760
    %7689 = vmatpush1.msra.mxu0 %v7688
    %7690 = vmatprep.subr.mxu0 0.0
    %v7691 = vand.u32 %v7661, 4294901760
    %7692 = vmatpush1.msra.mxu0 %v7691
    %7693 = vmatprep.subr.mxu0 0.0
    %v7694 = vand.u32 %v7662, 4294901760
    %7695 = vmatpush1.msra.mxu0 %v7694
    %7696 = vmatprep.subr.mxu0 0.0
    %v7697 = vand.u32 %v7663, 4294901760
    %7698 = vmatpush1.msra.mxu0 %v7697
    %7699 = vmatprep.subr.mxu0 0.0
    %v7700 = vand.u32 %v7664, 4294901760
    %7701 = vmatpush1.msra.mxu0 %v7700
    %7702 = vmatprep.subr.mxu0 0.0
    %v7703 = vand.u32 %v7665, 4294901760
    %7704 = vmatpush1.msra.mxu0 %v7703
    %7705 = vmatprep.subr.mxu0 0.0
    %v7706 = vand.u32 %v7666, 4294901760
    %7707 = vmatpush1.msra.mxu0 %v7706
    %7708 = vmatprep.subr.mxu0 0.0
    %v7709 = vand.u32 %v7667, 4294901760
    %7710 = vmatpush1.msra.mxu0 %v7709
    %7711 = vmatprep.subr.mxu0 0.0
    %v7712 = vand.u32 %v7668, 4294901760
    %7713 = vmatpush1.msra.mxu0 %v7712
    %7714 = vmatprep.subr.mxu0 0.0
    %v7715 = vand.u32 %v7669, 4294901760
    %7716 = vmatpush1.msra.mxu0 %v7715
    %7717 = vmatprep.subr.mxu0 0.0
    %v7718 = vand.u32 %v7670, 4294901760
    %7719 = vmatpush1.msra.mxu0 %v7718
    %7720 = vmatprep.subr.mxu0 0.0
    %v7721 = vand.u32 %v7671, 4294901760
    %7722 = vmatpush1.msra.mxu0 %v7721
    %7723 = vmatprep.subr.mxu0 0.0
    %v7724 = vand.u32 %v7672, 4294901760
    %7725 = vmatpush1.msra.mxu0 %v7724
    %7726 = vmatprep.subr.mxu0 0.0
    %v7727 = vand.u32 %v7673, 4294901760
    %7728 = vmatpush1.msra.mxu0 %v7727
    %7729 = vmatprep.subr.mxu0 0.0
    %7730 = vmatpush1.msra.mxu0 0.0
    %7731 = vmatprep.subr.mxu0 0.0
    %7732 = vmatpush1.msra.mxu0 0.0
    %7733 = vmatprep.subr.mxu0 0.0
    %7734 = vmatpush1.msra.mxu0 0.0
    %7735 = vmatprep.subr.mxu0 0.0
    %7736 = vmatpush1.msra.mxu0 0.0
    %7737 = vmatprep.subr.mxu0 0.0
    %7738 = vmatpush1.msra.mxu0 0.0
    %7739 = vmatprep.subr.mxu0 0.0
    %7740 = vmatpush1.msra.mxu0 0.0
    %7741 = vmatprep.subr.mxu0 0.0
    %7742 = vmatpush1.msra.mxu0 0.0
    %7743 = vmatprep.subr.mxu0 0.0
    %7744 = vmatpush1.msra.mxu0 0.0
    %7745 = vmatprep.subr.mxu0 0.0
    %7746 = vmatpush1.msra.mxu0 0.0
    %7747 = vmatprep.subr.mxu0 0.0
    %7748 = vmatpush1.msra.mxu0 0.0
    %7749 = vmatprep.subr.mxu0 0.0
    %7750 = vmatpush1.msra.mxu0 0.0
    %7751 = vmatprep.subr.mxu0 0.0
    %7752 = vmatpush1.msra.mxu0 0.0
    %7753 = vmatprep.subr.mxu0 0.0
    %7754 = vmatpush1.msra.mxu0 0.0
    %7755 = vmatprep.subr.mxu0 0.0
    %7756 = vmatpush1.msra.mxu0 0.0
    %7757 = vmatprep.subr.mxu0 0.0
    %7758 = vmatpush1.msra.mxu0 0.0
    %7759 = vmatprep.subr.mxu0 0.0
    %7760 = vmatpush1.msra.mxu0 0.0
    %7761 = vmatprep.mubr.f32.mxu0 0.0
    %v7762 = vand.u32 %v7656, 4294901760
    %v7763 = vsub.f32 %v7656, %v7762
    %v7764 = vand.u32 %v7763, 4294901760
    %v7765 = vsub.f32 %v7763, %v7764
    %v7766 = vand.u32 %v7765, 4294901760
    %7767 = vmatmul.mubr.f32.gmra.mrb[0].mxu0 %v7766
    %v7768 = vpop.f32.mrb[0].mxu0
    %v7769 = vadd.f32 %v7679, %v7768
    %v7770 = vpop.f32.mrb[0].mxu0
    %7771 = vmatprep.mubr.f32.mxu0 0.0
    %v7772 = vand.u32 %v7657, 4294901760
    %v7773 = vsub.f32 %v7657, %v7772
    %v7774 = vand.u32 %v7773, 4294901760
    %v7775 = vsub.f32 %v7773, %v7774
    %v7776 = vand.u32 %v7775, 4294901760
    %7777 = vmatmul.mubr.f32.gmra.mrb[0].mxu0 %v7776
    %v7778 = vpop.f32.mrb[0].mxu0
    %v7779 = vadd.f32 %v7679, %v7778
    %v7780 = vpop.f32.mrb[0].mxu0
    %7781 = vdwg.mxu0
    %7782 = vmatprep.subr.mxu0 0.0
    %v7783 = vand.u32 %v7658, 4294901760
    %v7784 = vsub.f32 %v7658, %v7783
    %v7785 = vand.u32 %v7784, 4294901760
    %v7786 = vsub.f32 %v7784, %v7785
    %v7787 = vand.u32 %v7786, 4294901760
    %7788 = vmatpush1.msra.mxu0 %v7787
    %7789 = vmatprep.subr.mxu0 0.0
    %v7790 = vand.u32 %v7659, 4294901760
    %v7791 = vsub.f32 %v7659, %v7790
    %v7792 = vand.u32 %v7791, 4294901760
    %v7793 = vsub.f32 %v7791, %v7792
    %v7794 = vand.u32 %v7793, 4294901760
    %7795 = vmatpush1.msra.mxu0 %v7794
    %7796 = vmatprep.subr.mxu0 0.0
    %v7797 = vand.u32 %v7660, 4294901760
    %v7798 = vsub.f32 %v7660, %v7797
    %v7799 = vand.u32 %v7798, 4294901760
    %v7800 = vsub.f32 %v7798, %v7799
    %v7801 = vand.u32 %v7800, 4294901760
    %7802 = vmatpush1.msra.mxu0 %v7801
    %7803 = vmatprep.subr.mxu0 0.0
    %v7804 = vand.u32 %v7661, 4294901760
    %v7805 = vsub.f32 %v7661, %v7804
    %v7806 = vand.u32 %v7805, 4294901760
    %v7807 = vsub.f32 %v7805, %v7806
    %v7808 = vand.u32 %v7807, 4294901760
    %7809 = vmatpush1.msra.mxu0 %v7808
    %7810 = vmatprep.subr.mxu0 0.0
    %v7811 = vand.u32 %v7662, 4294901760
    %v7812 = vsub.f32 %v7662, %v7811
    %v7813 = vand.u32 %v7812, 4294901760
    %v7814 = vsub.f32 %v7812, %v7813
    %v7815 = vand.u32 %v7814, 4294901760
    %7816 = vmatpush1.msra.mxu0 %v7815
    %7817 = vmatprep.subr.mxu0 0.0
    %v7818 = vand.u32 %v7663, 4294901760
    %v7819 = vsub.f32 %v7663, %v7818
    %v7820 = vand.u32 %v7819, 4294901760
    %v7821 = vsub.f32 %v7819, %v7820
    %v7822 = vand.u32 %v7821, 4294901760
    %7823 = vmatpush1.msra.mxu0 %v7822
    %7824 = vmatprep.subr.mxu0 0.0
    %v7825 = vand.u32 %v7664, 4294901760
    %v7826 = vsub.f32 %v7664, %v7825
    %v7827 = vand.u32 %v7826, 4294901760
    %v7828 = vsub.f32 %v7826, %v7827
    %v7829 = vand.u32 %v7828, 4294901760
    %7830 = vmatpush1.msra.mxu0 %v7829
    %7831 = vmatprep.subr.mxu0 0.0
    %v7832 = vand.u32 %v7665, 4294901760
    %v7833 = vsub.f32 %v7665, %v7832
    %v7834 = vand.u32 %v7833, 4294901760
    %v7835 = vsub.f32 %v7833, %v7834
    %v7836 = vand.u32 %v7835, 4294901760
    %7837 = vmatpush1.msra.mxu0 %v7836
    %7838 = vmatprep.subr.mxu0 0.0
    %v7839 = vand.u32 %v7666, 4294901760
    %v7840 = vsub.f32 %v7666, %v7839
    %v7841 = vand.u32 %v7840, 4294901760
    %v7842 = vsub.f32 %v7840, %v7841
    %v7843 = vand.u32 %v7842, 4294901760
    %7844 = vmatpush1.msra.mxu0 %v7843
    %7845 = vmatprep.subr.mxu0 0.0
    %v7846 = vand.u32 %v7667, 4294901760
    %v7847 = vsub.f32 %v7667, %v7846
    %v7848 = vand.u32 %v7847, 4294901760
    %v7849 = vsub.f32 %v7847, %v7848
    %v7850 = vand.u32 %v7849, 4294901760
    %7851 = vmatpush1.msra.mxu0 %v7850
    %7852 = vmatprep.subr.mxu0 0.0
    %v7853 = vand.u32 %v7668, 4294901760
    %v7854 = vsub.f32 %v7668, %v7853
    %v7855 = vand.u32 %v7854, 4294901760
    %v7856 = vsub.f32 %v7854, %v7855
    %v7857 = vand.u32 %v7856, 4294901760
    %7858 = vmatpush1.msra.mxu0 %v7857
    %7859 = vmatprep.subr.mxu0 0.0
    %v7860 = vand.u32 %v7669, 4294901760
    %v7861 = vsub.f32 %v7669, %v7860
    %v7862 = vand.u32 %v7861, 4294901760
    %v7863 = vsub.f32 %v7861, %v7862
    %v7864 = vand.u32 %v7863, 4294901760
    %7865 = vmatpush1.msra.mxu0 %v7864
    %7866 = vmatprep.subr.mxu0 0.0
    %v7867 = vand.u32 %v7670, 4294901760
    %v7868 = vsub.f32 %v7670, %v7867
    %v7869 = vand.u32 %v7868, 4294901760
    %v7870 = vsub.f32 %v7868, %v7869
    %v7871 = vand.u32 %v7870, 4294901760
    %7872 = vmatpush1.msra.mxu0 %v7871
    %7873 = vmatprep.subr.mxu0 0.0
    %v7874 = vand.u32 %v7671, 4294901760
    %v7875 = vsub.f32 %v7671, %v7874
    %v7876 = vand.u32 %v7875, 4294901760
    %v7877 = vsub.f32 %v7875, %v7876
    %v7878 = vand.u32 %v7877, 4294901760
    %7879 = vmatpush1.msra.mxu0 %v7878
    %7880 = vmatprep.subr.mxu0 0.0
    %v7881 = vand.u32 %v7672, 4294901760
    %v7882 = vsub.f32 %v7672, %v7881
    %v7883 = vand.u32 %v7882, 4294901760
    %v7884 = vsub.f32 %v7882, %v7883
    %v7885 = vand.u32 %v7884, 4294901760
    %7886 = vmatpush1.msra.mxu0 %v7885
    %7887 = vmatprep.subr.mxu0 0.0
    %v7888 = vand.u32 %v7673, 4294901760
    %v7889 = vsub.f32 %v7673, %v7888
    %v7890 = vand.u32 %v7889, 4294901760
    %v7891 = vsub.f32 %v7889, %v7890
    %v7892 = vand.u32 %v7891, 4294901760
    %7893 = vmatpush1.msra.mxu0 %v7892
    %7894 = vmatprep.subr.mxu0 0.0
    %7895 = vmatpush1.msra.mxu0 0.0
    %7896 = vmatprep.subr.mxu0 0.0
    %7897 = vmatpush1.msra.mxu0 0.0
    %7898 = vmatprep.subr.mxu0 0.0
    %7899 = vmatpush1.msra.mxu0 0.0
    %7900 = vmatprep.subr.mxu0 0.0
    %7901 = vmatpush1.msra.mxu0 0.0
    %7902 = vmatprep.subr.mxu0 0.0
    %7903 = vmatpush1.msra.mxu0 0.0
    %7904 = vmatprep.subr.mxu0 0.0
    %7905 = vmatpush1.msra.mxu0 0.0
    %7906 = vmatprep.subr.mxu0 0.0
    %7907 = vmatpush1.msra.mxu0 0.0
    %7908 = vmatprep.subr.mxu0 0.0
    %7909 = vmatpush1.msra.mxu0 0.0
    %7910 = vmatprep.subr.mxu0 0.0
    %7911 = vmatpush1.msra.mxu0 0.0
    %7912 = vmatprep.subr.mxu0 0.0
    %7913 = vmatpush1.msra.mxu0 0.0
    %7914 = vmatprep.subr.mxu0 0.0
    %7915 = vmatpush1.msra.mxu0 0.0
    %7916 = vmatprep.subr.mxu0 0.0
    %7917 = vmatpush1.msra.mxu0 0.0
    %7918 = vmatprep.subr.mxu0 0.0
    %7919 = vmatpush1.msra.mxu0 0.0
    %7920 = vmatprep.subr.mxu0 0.0
    %7921 = vmatpush1.msra.mxu0 0.0
    %7922 = vmatprep.subr.mxu0 0.0
    %7923 = vmatpush1.msra.mxu0 0.0
    %7924 = vmatprep.subr.mxu0 0.0
    %7925 = vmatpush1.msra.mxu0 0.0
    %7926 = vmatprep.mubr.f32.mxu0 0.0
    %v7927 = vand.u32 %v7656, 4294901760
    %7928 = vmatmul.mubr.f32.gmra.mrb[0].mxu0 %v7927
    %v7929 = vpop.f32.mrb[0].mxu0
    %v7930 = vadd.f32 %v7769, %v7929
    %v7931 = vpop.f32.mrb[0].mxu0
    %7932 = vmatprep.mubr.f32.mxu0 0.0
    %v7933 = vand.u32 %v7657, 4294901760
    %7934 = vmatmul.mubr.f32.gmra.mrb[0].mxu0 %v7933
    %v7935 = vpop.f32.mrb[0].mxu0
    %v7936 = vadd.f32 %v7779, %v7935
    %v7937 = vpop.f32.mrb[0].mxu0
    %7938 = vdwg.mxu0
    %7939 = vmatprep.subr.mxu0 0.0
    %v7940 = vand.u32 %v7658, 4294901760
    %v7941 = vsub.f32 %v7658, %v7940
    %7942 = vmatpush1.msra.mxu0 %v7941
    %7943 = vmatprep.subr.mxu0 0.0
    %v7944 = vand.u32 %v7659, 4294901760
    %v7945 = vsub.f32 %v7659, %v7944
    %7946 = vmatpush1.msra.mxu0 %v7945
    %7947 = vmatprep.subr.mxu0 0.0
    %v7948 = vand.u32 %v7660, 4294901760
    %v7949 = vsub.f32 %v7660, %v7948
    %7950 = vmatpush1.msra.mxu0 %v7949
    %7951 = vmatprep.subr.mxu0 0.0
    %v7952 = vand.u32 %v7661, 4294901760
    %v7953 = vsub.f32 %v7661, %v7952
    %7954 = vmatpush1.msra.mxu0 %v7953
    %7955 = vmatprep.subr.mxu0 0.0
    %v7956 = vand.u32 %v7662, 4294901760
    %v7957 = vsub.f32 %v7662, %v7956
    %7958 = vmatpush1.msra.mxu0 %v7957
    %7959 = vmatprep.subr.mxu0 0.0
    %v7960 = vand.u32 %v7663, 4294901760
    %v7961 = vsub.f32 %v7663, %v7960
    %7962 = vmatpush1.msra.mxu0 %v7961
    %7963 = vmatprep.subr.mxu0 0.0
    %v7964 = vand.u32 %v7664, 4294901760
    %v7965 = vsub.f32 %v7664, %v7964
    %7966 = vmatpush1.msra.mxu0 %v7965
    %7967 = vmatprep.subr.mxu0 0.0
    %v7968 = vand.u32 %v7665, 4294901760
    %v7969 = vsub.f32 %v7665, %v7968
    %7970 = vmatpush1.msra.mxu0 %v7969
    %7971 = vmatprep.subr.mxu0 0.0
    %v7972 = vand.u32 %v7666, 4294901760
    %v7973 = vsub.f32 %v7666, %v7972
    %7974 = vmatpush1.msra.mxu0 %v7973
    %7975 = vmatprep.subr.mxu0 0.0
    %v7976 = vand.u32 %v7667, 4294901760
    %v7977 = vsub.f32 %v7667, %v7976
    %7978 = vmatpush1.msra.mxu0 %v7977
    %7979 = vmatprep.subr.mxu0 0.0
    %v7980 = vand.u32 %v7668, 4294901760
    %v7981 = vsub.f32 %v7668, %v7980
    %7982 = vmatpush1.msra.mxu0 %v7981
    %7983 = vmatprep.subr.mxu0 0.0
    %v7984 = vand.u32 %v7669, 4294901760
    %v7985 = vsub.f32 %v7669, %v7984
    %7986 = vmatpush1.msra.mxu0 %v7985
    %7987 = vmatprep.subr.mxu0 0.0
    %v7988 = vand.u32 %v7670, 4294901760
    %v7989 = vsub.f32 %v7670, %v7988
    %7990 = vmatpush1.msra.mxu0 %v7989
    %7991 = vmatprep.subr.mxu0 0.0
    %v7992 = vand.u32 %v7671, 4294901760
    %v7993 = vsub.f32 %v7671, %v7992
    %7994 = vmatpush1.msra.mxu0 %v7993
    %7995 = vmatprep.subr.mxu0 0.0
    %v7996 = vand.u32 %v7672, 4294901760
    %v7997 = vsub.f32 %v7672, %v7996
    %7998 = vmatpush1.msra.mxu0 %v7997
    %7999 = vmatprep.subr.mxu0 0.0
    %v8000 = vand.u32 %v7673, 4294901760
    %v8001 = vsub.f32 %v7673, %v8000
    %8002 = vmatpush1.msra.mxu0 %v8001
    %8003 = vmatprep.subr.mxu0 0.0
    %8004 = vmatpush1.msra.mxu0 0.0
    %8005 = vmatprep.subr.mxu0 0.0
    %8006 = vmatpush1.msra.mxu0 0.0
    %8007 = vmatprep.subr.mxu0 0.0
    %8008 = vmatpush1.msra.mxu0 0.0
    %8009 = vmatprep.subr.mxu0 0.0
    %8010 = vmatpush1.msra.mxu0 0.0
    %8011 = vmatprep.subr.mxu0 0.0
    %8012 = vmatpush1.msra.mxu0 0.0
    %8013 = vmatprep.subr.mxu0 0.0
    %8014 = vmatpush1.msra.mxu0 0.0
    %8015 = vmatprep.subr.mxu0 0.0
    %8016 = vmatpush1.msra.mxu0 0.0
    %8017 = vmatprep.subr.mxu0 0.0
    %8018 = vmatpush1.msra.mxu0 0.0
    %8019 = vmatprep.subr.mxu0 0.0
    %8020 = vmatpush1.msra.mxu0 0.0
    %8021 = vmatprep.subr.mxu0 0.0
    %8022 = vmatpush1.msra.mxu0 0.0
    %8023 = vmatprep.subr.mxu0 0.0
    %8024 = vmatpush1.msra.mxu0 0.0
    %8025 = vmatprep.subr.mxu0 0.0
    %8026 = vmatpush1.msra.mxu0 0.0
    %8027 = vmatprep.subr.mxu0 0.0
    %8028 = vmatpush1.msra.mxu0 0.0
    %8029 = vmatprep.subr.mxu0 0.0
    %8030 = vmatpush1.msra.mxu0 0.0
    %8031 = vmatprep.subr.mxu0 0.0
    %8032 = vmatpush1.msra.mxu0 0.0
    %8033 = vmatprep.subr.mxu0 0.0
    %8034 = vmatpush1.msra.mxu0 0.0
    %8035 = vmatprep.mubr.f32.mxu0 0.0
    %v8036 = vand.u32 %v7656, 4294901760
    %v8037 = vsub.f32 %v7656, %v8036
    %8038 = vmatmul.mubr.f32.gmra.mrb[0].mxu0 %v8037
    %v8039 = vpop.f32.mrb[0].mxu0
    %v8040 = vadd.f32 %v7930, %v8039
    %v8041 = vpop.f32.mrb[0].mxu0
    %8042 = vmatprep.mubr.f32.mxu0 0.0
    %v8043 = vand.u32 %v7657, 4294901760
    %v8044 = vsub.f32 %v7657, %v8043
    %8045 = vmatmul.mubr.f32.gmra.mrb[0].mxu0 %v8044
    %v8046 = vpop.f32.mrb[0].mxu0
    %v8047 = vadd.f32 %v7936, %v8046
    %v8048 = vpop.f32.mrb[0].mxu0
    %8049 = vdwg.mxu0
    %8050 = vmatprep.subr.mxu0 0.0
    %v8051 = vand.u32 %v7658, 4294901760
    %8052 = vmatpush1.msra.mxu0 %v8051
    %8053 = vmatprep.subr.mxu0 0.0
    %v8054 = vand.u32 %v7659, 4294901760
    %8055 = vmatpush1.msra.mxu0 %v8054
    %8056 = vmatprep.subr.mxu0 0.0
    %v8057 = vand.u32 %v7660, 4294901760
    %8058 = vmatpush1.msra.mxu0 %v8057
    %8059 = vmatprep.subr.mxu0 0.0
    %v8060 = vand.u32 %v7661, 4294901760
    %8061 = vmatpush1.msra.mxu0 %v8060
    %8062 = vmatprep.subr.mxu0 0.0
    %v8063 = vand.u32 %v7662, 4294901760
    %8064 = vmatpush1.msra.mxu0 %v8063
    %8065 = vmatprep.subr.mxu0 0.0
    %v8066 = vand.u32 %v7663, 4294901760
    %8067 = vmatpush1.msra.mxu0 %v8066
    %8068 = vmatprep.subr.mxu0 0.0
    %v8069 = vand.u32 %v7664, 4294901760
    %8070 = vmatpush1.msra.mxu0 %v8069
    %8071 = vmatprep.subr.mxu0 0.0
    %v8072 = vand.u32 %v7665, 4294901760
    %8073 = vmatpush1.msra.mxu0 %v8072
    %8074 = vmatprep.subr.mxu0 0.0
    %v8075 = vand.u32 %v7666, 4294901760
    %8076 = vmatpush1.msra.mxu0 %v8075
    %8077 = vmatprep.subr.mxu0 0.0
    %v8078 = vand.u32 %v7667, 4294901760
    %8079 = vmatpush1.msra.mxu0 %v8078
    %8080 = vmatprep.subr.mxu0 0.0
    %v8081 = vand.u32 %v7668, 4294901760
    %8082 = vmatpush1.msra.mxu0 %v8081
    %8083 = vmatprep.subr.mxu0 0.0
    %v8084 = vand.u32 %v7669, 4294901760
    %8085 = vmatpush1.msra.mxu0 %v8084
    %8086 = vmatprep.subr.mxu0 0.0
    %v8087 = vand.u32 %v7670, 4294901760
    %8088 = vmatpush1.msra.mxu0 %v8087
    %8089 = vmatprep.subr.mxu0 0.0
    %v8090 = vand.u32 %v7671, 4294901760
    %8091 = vmatpush1.msra.mxu0 %v8090
    %8092 = vmatprep.subr.mxu0 0.0
    %v8093 = vand.u32 %v7672, 4294901760
    %8094 = vmatpush1.msra.mxu0 %v8093
    %8095 = vmatprep.subr.mxu0 0.0
    %v8096 = vand.u32 %v7673, 4294901760
    %8097 = vmatpush1.msra.mxu0 %v8096
    %8098 = vmatprep.subr.mxu0 0.0
    %8099 = vmatpush1.msra.mxu0 0.0
    %8100 = vmatprep.subr.mxu0 0.0
    %8101 = vmatpush1.msra.mxu0 0.0
    %8102 = vmatprep.subr.mxu0 0.0
    %8103 = vmatpush1.msra.mxu0 0.0
    %8104 = vmatprep.subr.mxu0 0.0
    %8105 = vmatpush1.msra.mxu0 0.0
    %8106 = vmatprep.subr.mxu0 0.0
    %8107 = vmatpush1.msra.mxu0 0.0
    %8108 = vmatprep.subr.mxu0 0.0
    %8109 = vmatpush1.msra.mxu0 0.0
    %8110 = vmatprep.subr.mxu0 0.0
    %8111 = vmatpush1.msra.mxu0 0.0
    %8112 = vmatprep.subr.mxu0 0.0
    %8113 = vmatpush1.msra.mxu0 0.0
    %8114 = vmatprep.subr.mxu0 0.0
    %8115 = vmatpush1.msra.mxu0 0.0
    %8116 = vmatprep.subr.mxu0 0.0
    %8117 = vmatpush1.msra.mxu0 0.0
    %8118 = vmatprep.subr.mxu0 0.0
    %8119 = vmatpush1.msra.mxu0 0.0
    %8120 = vmatprep.subr.mxu0 0.0
    %8121 = vmatpush1.msra.mxu0 0.0
    %8122 = vmatprep.subr.mxu0 0.0
    %8123 = vmatpush1.msra.mxu0 0.0
    %8124 = vmatprep.subr.mxu0 0.0
    %8125 = vmatpush1.msra.mxu0 0.0
    %8126 = vmatprep.subr.mxu0 0.0
    %8127 = vmatpush1.msra.mxu0 0.0
    %8128 = vmatprep.subr.mxu0 0.0
    %8129 = vmatpush1.msra.mxu0 0.0
    %8130 = vmatprep.mubr.f32.mxu0 0.0
    %v8131 = vand.u32 %v7656, 4294901760
    %v8132 = vsub.f32 %v7656, %v8131
    %v8133 = vand.u32 %v8132, 4294901760
    %8134 = vmatmul.mubr.f32.gmra.mrb[0].mxu0 %v8133
    %v8135 = vpop.f32.mrb[0].mxu0
    %v8136 = vadd.f32 %v8040, %v8135
    %v8137 = vpop.f32.mrb[0].mxu0
    %8138 = vmatprep.mubr.f32.mxu0 0.0
    %v8139 = vand.u32 %v7657, 4294901760
    %v8140 = vsub.f32 %v7657, %v8139
    %v8141 = vand.u32 %v8140, 4294901760
    %8142 = vmatmul.mubr.f32.gmra.mrb[0].mxu0 %v8141
    %v8143 = vpop.f32.mrb[0].mxu0
    %v8144 = vadd.f32 %v8047, %v8143
    %v8145 = vpop.f32.mrb[0].mxu0
    %8146 = vdwg.mxu0
    %8147 = vmatprep.subr.mxu0 0.0
    %v8148 = vand.u32 %v7658, 4294901760
    %v8149 = vsub.f32 %v7658, %v8148
    %v8150 = vand.u32 %v8149, 4294901760
    %8151 = vmatpush1.msra.mxu0 %v8150
    %8152 = vmatprep.subr.mxu0 0.0
    %v8153 = vand.u32 %v7659, 4294901760
    %v8154 = vsub.f32 %v7659, %v8153
    %v8155 = vand.u32 %v8154, 4294901760
    %8156 = vmatpush1.msra.mxu0 %v8155
    %8157 = vmatprep.subr.mxu0 0.0
    %v8158 = vand.u32 %v7660, 4294901760
    %v8159 = vsub.f32 %v7660, %v8158
    %v8160 = vand.u32 %v8159, 4294901760
    %8161 = vmatpush1.msra.mxu0 %v8160
    %8162 = vmatprep.subr.mxu0 0.0
    %v8163 = vand.u32 %v7661, 4294901760
    %v8164 = vsub.f32 %v7661, %v8163
    %v8165 = vand.u32 %v8164, 4294901760
    %8166 = vmatpush1.msra.mxu0 %v8165
    %8167 = vmatprep.subr.mxu0 0.0
    %v8168 = vand.u32 %v7662, 4294901760
    %v8169 = vsub.f32 %v7662, %v8168
    %v8170 = vand.u32 %v8169, 4294901760
    %8171 = vmatpush1.msra.mxu0 %v8170
    %8172 = vmatprep.subr.mxu0 0.0
    %v8173 = vand.u32 %v7663, 4294901760
    %v8174 = vsub.f32 %v7663, %v8173
    %v8175 = vand.u32 %v8174, 4294901760
    %8176 = vmatpush1.msra.mxu0 %v8175
    %8177 = vmatprep.subr.mxu0 0.0
    %v8178 = vand.u32 %v7664, 4294901760
    %v8179 = vsub.f32 %v7664, %v8178
    %v8180 = vand.u32 %v8179, 4294901760
    %8181 = vmatpush1.msra.mxu0 %v8180
    %8182 = vmatprep.subr.mxu0 0.0
    %v8183 = vand.u32 %v7665, 4294901760
    %v8184 = vsub.f32 %v7665, %v8183
    %v8185 = vand.u32 %v8184, 4294901760
    %8186 = vmatpush1.msra.mxu0 %v8185
    %8187 = vmatprep.subr.mxu0 0.0
    %v8188 = vand.u32 %v7666, 4294901760
    %v8189 = vsub.f32 %v7666, %v8188
    %v8190 = vand.u32 %v8189, 4294901760
    %8191 = vmatpush1.msra.mxu0 %v8190
    %8192 = vmatprep.subr.mxu0 0.0
    %v8193 = vand.u32 %v7667, 4294901760
    %v8194 = vsub.f32 %v7667, %v8193
    %v8195 = vand.u32 %v8194, 4294901760
    %8196 = vmatpush1.msra.mxu0 %v8195
    %8197 = vmatprep.subr.mxu0 0.0
    %v8198 = vand.u32 %v7668, 4294901760
    %v8199 = vsub.f32 %v7668, %v8198
    %v8200 = vand.u32 %v8199, 4294901760
    %8201 = vmatpush1.msra.mxu0 %v8200
    %8202 = vmatprep.subr.mxu0 0.0
    %v8203 = vand.u32 %v7669, 4294901760
    %v8204 = vsub.f32 %v7669, %v8203
    %v8205 = vand.u32 %v8204, 4294901760
    %8206 = vmatpush1.msra.mxu0 %v8205
    %8207 = vmatprep.subr.mxu0 0.0
    %v8208 = vand.u32 %v7670, 4294901760
    %v8209 = vsub.f32 %v7670, %v8208
    %v8210 = vand.u32 %v8209, 4294901760
    %8211 = vmatpush1.msra.mxu0 %v8210
    %8212 = vmatprep.subr.mxu0 0.0
    %v8213 = vand.u32 %v7671, 4294901760
    %v8214 = vsub.f32 %v7671, %v8213
    %v8215 = vand.u32 %v8214, 4294901760
    %8216 = vmatpush1.msra.mxu0 %v8215
    %8217 = vmatprep.subr.mxu0 0.0
    %v8218 = vand.u32 %v7672, 4294901760
    %v8219 = vsub.f32 %v7672, %v8218
    %v8220 = vand.u32 %v8219, 4294901760
    %8221 = vmatpush1.msra.mxu0 %v8220
    %8222 = vmatprep.subr.mxu0 0.0
    %v8223 = vand.u32 %v7673, 4294901760
    %v8224 = vsub.f32 %v7673, %v8223
    %v8225 = vand.u32 %v8224, 4294901760
    %8226 = vmatpush1.msra.mxu0 %v8225
    %8227 = vmatprep.subr.mxu0 0.0
    %8228 = vmatpush1.msra.mxu0 0.0
    %8229 = vmatprep.subr.mxu0 0.0
    %8230 = vmatpush1.msra.mxu0 0.0
    %8231 = vmatprep.subr.mxu0 0.0
    %8232 = vmatpush1.msra.mxu0 0.0
    %8233 = vmatprep.subr.mxu0 0.0
    %8234 = vmatpush1.msra.mxu0 0.0
    %8235 = vmatprep.subr.mxu0 0.0
    %8236 = vmatpush1.msra.mxu0 0.0
    %8237 = vmatprep.subr.mxu0 0.0
    %8238 = vmatpush1.msra.mxu0 0.0
    %8239 = vmatprep.subr.mxu0 0.0
    %8240 = vmatpush1.msra.mxu0 0.0
    %8241 = vmatprep.subr.mxu0 0.0
    %8242 = vmatpush1.msra.mxu0 0.0
    %8243 = vmatprep.subr.mxu0 0.0
    %8244 = vmatpush1.msra.mxu0 0.0
    %8245 = vmatprep.subr.mxu0 0.0
    %8246 = vmatpush1.msra.mxu0 0.0
    %8247 = vmatprep.subr.mxu0 0.0
    %8248 = vmatpush1.msra.mxu0 0.0
    %8249 = vmatprep.subr.mxu0 0.0
    %8250 = vmatpush1.msra.mxu0 0.0
    %8251 = vmatprep.subr.mxu0 0.0
    %8252 = vmatpush1.msra.mxu0 0.0
    %8253 = vmatprep.subr.mxu0 0.0
    %8254 = vmatpush1.msra.mxu0 0.0
    %8255 = vmatprep.subr.mxu0 0.0
    %8256 = vmatpush1.msra.mxu0 0.0
    %8257 = vmatprep.subr.mxu0 0.0
    %8258 = vmatpush1.msra.mxu0 0.0
    %8259 = vmatprep.mubr.f32.mxu0 0.0
    %v8260 = vand.u32 %v7656, 4294901760
    %8261 = vmatmul.mubr.f32.gmra.mrb[0].mxu0 %v8260
    %v8262 = vpop.f32.mrb[0].mxu0
    %v8263 = vadd.f32 %v8136, %v8262
    %v8264 = vpop.f32.mrb[0].mxu0
    %8265 = vmatprep.mubr.f32.mxu0 0.0
    %v8266 = vand.u32 %v7657, 4294901760
    %8267 = vmatmul.mubr.f32.gmra.mrb[0].mxu0 %v8266
    %v8268 = vpop.f32.mrb[0].mxu0
    %v8269 = vadd.f32 %v8144, %v8268
    %v8270 = vpop.f32.mrb[0].mxu0
    %8271 = vdwg.mxu0
    %8272 = vmatprep.subr.mxu0 0.0
    %v8273 = vand.u32 %v7658, 4294901760
    %8274 = vmatpush1.msra.mxu0 %v8273
    %8275 = vmatprep.subr.mxu0 0.0
    %v8276 = vand.u32 %v7659, 4294901760
    %8277 = vmatpush1.msra.mxu0 %v8276
    %8278 = vmatprep.subr.mxu0 0.0
    %v8279 = vand.u32 %v7660, 4294901760
    %8280 = vmatpush1.msra.mxu0 %v8279
    %8281 = vmatprep.subr.mxu0 0.0
    %v8282 = vand.u32 %v7661, 4294901760
    %8283 = vmatpush1.msra.mxu0 %v8282
    %8284 = vmatprep.subr.mxu0 0.0
    %v8285 = vand.u32 %v7662, 4294901760
    %8286 = vmatpush1.msra.mxu0 %v8285
    %8287 = vmatprep.subr.mxu0 0.0
    %v8288 = vand.u32 %v7663, 4294901760
    %8289 = vmatpush1.msra.mxu0 %v8288
    %8290 = vmatprep.subr.mxu0 0.0
    %v8291 = vand.u32 %v7664, 4294901760
    %8292 = vmatpush1.msra.mxu0 %v8291
    %8293 = vmatprep.subr.mxu0 0.0
    %v8294 = vand.u32 %v7665, 4294901760
    %8295 = vmatpush1.msra.mxu0 %v8294
    %8296 = vmatprep.subr.mxu0 0.0
    %v8297 = vand.u32 %v7666, 4294901760
    %8298 = vmatpush1.msra.mxu0 %v8297
    %8299 = vmatprep.subr.mxu0 0.0
    %v8300 = vand.u32 %v7667, 4294901760
    %8301 = vmatpush1.msra.mxu0 %v8300
    %8302 = vmatprep.subr.mxu0 0.0
    %v8303 = vand.u32 %v7668, 4294901760
    %8304 = vmatpush1.msra.mxu0 %v8303
    %8305 = vmatprep.subr.mxu0 0.0
    %v8306 = vand.u32 %v7669, 4294901760
    %8307 = vmatpush1.msra.mxu0 %v8306
    %8308 = vmatprep.subr.mxu0 0.0
    %v8309 = vand.u32 %v7670, 4294901760
    %8310 = vmatpush1.msra.mxu0 %v8309
    %8311 = vmatprep.subr.mxu0 0.0
    %v8312 = vand.u32 %v7671, 4294901760
    %8313 = vmatpush1.msra.mxu0 %v8312
    %8314 = vmatprep.subr.mxu0 0.0
    %v8315 = vand.u32 %v7672, 4294901760
    %8316 = vmatpush1.msra.mxu0 %v8315
    %8317 = vmatprep.subr.mxu0 0.0
    %v8318 = vand.u32 %v7673, 4294901760
    %8319 = vmatpush1.msra.mxu0 %v8318
    %8320 = vmatprep.subr.mxu0 0.0
    %8321 = vmatpush1.msra.mxu0 0.0
    %8322 = vmatprep.subr.mxu0 0.0
    %8323 = vmatpush1.msra.mxu0 0.0
    %8324 = vmatprep.subr.mxu0 0.0
    %8325 = vmatpush1.msra.mxu0 0.0
    %8326 = vmatprep.subr.mxu0 0.0
    %8327 = vmatpush1.msra.mxu0 0.0
    %8328 = vmatprep.subr.mxu0 0.0
    %8329 = vmatpush1.msra.mxu0 0.0
    %8330 = vmatprep.subr.mxu0 0.0
    %8331 = vmatpush1.msra.mxu0 0.0
    %8332 = vmatprep.subr.mxu0 0.0
    %8333 = vmatpush1.msra.mxu0 0.0
    %8334 = vmatprep.subr.mxu0 0.0
    %8335 = vmatpush1.msra.mxu0 0.0
    %8336 = vmatprep.subr.mxu0 0.0
    %8337 = vmatpush1.msra.mxu0 0.0
    %8338 = vmatprep.subr.mxu0 0.0
    %8339 = vmatpush1.msra.mxu0 0.0
    %8340 = vmatprep.subr.mxu0 0.0
    %8341 = vmatpush1.msra.mxu0 0.0
    %8342 = vmatprep.subr.mxu0 0.0
    %8343 = vmatpush1.msra.mxu0 0.0
    %8344 = vmatprep.subr.mxu0 0.0
    %8345 = vmatpush1.msra.mxu0 0.0
    %8346 = vmatprep.subr.mxu0 0.0
    %8347 = vmatpush1.msra.mxu0 0.0
    %8348 = vmatprep.subr.mxu0 0.0
    %8349 = vmatpush1.msra.mxu0 0.0
    %8350 = vmatprep.subr.mxu0 0.0
    %8351 = vmatpush1.msra.mxu0 0.0
    %8352 = vmatprep.mubr.f32.mxu0 0.0
    %v8353 = vand.u32 %v7656, 4294901760
    %8354 = vmatmul.mubr.f32.gmra.mrb[0].mxu0 %v8353
    %v8355 = vpop.f32.mrb[0].mxu0
    %v8356 = vadd.f32 %v8263, %v8355
    %v8357 = vpop.f32.mrb[0].mxu0
    %8358 = vmatprep.mubr.f32.mxu0 0.0
    %v8359 = vand.u32 %v7657, 4294901760
    %8360 = vmatmul.mubr.f32.gmra.mrb[0].mxu0 %v8359
    %v8361 = vpop.f32.mrb[0].mxu0
    %v8362 = vadd.f32 %v8269, %v8361
    %v8363 = vpop.f32.mrb[0].mxu0
    %8364 = vdwg.mxu0
    %8365 = vst [vmem:[#allocation13] sm:$0xff] %v8356
    %8366 = vst [vmem:[#allocation13 + $0x8] sm:$0xff] %v8362
    // Predicated region
    $region90: #{tpu_custom_call.1} parent=1 // pred_check
      _
    $region91: #{tpu_custom_call.1} parent=1 // pred_check_branch
      %8368 = sbr.rel (0) target = $region93
    $region92: #{tpu_custom_call.1} parent=1 // pred_region
      %s8370 = ssub.s32 256, 256
      %8371 = vsyncadd [#allocation4], %s8370
      %s8372 = sshll.u32 [#allocation13], 4
      %s8373 = int_to_ptr.vmem [resolvable:$true] %s8372
      %8378 = dma.vmem_to_hbm [thread:$0]  %s8373, 256, %s16, [#allocation4], 128, 128, 8
    $region93: #{tpu_custom_call.1} parent=1 // pred_fallthru
      _
    // Predicated region
    $region94: #{tpu_custom_call.1} parent=1 // pred_check
      _
    $region95: #{tpu_custom_call.1} parent=1 // pred_check_branch
      %8380 = sbr.rel (0) target = $region97
    $region96: #{tpu_custom_call.1} parent=1 // pred_region
      %8381 = dma.done [#allocation4], 256
    $region97: #{tpu_custom_call.1} parent=1 // pred_fallthru
      _
    %8382 = vsyncpa [#allocation3], 1
    %8383 = vsyncpa [#allocation6], 1
    %8384 = vsyncpa [#allocation9], 1
    %8385 = vsyncpa [#allocation12], 1
    %8386 = vsyncpa [#allocation4], 1

</llo_original>
